<compile_context>
chip_gen: v5e
topology: v5e:2x2
jax: 0.10.0
libtpu: 0.0.40
codegen_flags: <defaults>
</compile_context>

<pallas_src>
import functools

import jax
import jax.numpy as jnp
from jax.experimental import pallas as pl
from jax.experimental.pallas import tpu as pltpu


# ------------------------------- Fused kernel -------------------------------- #

def _convnet_kernel(x_ref, fw_ref, fb_ref, bw_ref, bb_ref, bg_ref, bbe_ref,
                    lw_ref, lb_ref, o_ref, pad_in_ref, pad_h_ref, *,
                    K, n_layers, n_stacks, n_blocks):
    """Whole ConvNetDouble forward for one batch block, resident in VMEM.

    x_ref      : (bb, C_in, T)        input, PyTorch channel-first layout
    fw_ref     : (K, C_in, H)   bf16  first conv, per-tap weights
    fb_ref     : (1, H)         f32
    bw_ref     : (nb, K, H, H)  bf16  all ConvBlock conv weights
    bb_ref     : (nb, 1, H)     f32   ConvBlock conv biases
    bg_ref     : (nb, 1, H)     f32   LayerNorm gammas
    bbe_ref    : (nb, 1, H)     f32   LayerNorm betas
    lw_ref     : (K, H, C_out)  bf16  last conv, per-tap weights
    lb_ref     : (1, C_out)     f32
    o_ref      : (bb, C_out, T)       output (T on the lane axis)
    pad_in_ref : (T+K-1, C_in)  f32   zero-haloed conv-input scratch
    pad_h_ref  : (T+K-1, H)     f32   zero-haloed conv-input scratch (hidden)
    """
    bb, _, T = x_ref.shape
    pad = (K - 1) // 2

    # Zero once per invocation; only rows [pad:pad+T] are ever overwritten, so
    # the halo rows provide 'same' padding for every conv below.
    pad_in_ref[...] = jnp.zeros_like(pad_in_ref)
    pad_h_ref[...] = jnp.zeros_like(pad_h_ref)

    def conv_taps(pad_ref, get_w, bias):
        # K per-tap MXU matmuls accumulated in one f32 chain (no im2col concat,
        # no per-conv zero materialization).
        acc = jnp.dot(pad_ref[0:T, :].astype(jnp.bfloat16), get_w(0),
                      preferred_element_type=jnp.float32)
        for k in range(1, K):
            acc = acc + jnp.dot(pad_ref[k:k + T, :].astype(jnp.bfloat16),
                                get_w(k), preferred_element_type=jnp.float32)
        return acc + bias

    def layer_norm(y, idx):
        mean = jnp.mean(y, axis=-1, keepdims=True)
        c = y - mean
        var = jnp.mean(c * c, axis=-1, keepdims=True)
        return c * jax.lax.rsqrt(var + 1e-5) * bg_ref[idx] + bbe_ref[idx]

    def conv_block(x, idx):
        a = jnp.maximum(x, 0.0)                  # ReLU; Dropout(0.1) identity (eval)
        pad_h_ref[pad:pad + T, :] = a            # halo rows stay zero
        y = conv_taps(pad_h_ref, lambda k: bw_ref[idx, k], bb_ref[idx])
        return layer_norm(y, idx)

    def conv_stack(x, base):
        for j in range(n_blocks):
            x = conv_block(x, base + j)
        return x

    def residual_stack(x, base):
        for s in range(n_stacks):
            x = x + conv_stack(x, base + s * n_blocks)   # fused residual add
        return x

    def double_layer(x, l):
        off = l * 2 * n_stacks * n_blocks
        x = residual_stack(x, off)
        # TODO(synk): middle_layer has no defined body in the reference; Identity.
        return residual_stack(x, off + n_stacks * n_blocks)

    for b in range(bb):
        # First conv: transpose the tiny (C_in, T) tile in VMEM (one XLU op),
        # drop it into the zero-haloed scratch, per-tap matmuls.
        pad_in_ref[pad:pad + T, :] = jnp.transpose(x_ref[b]).astype(jnp.float32)
        h = conv_taps(pad_in_ref, lambda k: fw_ref[k], fb_ref[...])      # (T, H)

        out = double_layer(h, 0)
        for l in range(1, n_layers):
            out = out + double_layer(h, l)        # shared-h layer sum (module semantics)

        # Last conv (no ReLU), stored as (C_out, T) so no wrapper transpose.
        pad_h_ref[pad:pad + T, :] = out
        y = conv_taps(pad_h_ref, lambda k: lw_ref[k], lb_ref[...])       # (T, C_out)
        o_ref[b] = jnp.transpose(y).astype(o_ref.dtype)


# --------------------------------- Wrapper ----------------------------------- #

def _const_spec(shape, single_buffer):
    """BlockSpec for a grid-invariant operand (constant index_map)."""
    index_map = lambda i: (0,) * len(shape)
    if single_buffer:
        # Never changes across the grid: one buffer instead of the default
        # double-buffer reservation (VMEM headroom on v7x).
        return pl.BlockSpec(shape, index_map, pipeline_mode=pl.Buffered(1))
    return pl.BlockSpec(shape, index_map)


def _batch_block(batch):
    """v7x has 2 TensorCores/chip -> one grid step per TC; single-TC chips
    (v5e/v6e) fold the whole batch into one block (fewer steps / output DMAs)."""
    try:
        kind = jax.devices()[0].device_kind.lower()
    except Exception:
        kind = ""
    two_tensorcores = ("v7" in kind) or ("7x" in kind)
    if two_tensorcores and batch % 2 == 0:
        return batch // 2
    return batch


def conv_net_double(x_bct, params, *, n_layers, n_stacks, n_blocks, kernel_size,
                    single_buffer_weights=True, batch_block=None):
    """x_bct: (B, C_in, T) as in PyTorch -> (B, C_out, T)."""
    B, C_in, T = x_bct.shape
    K = kernel_size
    H = params["first_w"].shape[2]
    C_out = params["last_w"].shape[2]
    nb = params["block_w"].shape[0]

    bb = batch_block if batch_block is not None else _batch_block(B)
    assert B % bb == 0, (B, bb)

    kernel = functools.partial(_convnet_kernel, K=K, n_layers=n_layers,
                               n_stacks=n_stacks, n_blocks=n_blocks)

    itemsize = x_bct.dtype.itemsize
    cost = pl.CostEstimate(
        flops=2 * B * T * K * (C_in * H + nb * H * H + H * C_out),
        transcendentals=B * T * nb,                       # one rsqrt per LN row
        bytes_accessed=(x_bct.size + B * C_out * T) * itemsize
        + sum(int(v.size) * v.dtype.itemsize for v in params.values()),
    )

    return pl.pallas_call(
        kernel,
        out_shape=jax.ShapeDtypeStruct((B, C_out, T), x_bct.dtype),
        grid_spec=pltpu.PrefetchScalarGridSpec(
            num_scalar_prefetch=0,
            grid=(B // bb,),
            in_specs=[
                pl.BlockSpec((bb, C_in, T), lambda i: (i, 0, 0)),
                _const_spec((K, C_in, H), single_buffer_weights),
                _const_spec((1, H), single_buffer_weights),
                _const_spec((nb, K, H, H), single_buffer_weights),
                _const_spec((nb, 1, H), single_buffer_weights),
                _const_spec((nb, 1, H), single_buffer_weights),
                _const_spec((nb, 1, H), single_buffer_weights),
                _const_spec((K, H, C_out), single_buffer_weights),
                _const_spec((1, C_out), single_buffer_weights),
            ],
            out_specs=pl.BlockSpec((bb, C_out, T), lambda i: (i, 0, 0)),
            scratch_shapes=[
                pltpu.VMEM((T + K - 1, C_in), jnp.float32),
                pltpu.VMEM((T + K - 1, H), jnp.float32),
            ],
        ),
        compiler_params=pltpu.CompilerParams(
            dimension_semantics=("parallel",),   # one step per TC on v7x
        ),
        cost_estimate=cost,
    )(x_bct, params["first_w"], params["first_b"],
      params["block_w"], params["block_b"],
      params["block_gamma"], params["block_beta"],
      params["last_w"], params["last_b"])


# ----------------------------- Parameter creation ----------------------------- #

def init_params(key, *, in_channels, out_channels, hidden, n_layers,
                n_stacks, n_blocks, kernel_size):
    assert kernel_size % 2 == 1, "only odd kernel_size matches torch 'same' pad"
    nb = n_layers * 2 * n_stacks * n_blocks
    keys = iter(jax.random.split(key, 4 + 2 * nb))

    def conv_w(k, din, dout):
        # w[k, cin, cout] == torch_weight[cout, cin, k]  (per-tap layout).
        w = 0.05 * jax.random.normal(k, (kernel_size, din, dout), jnp.float32)
        return w.astype(jnp.bfloat16)

    def conv_b(k, d):
        return (0.01 * jax.random.normal(k, (d,), jnp.float32)).reshape(1, d)

    return {
        "first_w": conv_w(next(keys), in_channels, hidden),
        "first_b": conv_b(next(keys), hidden),
        "last_w": conv_w(next(keys), hidden, out_channels),
        "last_b": conv_b(next(keys), out_channels),
        "block_w": jnp.stack([conv_w(next(keys), hidden, hidden) for _ in range(nb)]),
        "block_b": jnp.stack([conv_b(next(keys), hidden) for _ in range(nb)]),
        "block_gamma": jnp.ones((nb, 1, hidden), jnp.float32),
        "block_beta": jnp.zeros((nb, 1, hidden), jnp.float32),
    }


# -------------------------- Pure-JAX reference (check) ------------------------ #
# NOTE: validates the Pallas lowering (same bf16-matmul / f32-accumulate math,
# same shared-h layer sum), not bit-fidelity to fp32 PyTorch numerics.

def _reference_forward(x_bct, params, *, n_layers, n_stacks, n_blocks, kernel_size):
    K = kernel_size
    pad = (K - 1) // 2

    def conv_same(x, w, b):                       # x: (B, T, Din), w: (K, Din, Dout)
        T = x.shape[1]
        Kk, Din, Dout = w.shape
        xp = jnp.pad(x, ((0, 0), (pad, pad), (0, 0)))
        x_cat = jnp.concatenate([xp[:, k:k + T, :] for k in range(Kk)], axis=-1)
        y = jnp.einsum("bti,io->bto", x_cat.astype(jnp.bfloat16),
                       w.reshape(Kk * Din, Dout),
                       preferred_element_type=jnp.float32)
        return y + b

    def layer_norm(y, g, beta):
        mean = jnp.mean(y, axis=-1, keepdims=True)
        c = y - mean
        var = jnp.mean(c * c, axis=-1, keepdims=True)
        return c * jax.lax.rsqrt(var + 1e-5) * g + beta

    def conv_block(x, idx):
        a = jnp.maximum(x, 0.0)
        y = conv_same(a, params["block_w"][idx], params["block_b"][idx])
        return layer_norm(y, params["block_gamma"][idx], params["block_beta"][idx])

    def conv_stack(x, base):
        for j in range(n_blocks):
            x = conv_block(x, base + j)
        return x

    def residual_stack(x, base):
        for s in range(n_stacks):
            x = x + conv_stack(x, base + s * n_blocks)
        return x

    def double_layer(x, l):
        off = l * 2 * n_stacks * n_blocks
        x = residual_stack(x, off)
        return residual_stack(x, off + n_stacks * n_blocks)

    x = jnp.transpose(x_bct, (0, 2, 1)).astype(jnp.float32)
    h = conv_same(x, params["first_w"], params["first_b"])
    out = double_layer(h, 0)
    for l in range(1, n_layers):
        out = out + double_layer(h, l)
    y = conv_same(out, params["last_w"], params["last_b"])
    return jnp.transpose(y, (0, 2, 1))


# ------------------------------------ Main ------------------------------------ #

if __name__ == "__main__":
    B, C_IN, C_OUT, T = 2, 4, 4, 16
    HIDDEN, N_LAYERS, N_STACKS, N_BLOCKS, K = 32, 2, 1, 1, 3

    key = jax.random.PRNGKey(0)
    k_params, k_x = jax.random.split(key)
    params = init_params(
        k_params, in_channels=C_IN, out_channels=C_OUT, hidden=HIDDEN,
        n_layers=N_LAYERS, n_stacks=N_STACKS, n_blocks=N_BLOCKS, kernel_size=K,
    )
    x = jax.random.normal(k_x, (B, C_IN, T), jnp.float32)   # PyTorch (B, C, T)

    cfg = dict(n_layers=N_LAYERS, n_stacks=N_STACKS, n_blocks=N_BLOCKS,
               kernel_size=K)
    fwd = jax.jit(functools.partial(conv_net_double, params=params, **cfg))
    try:
        y = jax.block_until_ready(fwd(x))
    except Exception:
        # TODO(synk): pl.Buffered(1) single-buffering rejected on this jax build;
        # fall back to default double-buffered constant operands.
        fwd = jax.jit(functools.partial(conv_net_double, params=params,
                                        single_buffer_weights=False, **cfg))
        y = jax.block_until_ready(fwd(x))
    assert y.shape == (B, C_OUT, T), y.shape

    # Correctness check against a pure-JAX reference with identical bf16 math.
    y_ref = jax.block_until_ready(
        jax.jit(functools.partial(_reference_forward, params=params, **cfg))(x))
    max_err = float(jnp.max(jnp.abs(y - y_ref)))
    assert max_err < 2e-2, f"mismatch vs reference: {max_err}"

    print("KERNEL_OK")
</pallas_src>

<mosaic_0001>
module attributes {stable_mosaic.version = 11 : i64} {
  func.func @_convnet_kernel(%arg0: i32, %arg1: memref<2x4x16xf32, #tpu.memory_space<vmem>>, %arg2: memref<3x4x32xbf16, #tpu.memory_space<vmem>>, %arg3: memref<1x32xf32, #tpu.memory_space<vmem>>, %arg4: memref<4x3x32x32xbf16, #tpu.memory_space<vmem>>, %arg5: memref<4x1x32xf32, #tpu.memory_space<vmem>>, %arg6: memref<4x1x32xf32, #tpu.memory_space<vmem>>, %arg7: memref<4x1x32xf32, #tpu.memory_space<vmem>>, %arg8: memref<3x32x4xbf16, #tpu.memory_space<vmem>>, %arg9: memref<1x4xf32, #tpu.memory_space<vmem>>, %arg10: memref<2x4x16xf32, #tpu.memory_space<vmem>>, %arg11: memref<18x4xf32, #tpu.memory_space<vmem>>, %arg12: memref<18x32xf32, #tpu.memory_space<vmem>>) attributes {dimension_semantics = [#tpu.dimension_semantics<parallel>], iteration_bounds = array<i64: 1>, scalar_prefetch = 0 : i64, scratch_operands = 2 : i64, tpu.core_type = #tpu.core_type<tc>, window_params = [{transform_indices = @transform_0, window_bounds = array<i64: 2, 4, 16>}, {pipeline_mode = #tpu.pipeline_mode<synchronous>, transform_indices = @transform_1, window_bounds = array<i64: 3, 4, 32>}, {pipeline_mode = #tpu.pipeline_mode<synchronous>, transform_indices = @transform_2, window_bounds = array<i64: 1, 32>}, {pipeline_mode = #tpu.pipeline_mode<synchronous>, transform_indices = @transform_3, window_bounds = array<i64: 4, 3, 32, 32>}, {pipeline_mode = #tpu.pipeline_mode<synchronous>, transform_indices = @transform_4, window_bounds = array<i64: 4, 1, 32>}, {pipeline_mode = #tpu.pipeline_mode<synchronous>, transform_indices = @transform_5, window_bounds = array<i64: 4, 1, 32>}, {pipeline_mode = #tpu.pipeline_mode<synchronous>, transform_indices = @transform_6, window_bounds = array<i64: 4, 1, 32>}, {pipeline_mode = #tpu.pipeline_mode<synchronous>, transform_indices = @transform_7, window_bounds = array<i64: 3, 32, 4>}, {pipeline_mode = #tpu.pipeline_mode<synchronous>, transform_indices = @transform_8, window_bounds = array<i64: 1, 4>}, {transform_indices = @transform_9, window_bounds = array<i64: 2, 4, 16>}]} {
    %cst = arith.constant 0.000000e+00 : f32
    %0 = vector.broadcast %cst : f32 to vector<18x4xf32>
    %c0 = arith.constant 0 : index
    %c0_0 = arith.constant 0 : index
    %1 = vector.load %arg11[%c0, %c0_0] : memref<18x4xf32, #tpu.memory_space<vmem>>, vector<18x4xf32>
    tpu.vector_store %arg11[%c0, %c0_0], %0 {strides = array<i32>} : memref<18x4xf32, #tpu.memory_space<vmem>>, vector<18x4xf32>,
    %cst_1 = arith.constant 0.000000e+00 : f32
    %2 = vector.broadcast %cst_1 : f32 to vector<18x32xf32>
    %c0_2 = arith.constant 0 : index
    %c0_3 = arith.constant 0 : index
    %3 = vector.load %arg12[%c0_2, %c0_3] : memref<18x32xf32, #tpu.memory_space<vmem>>, vector<18x32xf32>
    tpu.vector_store %arg12[%c0_2, %c0_3], %2 {strides = array<i32>} : memref<18x32xf32, #tpu.memory_space<vmem>>, vector<18x32xf32>,
    %c0_4 = arith.constant 0 : index
    %c0_5 = arith.constant 0 : index
    %c0_6 = arith.constant 0 : index
    %4 = vector.load %arg1[%c0_4, %c0_5, %c0_6] : memref<2x4x16xf32, #tpu.memory_space<vmem>>, vector<1x4x16xf32>
    %5 = vector.shape_cast %4 : vector<1x4x16xf32> to vector<4x16xf32>
    %6 = tpu.transpose %5, [1, 0] : vector<4x16xf32> -> vector<16x4xf32>
    %c1 = arith.constant 1 : index
    %c0_7 = arith.constant 0 : index
    %7 = vector.load %arg11[%c1, %c0_7] : memref<18x4xf32, #tpu.memory_space<vmem>>, vector<16x4xf32>
    tpu.vector_store %arg11[%c1, %c0_7], %6 {strides = array<i32>} : memref<18x4xf32, #tpu.memory_space<vmem>>, vector<16x4xf32>,
    %c0_8 = arith.constant 0 : index
    %c0_9 = arith.constant 0 : index
    %8 = vector.load %arg3[%c0_8, %c0_9] : memref<1x32xf32, #tpu.memory_space<vmem>>, vector<1x32xf32>
    %c0_10 = arith.constant 0 : index
    %c0_11 = arith.constant 0 : index
    %9 = vector.load %arg11[%c0_10, %c0_11] : memref<18x4xf32, #tpu.memory_space<vmem>>, vector<16x4xf32>
    %10 = arith.truncf %9 : vector<16x4xf32> to vector<16x4xbf16>
    %c0_12 = arith.constant 0 : index
    %c0_13 = arith.constant 0 : index
    %c0_14 = arith.constant 0 : index
    %11 = vector.load %arg2[%c0_12, %c0_13, %c0_14] : memref<3x4x32xbf16, #tpu.memory_space<vmem>>, vector<1x4x32xbf16>
    %12 = vector.shape_cast %11 : vector<1x4x32xbf16> to vector<4x32xbf16>
    %cst_15 = arith.constant dense<0.000000e+00> : vector<16x32xf32>
    %13 = tpu.matmul %10, %12, %cst_15 {dimension_numbers = #tpu.dot_dimension_numbers<[1], [0], [0], [1], [0, 0, 1, 1], [], []>} : vector<16x4xbf16>, vector<4x32xbf16>, vector<16x32xf32> -> vector<16x32xf32>
    %c1_16 = arith.constant 1 : index
    %c0_17 = arith.constant 0 : index
    %14 = vector.load %arg11[%c1_16, %c0_17] : memref<18x4xf32, #tpu.memory_space<vmem>>, vector<16x4xf32>
    %15 = arith.truncf %14 : vector<16x4xf32> to vector<16x4xbf16>
    %c1_18 = arith.constant 1 : index
    %c0_19 = arith.constant 0 : index
    %c0_20 = arith.constant 0 : index
    %16 = vector.load %arg2[%c1_18, %c0_19, %c0_20] : memref<3x4x32xbf16, #tpu.memory_space<vmem>>, vector<1x4x32xbf16>
    %17 = vector.shape_cast %16 : vector<1x4x32xbf16> to vector<4x32xbf16>
    %cst_21 = arith.constant dense<0.000000e+00> : vector<16x32xf32>
    %18 = tpu.matmul %15, %17, %cst_21 {dimension_numbers = #tpu.dot_dimension_numbers<[1], [0], [0], [1], [0, 0, 1, 1], [], []>} : vector<16x4xbf16>, vector<4x32xbf16>, vector<16x32xf32> -> vector<16x32xf32>
    %19 = arith.addf %13, %18 : vector<16x32xf32>
    %c2 = arith.constant 2 : index
    %c0_22 = arith.constant 0 : index
    %20 = vector.load %arg11[%c2, %c0_22] : memref<18x4xf32, #tpu.memory_space<vmem>>, vector<16x4xf32>
    %21 = arith.truncf %20 : vector<16x4xf32> to vector<16x4xbf16>
    %c2_23 = arith.constant 2 : index
    %c0_24 = arith.constant 0 : index
    %c0_25 = arith.constant 0 : index
    %22 = vector.load %arg2[%c2_23, %c0_24, %c0_25] : memref<3x4x32xbf16, #tpu.memory_space<vmem>>, vector<1x4x32xbf16>
    %23 = vector.shape_cast %22 : vector<1x4x32xbf16> to vector<4x32xbf16>
    %cst_26 = arith.constant dense<0.000000e+00> : vector<16x32xf32>
    %24 = tpu.matmul %21, %23, %cst_26 {dimension_numbers = #tpu.dot_dimension_numbers<[1], [0], [0], [1], [0, 0, 1, 1], [], []>} : vector<16x4xbf16>, vector<4x32xbf16>, vector<16x32xf32> -> vector<16x32xf32>
    %25 = arith.addf %19, %24 : vector<16x32xf32>
    %26 = vector.broadcast %8 : vector<1x32xf32> to vector<16x32xf32>
    %27 = arith.addf %25, %26 : vector<16x32xf32>
    %cst_27 = arith.constant 0.000000e+00 : f32
    %28 = vector.broadcast %cst_27 : f32 to vector<16x32xf32>
    %29 = arith.maximumf %27, %28 : vector<16x32xf32>
    %c1_28 = arith.constant 1 : index
    %c0_29 = arith.constant 0 : index
    %30 = vector.load %arg12[%c1_28, %c0_29] : memref<18x32xf32, #tpu.memory_space<vmem>>, vector<16x32xf32>
    tpu.vector_store %arg12[%c1_28, %c0_29], %29 {strides = array<i32>} : memref<18x32xf32, #tpu.memory_space<vmem>>, vector<16x32xf32>,
    %c0_30 = arith.constant 0 : index
    %c0_31 = arith.constant 0 : index
    %c0_32 = arith.constant 0 : index
    %31 = vector.load %arg5[%c0_30, %c0_31, %c0_32] : memref<4x1x32xf32, #tpu.memory_space<vmem>>, vector<1x1x32xf32>
    %32 = vector.shape_cast %31 : vector<1x1x32xf32> to vector<1x32xf32>
    %c0_33 = arith.constant 0 : index
    %c0_34 = arith.constant 0 : index
    %33 = vector.load %arg12[%c0_33, %c0_34] : memref<18x32xf32, #tpu.memory_space<vmem>>, vector<16x32xf32>
    %34 = arith.truncf %33 : vector<16x32xf32> to vector<16x32xbf16>
    %c0_35 = arith.constant 0 : index
    %c0_36 = arith.constant 0 : index
    %c0_37 = arith.constant 0 : index
    %c0_38 = arith.constant 0 : index
    %35 = vector.load %arg4[%c0_35, %c0_36, %c0_37, %c0_38] : memref<4x3x32x32xbf16, #tpu.memory_space<vmem>>, vector<1x1x32x32xbf16>
    %36 = vector.shape_cast %35 : vector<1x1x32x32xbf16> to vector<32x32xbf16>
    %cst_39 = arith.constant dense<0.000000e+00> : vector<16x32xf32>
    %37 = tpu.matmul %34, %36, %cst_39 {dimension_numbers = #tpu.dot_dimension_numbers<[1], [0], [0], [1], [0, 0, 1, 1], [], []>} : vector<16x32xbf16>, vector<32x32xbf16>, vector<16x32xf32> -> vector<16x32xf32>
    %c1_40 = arith.constant 1 : index
    %c0_41 = arith.constant 0 : index
    %38 = vector.load %arg12[%c1_40, %c0_41] : memref<18x32xf32, #tpu.memory_space<vmem>>, vector<16x32xf32>
    %39 = arith.truncf %38 : vector<16x32xf32> to vector<16x32xbf16>
    %c0_42 = arith.constant 0 : index
    %c1_43 = arith.constant 1 : index
    %c0_44 = arith.constant 0 : index
    %c0_45 = arith.constant 0 : index
    %40 = vector.load %arg4[%c0_42, %c1_43, %c0_44, %c0_45] : memref<4x3x32x32xbf16, #tpu.memory_space<vmem>>, vector<1x1x32x32xbf16>
    %41 = vector.shape_cast %40 : vector<1x1x32x32xbf16> to vector<32x32xbf16>
    %cst_46 = arith.constant dense<0.000000e+00> : vector<16x32xf32>
    %42 = tpu.matmul %39, %41, %cst_46 {dimension_numbers = #tpu.dot_dimension_numbers<[1], [0], [0], [1], [0, 0, 1, 1], [], []>} : vector<16x32xbf16>, vector<32x32xbf16>, vector<16x32xf32> -> vector<16x32xf32>
    %43 = arith.addf %37, %42 : vector<16x32xf32>
    %c2_47 = arith.constant 2 : index
    %c0_48 = arith.constant 0 : index
    %44 = vector.load %arg12[%c2_47, %c0_48] : memref<18x32xf32, #tpu.memory_space<vmem>>, vector<16x32xf32>
    %45 = arith.truncf %44 : vector<16x32xf32> to vector<16x32xbf16>
    %c0_49 = arith.constant 0 : index
    %c2_50 = arith.constant 2 : index
    %c0_51 = arith.constant 0 : index
    %c0_52 = arith.constant 0 : index
    %46 = vector.load %arg4[%c0_49, %c2_50, %c0_51, %c0_52] : memref<4x3x32x32xbf16, #tpu.memory_space<vmem>>, vector<1x1x32x32xbf16>
    %47 = vector.shape_cast %46 : vector<1x1x32x32xbf16> to vector<32x32xbf16>
    %cst_53 = arith.constant dense<0.000000e+00> : vector<16x32xf32>
    %48 = tpu.matmul %45, %47, %cst_53 {dimension_numbers = #tpu.dot_dimension_numbers<[1], [0], [0], [1], [0, 0, 1, 1], [], []>} : vector<16x32xbf16>, vector<32x32xbf16>, vector<16x32xf32> -> vector<16x32xf32>
    %49 = arith.addf %43, %48 : vector<16x32xf32>
    %50 = vector.broadcast %32 : vector<1x32xf32> to vector<16x32xf32>
    %51 = arith.addf %49, %50 : vector<16x32xf32>
    %cst_54 = arith.constant dense<0.000000e+00> : vector<16xf32>
    %52 = vector.multi_reduction <add>, %51, %cst_54 [1] : vector<16x32xf32> to vector<16xf32>
    %53 = vector.shape_cast %52 : vector<16xf32> to vector<16x1xf32>
    %cst_55 = arith.constant 3.200000e+01 : f32
    %54 = vector.broadcast %cst_55 : f32 to vector<16x1xf32>
    %55 = arith.divf %53, %54 : vector<16x1xf32>
    %56 = vector.broadcast %55 : vector<16x1xf32> to vector<16x32xf32>
    %57 = arith.subf %51, %56 : vector<16x32xf32>
    %58 = arith.mulf %57, %57 : vector<16x32xf32>
    %cst_56 = arith.constant dense<0.000000e+00> : vector<16xf32>
    %59 = vector.multi_reduction <add>, %58, %cst_56 [1] : vector<16x32xf32> to vector<16xf32>
    %60 = vector.shape_cast %59 : vector<16xf32> to vector<16x1xf32>
    %cst_57 = arith.constant 3.200000e+01 : f32
    %61 = vector.broadcast %cst_57 : f32 to vector<16x1xf32>
    %62 = arith.divf %60, %61 : vector<16x1xf32>
    %cst_58 = arith.constant 9.99999974E-6 : f32
    %63 = vector.broadcast %cst_58 : f32 to vector<16x1xf32>
    %64 = arith.addf %62, %63 : vector<16x1xf32>
    %65 = math.rsqrt %64 : vector<16x1xf32>
    %66 = vector.broadcast %65 : vector<16x1xf32> to vector<16x32xf32>
    %67 = arith.mulf %57, %66 : vector<16x32xf32>
    %c0_59 = arith.constant 0 : index
    %c0_60 = arith.constant 0 : index
    %c0_61 = arith.constant 0 : index
    %68 = vector.load %arg6[%c0_59, %c0_60, %c0_61] : memref<4x1x32xf32, #tpu.memory_space<vmem>>, vector<1x1x32xf32>
    %69 = vector.shape_cast %68 : vector<1x1x32xf32> to vector<1x32xf32>
    %70 = vector.broadcast %69 : vector<1x32xf32> to vector<16x32xf32>
    %71 = arith.mulf %67, %70 : vector<16x32xf32>
    %c0_62 = arith.constant 0 : index
    %c0_63 = arith.constant 0 : index
    %c0_64 = arith.constant 0 : index
    %72 = vector.load %arg7[%c0_62, %c0_63, %c0_64] : memref<4x1x32xf32, #tpu.memory_space<vmem>>, vector<1x1x32xf32>
    %73 = vector.shape_cast %72 : vector<1x1x32xf32> to vector<1x32xf32>
    %74 = vector.broadcast %73 : vector<1x32xf32> to vector<16x32xf32>
    %75 = arith.addf %71, %74 : vector<16x32xf32>
    %76 = arith.addf %27, %75 : vector<16x32xf32>
    %cst_65 = arith.constant 0.000000e+00 : f32
    %77 = vector.broadcast %cst_65 : f32 to vector<16x32xf32>
    %78 = arith.maximumf %76, %77 : vector<16x32xf32>
    %c1_66 = arith.constant 1 : index
    %c0_67 = arith.constant 0 : index
    %79 = vector.load %arg12[%c1_66, %c0_67] : memref<18x32xf32, #tpu.memory_space<vmem>>, vector<16x32xf32>
    tpu.vector_store %arg12[%c1_66, %c0_67], %78 {strides = array<i32>} : memref<18x32xf32, #tpu.memory_space<vmem>>, vector<16x32xf32>,
    %c1_68 = arith.constant 1 : index
    %c0_69 = arith.constant 0 : index
    %c0_70 = arith.constant 0 : index
    %80 = vector.load %arg5[%c1_68, %c0_69, %c0_70] : memref<4x1x32xf32, #tpu.memory_space<vmem>>, vector<1x1x32xf32>
    %81 = vector.shape_cast %80 : vector<1x1x32xf32> to vector<1x32xf32>
    %c0_71 = arith.constant 0 : index
    %c0_72 = arith.constant 0 : index
    %82 = vector.load %arg12[%c0_71, %c0_72] : memref<18x32xf32, #tpu.memory_space<vmem>>, vector<16x32xf32>
    %83 = arith.truncf %82 : vector<16x32xf32> to vector<16x32xbf16>
    %c1_73 = arith.constant 1 : index
    %c0_74 = arith.constant 0 : index
    %c0_75 = arith.constant 0 : index
    %c0_76 = arith.constant 0 : index
    %84 = vector.load %arg4[%c1_73, %c0_74, %c0_75, %c0_76] : memref<4x3x32x32xbf16, #tpu.memory_space<vmem>>, vector<1x1x32x32xbf16>
    %85 = vector.shape_cast %84 : vector<1x1x32x32xbf16> to vector<32x32xbf16>
    %cst_77 = arith.constant dense<0.000000e+00> : vector<16x32xf32>
    %86 = tpu.matmul %83, %85, %cst_77 {dimension_numbers = #tpu.dot_dimension_numbers<[1], [0], [0], [1], [0, 0, 1, 1], [], []>} : vector<16x32xbf16>, vector<32x32xbf16>, vector<16x32xf32> -> vector<16x32xf32>
    %c1_78 = arith.constant 1 : index
    %c0_79 = arith.constant 0 : index
    %87 = vector.load %arg12[%c1_78, %c0_79] : memref<18x32xf32, #tpu.memory_space<vmem>>, vector<16x32xf32>
    %88 = arith.truncf %87 : vector<16x32xf32> to vector<16x32xbf16>
    %c1_80 = arith.constant 1 : index
    %c1_81 = arith.constant 1 : index
    %c0_82 = arith.constant 0 : index
    %c0_83 = arith.constant 0 : index
    %89 = vector.load %arg4[%c1_80, %c1_81, %c0_82, %c0_83] : memref<4x3x32x32xbf16, #tpu.memory_space<vmem>>, vector<1x1x32x32xbf16>
    %90 = vector.shape_cast %89 : vector<1x1x32x32xbf16> to vector<32x32xbf16>
    %cst_84 = arith.constant dense<0.000000e+00> : vector<16x32xf32>
    %91 = tpu.matmul %88, %90, %cst_84 {dimension_numbers = #tpu.dot_dimension_numbers<[1], [0], [0], [1], [0, 0, 1, 1], [], []>} : vector<16x32xbf16>, vector<32x32xbf16>, vector<16x32xf32> -> vector<16x32xf32>
    %92 = arith.addf %86, %91 : vector<16x32xf32>
    %c2_85 = arith.constant 2 : index
    %c0_86 = arith.constant 0 : index
    %93 = vector.load %arg12[%c2_85, %c0_86] : memref<18x32xf32, #tpu.memory_space<vmem>>, vector<16x32xf32>
    %94 = arith.truncf %93 : vector<16x32xf32> to vector<16x32xbf16>
    %c1_87 = arith.constant 1 : index
    %c2_88 = arith.constant 2 : index
    %c0_89 = arith.constant 0 : index
    %c0_90 = arith.constant 0 : index
    %95 = vector.load %arg4[%c1_87, %c2_88, %c0_89, %c0_90] : memref<4x3x32x32xbf16, #tpu.memory_space<vmem>>, vector<1x1x32x32xbf16>
    %96 = vector.shape_cast %95 : vector<1x1x32x32xbf16> to vector<32x32xbf16>
    %cst_91 = arith.constant dense<0.000000e+00> : vector<16x32xf32>
    %97 = tpu.matmul %94, %96, %cst_91 {dimension_numbers = #tpu.dot_dimension_numbers<[1], [0], [0], [1], [0, 0, 1, 1], [], []>} : vector<16x32xbf16>, vector<32x32xbf16>, vector<16x32xf32> -> vector<16x32xf32>
    %98 = arith.addf %92, %97 : vector<16x32xf32>
    %99 = vector.broadcast %81 : vector<1x32xf32> to vector<16x32xf32>
    %100 = arith.addf %98, %99 : vector<16x32xf32>
    %cst_92 = arith.constant dense<0.000000e+00> : vector<16xf32>
    %101 = vector.multi_reduction <add>, %100, %cst_92 [1] : vector<16x32xf32> to vector<16xf32>
    %102 = vector.shape_cast %101 : vector<16xf32> to vector<16x1xf32>
    %cst_93 = arith.constant 3.200000e+01 : f32
    %103 = vector.broadcast %cst_93 : f32 to vector<16x1xf32>
    %104 = arith.divf %102, %103 : vector<16x1xf32>
    %105 = vector.broadcast %104 : vector<16x1xf32> to vector<16x32xf32>
    %106 = arith.subf %100, %105 : vector<16x32xf32>
    %107 = arith.mulf %106, %106 : vector<16x32xf32>
    %cst_94 = arith.constant dense<0.000000e+00> : vector<16xf32>
    %108 = vector.multi_reduction <add>, %107, %cst_94 [1] : vector<16x32xf32> to vector<16xf32>
    %109 = vector.shape_cast %108 : vector<16xf32> to vector<16x1xf32>
    %cst_95 = arith.constant 3.200000e+01 : f32
    %110 = vector.broadcast %cst_95 : f32 to vector<16x1xf32>
    %111 = arith.divf %109, %110 : vector<16x1xf32>
    %cst_96 = arith.constant 9.99999974E-6 : f32
    %112 = vector.broadcast %cst_96 : f32 to vector<16x1xf32>
    %113 = arith.addf %111, %112 : vector<16x1xf32>
    %114 = math.rsqrt %113 : vector<16x1xf32>
    %115 = vector.broadcast %114 : vector<16x1xf32> to vector<16x32xf32>
    %116 = arith.mulf %106, %115 : vector<16x32xf32>
    %c1_97 = arith.constant 1 : index
    %c0_98 = arith.constant 0 : index
    %c0_99 = arith.constant 0 : index
    %117 = vector.load %arg6[%c1_97, %c0_98, %c0_99] : memref<4x1x32xf32, #tpu.memory_space<vmem>>, vector<1x1x32xf32>
    %118 = vector.shape_cast %117 : vector<1x1x32xf32> to vector<1x32xf32>
    %119 = vector.broadcast %118 : vector<1x32xf32> to vector<16x32xf32>
    %120 = arith.mulf %116, %119 : vector<16x32xf32>
    %c1_100 = arith.constant 1 : index
    %c0_101 = arith.constant 0 : index
    %c0_102 = arith.constant 0 : index
    %121 = vector.load %arg7[%c1_100, %c0_101, %c0_102] : memref<4x1x32xf32, #tpu.memory_space<vmem>>, vector<1x1x32xf32>
    %122 = vector.shape_cast %121 : vector<1x1x32xf32> to vector<1x32xf32>
    %123 = vector.broadcast %122 : vector<1x32xf32> to vector<16x32xf32>
    %124 = arith.addf %120, %123 : vector<16x32xf32>
    %125 = arith.addf %76, %124 : vector<16x32xf32>
    %cst_103 = arith.constant 0.000000e+00 : f32
    %126 = vector.broadcast %cst_103 : f32 to vector<16x32xf32>
    %127 = arith.maximumf %27, %126 : vector<16x32xf32>
    %c1_104 = arith.constant 1 : index
    %c0_105 = arith.constant 0 : index
    %128 = vector.load %arg12[%c1_104, %c0_105] : memref<18x32xf32, #tpu.memory_space<vmem>>, vector<16x32xf32>
    tpu.vector_store %arg12[%c1_104, %c0_105], %127 {strides = array<i32>} : memref<18x32xf32, #tpu.memory_space<vmem>>, vector<16x32xf32>,
    %c2_106 = arith.constant 2 : index
    %c0_107 = arith.constant 0 : index
    %c0_108 = arith.constant 0 : index
    %129 = vector.load %arg5[%c2_106, %c0_107, %c0_108] : memref<4x1x32xf32, #tpu.memory_space<vmem>>, vector<1x1x32xf32>
    %130 = vector.shape_cast %129 : vector<1x1x32xf32> to vector<1x32xf32>
    %c0_109 = arith.constant 0 : index
    %c0_110 = arith.constant 0 : index
    %131 = vector.load %arg12[%c0_109, %c0_110] : memref<18x32xf32, #tpu.memory_space<vmem>>, vector<16x32xf32>
    %132 = arith.truncf %131 : vector<16x32xf32> to vector<16x32xbf16>
    %c2_111 = arith.constant 2 : index
    %c0_112 = arith.constant 0 : index
    %c0_113 = arith.constant 0 : index
    %c0_114 = arith.constant 0 : index
    %133 = vector.load %arg4[%c2_111, %c0_112, %c0_113, %c0_114] : memref<4x3x32x32xbf16, #tpu.memory_space<vmem>>, vector<1x1x32x32xbf16>
    %134 = vector.shape_cast %133 : vector<1x1x32x32xbf16> to vector<32x32xbf16>
    %cst_115 = arith.constant dense<0.000000e+00> : vector<16x32xf32>
    %135 = tpu.matmul %132, %134, %cst_115 {dimension_numbers = #tpu.dot_dimension_numbers<[1], [0], [0], [1], [0, 0, 1, 1], [], []>} : vector<16x32xbf16>, vector<32x32xbf16>, vector<16x32xf32> -> vector<16x32xf32>
    %c1_116 = arith.constant 1 : index
    %c0_117 = arith.constant 0 : index
    %136 = vector.load %arg12[%c1_116, %c0_117] : memref<18x32xf32, #tpu.memory_space<vmem>>, vector<16x32xf32>
    %137 = arith.truncf %136 : vector<16x32xf32> to vector<16x32xbf16>
    %c2_118 = arith.constant 2 : index
    %c1_119 = arith.constant 1 : index
    %c0_120 = arith.constant 0 : index
    %c0_121 = arith.constant 0 : index
    %138 = vector.load %arg4[%c2_118, %c1_119, %c0_120, %c0_121] : memref<4x3x32x32xbf16, #tpu.memory_space<vmem>>, vector<1x1x32x32xbf16>
    %139 = vector.shape_cast %138 : vector<1x1x32x32xbf16> to vector<32x32xbf16>
    %cst_122 = arith.constant dense<0.000000e+00> : vector<16x32xf32>
    %140 = tpu.matmul %137, %139, %cst_122 {dimension_numbers = #tpu.dot_dimension_numbers<[1], [0], [0], [1], [0, 0, 1, 1], [], []>} : vector<16x32xbf16>, vector<32x32xbf16>, vector<16x32xf32> -> vector<16x32xf32>
    %141 = arith.addf %135, %140 : vector<16x32xf32>
    %c2_123 = arith.constant 2 : index
    %c0_124 = arith.constant 0 : index
    %142 = vector.load %arg12[%c2_123, %c0_124] : memref<18x32xf32, #tpu.memory_space<vmem>>, vector<16x32xf32>
    %143 = arith.truncf %142 : vector<16x32xf32> to vector<16x32xbf16>
    %c2_125 = arith.constant 2 : index
    %c2_126 = arith.constant 2 : index
    %c0_127 = arith.constant 0 : index
    %c0_128 = arith.constant 0 : index
    %144 = vector.load %arg4[%c2_125, %c2_126, %c0_127, %c0_128] : memref<4x3x32x32xbf16, #tpu.memory_space<vmem>>, vector<1x1x32x32xbf16>
    %145 = vector.shape_cast %144 : vector<1x1x32x32xbf16> to vector<32x32xbf16>
    %cst_129 = arith.constant dense<0.000000e+00> : vector<16x32xf32>
    %146 = tpu.matmul %143, %145, %cst_129 {dimension_numbers = #tpu.dot_dimension_numbers<[1], [0], [0], [1], [0, 0, 1, 1], [], []>} : vector<16x32xbf16>, vector<32x32xbf16>, vector<16x32xf32> -> vector<16x32xf32>
    %147 = arith.addf %141, %146 : vector<16x32xf32>
    %148 = vector.broadcast %130 : vector<1x32xf32> to vector<16x32xf32>
    %149 = arith.addf %147, %148 : vector<16x32xf32>
    %cst_130 = arith.constant dense<0.000000e+00> : vector<16xf32>
    %150 = vector.multi_reduction <add>, %149, %cst_130 [1] : vector<16x32xf32> to vector<16xf32>
    %151 = vector.shape_cast %150 : vector<16xf32> to vector<16x1xf32>
    %cst_131 = arith.constant 3.200000e+01 : f32
    %152 = vector.broadcast %cst_131 : f32 to vector<16x1xf32>
    %153 = arith.divf %151, %152 : vector<16x1xf32>
    %154 = vector.broadcast %153 : vector<16x1xf32> to vector<16x32xf32>
    %155 = arith.subf %149, %154 : vector<16x32xf32>
    %156 = arith.mulf %155, %155 : vector<16x32xf32>
    %cst_132 = arith.constant dense<0.000000e+00> : vector<16xf32>
    %157 = vector.multi_reduction <add>, %156, %cst_132 [1] : vector<16x32xf32> to vector<16xf32>
    %158 = vector.shape_cast %157 : vector<16xf32> to vector<16x1xf32>
    %cst_133 = arith.constant 3.200000e+01 : f32
    %159 = vector.broadcast %cst_133 : f32 to vector<16x1xf32>
    %160 = arith.divf %158, %159 : vector<16x1xf32>
    %cst_134 = arith.constant 9.99999974E-6 : f32
    %161 = vector.broadcast %cst_134 : f32 to vector<16x1xf32>
    %162 = arith.addf %160, %161 : vector<16x1xf32>
    %163 = math.rsqrt %162 : vector<16x1xf32>
    %164 = vector.broadcast %163 : vector<16x1xf32> to vector<16x32xf32>
    %165 = arith.mulf %155, %164 : vector<16x32xf32>
    %c2_135 = arith.constant 2 : index
    %c0_136 = arith.constant 0 : index
    %c0_137 = arith.constant 0 : index
    %166 = vector.load %arg6[%c2_135, %c0_136, %c0_137] : memref<4x1x32xf32, #tpu.memory_space<vmem>>, vector<1x1x32xf32>
    %167 = vector.shape_cast %166 : vector<1x1x32xf32> to vector<1x32xf32>
    %168 = vector.broadcast %167 : vector<1x32xf32> to vector<16x32xf32>
    %169 = arith.mulf %165, %168 : vector<16x32xf32>
    %c2_138 = arith.constant 2 : index
    %c0_139 = arith.constant 0 : index
    %c0_140 = arith.constant 0 : index
    %170 = vector.load %arg7[%c2_138, %c0_139, %c0_140] : memref<4x1x32xf32, #tpu.memory_space<vmem>>, vector<1x1x32xf32>
    %171 = vector.shape_cast %170 : vector<1x1x32xf32> to vector<1x32xf32>
    %172 = vector.broadcast %171 : vector<1x32xf32> to vector<16x32xf32>
    %173 = arith.addf %169, %172 : vector<16x32xf32>
    %174 = arith.addf %27, %173 : vector<16x32xf32>
    %cst_141 = arith.constant 0.000000e+00 : f32
    %175 = vector.broadcast %cst_141 : f32 to vector<16x32xf32>
    %176 = arith.maximumf %174, %175 : vector<16x32xf32>
    %c1_142 = arith.constant 1 : index
    %c0_143 = arith.constant 0 : index
    %177 = vector.load %arg12[%c1_142, %c0_143] : memref<18x32xf32, #tpu.memory_space<vmem>>, vector<16x32xf32>
    tpu.vector_store %arg12[%c1_142, %c0_143], %176 {strides = array<i32>} : memref<18x32xf32, #tpu.memory_space<vmem>>, vector<16x32xf32>,
    %c3 = arith.constant 3 : index
    %c0_144 = arith.constant 0 : index
    %c0_145 = arith.constant 0 : index
    %178 = vector.load %arg5[%c3, %c0_144, %c0_145] : memref<4x1x32xf32, #tpu.memory_space<vmem>>, vector<1x1x32xf32>
    %179 = vector.shape_cast %178 : vector<1x1x32xf32> to vector<1x32xf32>
    %c0_146 = arith.constant 0 : index
    %c0_147 = arith.constant 0 : index
    %180 = vector.load %arg12[%c0_146, %c0_147] : memref<18x32xf32, #tpu.memory_space<vmem>>, vector<16x32xf32>
    %181 = arith.truncf %180 : vector<16x32xf32> to vector<16x32xbf16>
    %c3_148 = arith.constant 3 : index
    %c0_149 = arith.constant 0 : index
    %c0_150 = arith.constant 0 : index
    %c0_151 = arith.constant 0 : index
    %182 = vector.load %arg4[%c3_148, %c0_149, %c0_150, %c0_151] : memref<4x3x32x32xbf16, #tpu.memory_space<vmem>>, vector<1x1x32x32xbf16>
    %183 = vector.shape_cast %182 : vector<1x1x32x32xbf16> to vector<32x32xbf16>
    %cst_152 = arith.constant dense<0.000000e+00> : vector<16x32xf32>
    %184 = tpu.matmul %181, %183, %cst_152 {dimension_numbers = #tpu.dot_dimension_numbers<[1], [0], [0], [1], [0, 0, 1, 1], [], []>} : vector<16x32xbf16>, vector<32x32xbf16>, vector<16x32xf32> -> vector<16x32xf32>
    %c1_153 = arith.constant 1 : index
    %c0_154 = arith.constant 0 : index
    %185 = vector.load %arg12[%c1_153, %c0_154] : memref<18x32xf32, #tpu.memory_space<vmem>>, vector<16x32xf32>
    %186 = arith.truncf %185 : vector<16x32xf32> to vector<16x32xbf16>
    %c3_155 = arith.constant 3 : index
    %c1_156 = arith.constant 1 : index
    %c0_157 = arith.constant 0 : index
    %c0_158 = arith.constant 0 : index
    %187 = vector.load %arg4[%c3_155, %c1_156, %c0_157, %c0_158] : memref<4x3x32x32xbf16, #tpu.memory_space<vmem>>, vector<1x1x32x32xbf16>
    %188 = vector.shape_cast %187 : vector<1x1x32x32xbf16> to vector<32x32xbf16>
    %cst_159 = arith.constant dense<0.000000e+00> : vector<16x32xf32>
    %189 = tpu.matmul %186, %188, %cst_159 {dimension_numbers = #tpu.dot_dimension_numbers<[1], [0], [0], [1], [0, 0, 1, 1], [], []>} : vector<16x32xbf16>, vector<32x32xbf16>, vector<16x32xf32> -> vector<16x32xf32>
    %190 = arith.addf %184, %189 : vector<16x32xf32>
    %c2_160 = arith.constant 2 : index
    %c0_161 = arith.constant 0 : index
    %191 = vector.load %arg12[%c2_160, %c0_161] : memref<18x32xf32, #tpu.memory_space<vmem>>, vector<16x32xf32>
    %192 = arith.truncf %191 : vector<16x32xf32> to vector<16x32xbf16>
    %c3_162 = arith.constant 3 : index
    %c2_163 = arith.constant 2 : index
    %c0_164 = arith.constant 0 : index
    %c0_165 = arith.constant 0 : index
    %193 = vector.load %arg4[%c3_162, %c2_163, %c0_164, %c0_165] : memref<4x3x32x32xbf16, #tpu.memory_space<vmem>>, vector<1x1x32x32xbf16>
    %194 = vector.shape_cast %193 : vector<1x1x32x32xbf16> to vector<32x32xbf16>
    %cst_166 = arith.constant dense<0.000000e+00> : vector<16x32xf32>
    %195 = tpu.matmul %192, %194, %cst_166 {dimension_numbers = #tpu.dot_dimension_numbers<[1], [0], [0], [1], [0, 0, 1, 1], [], []>} : vector<16x32xbf16>, vector<32x32xbf16>, vector<16x32xf32> -> vector<16x32xf32>
    %196 = arith.addf %190, %195 : vector<16x32xf32>
    %197 = vector.broadcast %179 : vector<1x32xf32> to vector<16x32xf32>
    %198 = arith.addf %196, %197 : vector<16x32xf32>
    %cst_167 = arith.constant dense<0.000000e+00> : vector<16xf32>
    %199 = vector.multi_reduction <add>, %198, %cst_167 [1] : vector<16x32xf32> to vector<16xf32>
    %200 = vector.shape_cast %199 : vector<16xf32> to vector<16x1xf32>
    %cst_168 = arith.constant 3.200000e+01 : f32
    %201 = vector.broadcast %cst_168 : f32 to vector<16x1xf32>
    %202 = arith.divf %200, %201 : vector<16x1xf32>
    %203 = vector.broadcast %202 : vector<16x1xf32> to vector<16x32xf32>
    %204 = arith.subf %198, %203 : vector<16x32xf32>
    %205 = arith.mulf %204, %204 : vector<16x32xf32>
    %cst_169 = arith.constant dense<0.000000e+00> : vector<16xf32>
    %206 = vector.multi_reduction <add>, %205, %cst_169 [1] : vector<16x32xf32> to vector<16xf32>
    %207 = vector.shape_cast %206 : vector<16xf32> to vector<16x1xf32>
    %cst_170 = arith.constant 3.200000e+01 : f32
    %208 = vector.broadcast %cst_170 : f32 to vector<16x1xf32>
    %209 = arith.divf %207, %208 : vector<16x1xf32>
    %cst_171 = arith.constant 9.99999974E-6 : f32
    %210 = vector.broadcast %cst_171 : f32 to vector<16x1xf32>
    %211 = arith.addf %209, %210 : vector<16x1xf32>
    %212 = math.rsqrt %211 : vector<16x1xf32>
    %213 = vector.broadcast %212 : vector<16x1xf32> to vector<16x32xf32>
    %214 = arith.mulf %204, %213 : vector<16x32xf32>
    %c3_172 = arith.constant 3 : index
    %c0_173 = arith.constant 0 : index
    %c0_174 = arith.constant 0 : index
    %215 = vector.load %arg6[%c3_172, %c0_173, %c0_174] : memref<4x1x32xf32, #tpu.memory_space<vmem>>, vector<1x1x32xf32>
    %216 = vector.shape_cast %215 : vector<1x1x32xf32> to vector<1x32xf32>
    %217 = vector.broadcast %216 : vector<1x32xf32> to vector<16x32xf32>
    %218 = arith.mulf %214, %217 : vector<16x32xf32>
    %c3_175 = arith.constant 3 : index
    %c0_176 = arith.constant 0 : index
    %c0_177 = arith.constant 0 : index
    %219 = vector.load %arg7[%c3_175, %c0_176, %c0_177] : memref<4x1x32xf32, #tpu.memory_space<vmem>>, vector<1x1x32xf32>
    %220 = vector.shape_cast %219 : vector<1x1x32xf32> to vector<1x32xf32>
    %221 = vector.broadcast %220 : vector<1x32xf32> to vector<16x32xf32>
    %222 = arith.addf %218, %221 : vector<16x32xf32>
    %223 = arith.addf %174, %222 : vector<16x32xf32>
    %224 = arith.addf %125, %223 : vector<16x32xf32>
    %c1_178 = arith.constant 1 : index
    %c0_179 = arith.constant 0 : index
    %225 = vector.load %arg12[%c1_178, %c0_179] : memref<18x32xf32, #tpu.memory_space<vmem>>, vector<16x32xf32>
    tpu.vector_store %arg12[%c1_178, %c0_179], %224 {strides = array<i32>} : memref<18x32xf32, #tpu.memory_space<vmem>>, vector<16x32xf32>,
    %c0_180 = arith.constant 0 : index
    %c0_181 = arith.constant 0 : index
    %226 = vector.load %arg9[%c0_180, %c0_181] : memref<1x4xf32, #tpu.memory_space<vmem>>, vector<1x4xf32>
    %c0_182 = arith.constant 0 : index
    %c0_183 = arith.constant 0 : index
    %227 = vector.load %arg12[%c0_182, %c0_183] : memref<18x32xf32, #tpu.memory_space<vmem>>, vector<16x32xf32>
    %228 = arith.truncf %227 : vector<16x32xf32> to vector<16x32xbf16>
    %c0_184 = arith.constant 0 : index
    %c0_185 = arith.constant 0 : index
    %c0_186 = arith.constant 0 : index
    %229 = vector.load %arg8[%c0_184, %c0_185, %c0_186] : memref<3x32x4xbf16, #tpu.memory_space<vmem>>, vector<1x32x4xbf16>
    %230 = vector.shape_cast %229 : vector<1x32x4xbf16> to vector<32x4xbf16>
    %cst_187 = arith.constant dense<0.000000e+00> : vector<16x4xf32>
    %231 = tpu.matmul %228, %230, %cst_187 {dimension_numbers = #tpu.dot_dimension_numbers<[1], [0], [0], [1], [0, 0, 1, 1], [], []>} : vector<16x32xbf16>, vector<32x4xbf16>, vector<16x4xf32> -> vector<16x4xf32>
    %c1_188 = arith.constant 1 : index
    %c0_189 = arith.constant 0 : index
    %232 = vector.load %arg12[%c1_188, %c0_189] : memref<18x32xf32, #tpu.memory_space<vmem>>, vector<16x32xf32>
    %233 = arith.truncf %232 : vector<16x32xf32> to vector<16x32xbf16>
    %c1_190 = arith.constant 1 : index
    %c0_191 = arith.constant 0 : index
    %c0_192 = arith.constant 0 : index
    %234 = vector.load %arg8[%c1_190, %c0_191, %c0_192] : memref<3x32x4xbf16, #tpu.memory_space<vmem>>, vector<1x32x4xbf16>
    %235 = vector.shape_cast %234 : vector<1x32x4xbf16> to vector<32x4xbf16>
    %cst_193 = arith.constant dense<0.000000e+00> : vector<16x4xf32>
    %236 = tpu.matmul %233, %235, %cst_193 {dimension_numbers = #tpu.dot_dimension_numbers<[1], [0], [0], [1], [0, 0, 1, 1], [], []>} : vector<16x32xbf16>, vector<32x4xbf16>, vector<16x4xf32> -> vector<16x4xf32>
    %237 = arith.addf %231, %236 : vector<16x4xf32>
    %c2_194 = arith.constant 2 : index
    %c0_195 = arith.constant 0 : index
    %238 = vector.load %arg12[%c2_194, %c0_195] : memref<18x32xf32, #tpu.memory_space<vmem>>, vector<16x32xf32>
    %239 = arith.truncf %238 : vector<16x32xf32> to vector<16x32xbf16>
    %c2_196 = arith.constant 2 : index
    %c0_197 = arith.constant 0 : index
    %c0_198 = arith.constant 0 : index
    %240 = vector.load %arg8[%c2_196, %c0_197, %c0_198] : memref<3x32x4xbf16, #tpu.memory_space<vmem>>, vector<1x32x4xbf16>
    %241 = vector.shape_cast %240 : vector<1x32x4xbf16> to vector<32x4xbf16>
    %cst_199 = arith.constant dense<0.000000e+00> : vector<16x4xf32>
    %242 = tpu.matmul %239, %241, %cst_199 {dimension_numbers = #tpu.dot_dimension_numbers<[1], [0], [0], [1], [0, 0, 1, 1], [], []>} : vector<16x32xbf16>, vector<32x4xbf16>, vector<16x4xf32> -> vector<16x4xf32>
    %243 = arith.addf %237, %242 : vector<16x4xf32>
    %244 = vector.broadcast %226 : vector<1x4xf32> to vector<16x4xf32>
    %245 = arith.addf %243, %244 : vector<16x4xf32>
    %246 = tpu.transpose %245, [1, 0] : vector<16x4xf32> -> vector<4x16xf32>
    %c0_200 = arith.constant 0 : index
    %c0_201 = arith.constant 0 : index
    %c0_202 = arith.constant 0 : index
    %247 = vector.load %arg10[%c0_200, %c0_201, %c0_202] : memref<2x4x16xf32, #tpu.memory_space<vmem>>, vector<1x4x16xf32>
    %248 = vector.shape_cast %247 : vector<1x4x16xf32> to vector<4x16xf32>
    %249 = vector.shape_cast %246 : vector<4x16xf32> to vector<1x4x16xf32>
    tpu.vector_store %arg10[%c0_200, %c0_201, %c0_202], %249 {strides = array<i32>} : memref<2x4x16xf32, #tpu.memory_space<vmem>>, vector<1x4x16xf32>,
    %c1_203 = arith.constant 1 : index
    %c0_204 = arith.constant 0 : index
    %c0_205 = arith.constant 0 : index
    %250 = vector.load %arg1[%c1_203, %c0_204, %c0_205] : memref<2x4x16xf32, #tpu.memory_space<vmem>>, vector<1x4x16xf32>
    %251 = vector.shape_cast %250 : vector<1x4x16xf32> to vector<4x16xf32>
    %252 = tpu.transpose %251, [1, 0] : vector<4x16xf32> -> vector<16x4xf32>
    %c1_206 = arith.constant 1 : index
    %c0_207 = arith.constant 0 : index
    %253 = vector.load %arg11[%c1_206, %c0_207] : memref<18x4xf32, #tpu.memory_space<vmem>>, vector<16x4xf32>
    tpu.vector_store %arg11[%c1_206, %c0_207], %252 {strides = array<i32>} : memref<18x4xf32, #tpu.memory_space<vmem>>, vector<16x4xf32>,
    %c0_208 = arith.constant 0 : index
    %c0_209 = arith.constant 0 : index
    %254 = vector.load %arg3[%c0_208, %c0_209] : memref<1x32xf32, #tpu.memory_space<vmem>>, vector<1x32xf32>
    %c0_210 = arith.constant 0 : index
    %c0_211 = arith.constant 0 : index
    %255 = vector.load %arg11[%c0_210, %c0_211] : memref<18x4xf32, #tpu.memory_space<vmem>>, vector<16x4xf32>
    %256 = arith.truncf %255 : vector<16x4xf32> to vector<16x4xbf16>
    %c0_212 = arith.constant 0 : index
    %c0_213 = arith.constant 0 : index
    %c0_214 = arith.constant 0 : index
    %257 = vector.load %arg2[%c0_212, %c0_213, %c0_214] : memref<3x4x32xbf16, #tpu.memory_space<vmem>>, vector<1x4x32xbf16>
    %258 = vector.shape_cast %257 : vector<1x4x32xbf16> to vector<4x32xbf16>
    %cst_215 = arith.constant dense<0.000000e+00> : vector<16x32xf32>
    %259 = tpu.matmul %256, %258, %cst_215 {dimension_numbers = #tpu.dot_dimension_numbers<[1], [0], [0], [1], [0, 0, 1, 1], [], []>} : vector<16x4xbf16>, vector<4x32xbf16>, vector<16x32xf32> -> vector<16x32xf32>
    %c1_216 = arith.constant 1 : index
    %c0_217 = arith.constant 0 : index
    %260 = vector.load %arg11[%c1_216, %c0_217] : memref<18x4xf32, #tpu.memory_space<vmem>>, vector<16x4xf32>
    %261 = arith.truncf %260 : vector<16x4xf32> to vector<16x4xbf16>
    %c1_218 = arith.constant 1 : index
    %c0_219 = arith.constant 0 : index
    %c0_220 = arith.constant 0 : index
    %262 = vector.load %arg2[%c1_218, %c0_219, %c0_220] : memref<3x4x32xbf16, #tpu.memory_space<vmem>>, vector<1x4x32xbf16>
    %263 = vector.shape_cast %262 : vector<1x4x32xbf16> to vector<4x32xbf16>
    %cst_221 = arith.constant dense<0.000000e+00> : vector<16x32xf32>
    %264 = tpu.matmul %261, %263, %cst_221 {dimension_numbers = #tpu.dot_dimension_numbers<[1], [0], [0], [1], [0, 0, 1, 1], [], []>} : vector<16x4xbf16>, vector<4x32xbf16>, vector<16x32xf32> -> vector<16x32xf32>
    %265 = arith.addf %259, %264 : vector<16x32xf32>
    %c2_222 = arith.constant 2 : index
    %c0_223 = arith.constant 0 : index
    %266 = vector.load %arg11[%c2_222, %c0_223] : memref<18x4xf32, #tpu.memory_space<vmem>>, vector<16x4xf32>
    %267 = arith.truncf %266 : vector<16x4xf32> to vector<16x4xbf16>
    %c2_224 = arith.constant 2 : index
    %c0_225 = arith.constant 0 : index
    %c0_226 = arith.constant 0 : index
    %268 = vector.load %arg2[%c2_224, %c0_225, %c0_226] : memref<3x4x32xbf16, #tpu.memory_space<vmem>>, vector<1x4x32xbf16>
    %269 = vector.shape_cast %268 : vector<1x4x32xbf16> to vector<4x32xbf16>
    %cst_227 = arith.constant dense<0.000000e+00> : vector<16x32xf32>
    %270 = tpu.matmul %267, %269, %cst_227 {dimension_numbers = #tpu.dot_dimension_numbers<[1], [0], [0], [1], [0, 0, 1, 1], [], []>} : vector<16x4xbf16>, vector<4x32xbf16>, vector<16x32xf32> -> vector<16x32xf32>
    %271 = arith.addf %265, %270 : vector<16x32xf32>
    %272 = vector.broadcast %254 : vector<1x32xf32> to vector<16x32xf32>
    %273 = arith.addf %271, %272 : vector<16x32xf32>
    %cst_228 = arith.constant 0.000000e+00 : f32
    %274 = vector.broadcast %cst_228 : f32 to vector<16x32xf32>
    %275 = arith.maximumf %273, %274 : vector<16x32xf32>
    %c1_229 = arith.constant 1 : index
    %c0_230 = arith.constant 0 : index
    %276 = vector.load %arg12[%c1_229, %c0_230] : memref<18x32xf32, #tpu.memory_space<vmem>>, vector<16x32xf32>
    tpu.vector_store %arg12[%c1_229, %c0_230], %275 {strides = array<i32>} : memref<18x32xf32, #tpu.memory_space<vmem>>, vector<16x32xf32>,
    %c0_231 = arith.constant 0 : index
    %c0_232 = arith.constant 0 : index
    %c0_233 = arith.constant 0 : index
    %277 = vector.load %arg5[%c0_231, %c0_232, %c0_233] : memref<4x1x32xf32, #tpu.memory_space<vmem>>, vector<1x1x32xf32>
    %278 = vector.shape_cast %277 : vector<1x1x32xf32> to vector<1x32xf32>
    %c0_234 = arith.constant 0 : index
    %c0_235 = arith.constant 0 : index
    %279 = vector.load %arg12[%c0_234, %c0_235] : memref<18x32xf32, #tpu.memory_space<vmem>>, vector<16x32xf32>
    %280 = arith.truncf %279 : vector<16x32xf32> to vector<16x32xbf16>
    %c0_236 = arith.constant 0 : index
    %c0_237 = arith.constant 0 : index
    %c0_238 = arith.constant 0 : index
    %c0_239 = arith.constant 0 : index
    %281 = vector.load %arg4[%c0_236, %c0_237, %c0_238, %c0_239] : memref<4x3x32x32xbf16, #tpu.memory_space<vmem>>, vector<1x1x32x32xbf16>
    %282 = vector.shape_cast %281 : vector<1x1x32x32xbf16> to vector<32x32xbf16>
    %cst_240 = arith.constant dense<0.000000e+00> : vector<16x32xf32>
    %283 = tpu.matmul %280, %282, %cst_240 {dimension_numbers = #tpu.dot_dimension_numbers<[1], [0], [0], [1], [0, 0, 1, 1], [], []>} : vector<16x32xbf16>, vector<32x32xbf16>, vector<16x32xf32> -> vector<16x32xf32>
    %c1_241 = arith.constant 1 : index
    %c0_242 = arith.constant 0 : index
    %284 = vector.load %arg12[%c1_241, %c0_242] : memref<18x32xf32, #tpu.memory_space<vmem>>, vector<16x32xf32>
    %285 = arith.truncf %284 : vector<16x32xf32> to vector<16x32xbf16>
    %c0_243 = arith.constant 0 : index
    %c1_244 = arith.constant 1 : index
    %c0_245 = arith.constant 0 : index
    %c0_246 = arith.constant 0 : index
    %286 = vector.load %arg4[%c0_243, %c1_244, %c0_245, %c0_246] : memref<4x3x32x32xbf16, #tpu.memory_space<vmem>>, vector<1x1x32x32xbf16>
    %287 = vector.shape_cast %286 : vector<1x1x32x32xbf16> to vector<32x32xbf16>
    %cst_247 = arith.constant dense<0.000000e+00> : vector<16x32xf32>
    %288 = tpu.matmul %285, %287, %cst_247 {dimension_numbers = #tpu.dot_dimension_numbers<[1], [0], [0], [1], [0, 0, 1, 1], [], []>} : vector<16x32xbf16>, vector<32x32xbf16>, vector<16x32xf32> -> vector<16x32xf32>
    %289 = arith.addf %283, %288 : vector<16x32xf32>
    %c2_248 = arith.constant 2 : index
    %c0_249 = arith.constant 0 : index
    %290 = vector.load %arg12[%c2_248, %c0_249] : memref<18x32xf32, #tpu.memory_space<vmem>>, vector<16x32xf32>
    %291 = arith.truncf %290 : vector<16x32xf32> to vector<16x32xbf16>
    %c0_250 = arith.constant 0 : index
    %c2_251 = arith.constant 2 : index
    %c0_252 = arith.constant 0 : index
    %c0_253 = arith.constant 0 : index
    %292 = vector.load %arg4[%c0_250, %c2_251, %c0_252, %c0_253] : memref<4x3x32x32xbf16, #tpu.memory_space<vmem>>, vector<1x1x32x32xbf16>
    %293 = vector.shape_cast %292 : vector<1x1x32x32xbf16> to vector<32x32xbf16>
    %cst_254 = arith.constant dense<0.000000e+00> : vector<16x32xf32>
    %294 = tpu.matmul %291, %293, %cst_254 {dimension_numbers = #tpu.dot_dimension_numbers<[1], [0], [0], [1], [0, 0, 1, 1], [], []>} : vector<16x32xbf16>, vector<32x32xbf16>, vector<16x32xf32> -> vector<16x32xf32>
    %295 = arith.addf %289, %294 : vector<16x32xf32>
    %296 = vector.broadcast %278 : vector<1x32xf32> to vector<16x32xf32>
    %297 = arith.addf %295, %296 : vector<16x32xf32>
    %cst_255 = arith.constant dense<0.000000e+00> : vector<16xf32>
    %298 = vector.multi_reduction <add>, %297, %cst_255 [1] : vector<16x32xf32> to vector<16xf32>
    %299 = vector.shape_cast %298 : vector<16xf32> to vector<16x1xf32>
    %cst_256 = arith.constant 3.200000e+01 : f32
    %300 = vector.broadcast %cst_256 : f32 to vector<16x1xf32>
    %301 = arith.divf %299, %300 : vector<16x1xf32>
    %302 = vector.broadcast %301 : vector<16x1xf32> to vector<16x32xf32>
    %303 = arith.subf %297, %302 : vector<16x32xf32>
    %304 = arith.mulf %303, %303 : vector<16x32xf32>
    %cst_257 = arith.constant dense<0.000000e+00> : vector<16xf32>
    %305 = vector.multi_reduction <add>, %304, %cst_257 [1] : vector<16x32xf32> to vector<16xf32>
    %306 = vector.shape_cast %305 : vector<16xf32> to vector<16x1xf32>
    %cst_258 = arith.constant 3.200000e+01 : f32
    %307 = vector.broadcast %cst_258 : f32 to vector<16x1xf32>
    %308 = arith.divf %306, %307 : vector<16x1xf32>
    %cst_259 = arith.constant 9.99999974E-6 : f32
    %309 = vector.broadcast %cst_259 : f32 to vector<16x1xf32>
    %310 = arith.addf %308, %309 : vector<16x1xf32>
    %311 = math.rsqrt %310 : vector<16x1xf32>
    %312 = vector.broadcast %311 : vector<16x1xf32> to vector<16x32xf32>
    %313 = arith.mulf %303, %312 : vector<16x32xf32>
    %c0_260 = arith.constant 0 : index
    %c0_261 = arith.constant 0 : index
    %c0_262 = arith.constant 0 : index
    %314 = vector.load %arg6[%c0_260, %c0_261, %c0_262] : memref<4x1x32xf32, #tpu.memory_space<vmem>>, vector<1x1x32xf32>
    %315 = vector.shape_cast %314 : vector<1x1x32xf32> to vector<1x32xf32>
    %316 = vector.broadcast %315 : vector<1x32xf32> to vector<16x32xf32>
    %317 = arith.mulf %313, %316 : vector<16x32xf32>
    %c0_263 = arith.constant 0 : index
    %c0_264 = arith.constant 0 : index
    %c0_265 = arith.constant 0 : index
    %318 = vector.load %arg7[%c0_263, %c0_264, %c0_265] : memref<4x1x32xf32, #tpu.memory_space<vmem>>, vector<1x1x32xf32>
    %319 = vector.shape_cast %318 : vector<1x1x32xf32> to vector<1x32xf32>
    %320 = vector.broadcast %319 : vector<1x32xf32> to vector<16x32xf32>
    %321 = arith.addf %317, %320 : vector<16x32xf32>
    %322 = arith.addf %273, %321 : vector<16x32xf32>
    %cst_266 = arith.constant 0.000000e+00 : f32
    %323 = vector.broadcast %cst_266 : f32 to vector<16x32xf32>
    %324 = arith.maximumf %322, %323 : vector<16x32xf32>
    %c1_267 = arith.constant 1 : index
    %c0_268 = arith.constant 0 : index
    %325 = vector.load %arg12[%c1_267, %c0_268] : memref<18x32xf32, #tpu.memory_space<vmem>>, vector<16x32xf32>
    tpu.vector_store %arg12[%c1_267, %c0_268], %324 {strides = array<i32>} : memref<18x32xf32, #tpu.memory_space<vmem>>, vector<16x32xf32>,
    %c1_269 = arith.constant 1 : index
    %c0_270 = arith.constant 0 : index
    %c0_271 = arith.constant 0 : index
    %326 = vector.load %arg5[%c1_269, %c0_270, %c0_271] : memref<4x1x32xf32, #tpu.memory_space<vmem>>, vector<1x1x32xf32>
    %327 = vector.shape_cast %326 : vector<1x1x32xf32> to vector<1x32xf32>
    %c0_272 = arith.constant 0 : index
    %c0_273 = arith.constant 0 : index
    %328 = vector.load %arg12[%c0_272, %c0_273] : memref<18x32xf32, #tpu.memory_space<vmem>>, vector<16x32xf32>
    %329 = arith.truncf %328 : vector<16x32xf32> to vector<16x32xbf16>
    %c1_274 = arith.constant 1 : index
    %c0_275 = arith.constant 0 : index
    %c0_276 = arith.constant 0 : index
    %c0_277 = arith.constant 0 : index
    %330 = vector.load %arg4[%c1_274, %c0_275, %c0_276, %c0_277] : memref<4x3x32x32xbf16, #tpu.memory_space<vmem>>, vector<1x1x32x32xbf16>
    %331 = vector.shape_cast %330 : vector<1x1x32x32xbf16> to vector<32x32xbf16>
    %cst_278 = arith.constant dense<0.000000e+00> : vector<16x32xf32>
    %332 = tpu.matmul %329, %331, %cst_278 {dimension_numbers = #tpu.dot_dimension_numbers<[1], [0], [0], [1], [0, 0, 1, 1], [], []>} : vector<16x32xbf16>, vector<32x32xbf16>, vector<16x32xf32> -> vector<16x32xf32>
    %c1_279 = arith.constant 1 : index
    %c0_280 = arith.constant 0 : index
    %333 = vector.load %arg12[%c1_279, %c0_280] : memref<18x32xf32, #tpu.memory_space<vmem>>, vector<16x32xf32>
    %334 = arith.truncf %333 : vector<16x32xf32> to vector<16x32xbf16>
    %c1_281 = arith.constant 1 : index
    %c1_282 = arith.constant 1 : index
    %c0_283 = arith.constant 0 : index
    %c0_284 = arith.constant 0 : index
    %335 = vector.load %arg4[%c1_281, %c1_282, %c0_283, %c0_284] : memref<4x3x32x32xbf16, #tpu.memory_space<vmem>>, vector<1x1x32x32xbf16>
    %336 = vector.shape_cast %335 : vector<1x1x32x32xbf16> to vector<32x32xbf16>
    %cst_285 = arith.constant dense<0.000000e+00> : vector<16x32xf32>
    %337 = tpu.matmul %334, %336, %cst_285 {dimension_numbers = #tpu.dot_dimension_numbers<[1], [0], [0], [1], [0, 0, 1, 1], [], []>} : vector<16x32xbf16>, vector<32x32xbf16>, vector<16x32xf32> -> vector<16x32xf32>
    %338 = arith.addf %332, %337 : vector<16x32xf32>
    %c2_286 = arith.constant 2 : index
    %c0_287 = arith.constant 0 : index
    %339 = vector.load %arg12[%c2_286, %c0_287] : memref<18x32xf32, #tpu.memory_space<vmem>>, vector<16x32xf32>
    %340 = arith.truncf %339 : vector<16x32xf32> to vector<16x32xbf16>
    %c1_288 = arith.constant 1 : index
    %c2_289 = arith.constant 2 : index
    %c0_290 = arith.constant 0 : index
    %c0_291 = arith.constant 0 : index
    %341 = vector.load %arg4[%c1_288, %c2_289, %c0_290, %c0_291] : memref<4x3x32x32xbf16, #tpu.memory_space<vmem>>, vector<1x1x32x32xbf16>
    %342 = vector.shape_cast %341 : vector<1x1x32x32xbf16> to vector<32x32xbf16>
    %cst_292 = arith.constant dense<0.000000e+00> : vector<16x32xf32>
    %343 = tpu.matmul %340, %342, %cst_292 {dimension_numbers = #tpu.dot_dimension_numbers<[1], [0], [0], [1], [0, 0, 1, 1], [], []>} : vector<16x32xbf16>, vector<32x32xbf16>, vector<16x32xf32> -> vector<16x32xf32>
    %344 = arith.addf %338, %343 : vector<16x32xf32>
    %345 = vector.broadcast %327 : vector<1x32xf32> to vector<16x32xf32>
    %346 = arith.addf %344, %345 : vector<16x32xf32>
    %cst_293 = arith.constant dense<0.000000e+00> : vector<16xf32>
    %347 = vector.multi_reduction <add>, %346, %cst_293 [1] : vector<16x32xf32> to vector<16xf32>
    %348 = vector.shape_cast %347 : vector<16xf32> to vector<16x1xf32>
    %cst_294 = arith.constant 3.200000e+01 : f32
    %349 = vector.broadcast %cst_294 : f32 to vector<16x1xf32>
    %350 = arith.divf %348, %349 : vector<16x1xf32>
    %351 = vector.broadcast %350 : vector<16x1xf32> to vector<16x32xf32>
    %352 = arith.subf %346, %351 : vector<16x32xf32>
    %353 = arith.mulf %352, %352 : vector<16x32xf32>
    %cst_295 = arith.constant dense<0.000000e+00> : vector<16xf32>
    %354 = vector.multi_reduction <add>, %353, %cst_295 [1] : vector<16x32xf32> to vector<16xf32>
    %355 = vector.shape_cast %354 : vector<16xf32> to vector<16x1xf32>
    %cst_296 = arith.constant 3.200000e+01 : f32
    %356 = vector.broadcast %cst_296 : f32 to vector<16x1xf32>
    %357 = arith.divf %355, %356 : vector<16x1xf32>
    %cst_297 = arith.constant 9.99999974E-6 : f32
    %358 = vector.broadcast %cst_297 : f32 to vector<16x1xf32>
    %359 = arith.addf %357, %358 : vector<16x1xf32>
    %360 = math.rsqrt %359 : vector<16x1xf32>
    %361 = vector.broadcast %360 : vector<16x1xf32> to vector<16x32xf32>
    %362 = arith.mulf %352, %361 : vector<16x32xf32>
    %c1_298 = arith.constant 1 : index
    %c0_299 = arith.constant 0 : index
    %c0_300 = arith.constant 0 : index
    %363 = vector.load %arg6[%c1_298, %c0_299, %c0_300] : memref<4x1x32xf32, #tpu.memory_space<vmem>>, vector<1x1x32xf32>
    %364 = vector.shape_cast %363 : vector<1x1x32xf32> to vector<1x32xf32>
    %365 = vector.broadcast %364 : vector<1x32xf32> to vector<16x32xf32>
    %366 = arith.mulf %362, %365 : vector<16x32xf32>
    %c1_301 = arith.constant 1 : index
    %c0_302 = arith.constant 0 : index
    %c0_303 = arith.constant 0 : index
    %367 = vector.load %arg7[%c1_301, %c0_302, %c0_303] : memref<4x1x32xf32, #tpu.memory_space<vmem>>, vector<1x1x32xf32>
    %368 = vector.shape_cast %367 : vector<1x1x32xf32> to vector<1x32xf32>
    %369 = vector.broadcast %368 : vector<1x32xf32> to vector<16x32xf32>
    %370 = arith.addf %366, %369 : vector<16x32xf32>
    %371 = arith.addf %322, %370 : vector<16x32xf32>
    %cst_304 = arith.constant 0.000000e+00 : f32
    %372 = vector.broadcast %cst_304 : f32 to vector<16x32xf32>
    %373 = arith.maximumf %273, %372 : vector<16x32xf32>
    %c1_305 = arith.constant 1 : index
    %c0_306 = arith.constant 0 : index
    %374 = vector.load %arg12[%c1_305, %c0_306] : memref<18x32xf32, #tpu.memory_space<vmem>>, vector<16x32xf32>
    tpu.vector_store %arg12[%c1_305, %c0_306], %373 {strides = array<i32>} : memref<18x32xf32, #tpu.memory_space<vmem>>, vector<16x32xf32>,
    %c2_307 = arith.constant 2 : index
    %c0_308 = arith.constant 0 : index
    %c0_309 = arith.constant 0 : index
    %375 = vector.load %arg5[%c2_307, %c0_308, %c0_309] : memref<4x1x32xf32, #tpu.memory_space<vmem>>, vector<1x1x32xf32>
    %376 = vector.shape_cast %375 : vector<1x1x32xf32> to vector<1x32xf32>
    %c0_310 = arith.constant 0 : index
    %c0_311 = arith.constant 0 : index
    %377 = vector.load %arg12[%c0_310, %c0_311] : memref<18x32xf32, #tpu.memory_space<vmem>>, vector<16x32xf32>
    %378 = arith.truncf %377 : vector<16x32xf32> to vector<16x32xbf16>
    %c2_312 = arith.constant 2 : index
    %c0_313 = arith.constant 0 : index
    %c0_314 = arith.constant 0 : index
    %c0_315 = arith.constant 0 : index
    %379 = vector.load %arg4[%c2_312, %c0_313, %c0_314, %c0_315] : memref<4x3x32x32xbf16, #tpu.memory_space<vmem>>, vector<1x1x32x32xbf16>
    %380 = vector.shape_cast %379 : vector<1x1x32x32xbf16> to vector<32x32xbf16>
    %cst_316 = arith.constant dense<0.000000e+00> : vector<16x32xf32>
    %381 = tpu.matmul %378, %380, %cst_316 {dimension_numbers = #tpu.dot_dimension_numbers<[1], [0], [0], [1], [0, 0, 1, 1], [], []>} : vector<16x32xbf16>, vector<32x32xbf16>, vector<16x32xf32> -> vector<16x32xf32>
    %c1_317 = arith.constant 1 : index
    %c0_318 = arith.constant 0 : index
    %382 = vector.load %arg12[%c1_317, %c0_318] : memref<18x32xf32, #tpu.memory_space<vmem>>, vector<16x32xf32>
    %383 = arith.truncf %382 : vector<16x32xf32> to vector<16x32xbf16>
    %c2_319 = arith.constant 2 : index
    %c1_320 = arith.constant 1 : index
    %c0_321 = arith.constant 0 : index
    %c0_322 = arith.constant 0 : index
    %384 = vector.load %arg4[%c2_319, %c1_320, %c0_321, %c0_322] : memref<4x3x32x32xbf16, #tpu.memory_space<vmem>>, vector<1x1x32x32xbf16>
    %385 = vector.shape_cast %384 : vector<1x1x32x32xbf16> to vector<32x32xbf16>
    %cst_323 = arith.constant dense<0.000000e+00> : vector<16x32xf32>
    %386 = tpu.matmul %383, %385, %cst_323 {dimension_numbers = #tpu.dot_dimension_numbers<[1], [0], [0], [1], [0, 0, 1, 1], [], []>} : vector<16x32xbf16>, vector<32x32xbf16>, vector<16x32xf32> -> vector<16x32xf32>
    %387 = arith.addf %381, %386 : vector<16x32xf32>
    %c2_324 = arith.constant 2 : index
    %c0_325 = arith.constant 0 : index
    %388 = vector.load %arg12[%c2_324, %c0_325] : memref<18x32xf32, #tpu.memory_space<vmem>>, vector<16x32xf32>
    %389 = arith.truncf %388 : vector<16x32xf32> to vector<16x32xbf16>
    %c2_326 = arith.constant 2 : index
    %c2_327 = arith.constant 2 : index
    %c0_328 = arith.constant 0 : index
    %c0_329 = arith.constant 0 : index
    %390 = vector.load %arg4[%c2_326, %c2_327, %c0_328, %c0_329] : memref<4x3x32x32xbf16, #tpu.memory_space<vmem>>, vector<1x1x32x32xbf16>
    %391 = vector.shape_cast %390 : vector<1x1x32x32xbf16> to vector<32x32xbf16>
    %cst_330 = arith.constant dense<0.000000e+00> : vector<16x32xf32>
    %392 = tpu.matmul %389, %391, %cst_330 {dimension_numbers = #tpu.dot_dimension_numbers<[1], [0], [0], [1], [0, 0, 1, 1], [], []>} : vector<16x32xbf16>, vector<32x32xbf16>, vector<16x32xf32> -> vector<16x32xf32>
    %393 = arith.addf %387, %392 : vector<16x32xf32>
    %394 = vector.broadcast %376 : vector<1x32xf32> to vector<16x32xf32>
    %395 = arith.addf %393, %394 : vector<16x32xf32>
    %cst_331 = arith.constant dense<0.000000e+00> : vector<16xf32>
    %396 = vector.multi_reduction <add>, %395, %cst_331 [1] : vector<16x32xf32> to vector<16xf32>
    %397 = vector.shape_cast %396 : vector<16xf32> to vector<16x1xf32>
    %cst_332 = arith.constant 3.200000e+01 : f32
    %398 = vector.broadcast %cst_332 : f32 to vector<16x1xf32>
    %399 = arith.divf %397, %398 : vector<16x1xf32>
    %400 = vector.broadcast %399 : vector<16x1xf32> to vector<16x32xf32>
    %401 = arith.subf %395, %400 : vector<16x32xf32>
    %402 = arith.mulf %401, %401 : vector<16x32xf32>
    %cst_333 = arith.constant dense<0.000000e+00> : vector<16xf32>
    %403 = vector.multi_reduction <add>, %402, %cst_333 [1] : vector<16x32xf32> to vector<16xf32>
    %404 = vector.shape_cast %403 : vector<16xf32> to vector<16x1xf32>
    %cst_334 = arith.constant 3.200000e+01 : f32
    %405 = vector.broadcast %cst_334 : f32 to vector<16x1xf32>
    %406 = arith.divf %404, %405 : vector<16x1xf32>
    %cst_335 = arith.constant 9.99999974E-6 : f32
    %407 = vector.broadcast %cst_335 : f32 to vector<16x1xf32>
    %408 = arith.addf %406, %407 : vector<16x1xf32>
    %409 = math.rsqrt %408 : vector<16x1xf32>
    %410 = vector.broadcast %409 : vector<16x1xf32> to vector<16x32xf32>
    %411 = arith.mulf %401, %410 : vector<16x32xf32>
    %c2_336 = arith.constant 2 : index
    %c0_337 = arith.constant 0 : index
    %c0_338 = arith.constant 0 : index
    %412 = vector.load %arg6[%c2_336, %c0_337, %c0_338] : memref<4x1x32xf32, #tpu.memory_space<vmem>>, vector<1x1x32xf32>
    %413 = vector.shape_cast %412 : vector<1x1x32xf32> to vector<1x32xf32>
    %414 = vector.broadcast %413 : vector<1x32xf32> to vector<16x32xf32>
    %415 = arith.mulf %411, %414 : vector<16x32xf32>
    %c2_339 = arith.constant 2 : index
    %c0_340 = arith.constant 0 : index
    %c0_341 = arith.constant 0 : index
    %416 = vector.load %arg7[%c2_339, %c0_340, %c0_341] : memref<4x1x32xf32, #tpu.memory_space<vmem>>, vector<1x1x32xf32>
    %417 = vector.shape_cast %416 : vector<1x1x32xf32> to vector<1x32xf32>
    %418 = vector.broadcast %417 : vector<1x32xf32> to vector<16x32xf32>
    %419 = arith.addf %415, %418 : vector<16x32xf32>
    %420 = arith.addf %273, %419 : vector<16x32xf32>
    %cst_342 = arith.constant 0.000000e+00 : f32
    %421 = vector.broadcast %cst_342 : f32 to vector<16x32xf32>
    %422 = arith.maximumf %420, %421 : vector<16x32xf32>
    %c1_343 = arith.constant 1 : index
    %c0_344 = arith.constant 0 : index
    %423 = vector.load %arg12[%c1_343, %c0_344] : memref<18x32xf32, #tpu.memory_space<vmem>>, vector<16x32xf32>
    tpu.vector_store %arg12[%c1_343, %c0_344], %422 {strides = array<i32>} : memref<18x32xf32, #tpu.memory_space<vmem>>, vector<16x32xf32>,
    %c3_345 = arith.constant 3 : index
    %c0_346 = arith.constant 0 : index
    %c0_347 = arith.constant 0 : index
    %424 = vector.load %arg5[%c3_345, %c0_346, %c0_347] : memref<4x1x32xf32, #tpu.memory_space<vmem>>, vector<1x1x32xf32>
    %425 = vector.shape_cast %424 : vector<1x1x32xf32> to vector<1x32xf32>
    %c0_348 = arith.constant 0 : index
    %c0_349 = arith.constant 0 : index
    %426 = vector.load %arg12[%c0_348, %c0_349] : memref<18x32xf32, #tpu.memory_space<vmem>>, vector<16x32xf32>
    %427 = arith.truncf %426 : vector<16x32xf32> to vector<16x32xbf16>
    %c3_350 = arith.constant 3 : index
    %c0_351 = arith.constant 0 : index
    %c0_352 = arith.constant 0 : index
    %c0_353 = arith.constant 0 : index
    %428 = vector.load %arg4[%c3_350, %c0_351, %c0_352, %c0_353] : memref<4x3x32x32xbf16, #tpu.memory_space<vmem>>, vector<1x1x32x32xbf16>
    %429 = vector.shape_cast %428 : vector<1x1x32x32xbf16> to vector<32x32xbf16>
    %cst_354 = arith.constant dense<0.000000e+00> : vector<16x32xf32>
    %430 = tpu.matmul %427, %429, %cst_354 {dimension_numbers = #tpu.dot_dimension_numbers<[1], [0], [0], [1], [0, 0, 1, 1], [], []>} : vector<16x32xbf16>, vector<32x32xbf16>, vector<16x32xf32> -> vector<16x32xf32>
    %c1_355 = arith.constant 1 : index
    %c0_356 = arith.constant 0 : index
    %431 = vector.load %arg12[%c1_355, %c0_356] : memref<18x32xf32, #tpu.memory_space<vmem>>, vector<16x32xf32>
    %432 = arith.truncf %431 : vector<16x32xf32> to vector<16x32xbf16>
    %c3_357 = arith.constant 3 : index
    %c1_358 = arith.constant 1 : index
    %c0_359 = arith.constant 0 : index
    %c0_360 = arith.constant 0 : index
    %433 = vector.load %arg4[%c3_357, %c1_358, %c0_359, %c0_360] : memref<4x3x32x32xbf16, #tpu.memory_space<vmem>>, vector<1x1x32x32xbf16>
    %434 = vector.shape_cast %433 : vector<1x1x32x32xbf16> to vector<32x32xbf16>
    %cst_361 = arith.constant dense<0.000000e+00> : vector<16x32xf32>
    %435 = tpu.matmul %432, %434, %cst_361 {dimension_numbers = #tpu.dot_dimension_numbers<[1], [0], [0], [1], [0, 0, 1, 1], [], []>} : vector<16x32xbf16>, vector<32x32xbf16>, vector<16x32xf32> -> vector<16x32xf32>
    %436 = arith.addf %430, %435 : vector<16x32xf32>
    %c2_362 = arith.constant 2 : index
    %c0_363 = arith.constant 0 : index
    %437 = vector.load %arg12[%c2_362, %c0_363] : memref<18x32xf32, #tpu.memory_space<vmem>>, vector<16x32xf32>
    %438 = arith.truncf %437 : vector<16x32xf32> to vector<16x32xbf16>
    %c3_364 = arith.constant 3 : index
    %c2_365 = arith.constant 2 : index
    %c0_366 = arith.constant 0 : index
    %c0_367 = arith.constant 0 : index
    %439 = vector.load %arg4[%c3_364, %c2_365, %c0_366, %c0_367] : memref<4x3x32x32xbf16, #tpu.memory_space<vmem>>, vector<1x1x32x32xbf16>
    %440 = vector.shape_cast %439 : vector<1x1x32x32xbf16> to vector<32x32xbf16>
    %cst_368 = arith.constant dense<0.000000e+00> : vector<16x32xf32>
    %441 = tpu.matmul %438, %440, %cst_368 {dimension_numbers = #tpu.dot_dimension_numbers<[1], [0], [0], [1], [0, 0, 1, 1], [], []>} : vector<16x32xbf16>, vector<32x32xbf16>, vector<16x32xf32> -> vector<16x32xf32>
    %442 = arith.addf %436, %441 : vector<16x32xf32>
    %443 = vector.broadcast %425 : vector<1x32xf32> to vector<16x32xf32>
    %444 = arith.addf %442, %443 : vector<16x32xf32>
    %cst_369 = arith.constant dense<0.000000e+00> : vector<16xf32>
    %445 = vector.multi_reduction <add>, %444, %cst_369 [1] : vector<16x32xf32> to vector<16xf32>
    %446 = vector.shape_cast %445 : vector<16xf32> to vector<16x1xf32>
    %cst_370 = arith.constant 3.200000e+01 : f32
    %447 = vector.broadcast %cst_370 : f32 to vector<16x1xf32>
    %448 = arith.divf %446, %447 : vector<16x1xf32>
    %449 = vector.broadcast %448 : vector<16x1xf32> to vector<16x32xf32>
    %450 = arith.subf %444, %449 : vector<16x32xf32>
    %451 = arith.mulf %450, %450 : vector<16x32xf32>
    %cst_371 = arith.constant dense<0.000000e+00> : vector<16xf32>
    %452 = vector.multi_reduction <add>, %451, %cst_371 [1] : vector<16x32xf32> to vector<16xf32>
    %453 = vector.shape_cast %452 : vector<16xf32> to vector<16x1xf32>
    %cst_372 = arith.constant 3.200000e+01 : f32
    %454 = vector.broadcast %cst_372 : f32 to vector<16x1xf32>
    %455 = arith.divf %453, %454 : vector<16x1xf32>
    %cst_373 = arith.constant 9.99999974E-6 : f32
    %456 = vector.broadcast %cst_373 : f32 to vector<16x1xf32>
    %457 = arith.addf %455, %456 : vector<16x1xf32>
    %458 = math.rsqrt %457 : vector<16x1xf32>
    %459 = vector.broadcast %458 : vector<16x1xf32> to vector<16x32xf32>
    %460 = arith.mulf %450, %459 : vector<16x32xf32>
    %c3_374 = arith.constant 3 : index
    %c0_375 = arith.constant 0 : index
    %c0_376 = arith.constant 0 : index
    %461 = vector.load %arg6[%c3_374, %c0_375, %c0_376] : memref<4x1x32xf32, #tpu.memory_space<vmem>>, vector<1x1x32xf32>
    %462 = vector.shape_cast %461 : vector<1x1x32xf32> to vector<1x32xf32>
    %463 = vector.broadcast %462 : vector<1x32xf32> to vector<16x32xf32>
    %464 = arith.mulf %460, %463 : vector<16x32xf32>
    %c3_377 = arith.constant 3 : index
    %c0_378 = arith.constant 0 : index
    %c0_379 = arith.constant 0 : index
    %465 = vector.load %arg7[%c3_377, %c0_378, %c0_379] : memref<4x1x32xf32, #tpu.memory_space<vmem>>, vector<1x1x32xf32>
    %466 = vector.shape_cast %465 : vector<1x1x32xf32> to vector<1x32xf32>
    %467 = vector.broadcast %466 : vector<1x32xf32> to vector<16x32xf32>
    %468 = arith.addf %464, %467 : vector<16x32xf32>
    %469 = arith.addf %420, %468 : vector<16x32xf32>
    %470 = arith.addf %371, %469 : vector<16x32xf32>
    %c1_380 = arith.constant 1 : index
    %c0_381 = arith.constant 0 : index
    %471 = vector.load %arg12[%c1_380, %c0_381] : memref<18x32xf32, #tpu.memory_space<vmem>>, vector<16x32xf32>
    tpu.vector_store %arg12[%c1_380, %c0_381], %470 {strides = array<i32>} : memref<18x32xf32, #tpu.memory_space<vmem>>, vector<16x32xf32>,
    %c0_382 = arith.constant 0 : index
    %c0_383 = arith.constant 0 : index
    %472 = vector.load %arg9[%c0_382, %c0_383] : memref<1x4xf32, #tpu.memory_space<vmem>>, vector<1x4xf32>
    %c0_384 = arith.constant 0 : index
    %c0_385 = arith.constant 0 : index
    %473 = vector.load %arg12[%c0_384, %c0_385] : memref<18x32xf32, #tpu.memory_space<vmem>>, vector<16x32xf32>
    %474 = arith.truncf %473 : vector<16x32xf32> to vector<16x32xbf16>
    %c0_386 = arith.constant 0 : index
    %c0_387 = arith.constant 0 : index
    %c0_388 = arith.constant 0 : index
    %475 = vector.load %arg8[%c0_386, %c0_387, %c0_388] : memref<3x32x4xbf16, #tpu.memory_space<vmem>>, vector<1x32x4xbf16>
    %476 = vector.shape_cast %475 : vector<1x32x4xbf16> to vector<32x4xbf16>
    %cst_389 = arith.constant dense<0.000000e+00> : vector<16x4xf32>
    %477 = tpu.matmul %474, %476, %cst_389 {dimension_numbers = #tpu.dot_dimension_numbers<[1], [0], [0], [1], [0, 0, 1, 1], [], []>} : vector<16x32xbf16>, vector<32x4xbf16>, vector<16x4xf32> -> vector<16x4xf32>
    %c1_390 = arith.constant 1 : index
    %c0_391 = arith.constant 0 : index
    %478 = vector.load %arg12[%c1_390, %c0_391] : memref<18x32xf32, #tpu.memory_space<vmem>>, vector<16x32xf32>
    %479 = arith.truncf %478 : vector<16x32xf32> to vector<16x32xbf16>
    %c1_392 = arith.constant 1 : index
    %c0_393 = arith.constant 0 : index
    %c0_394 = arith.constant 0 : index
    %480 = vector.load %arg8[%c1_392, %c0_393, %c0_394] : memref<3x32x4xbf16, #tpu.memory_space<vmem>>, vector<1x32x4xbf16>
    %481 = vector.shape_cast %480 : vector<1x32x4xbf16> to vector<32x4xbf16>
    %cst_395 = arith.constant dense<0.000000e+00> : vector<16x4xf32>
    %482 = tpu.matmul %479, %481, %cst_395 {dimension_numbers = #tpu.dot_dimension_numbers<[1], [0], [0], [1], [0, 0, 1, 1], [], []>} : vector<16x32xbf16>, vector<32x4xbf16>, vector<16x4xf32> -> vector<16x4xf32>
    %483 = arith.addf %477, %482 : vector<16x4xf32>
    %c2_396 = arith.constant 2 : index
    %c0_397 = arith.constant 0 : index
    %484 = vector.load %arg12[%c2_396, %c0_397] : memref<18x32xf32, #tpu.memory_space<vmem>>, vector<16x32xf32>
    %485 = arith.truncf %484 : vector<16x32xf32> to vector<16x32xbf16>
    %c2_398 = arith.constant 2 : index
    %c0_399 = arith.constant 0 : index
    %c0_400 = arith.constant 0 : index
    %486 = vector.load %arg8[%c2_398, %c0_399, %c0_400] : memref<3x32x4xbf16, #tpu.memory_space<vmem>>, vector<1x32x4xbf16>
    %487 = vector.shape_cast %486 : vector<1x32x4xbf16> to vector<32x4xbf16>
    %cst_401 = arith.constant dense<0.000000e+00> : vector<16x4xf32>
    %488 = tpu.matmul %485, %487, %cst_401 {dimension_numbers = #tpu.dot_dimension_numbers<[1], [0], [0], [1], [0, 0, 1, 1], [], []>} : vector<16x32xbf16>, vector<32x4xbf16>, vector<16x4xf32> -> vector<16x4xf32>
    %489 = arith.addf %483, %488 : vector<16x4xf32>
    %490 = vector.broadcast %472 : vector<1x4xf32> to vector<16x4xf32>
    %491 = arith.addf %489, %490 : vector<16x4xf32>
    %492 = tpu.transpose %491, [1, 0] : vector<16x4xf32> -> vector<4x16xf32>
    %c1_402 = arith.constant 1 : index
    %c0_403 = arith.constant 0 : index
    %c0_404 = arith.constant 0 : index
    %493 = vector.load %arg10[%c1_402, %c0_403, %c0_404] : memref<2x4x16xf32, #tpu.memory_space<vmem>>, vector<1x4x16xf32>
    %494 = vector.shape_cast %493 : vector<1x4x16xf32> to vector<4x16xf32>
    %495 = vector.shape_cast %492 : vector<4x16xf32> to vector<1x4x16xf32>
    tpu.vector_store %arg10[%c1_402, %c0_403, %c0_404], %495 {strides = array<i32>} : memref<2x4x16xf32, #tpu.memory_space<vmem>>, vector<1x4x16xf32>,
    return
  }
  func.func @transform_0(%arg0: i32) -> (i32, i32, i32) {
    %c0_i32 = arith.constant 0 : i32
    %c0_i32_0 = arith.constant 0 : i32
    %c0_i32_1 = arith.constant 0 : i32
    return %arg0, %c0_i32, %c0_i32_0 : i32, i32, i32
  }
  func.func @transform_1(%arg0: i32) -> (i32, i32, i32) {
    %c0_i32 = arith.constant 0 : i32
    %c0_i32_0 = arith.constant 0 : i32
    %c0_i32_1 = arith.constant 0 : i32
    %c0_i32_2 = arith.constant 0 : i32
    return %c0_i32, %c0_i32_0, %c0_i32_1 : i32, i32, i32
  }
  func.func @transform_2(%arg0: i32) -> (i32, i32) {
    %c0_i32 = arith.constant 0 : i32
    %c0_i32_0 = arith.constant 0 : i32
    %c0_i32_1 = arith.constant 0 : i32
    return %c0_i32, %c0_i32_0 : i32, i32
  }
  func.func @transform_3(%arg0: i32) -> (i32, i32, i32, i32) {
    %c0_i32 = arith.constant 0 : i32
    %c0_i32_0 = arith.constant 0 : i32
    %c0_i32_1 = arith.constant 0 : i32
    %c0_i32_2 = arith.constant 0 : i32
    %c0_i32_3 = arith.constant 0 : i32
    return %c0_i32, %c0_i32_0, %c0_i32_1, %c0_i32_2 : i32, i32, i32, i32
  }
  func.func @transform_4(%arg0: i32) -> (i32, i32, i32) {
    %c0_i32 = arith.constant 0 : i32
    %c0_i32_0 = arith.constant 0 : i32
    %c0_i32_1 = arith.constant 0 : i32
    %c0_i32_2 = arith.constant 0 : i32
    return %c0_i32, %c0_i32_0, %c0_i32_1 : i32, i32, i32
  }
  func.func @transform_5(%arg0: i32) -> (i32, i32, i32) {
    %c0_i32 = arith.constant 0 : i32
    %c0_i32_0 = arith.constant 0 : i32
    %c0_i32_1 = arith.constant 0 : i32
    %c0_i32_2 = arith.constant 0 : i32
    return %c0_i32, %c0_i32_0, %c0_i32_1 : i32, i32, i32
  }
  func.func @transform_6(%arg0: i32) -> (i32, i32, i32) {
    %c0_i32 = arith.constant 0 : i32
    %c0_i32_0 = arith.constant 0 : i32
    %c0_i32_1 = arith.constant 0 : i32
    %c0_i32_2 = arith.constant 0 : i32
    return %c0_i32, %c0_i32_0, %c0_i32_1 : i32, i32, i32
  }
  func.func @transform_7(%arg0: i32) -> (i32, i32, i32) {
    %c0_i32 = arith.constant 0 : i32
    %c0_i32_0 = arith.constant 0 : i32
    %c0_i32_1 = arith.constant 0 : i32
    %c0_i32_2 = arith.constant 0 : i32
    return %c0_i32, %c0_i32_0, %c0_i32_1 : i32, i32, i32
  }
  func.func @transform_8(%arg0: i32) -> (i32, i32) {
    %c0_i32 = arith.constant 0 : i32
    %c0_i32_0 = arith.constant 0 : i32
    %c0_i32_1 = arith.constant 0 : i32
    return %c0_i32, %c0_i32_0 : i32, i32
  }
  func.func @transform_9(%arg0: i32) -> (i32, i32, i32) {
    %c0_i32 = arith.constant 0 : i32
    %c0_i32_0 = arith.constant 0 : i32
    %c0_i32_1 = arith.constant 0 : i32
    return %arg0, %c0_i32, %c0_i32_0 : i32, i32, i32
  }
}

module attributes {stable_mosaic.version = 11 : i64} {
  func.func @_convnet_kernel(%arg0: i32, %arg1: memref<2x4x16xf32, #tpu.memory_space<vmem>>, %arg2: memref<3x4x32xbf16, #tpu.memory_space<vmem>>, %arg3: memref<1x32xf32, #tpu.memory_space<vmem>>, %arg4: memref<4x3x32x32xbf16, #tpu.memory_space<vmem>>, %arg5: memref<4x1x32xf32, #tpu.memory_space<vmem>>, %arg6: memref<4x1x32xf32, #tpu.memory_space<vmem>>, %arg7: memref<4x1x32xf32, #tpu.memory_space<vmem>>, %arg8: memref<3x32x4xbf16, #tpu.memory_space<vmem>>, %arg9: memref<1x4xf32, #tpu.memory_space<vmem>>, %arg10: memref<2x4x16xf32, #tpu.memory_space<vmem>>, %arg11: memref<18x4xf32, #tpu.memory_space<vmem>>, %arg12: memref<18x32xf32, #tpu.memory_space<vmem>>) attributes {dimension_semantics = [#tpu.dimension_semantics<parallel>], iteration_bounds = array<i64: 1>, scalar_prefetch = 0 : i64, scratch_operands = 2 : i64, tpu.core_type = #tpu.core_type<tc>, window_params = [{transform_indices = @transform_0, window_bounds = array<i64: 2, 4, 16>}, {pipeline_mode = #tpu.pipeline_mode<synchronous>, transform_indices = @transform_1, window_bounds = array<i64: 3, 4, 32>}, {pipeline_mode = #tpu.pipeline_mode<synchronous>, transform_indices = @transform_2, window_bounds = array<i64: 1, 32>}, {pipeline_mode = #tpu.pipeline_mode<synchronous>, transform_indices = @transform_3, window_bounds = array<i64: 4, 3, 32, 32>}, {pipeline_mode = #tpu.pipeline_mode<synchronous>, transform_indices = @transform_4, window_bounds = array<i64: 4, 1, 32>}, {pipeline_mode = #tpu.pipeline_mode<synchronous>, transform_indices = @transform_5, window_bounds = array<i64: 4, 1, 32>}, {pipeline_mode = #tpu.pipeline_mode<synchronous>, transform_indices = @transform_6, window_bounds = array<i64: 4, 1, 32>}, {pipeline_mode = #tpu.pipeline_mode<synchronous>, transform_indices = @transform_7, window_bounds = array<i64: 3, 32, 4>}, {pipeline_mode = #tpu.pipeline_mode<synchronous>, transform_indices = @transform_8, window_bounds = array<i64: 1, 4>}, {transform_indices = @transform_9, window_bounds = array<i64: 2, 4, 16>}]} {
    %cst = arith.constant 0.000000e+00 : f32
    %0 = vector.broadcast %cst : f32 to vector<18x4xf32>
    %c0 = arith.constant 0 : index
    %c0_0 = arith.constant 0 : index
    %1 = vector.load %arg11[%c0, %c0_0] : memref<18x4xf32, #tpu.memory_space<vmem>>, vector<18x4xf32>
    tpu.vector_store %arg11[%c0, %c0_0], %0 {strides = array<i32>} : memref<18x4xf32, #tpu.memory_space<vmem>>, vector<18x4xf32>,
    %cst_1 = arith.constant 0.000000e+00 : f32
    %2 = vector.broadcast %cst_1 : f32 to vector<18x32xf32>
    %c0_2 = arith.constant 0 : index
    %c0_3 = arith.constant 0 : index
    %3 = vector.load %arg12[%c0_2, %c0_3] : memref<18x32xf32, #tpu.memory_space<vmem>>, vector<18x32xf32>
    tpu.vector_store %arg12[%c0_2, %c0_3], %2 {strides = array<i32>} : memref<18x32xf32, #tpu.memory_space<vmem>>, vector<18x32xf32>,
    %c0_4 = arith.constant 0 : index
    %c0_5 = arith.constant 0 : index
    %c0_6 = arith.constant 0 : index
    %4 = vector.load %arg1[%c0_4, %c0_5, %c0_6] : memref<2x4x16xf32, #tpu.memory_space<vmem>>, vector<1x4x16xf32>
    %5 = vector.shape_cast %4 : vector<1x4x16xf32> to vector<4x16xf32>
    %6 = tpu.transpose %5, [1, 0] : vector<4x16xf32> -> vector<16x4xf32>
    %c1 = arith.constant 1 : index
    %c0_7 = arith.constant 0 : index
    %7 = vector.load %arg11[%c1, %c0_7] : memref<18x4xf32, #tpu.memory_space<vmem>>, vector<16x4xf32>
    tpu.vector_store %arg11[%c1, %c0_7], %6 {strides = array<i32>} : memref<18x4xf32, #tpu.memory_space<vmem>>, vector<16x4xf32>,
    %c0_8 = arith.constant 0 : index
    %c0_9 = arith.constant 0 : index
    %8 = vector.load %arg3[%c0_8, %c0_9] : memref<1x32xf32, #tpu.memory_space<vmem>>, vector<1x32xf32>
    %c0_10 = arith.constant 0 : index
    %c0_11 = arith.constant 0 : index
    %9 = vector.load %arg11[%c0_10, %c0_11] : memref<18x4xf32, #tpu.memory_space<vmem>>, vector<16x4xf32>
    %10 = arith.truncf %9 : vector<16x4xf32> to vector<16x4xbf16>
    %c0_12 = arith.constant 0 : index
    %c0_13 = arith.constant 0 : index
    %c0_14 = arith.constant 0 : index
    %11 = vector.load %arg2[%c0_12, %c0_13, %c0_14] : memref<3x4x32xbf16, #tpu.memory_space<vmem>>, vector<1x4x32xbf16>
    %12 = vector.shape_cast %11 : vector<1x4x32xbf16> to vector<4x32xbf16>
    %cst_15 = arith.constant dense<0.000000e+00> : vector<16x32xf32>
    %13 = tpu.matmul %10, %12, %cst_15 {dimension_numbers = #tpu.dot_dimension_numbers<[1], [0], [0], [1], [0, 0, 1, 1], [], []>} : vector<16x4xbf16>, vector<4x32xbf16>, vector<16x32xf32> -> vector<16x32xf32>
    %c1_16 = arith.constant 1 : index
    %c0_17 = arith.constant 0 : index
    %14 = vector.load %arg11[%c1_16, %c0_17] : memref<18x4xf32, #tpu.memory_space<vmem>>, vector<16x4xf32>
    %15 = arith.truncf %14 : vector<16x4xf32> to vector<16x4xbf16>
    %c1_18 = arith.constant 1 : index
    %c0_19 = arith.constant 0 : index
    %c0_20 = arith.constant 0 : index
    %16 = vector.load %arg2[%c1_18, %c0_19, %c0_20] : memref<3x4x32xbf16, #tpu.memory_space<vmem>>, vector<1x4x32xbf16>
    %17 = vector.shape_cast %16 : vector<1x4x32xbf16> to vector<4x32xbf16>
    %cst_21 = arith.constant dense<0.000000e+00> : vector<16x32xf32>
    %18 = tpu.matmul %15, %17, %cst_21 {dimension_numbers = #tpu.dot_dimension_numbers<[1], [0], [0], [1], [0, 0, 1, 1], [], []>} : vector<16x4xbf16>, vector<4x32xbf16>, vector<16x32xf32> -> vector<16x32xf32>
    %19 = arith.addf %13, %18 : vector<16x32xf32>
    %c2 = arith.constant 2 : index
    %c0_22 = arith.constant 0 : index
    %20 = vector.load %arg11[%c2, %c0_22] : memref<18x4xf32, #tpu.memory_space<vmem>>, vector<16x4xf32>
    %21 = arith.truncf %20 : vector<16x4xf32> to vector<16x4xbf16>
    %c2_23 = arith.constant 2 : index
    %c0_24 = arith.constant 0 : index
    %c0_25 = arith.constant 0 : index
    %22 = vector.load %arg2[%c2_23, %c0_24, %c0_25] : memref<3x4x32xbf16, #tpu.memory_space<vmem>>, vector<1x4x32xbf16>
    %23 = vector.shape_cast %22 : vector<1x4x32xbf16> to vector<4x32xbf16>
    %cst_26 = arith.constant dense<0.000000e+00> : vector<16x32xf32>
    %24 = tpu.matmul %21, %23, %cst_26 {dimension_numbers = #tpu.dot_dimension_numbers<[1], [0], [0], [1], [0, 0, 1, 1], [], []>} : vector<16x4xbf16>, vector<4x32xbf16>, vector<16x32xf32> -> vector<16x32xf32>
    %25 = arith.addf %19, %24 : vector<16x32xf32>
    %26 = vector.broadcast %8 : vector<1x32xf32> to vector<16x32xf32>
    %27 = arith.addf %25, %26 : vector<16x32xf32>
    %cst_27 = arith.constant 0.000000e+00 : f32
    %28 = vector.broadcast %cst_27 : f32 to vector<16x32xf32>
    %29 = arith.maximumf %27, %28 : vector<16x32xf32>
    %c1_28 = arith.constant 1 : index
    %c0_29 = arith.constant 0 : index
    %30 = vector.load %arg12[%c1_28, %c0_29] : memref<18x32xf32, #tpu.memory_space<vmem>>, vector<16x32xf32>
    tpu.vector_store %arg12[%c1_28, %c0_29], %29 {strides = array<i32>} : memref<18x32xf32, #tpu.memory_space<vmem>>, vector<16x32xf32>,
    %c0_30 = arith.constant 0 : index
    %c0_31 = arith.constant 0 : index
    %c0_32 = arith.constant 0 : index
    %31 = vector.load %arg5[%c0_30, %c0_31, %c0_32] : memref<4x1x32xf32, #tpu.memory_space<vmem>>, vector<1x1x32xf32>
    %32 = vector.shape_cast %31 : vector<1x1x32xf32> to vector<1x32xf32>
    %c0_33 = arith.constant 0 : index
    %c0_34 = arith.constant 0 : index
    %33 = vector.load %arg12[%c0_33, %c0_34] : memref<18x32xf32, #tpu.memory_space<vmem>>, vector<16x32xf32>
    %34 = arith.truncf %33 : vector<16x32xf32> to vector<16x32xbf16>
    %c0_35 = arith.constant 0 : index
    %c0_36 = arith.constant 0 : index
    %c0_37 = arith.constant 0 : index
    %c0_38 = arith.constant 0 : index
    %35 = vector.load %arg4[%c0_35, %c0_36, %c0_37, %c0_38] : memref<4x3x32x32xbf16, #tpu.memory_space<vmem>>, vector<1x1x32x32xbf16>
    %36 = vector.shape_cast %35 : vector<1x1x32x32xbf16> to vector<32x32xbf16>
    %cst_39 = arith.constant dense<0.000000e+00> : vector<16x32xf32>
    %37 = tpu.matmul %34, %36, %cst_39 {dimension_numbers = #tpu.dot_dimension_numbers<[1], [0], [0], [1], [0, 0, 1, 1], [], []>} : vector<16x32xbf16>, vector<32x32xbf16>, vector<16x32xf32> -> vector<16x32xf32>
    %c1_40 = arith.constant 1 : index
    %c0_41 = arith.constant 0 : index
    %38 = vector.load %arg12[%c1_40, %c0_41] : memref<18x32xf32, #tpu.memory_space<vmem>>, vector<16x32xf32>
    %39 = arith.truncf %38 : vector<16x32xf32> to vector<16x32xbf16>
    %c0_42 = arith.constant 0 : index
    %c1_43 = arith.constant 1 : index
    %c0_44 = arith.constant 0 : index
    %c0_45 = arith.constant 0 : index
    %40 = vector.load %arg4[%c0_42, %c1_43, %c0_44, %c0_45] : memref<4x3x32x32xbf16, #tpu.memory_space<vmem>>, vector<1x1x32x32xbf16>
    %41 = vector.shape_cast %40 : vector<1x1x32x32xbf16> to vector<32x32xbf16>
    %cst_46 = arith.constant dense<0.000000e+00> : vector<16x32xf32>
    %42 = tpu.matmul %39, %41, %cst_46 {dimension_numbers = #tpu.dot_dimension_numbers<[1], [0], [0], [1], [0, 0, 1, 1], [], []>} : vector<16x32xbf16>, vector<32x32xbf16>, vector<16x32xf32> -> vector<16x32xf32>
    %43 = arith.addf %37, %42 : vector<16x32xf32>
    %c2_47 = arith.constant 2 : index
    %c0_48 = arith.constant 0 : index
    %44 = vector.load %arg12[%c2_47, %c0_48] : memref<18x32xf32, #tpu.memory_space<vmem>>, vector<16x32xf32>
    %45 = arith.truncf %44 : vector<16x32xf32> to vector<16x32xbf16>
    %c0_49 = arith.constant 0 : index
    %c2_50 = arith.constant 2 : index
    %c0_51 = arith.constant 0 : index
    %c0_52 = arith.constant 0 : index
    %46 = vector.load %arg4[%c0_49, %c2_50, %c0_51, %c0_52] : memref<4x3x32x32xbf16, #tpu.memory_space<vmem>>, vector<1x1x32x32xbf16>
    %47 = vector.shape_cast %46 : vector<1x1x32x32xbf16> to vector<32x32xbf16>
    %cst_53 = arith.constant dense<0.000000e+00> : vector<16x32xf32>
    %48 = tpu.matmul %45, %47, %cst_53 {dimension_numbers = #tpu.dot_dimension_numbers<[1], [0], [0], [1], [0, 0, 1, 1], [], []>} : vector<16x32xbf16>, vector<32x32xbf16>, vector<16x32xf32> -> vector<16x32xf32>
    %49 = arith.addf %43, %48 : vector<16x32xf32>
    %50 = vector.broadcast %32 : vector<1x32xf32> to vector<16x32xf32>
    %51 = arith.addf %49, %50 : vector<16x32xf32>
    %cst_54 = arith.constant dense<0.000000e+00> : vector<16xf32>
    %52 = vector.multi_reduction <add>, %51, %cst_54 [1] : vector<16x32xf32> to vector<16xf32>
    %53 = vector.shape_cast %52 : vector<16xf32> to vector<16x1xf32>
    %cst_55 = arith.constant 3.200000e+01 : f32
    %54 = vector.broadcast %cst_55 : f32 to vector<16x1xf32>
    %55 = arith.divf %53, %54 : vector<16x1xf32>
    %56 = vector.broadcast %55 : vector<16x1xf32> to vector<16x32xf32>
    %57 = arith.subf %51, %56 : vector<16x32xf32>
    %58 = arith.mulf %57, %57 : vector<16x32xf32>
    %cst_56 = arith.constant dense<0.000000e+00> : vector<16xf32>
    %59 = vector.multi_reduction <add>, %58, %cst_56 [1] : vector<16x32xf32> to vector<16xf32>
    %60 = vector.shape_cast %59 : vector<16xf32> to vector<16x1xf32>
    %cst_57 = arith.constant 3.200000e+01 : f32
    %61 = vector.broadcast %cst_57 : f32 to vector<16x1xf32>
    %62 = arith.divf %60, %61 : vector<16x1xf32>
    %cst_58 = arith.constant 9.99999974E-6 : f32
    %63 = vector.broadcast %cst_58 : f32 to vector<16x1xf32>
    %64 = arith.addf %62, %63 : vector<16x1xf32>
    %65 = math.rsqrt %64 : vector<16x1xf32>
    %66 = vector.broadcast %65 : vector<16x1xf32> to vector<16x32xf32>
    %67 = arith.mulf %57, %66 : vector<16x32xf32>
    %c0_59 = arith.constant 0 : index
    %c0_60 = arith.constant 0 : index
    %c0_61 = arith.constant 0 : index
    %68 = vector.load %arg6[%c0_59, %c0_60, %c0_61] : memref<4x1x32xf32, #tpu.memory_space<vmem>>, vector<1x1x32xf32>
    %69 = vector.shape_cast %68 : vector<1x1x32xf32> to vector<1x32xf32>
    %70 = vector.broadcast %69 : vector<1x32xf32> to vector<16x32xf32>
    %71 = arith.mulf %67, %70 : vector<16x32xf32>
    %c0_62 = arith.constant 0 : index
    %c0_63 = arith.constant 0 : index
    %c0_64 = arith.constant 0 : index
    %72 = vector.load %arg7[%c0_62, %c0_63, %c0_64] : memref<4x1x32xf32, #tpu.memory_space<vmem>>, vector<1x1x32xf32>
    %73 = vector.shape_cast %72 : vector<1x1x32xf32> to vector<1x32xf32>
    %74 = vector.broadcast %73 : vector<1x32xf32> to vector<16x32xf32>
    %75 = arith.addf %71, %74 : vector<16x32xf32>
    %76 = arith.addf %27, %75 : vector<16x32xf32>
    %cst_65 = arith.constant 0.000000e+00 : f32
    %77 = vector.broadcast %cst_65 : f32 to vector<16x32xf32>
    %78 = arith.maximumf %76, %77 : vector<16x32xf32>
    %c1_66 = arith.constant 1 : index
    %c0_67 = arith.constant 0 : index
    %79 = vector.load %arg12[%c1_66, %c0_67] : memref<18x32xf32, #tpu.memory_space<vmem>>, vector<16x32xf32>
    tpu.vector_store %arg12[%c1_66, %c0_67], %78 {strides = array<i32>} : memref<18x32xf32, #tpu.memory_space<vmem>>, vector<16x32xf32>,
    %c1_68 = arith.constant 1 : index
    %c0_69 = arith.constant 0 : index
    %c0_70 = arith.constant 0 : index
    %80 = vector.load %arg5[%c1_68, %c0_69, %c0_70] : memref<4x1x32xf32, #tpu.memory_space<vmem>>, vector<1x1x32xf32>
    %81 = vector.shape_cast %80 : vector<1x1x32xf32> to vector<1x32xf32>
    %c0_71 = arith.constant 0 : index
    %c0_72 = arith.constant 0 : index
    %82 = vector.load %arg12[%c0_71, %c0_72] : memref<18x32xf32, #tpu.memory_space<vmem>>, vector<16x32xf32>
    %83 = arith.truncf %82 : vector<16x32xf32> to vector<16x32xbf16>
    %c1_73 = arith.constant 1 : index
    %c0_74 = arith.constant 0 : index
    %c0_75 = arith.constant 0 : index
    %c0_76 = arith.constant 0 : index
    %84 = vector.load %arg4[%c1_73, %c0_74, %c0_75, %c0_76] : memref<4x3x32x32xbf16, #tpu.memory_space<vmem>>, vector<1x1x32x32xbf16>
    %85 = vector.shape_cast %84 : vector<1x1x32x32xbf16> to vector<32x32xbf16>
    %cst_77 = arith.constant dense<0.000000e+00> : vector<16x32xf32>
    %86 = tpu.matmul %83, %85, %cst_77 {dimension_numbers = #tpu.dot_dimension_numbers<[1], [0], [0], [1], [0, 0, 1, 1], [], []>} : vector<16x32xbf16>, vector<32x32xbf16>, vector<16x32xf32> -> vector<16x32xf32>
    %c1_78 = arith.constant 1 : index
    %c0_79 = arith.constant 0 : index
    %87 = vector.load %arg12[%c1_78, %c0_79] : memref<18x32xf32, #tpu.memory_space<vmem>>, vector<16x32xf32>
    %88 = arith.truncf %87 : vector<16x32xf32> to vector<16x32xbf16>
    %c1_80 = arith.constant 1 : index
    %c1_81 = arith.constant 1 : index
    %c0_82 = arith.constant 0 : index
    %c0_83 = arith.constant 0 : index
    %89 = vector.load %arg4[%c1_80, %c1_81, %c0_82, %c0_83] : memref<4x3x32x32xbf16, #tpu.memory_space<vmem>>, vector<1x1x32x32xbf16>
    %90 = vector.shape_cast %89 : vector<1x1x32x32xbf16> to vector<32x32xbf16>
    %cst_84 = arith.constant dense<0.000000e+00> : vector<16x32xf32>
    %91 = tpu.matmul %88, %90, %cst_84 {dimension_numbers = #tpu.dot_dimension_numbers<[1], [0], [0], [1], [0, 0, 1, 1], [], []>} : vector<16x32xbf16>, vector<32x32xbf16>, vector<16x32xf32> -> vector<16x32xf32>
    %92 = arith.addf %86, %91 : vector<16x32xf32>
    %c2_85 = arith.constant 2 : index
    %c0_86 = arith.constant 0 : index
    %93 = vector.load %arg12[%c2_85, %c0_86] : memref<18x32xf32, #tpu.memory_space<vmem>>, vector<16x32xf32>
    %94 = arith.truncf %93 : vector<16x32xf32> to vector<16x32xbf16>
    %c1_87 = arith.constant 1 : index
    %c2_88 = arith.constant 2 : index
    %c0_89 = arith.constant 0 : index
    %c0_90 = arith.constant 0 : index
    %95 = vector.load %arg4[%c1_87, %c2_88, %c0_89, %c0_90] : memref<4x3x32x32xbf16, #tpu.memory_space<vmem>>, vector<1x1x32x32xbf16>
    %96 = vector.shape_cast %95 : vector<1x1x32x32xbf16> to vector<32x32xbf16>
    %cst_91 = arith.constant dense<0.000000e+00> : vector<16x32xf32>
    %97 = tpu.matmul %94, %96, %cst_91 {dimension_numbers = #tpu.dot_dimension_numbers<[1], [0], [0], [1], [0, 0, 1, 1], [], []>} : vector<16x32xbf16>, vector<32x32xbf16>, vector<16x32xf32> -> vector<16x32xf32>
    %98 = arith.addf %92, %97 : vector<16x32xf32>
    %99 = vector.broadcast %81 : vector<1x32xf32> to vector<16x32xf32>
    %100 = arith.addf %98, %99 : vector<16x32xf32>
    %cst_92 = arith.constant dense<0.000000e+00> : vector<16xf32>
    %101 = vector.multi_reduction <add>, %100, %cst_92 [1] : vector<16x32xf32> to vector<16xf32>
    %102 = vector.shape_cast %101 : vector<16xf32> to vector<16x1xf32>
    %cst_93 = arith.constant 3.200000e+01 : f32
    %103 = vector.broadcast %cst_93 : f32 to vector<16x1xf32>
    %104 = arith.divf %102, %103 : vector<16x1xf32>
    %105 = vector.broadcast %104 : vector<16x1xf32> to vector<16x32xf32>
    %106 = arith.subf %100, %105 : vector<16x32xf32>
    %107 = arith.mulf %106, %106 : vector<16x32xf32>
    %cst_94 = arith.constant dense<0.000000e+00> : vector<16xf32>
    %108 = vector.multi_reduction <add>, %107, %cst_94 [1] : vector<16x32xf32> to vector<16xf32>
    %109 = vector.shape_cast %108 : vector<16xf32> to vector<16x1xf32>
    %cst_95 = arith.constant 3.200000e+01 : f32
    %110 = vector.broadcast %cst_95 : f32 to vector<16x1xf32>
    %111 = arith.divf %109, %110 : vector<16x1xf32>
    %cst_96 = arith.constant 9.99999974E-6 : f32
    %112 = vector.broadcast %cst_96 : f32 to vector<16x1xf32>
    %113 = arith.addf %111, %112 : vector<16x1xf32>
    %114 = math.rsqrt %113 : vector<16x1xf32>
    %115 = vector.broadcast %114 : vector<16x1xf32> to vector<16x32xf32>
    %116 = arith.mulf %106, %115 : vector<16x32xf32>
    %c1_97 = arith.constant 1 : index
    %c0_98 = arith.constant 0 : index
    %c0_99 = arith.constant 0 : index
    %117 = vector.load %arg6[%c1_97, %c0_98, %c0_99] : memref<4x1x32xf32, #tpu.memory_space<vmem>>, vector<1x1x32xf32>
    %118 = vector.shape_cast %117 : vector<1x1x32xf32> to vector<1x32xf32>
    %119 = vector.broadcast %118 : vector<1x32xf32> to vector<16x32xf32>
    %120 = arith.mulf %116, %119 : vector<16x32xf32>
    %c1_100 = arith.constant 1 : index
    %c0_101 = arith.constant 0 : index
    %c0_102 = arith.constant 0 : index
    %121 = vector.load %arg7[%c1_100, %c0_101, %c0_102] : memref<4x1x32xf32, #tpu.memory_space<vmem>>, vector<1x1x32xf32>
    %122 = vector.shape_cast %121 : vector<1x1x32xf32> to vector<1x32xf32>
    %123 = vector.broadcast %122 : vector<1x32xf32> to vector<16x32xf32>
    %124 = arith.addf %120, %123 : vector<16x32xf32>
    %125 = arith.addf %76, %124 : vector<16x32xf32>
    %cst_103 = arith.constant 0.000000e+00 : f32
    %126 = vector.broadcast %cst_103 : f32 to vector<16x32xf32>
    %127 = arith.maximumf %27, %126 : vector<16x32xf32>
    %c1_104 = arith.constant 1 : index
    %c0_105 = arith.constant 0 : index
    %128 = vector.load %arg12[%c1_104, %c0_105] : memref<18x32xf32, #tpu.memory_space<vmem>>, vector<16x32xf32>
    tpu.vector_store %arg12[%c1_104, %c0_105], %127 {strides = array<i32>} : memref<18x32xf32, #tpu.memory_space<vmem>>, vector<16x32xf32>,
    %c2_106 = arith.constant 2 : index
    %c0_107 = arith.constant 0 : index
    %c0_108 = arith.constant 0 : index
    %129 = vector.load %arg5[%c2_106, %c0_107, %c0_108] : memref<4x1x32xf32, #tpu.memory_space<vmem>>, vector<1x1x32xf32>
    %130 = vector.shape_cast %129 : vector<1x1x32xf32> to vector<1x32xf32>
    %c0_109 = arith.constant 0 : index
    %c0_110 = arith.constant 0 : index
    %131 = vector.load %arg12[%c0_109, %c0_110] : memref<18x32xf32, #tpu.memory_space<vmem>>, vector<16x32xf32>
    %132 = arith.truncf %131 : vector<16x32xf32> to vector<16x32xbf16>
    %c2_111 = arith.constant 2 : index
    %c0_112 = arith.constant 0 : index
    %c0_113 = arith.constant 0 : index
    %c0_114 = arith.constant 0 : index
    %133 = vector.load %arg4[%c2_111, %c0_112, %c0_113, %c0_114] : memref<4x3x32x32xbf16, #tpu.memory_space<vmem>>, vector<1x1x32x32xbf16>
    %134 = vector.shape_cast %133 : vector<1x1x32x32xbf16> to vector<32x32xbf16>
    %cst_115 = arith.constant dense<0.000000e+00> : vector<16x32xf32>
    %135 = tpu.matmul %132, %134, %cst_115 {dimension_numbers = #tpu.dot_dimension_numbers<[1], [0], [0], [1], [0, 0, 1, 1], [], []>} : vector<16x32xbf16>, vector<32x32xbf16>, vector<16x32xf32> -> vector<16x32xf32>
    %c1_116 = arith.constant 1 : index
    %c0_117 = arith.constant 0 : index
    %136 = vector.load %arg12[%c1_116, %c0_117] : memref<18x32xf32, #tpu.memory_space<vmem>>, vector<16x32xf32>
    %137 = arith.truncf %136 : vector<16x32xf32> to vector<16x32xbf16>
    %c2_118 = arith.constant 2 : index
    %c1_119 = arith.constant 1 : index
    %c0_120 = arith.constant 0 : index
    %c0_121 = arith.constant 0 : index
    %138 = vector.load %arg4[%c2_118, %c1_119, %c0_120, %c0_121] : memref<4x3x32x32xbf16, #tpu.memory_space<vmem>>, vector<1x1x32x32xbf16>
    %139 = vector.shape_cast %138 : vector<1x1x32x32xbf16> to vector<32x32xbf16>
    %cst_122 = arith.constant dense<0.000000e+00> : vector<16x32xf32>
    %140 = tpu.matmul %137, %139, %cst_122 {dimension_numbers = #tpu.dot_dimension_numbers<[1], [0], [0], [1], [0, 0, 1, 1], [], []>} : vector<16x32xbf16>, vector<32x32xbf16>, vector<16x32xf32> -> vector<16x32xf32>
    %141 = arith.addf %135, %140 : vector<16x32xf32>
    %c2_123 = arith.constant 2 : index
    %c0_124 = arith.constant 0 : index
    %142 = vector.load %arg12[%c2_123, %c0_124] : memref<18x32xf32, #tpu.memory_space<vmem>>, vector<16x32xf32>
    %143 = arith.truncf %142 : vector<16x32xf32> to vector<16x32xbf16>
    %c2_125 = arith.constant 2 : index
    %c2_126 = arith.constant 2 : index
    %c0_127 = arith.constant 0 : index
    %c0_128 = arith.constant 0 : index
    %144 = vector.load %arg4[%c2_125, %c2_126, %c0_127, %c0_128] : memref<4x3x32x32xbf16, #tpu.memory_space<vmem>>, vector<1x1x32x32xbf16>
    %145 = vector.shape_cast %144 : vector<1x1x32x32xbf16> to vector<32x32xbf16>
    %cst_129 = arith.constant dense<0.000000e+00> : vector<16x32xf32>
    %146 = tpu.matmul %143, %145, %cst_129 {dimension_numbers = #tpu.dot_dimension_numbers<[1], [0], [0], [1], [0, 0, 1, 1], [], []>} : vector<16x32xbf16>, vector<32x32xbf16>, vector<16x32xf32> -> vector<16x32xf32>
    %147 = arith.addf %141, %146 : vector<16x32xf32>
    %148 = vector.broadcast %130 : vector<1x32xf32> to vector<16x32xf32>
    %149 = arith.addf %147, %148 : vector<16x32xf32>
    %cst_130 = arith.constant dense<0.000000e+00> : vector<16xf32>
    %150 = vector.multi_reduction <add>, %149, %cst_130 [1] : vector<16x32xf32> to vector<16xf32>
    %151 = vector.shape_cast %150 : vector<16xf32> to vector<16x1xf32>
    %cst_131 = arith.constant 3.200000e+01 : f32
    %152 = vector.broadcast %cst_131 : f32 to vector<16x1xf32>
    %153 = arith.divf %151, %152 : vector<16x1xf32>
    %154 = vector.broadcast %153 : vector<16x1xf32> to vector<16x32xf32>
    %155 = arith.subf %149, %154 : vector<16x32xf32>
    %156 = arith.mulf %155, %155 : vector<16x32xf32>
    %cst_132 = arith.constant dense<0.000000e+00> : vector<16xf32>
    %157 = vector.multi_reduction <add>, %156, %cst_132 [1] : vector<16x32xf32> to vector<16xf32>
    %158 = vector.shape_cast %157 : vector<16xf32> to vector<16x1xf32>
    %cst_133 = arith.constant 3.200000e+01 : f32
    %159 = vector.broadcast %cst_133 : f32 to vector<16x1xf32>
    %160 = arith.divf %158, %159 : vector<16x1xf32>
    %cst_134 = arith.constant 9.99999974E-6 : f32
    %161 = vector.broadcast %cst_134 : f32 to vector<16x1xf32>
    %162 = arith.addf %160, %161 : vector<16x1xf32>
    %163 = math.rsqrt %162 : vector<16x1xf32>
    %164 = vector.broadcast %163 : vector<16x1xf32> to vector<16x32xf32>
    %165 = arith.mulf %155, %164 : vector<16x32xf32>
    %c2_135 = arith.constant 2 : index
    %c0_136 = arith.constant 0 : index
    %c0_137 = arith.constant 0 : index
    %166 = vector.load %arg6[%c2_135, %c0_136, %c0_137] : memref<4x1x32xf32, #tpu.memory_space<vmem>>, vector<1x1x32xf32>
    %167 = vector.shape_cast %166 : vector<1x1x32xf32> to vector<1x32xf32>
    %168 = vector.broadcast %167 : vector<1x32xf32> to vector<16x32xf32>
    %169 = arith.mulf %165, %168 : vector<16x32xf32>
    %c2_138 = arith.constant 2 : index
    %c0_139 = arith.constant 0 : index
    %c0_140 = arith.constant 0 : index
    %170 = vector.load %arg7[%c2_138, %c0_139, %c0_140] : memref<4x1x32xf32, #tpu.memory_space<vmem>>, vector<1x1x32xf32>
    %171 = vector.shape_cast %170 : vector<1x1x32xf32> to vector<1x32xf32>
    %172 = vector.broadcast %171 : vector<1x32xf32> to vector<16x32xf32>
    %173 = arith.addf %169, %172 : vector<16x32xf32>
    %174 = arith.addf %27, %173 : vector<16x32xf32>
    %cst_141 = arith.constant 0.000000e+00 : f32
    %175 = vector.broadcast %cst_141 : f32 to vector<16x32xf32>
    %176 = arith.maximumf %174, %175 : vector<16x32xf32>
    %c1_142 = arith.constant 1 : index
    %c0_143 = arith.constant 0 : index
    %177 = vector.load %arg12[%c1_142, %c0_143] : memref<18x32xf32, #tpu.memory_space<vmem>>, vector<16x32xf32>
    tpu.vector_store %arg12[%c1_142, %c0_143], %176 {strides = array<i32>} : memref<18x32xf32, #tpu.memory_space<vmem>>, vector<16x32xf32>,
    %c3 = arith.constant 3 : index
    %c0_144 = arith.constant 0 : index
    %c0_145 = arith.constant 0 : index
    %178 = vector.load %arg5[%c3, %c0_144, %c0_145] : memref<4x1x32xf32, #tpu.memory_space<vmem>>, vector<1x1x32xf32>
    %179 = vector.shape_cast %178 : vector<1x1x32xf32> to vector<1x32xf32>
    %c0_146 = arith.constant 0 : index
    %c0_147 = arith.constant 0 : index
    %180 = vector.load %arg12[%c0_146, %c0_147] : memref<18x32xf32, #tpu.memory_space<vmem>>, vector<16x32xf32>
    %181 = arith.truncf %180 : vector<16x32xf32> to vector<16x32xbf16>
    %c3_148 = arith.constant 3 : index
    %c0_149 = arith.constant 0 : index
    %c0_150 = arith.constant 0 : index
    %c0_151 = arith.constant 0 : index
    %182 = vector.load %arg4[%c3_148, %c0_149, %c0_150, %c0_151] : memref<4x3x32x32xbf16, #tpu.memory_space<vmem>>, vector<1x1x32x32xbf16>
    %183 = vector.shape_cast %182 : vector<1x1x32x32xbf16> to vector<32x32xbf16>
    %cst_152 = arith.constant dense<0.000000e+00> : vector<16x32xf32>
    %184 = tpu.matmul %181, %183, %cst_152 {dimension_numbers = #tpu.dot_dimension_numbers<[1], [0], [0], [1], [0, 0, 1, 1], [], []>} : vector<16x32xbf16>, vector<32x32xbf16>, vector<16x32xf32> -> vector<16x32xf32>
    %c1_153 = arith.constant 1 : index
    %c0_154 = arith.constant 0 : index
    %185 = vector.load %arg12[%c1_153, %c0_154] : memref<18x32xf32, #tpu.memory_space<vmem>>, vector<16x32xf32>
    %186 = arith.truncf %185 : vector<16x32xf32> to vector<16x32xbf16>
    %c3_155 = arith.constant 3 : index
    %c1_156 = arith.constant 1 : index
    %c0_157 = arith.constant 0 : index
    %c0_158 = arith.constant 0 : index
    %187 = vector.load %arg4[%c3_155, %c1_156, %c0_157, %c0_158] : memref<4x3x32x32xbf16, #tpu.memory_space<vmem>>, vector<1x1x32x32xbf16>
    %188 = vector.shape_cast %187 : vector<1x1x32x32xbf16> to vector<32x32xbf16>
    %cst_159 = arith.constant dense<0.000000e+00> : vector<16x32xf32>
    %189 = tpu.matmul %186, %188, %cst_159 {dimension_numbers = #tpu.dot_dimension_numbers<[1], [0], [0], [1], [0, 0, 1, 1], [], []>} : vector<16x32xbf16>, vector<32x32xbf16>, vector<16x32xf32> -> vector<16x32xf32>
    %190 = arith.addf %184, %189 : vector<16x32xf32>
    %c2_160 = arith.constant 2 : index
    %c0_161 = arith.constant 0 : index
    %191 = vector.load %arg12[%c2_160, %c0_161] : memref<18x32xf32, #tpu.memory_space<vmem>>, vector<16x32xf32>
    %192 = arith.truncf %191 : vector<16x32xf32> to vector<16x32xbf16>
    %c3_162 = arith.constant 3 : index
    %c2_163 = arith.constant 2 : index
    %c0_164 = arith.constant 0 : index
    %c0_165 = arith.constant 0 : index
    %193 = vector.load %arg4[%c3_162, %c2_163, %c0_164, %c0_165] : memref<4x3x32x32xbf16, #tpu.memory_space<vmem>>, vector<1x1x32x32xbf16>
    %194 = vector.shape_cast %193 : vector<1x1x32x32xbf16> to vector<32x32xbf16>
    %cst_166 = arith.constant dense<0.000000e+00> : vector<16x32xf32>
    %195 = tpu.matmul %192, %194, %cst_166 {dimension_numbers = #tpu.dot_dimension_numbers<[1], [0], [0], [1], [0, 0, 1, 1], [], []>} : vector<16x32xbf16>, vector<32x32xbf16>, vector<16x32xf32> -> vector<16x32xf32>
    %196 = arith.addf %190, %195 : vector<16x32xf32>
    %197 = vector.broadcast %179 : vector<1x32xf32> to vector<16x32xf32>
    %198 = arith.addf %196, %197 : vector<16x32xf32>
    %cst_167 = arith.constant dense<0.000000e+00> : vector<16xf32>
    %199 = vector.multi_reduction <add>, %198, %cst_167 [1] : vector<16x32xf32> to vector<16xf32>
    %200 = vector.shape_cast %199 : vector<16xf32> to vector<16x1xf32>
    %cst_168 = arith.constant 3.200000e+01 : f32
    %201 = vector.broadcast %cst_168 : f32 to vector<16x1xf32>
    %202 = arith.divf %200, %201 : vector<16x1xf32>
    %203 = vector.broadcast %202 : vector<16x1xf32> to vector<16x32xf32>
    %204 = arith.subf %198, %203 : vector<16x32xf32>
    %205 = arith.mulf %204, %204 : vector<16x32xf32>
    %cst_169 = arith.constant dense<0.000000e+00> : vector<16xf32>
    %206 = vector.multi_reduction <add>, %205, %cst_169 [1] : vector<16x32xf32> to vector<16xf32>
    %207 = vector.shape_cast %206 : vector<16xf32> to vector<16x1xf32>
    %cst_170 = arith.constant 3.200000e+01 : f32
    %208 = vector.broadcast %cst_170 : f32 to vector<16x1xf32>
    %209 = arith.divf %207, %208 : vector<16x1xf32>
    %cst_171 = arith.constant 9.99999974E-6 : f32
    %210 = vector.broadcast %cst_171 : f32 to vector<16x1xf32>
    %211 = arith.addf %209, %210 : vector<16x1xf32>
    %212 = math.rsqrt %211 : vector<16x1xf32>
    %213 = vector.broadcast %212 : vector<16x1xf32> to vector<16x32xf32>
    %214 = arith.mulf %204, %213 : vector<16x32xf32>
    %c3_172 = arith.constant 3 : index
    %c0_173 = arith.constant 0 : index
    %c0_174 = arith.constant 0 : index
    %215 = vector.load %arg6[%c3_172, %c0_173, %c0_174] : memref<4x1x32xf32, #tpu.memory_space<vmem>>, vector<1x1x32xf32>
    %216 = vector.shape_cast %215 : vector<1x1x32xf32> to vector<1x32xf32>
    %217 = vector.broadcast %216 : vector<1x32xf32> to vector<16x32xf32>
    %218 = arith.mulf %214, %217 : vector<16x32xf32>
    %c3_175 = arith.constant 3 : index
    %c0_176 = arith.constant 0 : index
    %c0_177 = arith.constant 0 : index
    %219 = vector.load %arg7[%c3_175, %c0_176, %c0_177] : memref<4x1x32xf32, #tpu.memory_space<vmem>>, vector<1x1x32xf32>
    %220 = vector.shape_cast %219 : vector<1x1x32xf32> to vector<1x32xf32>
    %221 = vector.broadcast %220 : vector<1x32xf32> to vector<16x32xf32>
    %222 = arith.addf %218, %221 : vector<16x32xf32>
    %223 = arith.addf %174, %222 : vector<16x32xf32>
    %224 = arith.addf %125, %223 : vector<16x32xf32>
    %c1_178 = arith.constant 1 : index
    %c0_179 = arith.constant 0 : index
    %225 = vector.load %arg12[%c1_178, %c0_179] : memref<18x32xf32, #tpu.memory_space<vmem>>, vector<16x32xf32>
    tpu.vector_store %arg12[%c1_178, %c0_179], %224 {strides = array<i32>} : memref<18x32xf32, #tpu.memory_space<vmem>>, vector<16x32xf32>,
    %c0_180 = arith.constant 0 : index
    %c0_181 = arith.constant 0 : index
    %226 = vector.load %arg9[%c0_180, %c0_181] : memref<1x4xf32, #tpu.memory_space<vmem>>, vector<1x4xf32>
    %c0_182 = arith.constant 0 : index
    %c0_183 = arith.constant 0 : index
    %227 = vector.load %arg12[%c0_182, %c0_183] : memref<18x32xf32, #tpu.memory_space<vmem>>, vector<16x32xf32>
    %228 = arith.truncf %227 : vector<16x32xf32> to vector<16x32xbf16>
    %c0_184 = arith.constant 0 : index
    %c0_185 = arith.constant 0 : index
    %c0_186 = arith.constant 0 : index
    %229 = vector.load %arg8[%c0_184, %c0_185, %c0_186] : memref<3x32x4xbf16, #tpu.memory_space<vmem>>, vector<1x32x4xbf16>
    %230 = vector.shape_cast %229 : vector<1x32x4xbf16> to vector<32x4xbf16>
    %cst_187 = arith.constant dense<0.000000e+00> : vector<16x4xf32>
    %231 = tpu.matmul %228, %230, %cst_187 {dimension_numbers = #tpu.dot_dimension_numbers<[1], [0], [0], [1], [0, 0, 1, 1], [], []>} : vector<16x32xbf16>, vector<32x4xbf16>, vector<16x4xf32> -> vector<16x4xf32>
    %c1_188 = arith.constant 1 : index
    %c0_189 = arith.constant 0 : index
    %232 = vector.load %arg12[%c1_188, %c0_189] : memref<18x32xf32, #tpu.memory_space<vmem>>, vector<16x32xf32>
    %233 = arith.truncf %232 : vector<16x32xf32> to vector<16x32xbf16>
    %c1_190 = arith.constant 1 : index
    %c0_191 = arith.constant 0 : index
    %c0_192 = arith.constant 0 : index
    %234 = vector.load %arg8[%c1_190, %c0_191, %c0_192] : memref<3x32x4xbf16, #tpu.memory_space<vmem>>, vector<1x32x4xbf16>
    %235 = vector.shape_cast %234 : vector<1x32x4xbf16> to vector<32x4xbf16>
    %cst_193 = arith.constant dense<0.000000e+00> : vector<16x4xf32>
    %236 = tpu.matmul %233, %235, %cst_193 {dimension_numbers = #tpu.dot_dimension_numbers<[1], [0], [0], [1], [0, 0, 1, 1], [], []>} : vector<16x32xbf16>, vector<32x4xbf16>, vector<16x4xf32> -> vector<16x4xf32>
    %237 = arith.addf %231, %236 : vector<16x4xf32>
    %c2_194 = arith.constant 2 : index
    %c0_195 = arith.constant 0 : index
    %238 = vector.load %arg12[%c2_194, %c0_195] : memref<18x32xf32, #tpu.memory_space<vmem>>, vector<16x32xf32>
    %239 = arith.truncf %238 : vector<16x32xf32> to vector<16x32xbf16>
    %c2_196 = arith.constant 2 : index
    %c0_197 = arith.constant 0 : index
    %c0_198 = arith.constant 0 : index
    %240 = vector.load %arg8[%c2_196, %c0_197, %c0_198] : memref<3x32x4xbf16, #tpu.memory_space<vmem>>, vector<1x32x4xbf16>
    %241 = vector.shape_cast %240 : vector<1x32x4xbf16> to vector<32x4xbf16>
    %cst_199 = arith.constant dense<0.000000e+00> : vector<16x4xf32>
    %242 = tpu.matmul %239, %241, %cst_199 {dimension_numbers = #tpu.dot_dimension_numbers<[1], [0], [0], [1], [0, 0, 1, 1], [], []>} : vector<16x32xbf16>, vector<32x4xbf16>, vector<16x4xf32> -> vector<16x4xf32>
    %243 = arith.addf %237, %242 : vector<16x4xf32>
    %244 = vector.broadcast %226 : vector<1x4xf32> to vector<16x4xf32>
    %245 = arith.addf %243, %244 : vector<16x4xf32>
    %246 = tpu.transpose %245, [1, 0] : vector<16x4xf32> -> vector<4x16xf32>
    %c0_200 = arith.constant 0 : index
    %c0_201 = arith.constant 0 : index
    %c0_202 = arith.constant 0 : index
    %247 = vector.load %arg10[%c0_200, %c0_201, %c0_202] : memref<2x4x16xf32, #tpu.memory_space<vmem>>, vector<1x4x16xf32>
    %248 = vector.shape_cast %247 : vector<1x4x16xf32> to vector<4x16xf32>
    %249 = vector.shape_cast %246 : vector<4x16xf32> to vector<1x4x16xf32>
    tpu.vector_store %arg10[%c0_200, %c0_201, %c0_202], %249 {strides = array<i32>} : memref<2x4x16xf32, #tpu.memory_space<vmem>>, vector<1x4x16xf32>,
    %c1_203 = arith.constant 1 : index
    %c0_204 = arith.constant 0 : index
    %c0_205 = arith.constant 0 : index
    %250 = vector.load %arg1[%c1_203, %c0_204, %c0_205] : memref<2x4x16xf32, #tpu.memory_space<vmem>>, vector<1x4x16xf32>
    %251 = vector.shape_cast %250 : vector<1x4x16xf32> to vector<4x16xf32>
    %252 = tpu.transpose %251, [1, 0] : vector<4x16xf32> -> vector<16x4xf32>
    %c1_206 = arith.constant 1 : index
    %c0_207 = arith.constant 0 : index
    %253 = vector.load %arg11[%c1_206, %c0_207] : memref<18x4xf32, #tpu.memory_space<vmem>>, vector<16x4xf32>
    tpu.vector_store %arg11[%c1_206, %c0_207], %252 {strides = array<i32>} : memref<18x4xf32, #tpu.memory_space<vmem>>, vector<16x4xf32>,
    %c0_208 = arith.constant 0 : index
    %c0_209 = arith.constant 0 : index
    %254 = vector.load %arg3[%c0_208, %c0_209] : memref<1x32xf32, #tpu.memory_space<vmem>>, vector<1x32xf32>
    %c0_210 = arith.constant 0 : index
    %c0_211 = arith.constant 0 : index
    %255 = vector.load %arg11[%c0_210, %c0_211] : memref<18x4xf32, #tpu.memory_space<vmem>>, vector<16x4xf32>
    %256 = arith.truncf %255 : vector<16x4xf32> to vector<16x4xbf16>
    %c0_212 = arith.constant 0 : index
    %c0_213 = arith.constant 0 : index
    %c0_214 = arith.constant 0 : index
    %257 = vector.load %arg2[%c0_212, %c0_213, %c0_214] : memref<3x4x32xbf16, #tpu.memory_space<vmem>>, vector<1x4x32xbf16>
    %258 = vector.shape_cast %257 : vector<1x4x32xbf16> to vector<4x32xbf16>
    %cst_215 = arith.constant dense<0.000000e+00> : vector<16x32xf32>
    %259 = tpu.matmul %256, %258, %cst_215 {dimension_numbers = #tpu.dot_dimension_numbers<[1], [0], [0], [1], [0, 0, 1, 1], [], []>} : vector<16x4xbf16>, vector<4x32xbf16>, vector<16x32xf32> -> vector<16x32xf32>
    %c1_216 = arith.constant 1 : index
    %c0_217 = arith.constant 0 : index
    %260 = vector.load %arg11[%c1_216, %c0_217] : memref<18x4xf32, #tpu.memory_space<vmem>>, vector<16x4xf32>
    %261 = arith.truncf %260 : vector<16x4xf32> to vector<16x4xbf16>
    %c1_218 = arith.constant 1 : index
    %c0_219 = arith.constant 0 : index
    %c0_220 = arith.constant 0 : index
    %262 = vector.load %arg2[%c1_218, %c0_219, %c0_220] : memref<3x4x32xbf16, #tpu.memory_space<vmem>>, vector<1x4x32xbf16>
    %263 = vector.shape_cast %262 : vector<1x4x32xbf16> to vector<4x32xbf16>
    %cst_221 = arith.constant dense<0.000000e+00> : vector<16x32xf32>
    %264 = tpu.matmul %261, %263, %cst_221 {dimension_numbers = #tpu.dot_dimension_numbers<[1], [0], [0], [1], [0, 0, 1, 1], [], []>} : vector<16x4xbf16>, vector<4x32xbf16>, vector<16x32xf32> -> vector<16x32xf32>
    %265 = arith.addf %259, %264 : vector<16x32xf32>
    %c2_222 = arith.constant 2 : index
    %c0_223 = arith.constant 0 : index
    %266 = vector.load %arg11[%c2_222, %c0_223] : memref<18x4xf32, #tpu.memory_space<vmem>>, vector<16x4xf32>
    %267 = arith.truncf %266 : vector<16x4xf32> to vector<16x4xbf16>
    %c2_224 = arith.constant 2 : index
    %c0_225 = arith.constant 0 : index
    %c0_226 = arith.constant 0 : index
    %268 = vector.load %arg2[%c2_224, %c0_225, %c0_226] : memref<3x4x32xbf16, #tpu.memory_space<vmem>>, vector<1x4x32xbf16>
    %269 = vector.shape_cast %268 : vector<1x4x32xbf16> to vector<4x32xbf16>
    %cst_227 = arith.constant dense<0.000000e+00> : vector<16x32xf32>
    %270 = tpu.matmul %267, %269, %cst_227 {dimension_numbers = #tpu.dot_dimension_numbers<[1], [0], [0], [1], [0, 0, 1, 1], [], []>} : vector<16x4xbf16>, vector<4x32xbf16>, vector<16x32xf32> -> vector<16x32xf32>
    %271 = arith.addf %265, %270 : vector<16x32xf32>
    %272 = vector.broadcast %254 : vector<1x32xf32> to vector<16x32xf32>
    %273 = arith.addf %271, %272 : vector<16x32xf32>
    %cst_228 = arith.constant 0.000000e+00 : f32
    %274 = vector.broadcast %cst_228 : f32 to vector<16x32xf32>
    %275 = arith.maximumf %273, %274 : vector<16x32xf32>
    %c1_229 = arith.constant 1 : index
    %c0_230 = arith.constant 0 : index
    %276 = vector.load %arg12[%c1_229, %c0_230] : memref<18x32xf32, #tpu.memory_space<vmem>>, vector<16x32xf32>
    tpu.vector_store %arg12[%c1_229, %c0_230], %275 {strides = array<i32>} : memref<18x32xf32, #tpu.memory_space<vmem>>, vector<16x32xf32>,
    %c0_231 = arith.constant 0 : index
    %c0_232 = arith.constant 0 : index
    %c0_233 = arith.constant 0 : index
    %277 = vector.load %arg5[%c0_231, %c0_232, %c0_233] : memref<4x1x32xf32, #tpu.memory_space<vmem>>, vector<1x1x32xf32>
    %278 = vector.shape_cast %277 : vector<1x1x32xf32> to vector<1x32xf32>
    %c0_234 = arith.constant 0 : index
    %c0_235 = arith.constant 0 : index
    %279 = vector.load %arg12[%c0_234, %c0_235] : memref<18x32xf32, #tpu.memory_space<vmem>>, vector<16x32xf32>
    %280 = arith.truncf %279 : vector<16x32xf32> to vector<16x32xbf16>
    %c0_236 = arith.constant 0 : index
    %c0_237 = arith.constant 0 : index
    %c0_238 = arith.constant 0 : index
    %c0_239 = arith.constant 0 : index
    %281 = vector.load %arg4[%c0_236, %c0_237, %c0_238, %c0_239] : memref<4x3x32x32xbf16, #tpu.memory_space<vmem>>, vector<1x1x32x32xbf16>
    %282 = vector.shape_cast %281 : vector<1x1x32x32xbf16> to vector<32x32xbf16>
    %cst_240 = arith.constant dense<0.000000e+00> : vector<16x32xf32>
    %283 = tpu.matmul %280, %282, %cst_240 {dimension_numbers = #tpu.dot_dimension_numbers<[1], [0], [0], [1], [0, 0, 1, 1], [], []>} : vector<16x32xbf16>, vector<32x32xbf16>, vector<16x32xf32> -> vector<16x32xf32>
    %c1_241 = arith.constant 1 : index
    %c0_242 = arith.constant 0 : index
    %284 = vector.load %arg12[%c1_241, %c0_242] : memref<18x32xf32, #tpu.memory_space<vmem>>, vector<16x32xf32>
    %285 = arith.truncf %284 : vector<16x32xf32> to vector<16x32xbf16>
    %c0_243 = arith.constant 0 : index
    %c1_244 = arith.constant 1 : index
    %c0_245 = arith.constant 0 : index
    %c0_246 = arith.constant 0 : index
    %286 = vector.load %arg4[%c0_243, %c1_244, %c0_245, %c0_246] : memref<4x3x32x32xbf16, #tpu.memory_space<vmem>>, vector<1x1x32x32xbf16>
    %287 = vector.shape_cast %286 : vector<1x1x32x32xbf16> to vector<32x32xbf16>
    %cst_247 = arith.constant dense<0.000000e+00> : vector<16x32xf32>
    %288 = tpu.matmul %285, %287, %cst_247 {dimension_numbers = #tpu.dot_dimension_numbers<[1], [0], [0], [1], [0, 0, 1, 1], [], []>} : vector<16x32xbf16>, vector<32x32xbf16>, vector<16x32xf32> -> vector<16x32xf32>
    %289 = arith.addf %283, %288 : vector<16x32xf32>
    %c2_248 = arith.constant 2 : index
    %c0_249 = arith.constant 0 : index
    %290 = vector.load %arg12[%c2_248, %c0_249] : memref<18x32xf32, #tpu.memory_space<vmem>>, vector<16x32xf32>
    %291 = arith.truncf %290 : vector<16x32xf32> to vector<16x32xbf16>
    %c0_250 = arith.constant 0 : index
    %c2_251 = arith.constant 2 : index
    %c0_252 = arith.constant 0 : index
    %c0_253 = arith.constant 0 : index
    %292 = vector.load %arg4[%c0_250, %c2_251, %c0_252, %c0_253] : memref<4x3x32x32xbf16, #tpu.memory_space<vmem>>, vector<1x1x32x32xbf16>
    %293 = vector.shape_cast %292 : vector<1x1x32x32xbf16> to vector<32x32xbf16>
    %cst_254 = arith.constant dense<0.000000e+00> : vector<16x32xf32>
    %294 = tpu.matmul %291, %293, %cst_254 {dimension_numbers = #tpu.dot_dimension_numbers<[1], [0], [0], [1], [0, 0, 1, 1], [], []>} : vector<16x32xbf16>, vector<32x32xbf16>, vector<16x32xf32> -> vector<16x32xf32>
    %295 = arith.addf %289, %294 : vector<16x32xf32>
    %296 = vector.broadcast %278 : vector<1x32xf32> to vector<16x32xf32>
    %297 = arith.addf %295, %296 : vector<16x32xf32>
    %cst_255 = arith.constant dense<0.000000e+00> : vector<16xf32>
    %298 = vector.multi_reduction <add>, %297, %cst_255 [1] : vector<16x32xf32> to vector<16xf32>
    %299 = vector.shape_cast %298 : vector<16xf32> to vector<16x1xf32>
    %cst_256 = arith.constant 3.200000e+01 : f32
    %300 = vector.broadcast %cst_256 : f32 to vector<16x1xf32>
    %301 = arith.divf %299, %300 : vector<16x1xf32>
    %302 = vector.broadcast %301 : vector<16x1xf32> to vector<16x32xf32>
    %303 = arith.subf %297, %302 : vector<16x32xf32>
    %304 = arith.mulf %303, %303 : vector<16x32xf32>
    %cst_257 = arith.constant dense<0.000000e+00> : vector<16xf32>
    %305 = vector.multi_reduction <add>, %304, %cst_257 [1] : vector<16x32xf32> to vector<16xf32>
    %306 = vector.shape_cast %305 : vector<16xf32> to vector<16x1xf32>
    %cst_258 = arith.constant 3.200000e+01 : f32
    %307 = vector.broadcast %cst_258 : f32 to vector<16x1xf32>
    %308 = arith.divf %306, %307 : vector<16x1xf32>
    %cst_259 = arith.constant 9.99999974E-6 : f32
    %309 = vector.broadcast %cst_259 : f32 to vector<16x1xf32>
    %310 = arith.addf %308, %309 : vector<16x1xf32>
    %311 = math.rsqrt %310 : vector<16x1xf32>
    %312 = vector.broadcast %311 : vector<16x1xf32> to vector<16x32xf32>
    %313 = arith.mulf %303, %312 : vector<16x32xf32>
    %c0_260 = arith.constant 0 : index
    %c0_261 = arith.constant 0 : index
    %c0_262 = arith.constant 0 : index
    %314 = vector.load %arg6[%c0_260, %c0_261, %c0_262] : memref<4x1x32xf32, #tpu.memory_space<vmem>>, vector<1x1x32xf32>
    %315 = vector.shape_cast %314 : vector<1x1x32xf32> to vector<1x32xf32>
    %316 = vector.broadcast %315 : vector<1x32xf32> to vector<16x32xf32>
    %317 = arith.mulf %313, %316 : vector<16x32xf32>
    %c0_263 = arith.constant 0 : index
    %c0_264 = arith.constant 0 : index
    %c0_265 = arith.constant 0 : index
    %318 = vector.load %arg7[%c0_263, %c0_264, %c0_265] : memref<4x1x32xf32, #tpu.memory_space<vmem>>, vector<1x1x32xf32>
    %319 = vector.shape_cast %318 : vector<1x1x32xf32> to vector<1x32xf32>
    %320 = vector.broadcast %319 : vector<1x32xf32> to vector<16x32xf32>
    %321 = arith.addf %317, %320 : vector<16x32xf32>
    %322 = arith.addf %273, %321 : vector<16x32xf32>
    %cst_266 = arith.constant 0.000000e+00 : f32
    %323 = vector.broadcast %cst_266 : f32 to vector<16x32xf32>
    %324 = arith.maximumf %322, %323 : vector<16x32xf32>
    %c1_267 = arith.constant 1 : index
    %c0_268 = arith.constant 0 : index
    %325 = vector.load %arg12[%c1_267, %c0_268] : memref<18x32xf32, #tpu.memory_space<vmem>>, vector<16x32xf32>
    tpu.vector_store %arg12[%c1_267, %c0_268], %324 {strides = array<i32>} : memref<18x32xf32, #tpu.memory_space<vmem>>, vector<16x32xf32>,
    %c1_269 = arith.constant 1 : index
    %c0_270 = arith.constant 0 : index
    %c0_271 = arith.constant 0 : index
    %326 = vector.load %arg5[%c1_269, %c0_270, %c0_271] : memref<4x1x32xf32, #tpu.memory_space<vmem>>, vector<1x1x32xf32>
    %327 = vector.shape_cast %326 : vector<1x1x32xf32> to vector<1x32xf32>
    %c0_272 = arith.constant 0 : index
    %c0_273 = arith.constant 0 : index
    %328 = vector.load %arg12[%c0_272, %c0_273] : memref<18x32xf32, #tpu.memory_space<vmem>>, vector<16x32xf32>
    %329 = arith.truncf %328 : vector<16x32xf32> to vector<16x32xbf16>
    %c1_274 = arith.constant 1 : index
    %c0_275 = arith.constant 0 : index
    %c0_276 = arith.constant 0 : index
    %c0_277 = arith.constant 0 : index
    %330 = vector.load %arg4[%c1_274, %c0_275, %c0_276, %c0_277] : memref<4x3x32x32xbf16, #tpu.memory_space<vmem>>, vector<1x1x32x32xbf16>
    %331 = vector.shape_cast %330 : vector<1x1x32x32xbf16> to vector<32x32xbf16>
    %cst_278 = arith.constant dense<0.000000e+00> : vector<16x32xf32>
    %332 = tpu.matmul %329, %331, %cst_278 {dimension_numbers = #tpu.dot_dimension_numbers<[1], [0], [0], [1], [0, 0, 1, 1], [], []>} : vector<16x32xbf16>, vector<32x32xbf16>, vector<16x32xf32> -> vector<16x32xf32>
    %c1_279 = arith.constant 1 : index
    %c0_280 = arith.constant 0 : index
    %333 = vector.load %arg12[%c1_279, %c0_280] : memref<18x32xf32, #tpu.memory_space<vmem>>, vector<16x32xf32>
    %334 = arith.truncf %333 : vector<16x32xf32> to vector<16x32xbf16>
    %c1_281 = arith.constant 1 : index
    %c1_282 = arith.constant 1 : index
    %c0_283 = arith.constant 0 : index
    %c0_284 = arith.constant 0 : index
    %335 = vector.load %arg4[%c1_281, %c1_282, %c0_283, %c0_284] : memref<4x3x32x32xbf16, #tpu.memory_space<vmem>>, vector<1x1x32x32xbf16>
    %336 = vector.shape_cast %335 : vector<1x1x32x32xbf16> to vector<32x32xbf16>
    %cst_285 = arith.constant dense<0.000000e+00> : vector<16x32xf32>
    %337 = tpu.matmul %334, %336, %cst_285 {dimension_numbers = #tpu.dot_dimension_numbers<[1], [0], [0], [1], [0, 0, 1, 1], [], []>} : vector<16x32xbf16>, vector<32x32xbf16>, vector<16x32xf32> -> vector<16x32xf32>
    %338 = arith.addf %332, %337 : vector<16x32xf32>
    %c2_286 = arith.constant 2 : index
    %c0_287 = arith.constant 0 : index
    %339 = vector.load %arg12[%c2_286, %c0_287] : memref<18x32xf32, #tpu.memory_space<vmem>>, vector<16x32xf32>
    %340 = arith.truncf %339 : vector<16x32xf32> to vector<16x32xbf16>
    %c1_288 = arith.constant 1 : index
    %c2_289 = arith.constant 2 : index
    %c0_290 = arith.constant 0 : index
    %c0_291 = arith.constant 0 : index
    %341 = vector.load %arg4[%c1_288, %c2_289, %c0_290, %c0_291] : memref<4x3x32x32xbf16, #tpu.memory_space<vmem>>, vector<1x1x32x32xbf16>
    %342 = vector.shape_cast %341 : vector<1x1x32x32xbf16> to vector<32x32xbf16>
    %cst_292 = arith.constant dense<0.000000e+00> : vector<16x32xf32>
    %343 = tpu.matmul %340, %342, %cst_292 {dimension_numbers = #tpu.dot_dimension_numbers<[1], [0], [0], [1], [0, 0, 1, 1], [], []>} : vector<16x32xbf16>, vector<32x32xbf16>, vector<16x32xf32> -> vector<16x32xf32>
    %344 = arith.addf %338, %343 : vector<16x32xf32>
    %345 = vector.broadcast %327 : vector<1x32xf32> to vector<16x32xf32>
    %346 = arith.addf %344, %345 : vector<16x32xf32>
    %cst_293 = arith.constant dense<0.000000e+00> : vector<16xf32>
    %347 = vector.multi_reduction <add>, %346, %cst_293 [1] : vector<16x32xf32> to vector<16xf32>
    %348 = vector.shape_cast %347 : vector<16xf32> to vector<16x1xf32>
    %cst_294 = arith.constant 3.200000e+01 : f32
    %349 = vector.broadcast %cst_294 : f32 to vector<16x1xf32>
    %350 = arith.divf %348, %349 : vector<16x1xf32>
    %351 = vector.broadcast %350 : vector<16x1xf32> to vector<16x32xf32>
    %352 = arith.subf %346, %351 : vector<16x32xf32>
    %353 = arith.mulf %352, %352 : vector<16x32xf32>
    %cst_295 = arith.constant dense<0.000000e+00> : vector<16xf32>
    %354 = vector.multi_reduction <add>, %353, %cst_295 [1] : vector<16x32xf32> to vector<16xf32>
    %355 = vector.shape_cast %354 : vector<16xf32> to vector<16x1xf32>
    %cst_296 = arith.constant 3.200000e+01 : f32
    %356 = vector.broadcast %cst_296 : f32 to vector<16x1xf32>
    %357 = arith.divf %355, %356 : vector<16x1xf32>
    %cst_297 = arith.constant 9.99999974E-6 : f32
    %358 = vector.broadcast %cst_297 : f32 to vector<16x1xf32>
    %359 = arith.addf %357, %358 : vector<16x1xf32>
    %360 = math.rsqrt %359 : vector<16x1xf32>
    %361 = vector.broadcast %360 : vector<16x1xf32> to vector<16x32xf32>
    %362 = arith.mulf %352, %361 : vector<16x32xf32>
    %c1_298 = arith.constant 1 : index
    %c0_299 = arith.constant 0 : index
    %c0_300 = arith.constant 0 : index
    %363 = vector.load %arg6[%c1_298, %c0_299, %c0_300] : memref<4x1x32xf32, #tpu.memory_space<vmem>>, vector<1x1x32xf32>
    %364 = vector.shape_cast %363 : vector<1x1x32xf32> to vector<1x32xf32>
    %365 = vector.broadcast %364 : vector<1x32xf32> to vector<16x32xf32>
    %366 = arith.mulf %362, %365 : vector<16x32xf32>
    %c1_301 = arith.constant 1 : index
    %c0_302 = arith.constant 0 : index
    %c0_303 = arith.constant 0 : index
    %367 = vector.load %arg7[%c1_301, %c0_302, %c0_303] : memref<4x1x32xf32, #tpu.memory_space<vmem>>, vector<1x1x32xf32>
    %368 = vector.shape_cast %367 : vector<1x1x32xf32> to vector<1x32xf32>
    %369 = vector.broadcast %368 : vector<1x32xf32> to vector<16x32xf32>
    %370 = arith.addf %366, %369 : vector<16x32xf32>
    %371 = arith.addf %322, %370 : vector<16x32xf32>
    %cst_304 = arith.constant 0.000000e+00 : f32
    %372 = vector.broadcast %cst_304 : f32 to vector<16x32xf32>
    %373 = arith.maximumf %273, %372 : vector<16x32xf32>
    %c1_305 = arith.constant 1 : index
    %c0_306 = arith.constant 0 : index
    %374 = vector.load %arg12[%c1_305, %c0_306] : memref<18x32xf32, #tpu.memory_space<vmem>>, vector<16x32xf32>
    tpu.vector_store %arg12[%c1_305, %c0_306], %373 {strides = array<i32>} : memref<18x32xf32, #tpu.memory_space<vmem>>, vector<16x32xf32>,
    %c2_307 = arith.constant 2 : index
    %c0_308 = arith.constant 0 : index
    %c0_309 = arith.constant 0 : index
    %375 = vector.load %arg5[%c2_307, %c0_308, %c0_309] : memref<4x1x32xf32, #tpu.memory_space<vmem>>, vector<1x1x32xf32>
    %376 = vector.shape_cast %375 : vector<1x1x32xf32> to vector<1x32xf32>
    %c0_310 = arith.constant 0 : index
    %c0_311 = arith.constant 0 : index
    %377 = vector.load %arg12[%c0_310, %c0_311] : memref<18x32xf32, #tpu.memory_space<vmem>>, vector<16x32xf32>
    %378 = arith.truncf %377 : vector<16x32xf32> to vector<16x32xbf16>
    %c2_312 = arith.constant 2 : index
    %c0_313 = arith.constant 0 : index
    %c0_314 = arith.constant 0 : index
    %c0_315 = arith.constant 0 : index
    %379 = vector.load %arg4[%c2_312, %c0_313, %c0_314, %c0_315] : memref<4x3x32x32xbf16, #tpu.memory_space<vmem>>, vector<1x1x32x32xbf16>
    %380 = vector.shape_cast %379 : vector<1x1x32x32xbf16> to vector<32x32xbf16>
    %cst_316 = arith.constant dense<0.000000e+00> : vector<16x32xf32>
    %381 = tpu.matmul %378, %380, %cst_316 {dimension_numbers = #tpu.dot_dimension_numbers<[1], [0], [0], [1], [0, 0, 1, 1], [], []>} : vector<16x32xbf16>, vector<32x32xbf16>, vector<16x32xf32> -> vector<16x32xf32>
    %c1_317 = arith.constant 1 : index
    %c0_318 = arith.constant 0 : index
    %382 = vector.load %arg12[%c1_317, %c0_318] : memref<18x32xf32, #tpu.memory_space<vmem>>, vector<16x32xf32>
    %383 = arith.truncf %382 : vector<16x32xf32> to vector<16x32xbf16>
    %c2_319 = arith.constant 2 : index
    %c1_320 = arith.constant 1 : index
    %c0_321 = arith.constant 0 : index
    %c0_322 = arith.constant 0 : index
    %384 = vector.load %arg4[%c2_319, %c1_320, %c0_321, %c0_322] : memref<4x3x32x32xbf16, #tpu.memory_space<vmem>>, vector<1x1x32x32xbf16>
    %385 = vector.shape_cast %384 : vector<1x1x32x32xbf16> to vector<32x32xbf16>
    %cst_323 = arith.constant dense<0.000000e+00> : vector<16x32xf32>
    %386 = tpu.matmul %383, %385, %cst_323 {dimension_numbers = #tpu.dot_dimension_numbers<[1], [0], [0], [1], [0, 0, 1, 1], [], []>} : vector<16x32xbf16>, vector<32x32xbf16>, vector<16x32xf32> -> vector<16x32xf32>
    %387 = arith.addf %381, %386 : vector<16x32xf32>
    %c2_324 = arith.constant 2 : index
    %c0_325 = arith.constant 0 : index
    %388 = vector.load %arg12[%c2_324, %c0_325] : memref<18x32xf32, #tpu.memory_space<vmem>>, vector<16x32xf32>
    %389 = arith.truncf %388 : vector<16x32xf32> to vector<16x32xbf16>
    %c2_326 = arith.constant 2 : index
    %c2_327 = arith.constant 2 : index
    %c0_328 = arith.constant 0 : index
    %c0_329 = arith.constant 0 : index
    %390 = vector.load %arg4[%c2_326, %c2_327, %c0_328, %c0_329] : memref<4x3x32x32xbf16, #tpu.memory_space<vmem>>, vector<1x1x32x32xbf16>
    %391 = vector.shape_cast %390 : vector<1x1x32x32xbf16> to vector<32x32xbf16>
    %cst_330 = arith.constant dense<0.000000e+00> : vector<16x32xf32>
    %392 = tpu.matmul %389, %391, %cst_330 {dimension_numbers = #tpu.dot_dimension_numbers<[1], [0], [0], [1], [0, 0, 1, 1], [], []>} : vector<16x32xbf16>, vector<32x32xbf16>, vector<16x32xf32> -> vector<16x32xf32>
    %393 = arith.addf %387, %392 : vector<16x32xf32>
    %394 = vector.broadcast %376 : vector<1x32xf32> to vector<16x32xf32>
    %395 = arith.addf %393, %394 : vector<16x32xf32>
    %cst_331 = arith.constant dense<0.000000e+00> : vector<16xf32>
    %396 = vector.multi_reduction <add>, %395, %cst_331 [1] : vector<16x32xf32> to vector<16xf32>
    %397 = vector.shape_cast %396 : vector<16xf32> to vector<16x1xf32>
    %cst_332 = arith.constant 3.200000e+01 : f32
    %398 = vector.broadcast %cst_332 : f32 to vector<16x1xf32>
    %399 = arith.divf %397, %398 : vector<16x1xf32>
    %400 = vector.broadcast %399 : vector<16x1xf32> to vector<16x32xf32>
    %401 = arith.subf %395, %400 : vector<16x32xf32>
    %402 = arith.mulf %401, %401 : vector<16x32xf32>
    %cst_333 = arith.constant dense<0.000000e+00> : vector<16xf32>
    %403 = vector.multi_reduction <add>, %402, %cst_333 [1] : vector<16x32xf32> to vector<16xf32>
    %404 = vector.shape_cast %403 : vector<16xf32> to vector<16x1xf32>
    %cst_334 = arith.constant 3.200000e+01 : f32
    %405 = vector.broadcast %cst_334 : f32 to vector<16x1xf32>
    %406 = arith.divf %404, %405 : vector<16x1xf32>
    %cst_335 = arith.constant 9.99999974E-6 : f32
    %407 = vector.broadcast %cst_335 : f32 to vector<16x1xf32>
    %408 = arith.addf %406, %407 : vector<16x1xf32>
    %409 = math.rsqrt %408 : vector<16x1xf32>
    %410 = vector.broadcast %409 : vector<16x1xf32> to vector<16x32xf32>
    %411 = arith.mulf %401, %410 : vector<16x32xf32>
    %c2_336 = arith.constant 2 : index
    %c0_337 = arith.constant 0 : index
    %c0_338 = arith.constant 0 : index
    %412 = vector.load %arg6[%c2_336, %c0_337, %c0_338] : memref<4x1x32xf32, #tpu.memory_space<vmem>>, vector<1x1x32xf32>
    %413 = vector.shape_cast %412 : vector<1x1x32xf32> to vector<1x32xf32>
    %414 = vector.broadcast %413 : vector<1x32xf32> to vector<16x32xf32>
    %415 = arith.mulf %411, %414 : vector<16x32xf32>
    %c2_339 = arith.constant 2 : index
    %c0_340 = arith.constant 0 : index
    %c0_341 = arith.constant 0 : index
    %416 = vector.load %arg7[%c2_339, %c0_340, %c0_341] : memref<4x1x32xf32, #tpu.memory_space<vmem>>, vector<1x1x32xf32>
    %417 = vector.shape_cast %416 : vector<1x1x32xf32> to vector<1x32xf32>
    %418 = vector.broadcast %417 : vector<1x32xf32> to vector<16x32xf32>
    %419 = arith.addf %415, %418 : vector<16x32xf32>
    %420 = arith.addf %273, %419 : vector<16x32xf32>
    %cst_342 = arith.constant 0.000000e+00 : f32
    %421 = vector.broadcast %cst_342 : f32 to vector<16x32xf32>
    %422 = arith.maximumf %420, %421 : vector<16x32xf32>
    %c1_343 = arith.constant 1 : index
    %c0_344 = arith.constant 0 : index
    %423 = vector.load %arg12[%c1_343, %c0_344] : memref<18x32xf32, #tpu.memory_space<vmem>>, vector<16x32xf32>
    tpu.vector_store %arg12[%c1_343, %c0_344], %422 {strides = array<i32>} : memref<18x32xf32, #tpu.memory_space<vmem>>, vector<16x32xf32>,
    %c3_345 = arith.constant 3 : index
    %c0_346 = arith.constant 0 : index
    %c0_347 = arith.constant 0 : index
    %424 = vector.load %arg5[%c3_345, %c0_346, %c0_347] : memref<4x1x32xf32, #tpu.memory_space<vmem>>, vector<1x1x32xf32>
    %425 = vector.shape_cast %424 : vector<1x1x32xf32> to vector<1x32xf32>
    %c0_348 = arith.constant 0 : index
    %c0_349 = arith.constant 0 : index
    %426 = vector.load %arg12[%c0_348, %c0_349] : memref<18x32xf32, #tpu.memory_space<vmem>>, vector<16x32xf32>
    %427 = arith.truncf %426 : vector<16x32xf32> to vector<16x32xbf16>
    %c3_350 = arith.constant 3 : index
    %c0_351 = arith.constant 0 : index
    %c0_352 = arith.constant 0 : index
    %c0_353 = arith.constant 0 : index
    %428 = vector.load %arg4[%c3_350, %c0_351, %c0_352, %c0_353] : memref<4x3x32x32xbf16, #tpu.memory_space<vmem>>, vector<1x1x32x32xbf16>
    %429 = vector.shape_cast %428 : vector<1x1x32x32xbf16> to vector<32x32xbf16>
    %cst_354 = arith.constant dense<0.000000e+00> : vector<16x32xf32>
    %430 = tpu.matmul %427, %429, %cst_354 {dimension_numbers = #tpu.dot_dimension_numbers<[1], [0], [0], [1], [0, 0, 1, 1], [], []>} : vector<16x32xbf16>, vector<32x32xbf16>, vector<16x32xf32> -> vector<16x32xf32>
    %c1_355 = arith.constant 1 : index
    %c0_356 = arith.constant 0 : index
    %431 = vector.load %arg12[%c1_355, %c0_356] : memref<18x32xf32, #tpu.memory_space<vmem>>, vector<16x32xf32>
    %432 = arith.truncf %431 : vector<16x32xf32> to vector<16x32xbf16>
    %c3_357 = arith.constant 3 : index
    %c1_358 = arith.constant 1 : index
    %c0_359 = arith.constant 0 : index
    %c0_360 = arith.constant 0 : index
    %433 = vector.load %arg4[%c3_357, %c1_358, %c0_359, %c0_360] : memref<4x3x32x32xbf16, #tpu.memory_space<vmem>>, vector<1x1x32x32xbf16>
    %434 = vector.shape_cast %433 : vector<1x1x32x32xbf16> to vector<32x32xbf16>
    %cst_361 = arith.constant dense<0.000000e+00> : vector<16x32xf32>
    %435 = tpu.matmul %432, %434, %cst_361 {dimension_numbers = #tpu.dot_dimension_numbers<[1], [0], [0], [1], [0, 0, 1, 1], [], []>} : vector<16x32xbf16>, vector<32x32xbf16>, vector<16x32xf32> -> vector<16x32xf32>
    %436 = arith.addf %430, %435 : vector<16x32xf32>
    %c2_362 = arith.constant 2 : index
    %c0_363 = arith.constant 0 : index
    %437 = vector.load %arg12[%c2_362, %c0_363] : memref<18x32xf32, #tpu.memory_space<vmem>>, vector<16x32xf32>
    %438 = arith.truncf %437 : vector<16x32xf32> to vector<16x32xbf16>
    %c3_364 = arith.constant 3 : index
    %c2_365 = arith.constant 2 : index
    %c0_366 = arith.constant 0 : index
    %c0_367 = arith.constant 0 : index
    %439 = vector.load %arg4[%c3_364, %c2_365, %c0_366, %c0_367] : memref<4x3x32x32xbf16, #tpu.memory_space<vmem>>, vector<1x1x32x32xbf16>
    %440 = vector.shape_cast %439 : vector<1x1x32x32xbf16> to vector<32x32xbf16>
    %cst_368 = arith.constant dense<0.000000e+00> : vector<16x32xf32>
    %441 = tpu.matmul %438, %440, %cst_368 {dimension_numbers = #tpu.dot_dimension_numbers<[1], [0], [0], [1], [0, 0, 1, 1], [], []>} : vector<16x32xbf16>, vector<32x32xbf16>, vector<16x32xf32> -> vector<16x32xf32>
    %442 = arith.addf %436, %441 : vector<16x32xf32>
    %443 = vector.broadcast %425 : vector<1x32xf32> to vector<16x32xf32>
    %444 = arith.addf %442, %443 : vector<16x32xf32>
    %cst_369 = arith.constant dense<0.000000e+00> : vector<16xf32>
    %445 = vector.multi_reduction <add>, %444, %cst_369 [1] : vector<16x32xf32> to vector<16xf32>
    %446 = vector.shape_cast %445 : vector<16xf32> to vector<16x1xf32>
    %cst_370 = arith.constant 3.200000e+01 : f32
    %447 = vector.broadcast %cst_370 : f32 to vector<16x1xf32>
    %448 = arith.divf %446, %447 : vector<16x1xf32>
    %449 = vector.broadcast %448 : vector<16x1xf32> to vector<16x32xf32>
    %450 = arith.subf %444, %449 : vector<16x32xf32>
    %451 = arith.mulf %450, %450 : vector<16x32xf32>
    %cst_371 = arith.constant dense<0.000000e+00> : vector<16xf32>
    %452 = vector.multi_reduction <add>, %451, %cst_371 [1] : vector<16x32xf32> to vector<16xf32>
    %453 = vector.shape_cast %452 : vector<16xf32> to vector<16x1xf32>
    %cst_372 = arith.constant 3.200000e+01 : f32
    %454 = vector.broadcast %cst_372 : f32 to vector<16x1xf32>
    %455 = arith.divf %453, %454 : vector<16x1xf32>
    %cst_373 = arith.constant 9.99999974E-6 : f32
    %456 = vector.broadcast %cst_373 : f32 to vector<16x1xf32>
    %457 = arith.addf %455, %456 : vector<16x1xf32>
    %458 = math.rsqrt %457 : vector<16x1xf32>
    %459 = vector.broadcast %458 : vector<16x1xf32> to vector<16x32xf32>
    %460 = arith.mulf %450, %459 : vector<16x32xf32>
    %c3_374 = arith.constant 3 : index
    %c0_375 = arith.constant 0 : index
    %c0_376 = arith.constant 0 : index
    %461 = vector.load %arg6[%c3_374, %c0_375, %c0_376] : memref<4x1x32xf32, #tpu.memory_space<vmem>>, vector<1x1x32xf32>
    %462 = vector.shape_cast %461 : vector<1x1x32xf32> to vector<1x32xf32>
    %463 = vector.broadcast %462 : vector<1x32xf32> to vector<16x32xf32>
    %464 = arith.mulf %460, %463 : vector<16x32xf32>
    %c3_377 = arith.constant 3 : index
    %c0_378 = arith.constant 0 : index
    %c0_379 = arith.constant 0 : index
    %465 = vector.load %arg7[%c3_377, %c0_378, %c0_379] : memref<4x1x32xf32, #tpu.memory_space<vmem>>, vector<1x1x32xf32>
    %466 = vector.shape_cast %465 : vector<1x1x32xf32> to vector<1x32xf32>
    %467 = vector.broadcast %466 : vector<1x32xf32> to vector<16x32xf32>
    %468 = arith.addf %464, %467 : vector<16x32xf32>
    %469 = arith.addf %420, %468 : vector<16x32xf32>
    %470 = arith.addf %371, %469 : vector<16x32xf32>
    %c1_380 = arith.constant 1 : index
    %c0_381 = arith.constant 0 : index
    %471 = vector.load %arg12[%c1_380, %c0_381] : memref<18x32xf32, #tpu.memory_space<vmem>>, vector<16x32xf32>
    tpu.vector_store %arg12[%c1_380, %c0_381], %470 {strides = array<i32>} : memref<18x32xf32, #tpu.memory_space<vmem>>, vector<16x32xf32>,
    %c0_382 = arith.constant 0 : index
    %c0_383 = arith.constant 0 : index
    %472 = vector.load %arg9[%c0_382, %c0_383] : memref<1x4xf32, #tpu.memory_space<vmem>>, vector<1x4xf32>
    %c0_384 = arith.constant 0 : index
    %c0_385 = arith.constant 0 : index
    %473 = vector.load %arg12[%c0_384, %c0_385] : memref<18x32xf32, #tpu.memory_space<vmem>>, vector<16x32xf32>
    %474 = arith.truncf %473 : vector<16x32xf32> to vector<16x32xbf16>
    %c0_386 = arith.constant 0 : index
    %c0_387 = arith.constant 0 : index
    %c0_388 = arith.constant 0 : index
    %475 = vector.load %arg8[%c0_386, %c0_387, %c0_388] : memref<3x32x4xbf16, #tpu.memory_space<vmem>>, vector<1x32x4xbf16>
    %476 = vector.shape_cast %475 : vector<1x32x4xbf16> to vector<32x4xbf16>
    %cst_389 = arith.constant dense<0.000000e+00> : vector<16x4xf32>
    %477 = tpu.matmul %474, %476, %cst_389 {dimension_numbers = #tpu.dot_dimension_numbers<[1], [0], [0], [1], [0, 0, 1, 1], [], []>} : vector<16x32xbf16>, vector<32x4xbf16>, vector<16x4xf32> -> vector<16x4xf32>
    %c1_390 = arith.constant 1 : index
    %c0_391 = arith.constant 0 : index
    %478 = vector.load %arg12[%c1_390, %c0_391] : memref<18x32xf32, #tpu.memory_space<vmem>>, vector<16x32xf32>
    %479 = arith.truncf %478 : vector<16x32xf32> to vector<16x32xbf16>
    %c1_392 = arith.constant 1 : index
    %c0_393 = arith.constant 0 : index
    %c0_394 = arith.constant 0 : index
    %480 = vector.load %arg8[%c1_392, %c0_393, %c0_394] : memref<3x32x4xbf16, #tpu.memory_space<vmem>>, vector<1x32x4xbf16>
    %481 = vector.shape_cast %480 : vector<1x32x4xbf16> to vector<32x4xbf16>
    %cst_395 = arith.constant dense<0.000000e+00> : vector<16x4xf32>
    %482 = tpu.matmul %479, %481, %cst_395 {dimension_numbers = #tpu.dot_dimension_numbers<[1], [0], [0], [1], [0, 0, 1, 1], [], []>} : vector<16x32xbf16>, vector<32x4xbf16>, vector<16x4xf32> -> vector<16x4xf32>
    %483 = arith.addf %477, %482 : vector<16x4xf32>
    %c2_396 = arith.constant 2 : index
    %c0_397 = arith.constant 0 : index
    %484 = vector.load %arg12[%c2_396, %c0_397] : memref<18x32xf32, #tpu.memory_space<vmem>>, vector<16x32xf32>
    %485 = arith.truncf %484 : vector<16x32xf32> to vector<16x32xbf16>
    %c2_398 = arith.constant 2 : index
    %c0_399 = arith.constant 0 : index
    %c0_400 = arith.constant 0 : index
    %486 = vector.load %arg8[%c2_398, %c0_399, %c0_400] : memref<3x32x4xbf16, #tpu.memory_space<vmem>>, vector<1x32x4xbf16>
    %487 = vector.shape_cast %486 : vector<1x32x4xbf16> to vector<32x4xbf16>
    %cst_401 = arith.constant dense<0.000000e+00> : vector<16x4xf32>
    %488 = tpu.matmul %485, %487, %cst_401 {dimension_numbers = #tpu.dot_dimension_numbers<[1], [0], [0], [1], [0, 0, 1, 1], [], []>} : vector<16x32xbf16>, vector<32x4xbf16>, vector<16x4xf32> -> vector<16x4xf32>
    %489 = arith.addf %483, %488 : vector<16x4xf32>
    %490 = vector.broadcast %472 : vector<1x4xf32> to vector<16x4xf32>
    %491 = arith.addf %489, %490 : vector<16x4xf32>
    %492 = tpu.transpose %491, [1, 0] : vector<16x4xf32> -> vector<4x16xf32>
    %c1_402 = arith.constant 1 : index
    %c0_403 = arith.constant 0 : index
    %c0_404 = arith.constant 0 : index
    %493 = vector.load %arg10[%c1_402, %c0_403, %c0_404] : memref<2x4x16xf32, #tpu.memory_space<vmem>>, vector<1x4x16xf32>
    %494 = vector.shape_cast %493 : vector<1x4x16xf32> to vector<4x16xf32>
    %495 = vector.shape_cast %492 : vector<4x16xf32> to vector<1x4x16xf32>
    tpu.vector_store %arg10[%c1_402, %c0_403, %c0_404], %495 {strides = array<i32>} : memref<2x4x16xf32, #tpu.memory_space<vmem>>, vector<1x4x16xf32>,
    return
  }
  func.func @transform_0(%arg0: i32) -> (i32, i32, i32) {
    %c0_i32 = arith.constant 0 : i32
    %c0_i32_0 = arith.constant 0 : i32
    %c0_i32_1 = arith.constant 0 : i32
    return %arg0, %c0_i32, %c0_i32_0 : i32, i32, i32
  }
  func.func @transform_1(%arg0: i32) -> (i32, i32, i32) {
    %c0_i32 = arith.constant 0 : i32
    %c0_i32_0 = arith.constant 0 : i32
    %c0_i32_1 = arith.constant 0 : i32
    %c0_i32_2 = arith.constant 0 : i32
    return %c0_i32, %c0_i32_0, %c0_i32_1 : i32, i32, i32
  }
  func.func @transform_2(%arg0: i32) -> (i32, i32) {
    %c0_i32 = arith.constant 0 : i32
    %c0_i32_0 = arith.constant 0 : i32
    %c0_i32_1 = arith.constant 0 : i32
    return %c0_i32, %c0_i32_0 : i32, i32
  }
  func.func @transform_3(%arg0: i32) -> (i32, i32, i32, i32) {
    %c0_i32 = arith.constant 0 : i32
    %c0_i32_0 = arith.constant 0 : i32
    %c0_i32_1 = arith.constant 0 : i32
    %c0_i32_2 = arith.constant 0 : i32
    %c0_i32_3 = arith.constant 0 : i32
    return %c0_i32, %c0_i32_0, %c0_i32_1, %c0_i32_2 : i32, i32, i32, i32
  }
  func.func @transform_4(%arg0: i32) -> (i32, i32, i32) {
    %c0_i32 = arith.constant 0 : i32
    %c0_i32_0 = arith.constant 0 : i32
    %c0_i32_1 = arith.constant 0 : i32
    %c0_i32_2 = arith.constant 0 : i32
    return %c0_i32, %c0_i32_0, %c0_i32_1 : i32, i32, i32
  }
  func.func @transform_5(%arg0: i32) -> (i32, i32, i32) {
    %c0_i32 = arith.constant 0 : i32
    %c0_i32_0 = arith.constant 0 : i32
    %c0_i32_1 = arith.constant 0 : i32
    %c0_i32_2 = arith.constant 0 : i32
    return %c0_i32, %c0_i32_0, %c0_i32_1 : i32, i32, i32
  }
  func.func @transform_6(%arg0: i32) -> (i32, i32, i32) {
    %c0_i32 = arith.constant 0 : i32
    %c0_i32_0 = arith.constant 0 : i32
    %c0_i32_1 = arith.constant 0 : i32
    %c0_i32_2 = arith.constant 0 : i32
    return %c0_i32, %c0_i32_0, %c0_i32_1 : i32, i32, i32
  }
  func.func @transform_7(%arg0: i32) -> (i32, i32, i32) {
    %c0_i32 = arith.constant 0 : i32
    %c0_i32_0 = arith.constant 0 : i32
    %c0_i32_1 = arith.constant 0 : i32
    %c0_i32_2 = arith.constant 0 : i32
    return %c0_i32, %c0_i32_0, %c0_i32_1 : i32, i32, i32
  }
  func.func @transform_8(%arg0: i32) -> (i32, i32) {
    %c0_i32 = arith.constant 0 : i32
    %c0_i32_0 = arith.constant 0 : i32
    %c0_i32_1 = arith.constant 0 : i32
    return %c0_i32, %c0_i32_0 : i32, i32
  }
  func.func @transform_9(%arg0: i32) -> (i32, i32, i32) {
    %c0_i32 = arith.constant 0 : i32
    %c0_i32_0 = arith.constant 0 : i32
    %c0_i32_1 = arith.constant 0 : i32
    return %arg0, %c0_i32, %c0_i32_0 : i32, i32, i32
  }
}

</mosaic_0001>

<llo_original>
// kernel: conv_net_double.1
$region0: #{conv_net_double.1}
  #allocation0 [shape = 'u32[]', space=smem, size = 0x4, offset = 0x4, fixed_abs, tag = 'smem constant byte address 0x4 - core index']
  #allocation1 [shape = 'u32[72,128]{1,0:T(1,128)}', space=vmem, size = 0x9000, scoped, tag = 'internal scratch']
  #allocation2 [shape = 'f32[18,4]{1,0:T(8,128)}', space=vmem, size = 0x3000, scoped, tag = 'scratch operand']
  #allocation3 [shape = 'f32[18,32]{1,0:T(8,128)}', space=vmem, size = 0x3000, scoped, tag = 'scratch operand']
  %s0 = inlined_call_operand.vmem [shape: f32[2,4,16], index: 0, kind: input, shape index: {}]
  %s1 = inlined_call_operand.hbm [shape: bf16[3,4,32], index: 1, kind: input, shape index: {}]
  %s2 = inlined_call_operand.hbm [shape: f32[1,32], index: 2, kind: input, shape index: {}]
  %s3 = inlined_call_operand.hbm [shape: bf16[4,3,32,32], index: 3, kind: input, shape index: {}]
  %s4 = inlined_call_operand.vmem [shape: f32[4,1,32], index: 4, kind: input, shape index: {}]
  %s5 = inlined_call_operand.vmem [shape: f32[4,1,32], index: 5, kind: input, shape index: {}]
  %s6 = inlined_call_operand.vmem [shape: f32[4,1,32], index: 6, kind: input, shape index: {}]
  %s7 = inlined_call_operand.hbm [shape: bf16[3,32,4], index: 7, kind: input, shape index: {}]
  %s8 = inlined_call_operand.vmem [shape: f32[1,4], index: 8, kind: input, shape index: {}]
  %s9 = inlined_call_operand.hbm [shape: f32[2,4,16], index: 9, kind: output, shape index: {}]
  %s10 = sld [smem:[#allocation0]]
  $region62: #{conv_net_double.1} parent=0
    _
  %s12 = ssub.s32 1, %s10
  %s13 = scalar_select 0, %s12, %s10
  $region1: #{conv_net_double.1} parent=0
    #allocation4 [shape = 'u8[3072]{0}', space=vmem, size = 0xc00, scoped, tag = 'input window, operand 1, single buffered']
    #allocation5 [shape = 's32[1]{0}', space=sflag, size = 0x4, scoped, tag = 'scoped memory for conv_net_double.1']
    #allocation6 [shape = 's32[1]{0}', space=sflag, size = 0x4, scoped, tag = 'scoped memory for conv_net_double.1']
    #allocation7 [shape = 'u8[512]{0}', space=vmem, size = 0x400, scoped, tag = 'input window, operand 2, single buffered']
    #allocation8 [shape = 's32[1]{0}', space=sflag, size = 0x4, scoped, tag = 'scoped memory for conv_net_double.1']
    #allocation9 [shape = 'u8[98304]{0}', space=vmem, size = 0x18000, scoped, tag = 'input window, operand 3, single buffered']
    #allocation10 [shape = 'u8[24576]{0}', space=vmem, size = 0x6000, scoped, tag = 'input window, operand 7, single buffered']
    #allocation11 [shape = 's32[1]{0}', space=sflag, size = 0x4, scoped, tag = 'scoped memory for conv_net_double.1']
    #allocation12 [shape = 'u8[4096]{0}', space=vmem, size = 0x1000, scoped, tag = 'output window, operand 0, single buffered']
    %14 = vsyncpa [#allocation5], 0
    %15 = vsyncpa [#allocation8], 0
    %16 = vsyncpa [#allocation11], 0
    %17 = vsyncpa [#allocation6], 0
    // Predicated region
    $region2: #{conv_net_double.1} parent=1 // pred_check
      _
    $region3: #{conv_net_double.1} parent=1 // pred_check_branch
      %19 = sbr.rel (0) target = $region5
    $region4: #{conv_net_double.1} parent=1 // pred_region
      _
    $region5: #{conv_net_double.1} parent=1 // pred_fallthru
      _
    // Predicated region
    $region6: #{conv_net_double.1} parent=1 // pred_check
      _
    $region7: #{conv_net_double.1} parent=1 // pred_check_branch
      %21 = sbr.rel (0) target = $region9
    $region8: #{conv_net_double.1} parent=1 // pred_region
      %23 = vsyncadd [#allocation5], 0
      %s24 = sshll.u32 %s1, 4
      %s25 = int_to_ptr.hbm [resolvable:$true] %s24
      %s26 = sshll.u32 [#allocation4], 4
      %s27 = int_to_ptr.vmem [resolvable:$true] %s26
      %32 = dma.hbm_to_vmem [thread:$0]  %s25, 96, %s27, [#allocation5], 32, 32, 2
    $region9: #{conv_net_double.1} parent=1 // pred_fallthru
      _
    // Predicated region
    $region10: #{conv_net_double.1} parent=1 // pred_check
      _
    $region11: #{conv_net_double.1} parent=1 // pred_check_branch
      %34 = sbr.rel (0) target = $region13
    $region12: #{conv_net_double.1} parent=1 // pred_region
      %36 = vsyncadd [#allocation8], 0
      %s38 = sshll.u32 %s2, 4
      %s39 = int_to_ptr.hbm [resolvable:$true] %s38
      %s40 = sshll.u32 [#allocation7], 4
      %s41 = int_to_ptr.vmem [resolvable:$true] %s40
      %43 = dma.hbm_to_vmem [thread:$0]  %s39, 16, %s41, [#allocation8]
    $region13: #{conv_net_double.1} parent=1 // pred_fallthru
      _
    // Predicated region
    $region14: #{conv_net_double.1} parent=1 // pred_check
      _
    $region15: #{conv_net_double.1} parent=1 // pred_check_branch
      %45 = sbr.rel (0) target = $region17
    $region16: #{conv_net_double.1} parent=1 // pred_region
      %47 = vsyncadd [#allocation8], 0
      %s48 = sshll.u32 %s3, 4
      %s49 = int_to_ptr.hbm [resolvable:$true] %s48
      %s50 = sshll.u32 [#allocation9], 4
      %s51 = int_to_ptr.vmem [resolvable:$true] %s50
      %56 = dma.hbm_to_vmem [thread:$0]  %s49, 3072, %s51, [#allocation8], 64, 64, 4
    $region17: #{conv_net_double.1} parent=1 // pred_fallthru
      _
    // Predicated region
    $region18: #{conv_net_double.1} parent=1 // pred_check
      _
    $region19: #{conv_net_double.1} parent=1 // pred_check_branch
      %58 = sbr.rel (0) target = $region21
    $region20: #{conv_net_double.1} parent=1 // pred_region
      _
    $region21: #{conv_net_double.1} parent=1 // pred_fallthru
      _
    // Predicated region
    $region22: #{conv_net_double.1} parent=1 // pred_check
      _
    $region23: #{conv_net_double.1} parent=1 // pred_check_branch
      %60 = sbr.rel (0) target = $region25
    $region24: #{conv_net_double.1} parent=1 // pred_region
      _
    $region25: #{conv_net_double.1} parent=1 // pred_fallthru
      _
    // Predicated region
    $region26: #{conv_net_double.1} parent=1 // pred_check
      _
    $region27: #{conv_net_double.1} parent=1 // pred_check_branch
      %62 = sbr.rel (0) target = $region29
    $region28: #{conv_net_double.1} parent=1 // pred_region
      _
    $region29: #{conv_net_double.1} parent=1 // pred_fallthru
      _
    // Predicated region
    $region30: #{conv_net_double.1} parent=1 // pred_check
      _
    $region31: #{conv_net_double.1} parent=1 // pred_check_branch
      %64 = sbr.rel (0) target = $region33
    $region32: #{conv_net_double.1} parent=1 // pred_region
      %66 = vsyncadd [#allocation11], 0
      %s67 = sshll.u32 %s7, 4
      %s68 = int_to_ptr.hbm [resolvable:$true] %s67
      %s69 = sshll.u32 [#allocation10], 4
      %s70 = int_to_ptr.vmem [resolvable:$true] %s69
      %75 = dma.hbm_to_vmem [thread:$0]  %s68, 768, %s70, [#allocation11], 64, 64, 4
    $region33: #{conv_net_double.1} parent=1 // pred_fallthru
      _
    // Predicated region
    $region34: #{conv_net_double.1} parent=1 // pred_check
      _
    $region35: #{conv_net_double.1} parent=1 // pred_check_branch
      %77 = sbr.rel (0) target = $region37
    $region36: #{conv_net_double.1} parent=1 // pred_region
      _
    $region37: #{conv_net_double.1} parent=1 // pred_fallthru
      _
    // Predicated region
    $region38: #{conv_net_double.1} parent=1 // pred_check
      _
    $region39: #{conv_net_double.1} parent=1 // pred_check_branch
      %79 = sbr.rel (0) target = $region41
    $region40: #{conv_net_double.1} parent=1 // pred_region
      %81 = dma.done [#allocation5], 96
    $region41: #{conv_net_double.1} parent=1 // pred_fallthru
      _
    // Predicated region
    $region42: #{conv_net_double.1} parent=1 // pred_check
      _
    $region43: #{conv_net_double.1} parent=1 // pred_check_branch
      %83 = sbr.rel (0) target = $region45
    $region44: #{conv_net_double.1} parent=1 // pred_region
      %85 = dma.done [#allocation8], 16
    $region45: #{conv_net_double.1} parent=1 // pred_fallthru
      _
    // Predicated region
    $region46: #{conv_net_double.1} parent=1 // pred_check
      _
    $region47: #{conv_net_double.1} parent=1 // pred_check_branch
      %87 = sbr.rel (0) target = $region49
    $region48: #{conv_net_double.1} parent=1 // pred_region
      %89 = dma.done [#allocation8], 3072
    $region49: #{conv_net_double.1} parent=1 // pred_fallthru
      _
    // Predicated region
    $region50: #{conv_net_double.1} parent=1 // pred_check
      _
    $region51: #{conv_net_double.1} parent=1 // pred_check_branch
      %91 = sbr.rel (0) target = $region53
    $region52: #{conv_net_double.1} parent=1 // pred_region
      %93 = dma.done [#allocation11], 768
    $region53: #{conv_net_double.1} parent=1 // pred_fallthru
      _
    %vm95 = vcmask 31744
    %96 = vst.msk [vmem:[#allocation2] sm:$0xff] %vm95, 0.0
    %97 = vst.msk [vmem:[#allocation2 + $0x8] sm:$0xff] %vm95, 0.0
    %vm98 = vcmask 25600
    %99 = vst.msk [vmem:[#allocation2 + $0x10] sm:$0x3] %vm98, 0.0
    %vm100 = vcmask 261120
    %101 = vst.msk [vmem:[#allocation3] sm:$0xff] %vm100, 0.0
    %102 = vst.msk [vmem:[#allocation3 + $0x8] sm:$0xff] %vm100, 0.0
    %vm103 = vcmask 254976
    %104 = vst.msk [vmem:[#allocation3 + $0x10] sm:$0x3] %vm103, 0.0
    %v105 = vld [vmem:[%s0] sm:$0xf]
    %106 = vxpose.xlu0.b32.start [1/16] %v105, 128
    %107 = vxpose.xlu0.b32.cont [2/16] 0.0, 128
    %108 = vxpose.xlu0.b32.cont [3/16] 0.0, 128
    %109 = vxpose.xlu0.b32.cont [4/16] 0.0, 128
    %110 = vxpose.xlu0.b32.cont [5/16] 0.0, 128
    %111 = vxpose.xlu0.b32.cont [6/16] 0.0, 128
    %112 = vxpose.xlu0.b32.cont [7/16] 0.0, 128
    %113 = vxpose.xlu0.b32.cont [8/16] 0.0, 128
    %114 = vxpose.xlu0.b32.cont [9/16] 0.0, 128
    %115 = vxpose.xlu0.b32.cont [10/16] 0.0, 128
    %116 = vxpose.xlu0.b32.cont [11/16] 0.0, 128
    %117 = vxpose.xlu0.b32.cont [12/16] 0.0, 128
    %118 = vxpose.xlu0.b32.cont [13/16] 0.0, 128
    %119 = vxpose.xlu0.b32.cont [14/16] 0.0, 128
    %120 = vxpose.xlu0.b32.cont [15/16] 0.0, 128
    %121 = vxpose.xlu0.b32.end [16/16] 0.0, 128
    %v122 = vpop.trf.xlu0
    %v123 = vpop.trf.xlu0
    %v124 = vpop.trf.xlu0
    %v125 = vpop.trf.xlu0
    %v126 = vpop.trf.xlu0
    %v127 = vpop.trf.xlu0
    %v128 = vpop.trf.xlu0
    %v129 = vpop.trf.xlu0
    %v130 = vpop.trf.xlu0
    %v131 = vpop.trf.xlu0
    %v132 = vpop.trf.xlu0
    %v133 = vpop.trf.xlu0
    %v134 = vpop.trf.xlu0
    %v135 = vpop.trf.xlu0
    %v136 = vpop.trf.xlu0
    %v137 = vpop.trf.xlu0
    %138 = vst.msk [vmem:[#allocation2 + $0x1] sm:$0xff] %vm95, %v122
    %139 = vst.msk [vmem:[#allocation2 + $0x9] sm:$0xff] %vm95, %v123
    %v140 = vld [vmem:[#allocation7] sm:$0x1]
    %v141 = vld [vmem:[#allocation2] sm:$0xff]
    %v142 = vld [vmem:[#allocation2 + $0x8] sm:$0xff]
    %v143 = vpack.c.bf16 %v142, %v141
    %v144 = vld [vmem:[#allocation4] sm:$0x3]
    %v145 = vld [vmem:[#allocation2 + $0x1] sm:$0xff]
    %v146 = vld [vmem:[#allocation2 + $0x9] sm:$0xff]
    %v147 = vpack.c.bf16 %v146, %v145
    %s148 = scalar_lea.vmem [#allocation4], 2
    %v149 = vld [vmem:[%s148] sm:$0x3]
    %v151 = vsel %vm95, %v147, 0
    %vm153 = vcmask 1041408
    %v155 = vsel %vm153, %v149, 0
    %157 = vmatpush.bf16.msra.mxu0 0
    %158 = vmatpush.bf16.msra.mxu0 0
    %159 = vmatpush.bf16.msra.mxu0 0
    %160 = vmatpush.bf16.msra.mxu0 0
    %161 = vmatpush.bf16.msra.mxu0 0
    %162 = vmatpush.bf16.msra.mxu0 0
    %163 = vmatpush.bf16.msra.mxu0 0
    %164 = vmatpush.bf16.msra.mxu0 %v155
    %165 = vmatmul.bf16.gmra.mxu0 %v151
    %v166 = vpop.f32.mrf.mxu0
    %v167 = vadd.f32 0.0, %v166
    %v168 = vpop.f32.mrf.mxu0
    %v169 = vadd.f32 0.0, %v168
    %170 = vdwg.mxu0
    %v172 = vsel %vm95, %v143, 0
    %v175 = vsel %vm153, %v144, 0
    %177 = vmatpush.bf16.msra.mxu0 0
    %178 = vmatpush.bf16.msra.mxu0 0
    %179 = vmatpush.bf16.msra.mxu0 0
    %180 = vmatpush.bf16.msra.mxu0 0
    %181 = vmatpush.bf16.msra.mxu0 0
    %182 = vmatpush.bf16.msra.mxu0 0
    %183 = vmatpush.bf16.msra.mxu0 0
    %184 = vmatpush.bf16.msra.mxu0 %v175
    %185 = vmatmul.bf16.gmra.mxu0 %v172
    %v186 = vpop.f32.mrf.mxu0
    %v187 = vadd.f32 %v167, %v186
    %v188 = vpop.f32.mrf.mxu0
    %v189 = vadd.f32 %v169, %v188
    %190 = vdwg.mxu0
    %v191 = vld [vmem:[#allocation2 + $0x2] sm:$0xff]
    %v192 = vld [vmem:[#allocation2 + $0xa] sm:$0xff]
    %v193 = vpack.c.bf16 %v192, %v191
    %s194 = scalar_lea.vmem [#allocation4], 4
    %v195 = vld [vmem:[%s194] sm:$0x3]
    %v197 = vsel %vm95, %v193, 0
    %v200 = vsel %vm153, %v195, 0
    %202 = vmatpush.bf16.msra.mxu0 0
    %203 = vmatpush.bf16.msra.mxu0 0
    %204 = vmatpush.bf16.msra.mxu0 0
    %205 = vmatpush.bf16.msra.mxu0 0
    %206 = vmatpush.bf16.msra.mxu0 0
    %207 = vmatpush.bf16.msra.mxu0 0
    %208 = vmatpush.bf16.msra.mxu0 0
    %209 = vmatpush.bf16.msra.mxu0 %v200
    %210 = vmatmul.bf16.gmra.mxu0 %v197
    %v211 = vpop.f32.mrf.mxu0
    %v212 = vadd.f32 0.0, %v211
    %v213 = vpop.f32.mrf.mxu0
    %v214 = vadd.f32 0.0, %v213
    %215 = vdwg.mxu0
    %v216 = vadd.f32 %v187, %v212
    %v217 = vadd.f32 %v189, %v214
    %v219 = vperm.slane %v140, 0
    %v221 = vadd.f32 %v216, %v219
    %v222 = vadd.f32 %v217, %v219
    %v223 = vmax.f32 %v221, 0.0
    %v224 = vmax.f32 %v222, 0.0
    %225 = vst.msk [vmem:[#allocation3 + $0x1] sm:$0xff] %vm100, %v223
    %226 = vst.msk [vmem:[#allocation3 + $0x9] sm:$0xff] %vm100, %v224
    %v227 = vld [vmem:[%s4] sm:$0x1]
    %v228 = vld [vmem:[#allocation3] sm:$0xff]
    %v229 = vld [vmem:[#allocation3 + $0x8] sm:$0xff]
    %v230 = vpack.c.bf16 %v229, %v228
    %v231 = vld [vmem:[#allocation9] sm:$0xf]
    %v232 = vld [vmem:[#allocation9 + $0x4] sm:$0xf]
    %v233 = vld [vmem:[#allocation9 + $0x8] sm:$0xf]
    %v234 = vld [vmem:[#allocation9 + $0xc] sm:$0xf]
    %v235 = vld [vmem:[#allocation3 + $0x1] sm:$0xff]
    %v236 = vld [vmem:[#allocation3 + $0x9] sm:$0xff]
    %v237 = vpack.c.bf16 %v236, %v235
    %s238 = scalar_lea.vmem [#allocation9], 16
    %v239 = vld [vmem:[%s238] sm:$0xf]
    %v240 = vld [vmem:[%s238 + $0x4] sm:$0xf]
    %v241 = vld [vmem:[%s238 + $0x8] sm:$0xf]
    %v242 = vld [vmem:[%s238 + $0xc] sm:$0xf]
    %v247 = vunpack.c.l.b16 %v239
    %v248 = vunpack.c.l.b16 %v240
    %v249 = vunpack.c.l.b16 %v241
    %v250 = vunpack.c.l.b16 %v242
    %v251 = vpack.c.b16 %v248, %v247
    %v252 = vpack.c.b16 %v250, %v249
    %v256 = vsel %vm100, %v237, 0
    %258 = vmatpush.bf16.msra.mxu0 0
    %259 = vmatpush.bf16.msra.mxu0 0
    %260 = vmatpush.bf16.msra.mxu0 0
    %261 = vmatpush.bf16.msra.mxu0 0
    %262 = vmatpush.bf16.msra.mxu0 0
    %263 = vmatpush.bf16.msra.mxu0 0
    %264 = vmatpush.bf16.msra.mxu0 %v252
    %265 = vmatpush.bf16.msra.mxu0 %v251
    %266 = vmatmul.bf16.gmra.mxu0 %v256
    %v267 = vpop.f32.mrf.mxu0
    %v268 = vadd.f32 0.0, %v267
    %v269 = vpop.f32.mrf.mxu0
    %v270 = vadd.f32 0.0, %v269
    %271 = vdwg.mxu0
    %v276 = vunpack.c.l.b16 %v231
    %v277 = vunpack.c.l.b16 %v232
    %v278 = vunpack.c.l.b16 %v233
    %v279 = vunpack.c.l.b16 %v234
    %v280 = vpack.c.b16 %v277, %v276
    %v281 = vpack.c.b16 %v279, %v278
    %v285 = vsel %vm100, %v230, 0
    %287 = vmatpush.bf16.msra.mxu0 0
    %288 = vmatpush.bf16.msra.mxu0 0
    %289 = vmatpush.bf16.msra.mxu0 0
    %290 = vmatpush.bf16.msra.mxu0 0
    %291 = vmatpush.bf16.msra.mxu0 0
    %292 = vmatpush.bf16.msra.mxu0 0
    %293 = vmatpush.bf16.msra.mxu0 %v281
    %294 = vmatpush.bf16.msra.mxu0 %v280
    %295 = vmatmul.bf16.gmra.mxu0 %v285
    %v296 = vpop.f32.mrf.mxu0
    %v297 = vadd.f32 %v268, %v296
    %v298 = vpop.f32.mrf.mxu0
    %v299 = vadd.f32 %v270, %v298
    %300 = vdwg.mxu0
    %v301 = vld [vmem:[#allocation3 + $0x2] sm:$0xff]
    %v302 = vld [vmem:[#allocation3 + $0xa] sm:$0xff]
    %v303 = vpack.c.bf16 %v302, %v301
    %s304 = scalar_lea.vmem [#allocation9], 32
    %v305 = vld [vmem:[%s304] sm:$0xf]
    %v306 = vld [vmem:[%s304 + $0x4] sm:$0xf]
    %v307 = vld [vmem:[%s304 + $0x8] sm:$0xf]
    %v308 = vld [vmem:[%s304 + $0xc] sm:$0xf]
    %v313 = vunpack.c.l.b16 %v305
    %v314 = vunpack.c.l.b16 %v306
    %v315 = vunpack.c.l.b16 %v307
    %v316 = vunpack.c.l.b16 %v308
    %v317 = vpack.c.b16 %v314, %v313
    %v318 = vpack.c.b16 %v316, %v315
    %v322 = vsel %vm100, %v303, 0
    %324 = vmatpush.bf16.msra.mxu0 0
    %325 = vmatpush.bf16.msra.mxu0 0
    %326 = vmatpush.bf16.msra.mxu0 0
    %327 = vmatpush.bf16.msra.mxu0 0
    %328 = vmatpush.bf16.msra.mxu0 0
    %329 = vmatpush.bf16.msra.mxu0 0
    %330 = vmatpush.bf16.msra.mxu0 %v318
    %331 = vmatpush.bf16.msra.mxu0 %v317
    %332 = vmatmul.bf16.gmra.mxu0 %v322
    %v333 = vpop.f32.mrf.mxu0
    %v334 = vadd.f32 0.0, %v333
    %v335 = vpop.f32.mrf.mxu0
    %v336 = vadd.f32 0.0, %v335
    %337 = vdwg.mxu0
    %v338 = vadd.f32 %v297, %v334
    %v339 = vadd.f32 %v299, %v336
    %v341 = vperm.slane %v227, 0
    %v343 = vadd.f32 %v338, %v341
    %v344 = vadd.f32 %v339, %v341
    %v345 = vsel %vm100, %v343, 0.0
    %346 = vadd.xlane.f32.xlu0 %v345
    %v347 = vpop.xlane.xlu0 %346
    %v348 = vsel %vm100, %v344, 0.0
    %349 = vadd.xlane.f32.xlu0 %v348
    %v350 = vpop.xlane.xlu0 %349
    %v351 = vrcp.pop 32.0
    %v352 = vmul.f32 32.0, %v351
    %v353 = vsub.f32 1.0, %v352
    %v354 = vmul.f32 %v351, %v353
    %v355 = vadd.f32 %v351, %v354
    %vm356 = vweird.f32 %v351
    %v357 = vsel %vm356, %v351, %v355
    %v358 = vmul.f32 %v347, %v357
    %v359 = vmul.f32 %v350, %v357
    %v360 = vsub.f32 %v343, %v358
    %v361 = vsub.f32 %v344, %v359
    %v362 = vmul.f32 %v360, %v360
    %v363 = vmul.f32 %v361, %v361
    %v364 = vsel %vm100, %v362, 0.0
    %365 = vadd.xlane.f32.xlu0 %v364
    %v366 = vpop.xlane.xlu0 %365
    %v367 = vsel %vm100, %v363, 0.0
    %368 = vadd.xlane.f32.xlu0 %v367
    %v369 = vpop.xlane.xlu0 %368
    %v370 = vmul.f32 %v366, %v357
    %v371 = vmul.f32 %v369, %v357
    %v372 = vadd.f32 %v370, 1e-05
    %v373 = vadd.f32 %v371, 1e-05
    %v374 = vrsqrt.pop %v372
    %v375 = vmul.f32 %v374, %v372
    %v376 = vmul.f32 %v375, %v374
    %v377 = vmul.f32 0.5, %v376
    %v378 = vsub.f32 1.5, %v377
    %v379 = vmul.f32 %v374, %v378
    %vm380 = vweird.f32 %v372
    %vm381 = vweird.f32 %v374
    %vm382 = vmor %vm380, %vm381
    %v383 = vsel %vm382, %v374, %v379
    %v384 = vrsqrt.pop %v373
    %v385 = vmul.f32 %v384, %v373
    %v386 = vmul.f32 %v385, %v384
    %v387 = vmul.f32 0.5, %v386
    %v388 = vsub.f32 1.5, %v387
    %v389 = vmul.f32 %v384, %v388
    %vm390 = vweird.f32 %v373
    %vm391 = vweird.f32 %v384
    %vm392 = vmor %vm390, %vm391
    %v393 = vsel %vm392, %v384, %v389
    %v394 = vmul.f32 %v360, %v383
    %v395 = vmul.f32 %v361, %v393
    %v396 = vld [vmem:[%s5] sm:$0x1]
    %v398 = vperm.slane %v396, 0
    %v400 = vmul.f32 %v394, %v398
    %v401 = vmul.f32 %v395, %v398
    %v402 = vld [vmem:[%s6] sm:$0x1]
    %v404 = vperm.slane %v402, 0
    %v406 = vadd.f32 %v400, %v404
    %v407 = vadd.f32 %v401, %v404
    %v408 = vadd.f32 %v221, %v406
    %v409 = vadd.f32 %v222, %v407
    %v410 = vmax.f32 %v408, 0.0
    %v411 = vmax.f32 %v409, 0.0
    %412 = vst.msk [vmem:[#allocation3 + $0x1] sm:$0xff] %vm100, %v410
    %413 = vst.msk [vmem:[#allocation3 + $0x9] sm:$0xff] %vm100, %v411
    %s414 = scalar_lea.vmem %s4, 1
    %v415 = vld [vmem:[%s414] sm:$0x1]
    %v416 = vld [vmem:[#allocation3] sm:$0xff]
    %v417 = vld [vmem:[#allocation3 + $0x8] sm:$0xff]
    %v418 = vpack.c.bf16 %v417, %v416
    %s419 = scalar_lea.vmem [#allocation9], 48
    %v420 = vld [vmem:[%s419] sm:$0xf]
    %v421 = vld [vmem:[%s419 + $0x4] sm:$0xf]
    %v422 = vld [vmem:[%s419 + $0x8] sm:$0xf]
    %v423 = vld [vmem:[%s419 + $0xc] sm:$0xf]
    %v424 = vld [vmem:[#allocation3 + $0x1] sm:$0xff]
    %v425 = vld [vmem:[#allocation3 + $0x9] sm:$0xff]
    %v426 = vpack.c.bf16 %v425, %v424
    %s427 = scalar_lea.vmem [#allocation9], 64
    %v428 = vld [vmem:[%s427] sm:$0xf]
    %v429 = vld [vmem:[%s427 + $0x4] sm:$0xf]
    %v430 = vld [vmem:[%s427 + $0x8] sm:$0xf]
    %v431 = vld [vmem:[%s427 + $0xc] sm:$0xf]
    %v436 = vunpack.c.l.b16 %v428
    %v437 = vunpack.c.l.b16 %v429
    %v438 = vunpack.c.l.b16 %v430
    %v439 = vunpack.c.l.b16 %v431
    %v440 = vpack.c.b16 %v437, %v436
    %v441 = vpack.c.b16 %v439, %v438
    %v445 = vsel %vm100, %v426, 0
    %447 = vmatpush.bf16.msra.mxu0 0
    %448 = vmatpush.bf16.msra.mxu0 0
    %449 = vmatpush.bf16.msra.mxu0 0
    %450 = vmatpush.bf16.msra.mxu0 0
    %451 = vmatpush.bf16.msra.mxu0 0
    %452 = vmatpush.bf16.msra.mxu0 0
    %453 = vmatpush.bf16.msra.mxu0 %v441
    %454 = vmatpush.bf16.msra.mxu0 %v440
    %455 = vmatmul.bf16.gmra.mxu0 %v445
    %v456 = vpop.f32.mrf.mxu0
    %v457 = vadd.f32 0.0, %v456
    %v458 = vpop.f32.mrf.mxu0
    %v459 = vadd.f32 0.0, %v458
    %460 = vdwg.mxu0
    %v465 = vunpack.c.l.b16 %v420
    %v466 = vunpack.c.l.b16 %v421
    %v467 = vunpack.c.l.b16 %v422
    %v468 = vunpack.c.l.b16 %v423
    %v469 = vpack.c.b16 %v466, %v465
    %v470 = vpack.c.b16 %v468, %v467
    %v474 = vsel %vm100, %v418, 0
    %476 = vmatpush.bf16.msra.mxu0 0
    %477 = vmatpush.bf16.msra.mxu0 0
    %478 = vmatpush.bf16.msra.mxu0 0
    %479 = vmatpush.bf16.msra.mxu0 0
    %480 = vmatpush.bf16.msra.mxu0 0
    %481 = vmatpush.bf16.msra.mxu0 0
    %482 = vmatpush.bf16.msra.mxu0 %v470
    %483 = vmatpush.bf16.msra.mxu0 %v469
    %484 = vmatmul.bf16.gmra.mxu0 %v474
    %v485 = vpop.f32.mrf.mxu0
    %v486 = vadd.f32 %v457, %v485
    %v487 = vpop.f32.mrf.mxu0
    %v488 = vadd.f32 %v459, %v487
    %489 = vdwg.mxu0
    %v490 = vld [vmem:[#allocation3 + $0x2] sm:$0xff]
    %v491 = vld [vmem:[#allocation3 + $0xa] sm:$0xff]
    %v492 = vpack.c.bf16 %v491, %v490
    %s493 = scalar_lea.vmem [#allocation9], 80
    %v494 = vld [vmem:[%s493] sm:$0xf]
    %v495 = vld [vmem:[%s493 + $0x4] sm:$0xf]
    %v496 = vld [vmem:[%s493 + $0x8] sm:$0xf]
    %v497 = vld [vmem:[%s493 + $0xc] sm:$0xf]
    %v502 = vunpack.c.l.b16 %v494
    %v503 = vunpack.c.l.b16 %v495
    %v504 = vunpack.c.l.b16 %v496
    %v505 = vunpack.c.l.b16 %v497
    %v506 = vpack.c.b16 %v503, %v502
    %v507 = vpack.c.b16 %v505, %v504
    %v511 = vsel %vm100, %v492, 0
    %513 = vmatpush.bf16.msra.mxu0 0
    %514 = vmatpush.bf16.msra.mxu0 0
    %515 = vmatpush.bf16.msra.mxu0 0
    %516 = vmatpush.bf16.msra.mxu0 0
    %517 = vmatpush.bf16.msra.mxu0 0
    %518 = vmatpush.bf16.msra.mxu0 0
    %519 = vmatpush.bf16.msra.mxu0 %v507
    %520 = vmatpush.bf16.msra.mxu0 %v506
    %521 = vmatmul.bf16.gmra.mxu0 %v511
    %v522 = vpop.f32.mrf.mxu0
    %v523 = vadd.f32 0.0, %v522
    %v524 = vpop.f32.mrf.mxu0
    %v525 = vadd.f32 0.0, %v524
    %526 = vdwg.mxu0
    %v527 = vadd.f32 %v486, %v523
    %v528 = vadd.f32 %v488, %v525
    %v530 = vperm.slane %v415, 0
    %v532 = vadd.f32 %v527, %v530
    %v533 = vadd.f32 %v528, %v530
    %v534 = vsel %vm100, %v532, 0.0
    %535 = vadd.xlane.f32.xlu0 %v534
    %v536 = vpop.xlane.xlu0 %535
    %v537 = vsel %vm100, %v533, 0.0
    %538 = vadd.xlane.f32.xlu0 %v537
    %v539 = vpop.xlane.xlu0 %538
    %v540 = vmul.f32 %v536, %v357
    %v541 = vmul.f32 %v539, %v357
    %v542 = vsub.f32 %v532, %v540
    %v543 = vsub.f32 %v533, %v541
    %v544 = vmul.f32 %v542, %v542
    %v545 = vmul.f32 %v543, %v543
    %v546 = vsel %vm100, %v544, 0.0
    %547 = vadd.xlane.f32.xlu0 %v546
    %v548 = vpop.xlane.xlu0 %547
    %v549 = vsel %vm100, %v545, 0.0
    %550 = vadd.xlane.f32.xlu0 %v549
    %v551 = vpop.xlane.xlu0 %550
    %v552 = vmul.f32 %v548, %v357
    %v553 = vmul.f32 %v551, %v357
    %v554 = vadd.f32 %v552, 1e-05
    %v555 = vadd.f32 %v553, 1e-05
    %v556 = vrsqrt.pop %v554
    %v557 = vmul.f32 %v556, %v554
    %v558 = vmul.f32 %v557, %v556
    %v559 = vmul.f32 0.5, %v558
    %v560 = vsub.f32 1.5, %v559
    %v561 = vmul.f32 %v556, %v560
    %vm562 = vweird.f32 %v554
    %vm563 = vweird.f32 %v556
    %vm564 = vmor %vm562, %vm563
    %v565 = vsel %vm564, %v556, %v561
    %v566 = vrsqrt.pop %v555
    %v567 = vmul.f32 %v566, %v555
    %v568 = vmul.f32 %v567, %v566
    %v569 = vmul.f32 0.5, %v568
    %v570 = vsub.f32 1.5, %v569
    %v571 = vmul.f32 %v566, %v570
    %vm572 = vweird.f32 %v555
    %vm573 = vweird.f32 %v566
    %vm574 = vmor %vm572, %vm573
    %v575 = vsel %vm574, %v566, %v571
    %v576 = vmul.f32 %v542, %v565
    %v577 = vmul.f32 %v543, %v575
    %s578 = scalar_lea.vmem %s5, 1
    %v579 = vld [vmem:[%s578] sm:$0x1]
    %v581 = vperm.slane %v579, 0
    %v583 = vmul.f32 %v576, %v581
    %v584 = vmul.f32 %v577, %v581
    %s585 = scalar_lea.vmem %s6, 1
    %v586 = vld [vmem:[%s585] sm:$0x1]
    %v588 = vperm.slane %v586, 0
    %v590 = vadd.f32 %v583, %v588
    %v591 = vadd.f32 %v584, %v588
    %v592 = vadd.f32 %v408, %v590
    %v593 = vadd.f32 %v409, %v591
    %594 = vst.msk [vmem:[#allocation3 + $0x1] sm:$0xff] %vm100, %v223
    %595 = vst.msk [vmem:[#allocation3 + $0x9] sm:$0xff] %vm100, %v224
    %s596 = scalar_lea.vmem %s4, 2
    %v597 = vld [vmem:[%s596] sm:$0x1]
    %v598 = vld [vmem:[#allocation3] sm:$0xff]
    %v599 = vld [vmem:[#allocation3 + $0x8] sm:$0xff]
    %v600 = vpack.c.bf16 %v599, %v598
    %s601 = scalar_lea.vmem [#allocation9], 96
    %v602 = vld [vmem:[%s601] sm:$0xf]
    %v603 = vld [vmem:[%s601 + $0x4] sm:$0xf]
    %v604 = vld [vmem:[%s601 + $0x8] sm:$0xf]
    %v605 = vld [vmem:[%s601 + $0xc] sm:$0xf]
    %v606 = vld [vmem:[#allocation3 + $0x1] sm:$0xff]
    %v607 = vld [vmem:[#allocation3 + $0x9] sm:$0xff]
    %v608 = vpack.c.bf16 %v607, %v606
    %s609 = scalar_lea.vmem [#allocation9], 112
    %v610 = vld [vmem:[%s609] sm:$0xf]
    %v611 = vld [vmem:[%s609 + $0x4] sm:$0xf]
    %v612 = vld [vmem:[%s609 + $0x8] sm:$0xf]
    %v613 = vld [vmem:[%s609 + $0xc] sm:$0xf]
    %v618 = vunpack.c.l.b16 %v610
    %v619 = vunpack.c.l.b16 %v611
    %v620 = vunpack.c.l.b16 %v612
    %v621 = vunpack.c.l.b16 %v613
    %v622 = vpack.c.b16 %v619, %v618
    %v623 = vpack.c.b16 %v621, %v620
    %v627 = vsel %vm100, %v608, 0
    %629 = vmatpush.bf16.msra.mxu0 0
    %630 = vmatpush.bf16.msra.mxu0 0
    %631 = vmatpush.bf16.msra.mxu0 0
    %632 = vmatpush.bf16.msra.mxu0 0
    %633 = vmatpush.bf16.msra.mxu0 0
    %634 = vmatpush.bf16.msra.mxu0 0
    %635 = vmatpush.bf16.msra.mxu0 %v623
    %636 = vmatpush.bf16.msra.mxu0 %v622
    %637 = vmatmul.bf16.gmra.mxu0 %v627
    %v638 = vpop.f32.mrf.mxu0
    %v639 = vadd.f32 0.0, %v638
    %v640 = vpop.f32.mrf.mxu0
    %v641 = vadd.f32 0.0, %v640
    %642 = vdwg.mxu0
    %v647 = vunpack.c.l.b16 %v602
    %v648 = vunpack.c.l.b16 %v603
    %v649 = vunpack.c.l.b16 %v604
    %v650 = vunpack.c.l.b16 %v605
    %v651 = vpack.c.b16 %v648, %v647
    %v652 = vpack.c.b16 %v650, %v649
    %v656 = vsel %vm100, %v600, 0
    %658 = vmatpush.bf16.msra.mxu0 0
    %659 = vmatpush.bf16.msra.mxu0 0
    %660 = vmatpush.bf16.msra.mxu0 0
    %661 = vmatpush.bf16.msra.mxu0 0
    %662 = vmatpush.bf16.msra.mxu0 0
    %663 = vmatpush.bf16.msra.mxu0 0
    %664 = vmatpush.bf16.msra.mxu0 %v652
    %665 = vmatpush.bf16.msra.mxu0 %v651
    %666 = vmatmul.bf16.gmra.mxu0 %v656
    %v667 = vpop.f32.mrf.mxu0
    %v668 = vadd.f32 %v639, %v667
    %v669 = vpop.f32.mrf.mxu0
    %v670 = vadd.f32 %v641, %v669
    %671 = vdwg.mxu0
    %v672 = vld [vmem:[#allocation3 + $0x2] sm:$0xff]
    %v673 = vld [vmem:[#allocation3 + $0xa] sm:$0xff]
    %v674 = vpack.c.bf16 %v673, %v672
    %s675 = scalar_lea.vmem [#allocation9], 128
    %v676 = vld [vmem:[%s675] sm:$0xf]
    %v677 = vld [vmem:[%s675 + $0x4] sm:$0xf]
    %v678 = vld [vmem:[%s675 + $0x8] sm:$0xf]
    %v679 = vld [vmem:[%s675 + $0xc] sm:$0xf]
    %v684 = vunpack.c.l.b16 %v676
    %v685 = vunpack.c.l.b16 %v677
    %v686 = vunpack.c.l.b16 %v678
    %v687 = vunpack.c.l.b16 %v679
    %v688 = vpack.c.b16 %v685, %v684
    %v689 = vpack.c.b16 %v687, %v686
    %v693 = vsel %vm100, %v674, 0
    %695 = vmatpush.bf16.msra.mxu0 0
    %696 = vmatpush.bf16.msra.mxu0 0
    %697 = vmatpush.bf16.msra.mxu0 0
    %698 = vmatpush.bf16.msra.mxu0 0
    %699 = vmatpush.bf16.msra.mxu0 0
    %700 = vmatpush.bf16.msra.mxu0 0
    %701 = vmatpush.bf16.msra.mxu0 %v689
    %702 = vmatpush.bf16.msra.mxu0 %v688
    %703 = vmatmul.bf16.gmra.mxu0 %v693
    %v704 = vpop.f32.mrf.mxu0
    %v705 = vadd.f32 0.0, %v704
    %v706 = vpop.f32.mrf.mxu0
    %v707 = vadd.f32 0.0, %v706
    %708 = vdwg.mxu0
    %v709 = vadd.f32 %v668, %v705
    %v710 = vadd.f32 %v670, %v707
    %v712 = vperm.slane %v597, 0
    %v714 = vadd.f32 %v709, %v712
    %v715 = vadd.f32 %v710, %v712
    %v716 = vsel %vm100, %v714, 0.0
    %717 = vadd.xlane.f32.xlu0 %v716
    %v718 = vpop.xlane.xlu0 %717
    %v719 = vsel %vm100, %v715, 0.0
    %720 = vadd.xlane.f32.xlu0 %v719
    %v721 = vpop.xlane.xlu0 %720
    %v722 = vmul.f32 %v718, %v357
    %v723 = vmul.f32 %v721, %v357
    %v724 = vsub.f32 %v714, %v722
    %v725 = vsub.f32 %v715, %v723
    %v726 = vmul.f32 %v724, %v724
    %v727 = vmul.f32 %v725, %v725
    %v728 = vsel %vm100, %v726, 0.0
    %729 = vadd.xlane.f32.xlu0 %v728
    %v730 = vpop.xlane.xlu0 %729
    %v731 = vsel %vm100, %v727, 0.0
    %732 = vadd.xlane.f32.xlu0 %v731
    %v733 = vpop.xlane.xlu0 %732
    %v734 = vmul.f32 %v730, %v357
    %v735 = vmul.f32 %v733, %v357
    %v736 = vadd.f32 %v734, 1e-05
    %v737 = vadd.f32 %v735, 1e-05
    %v738 = vrsqrt.pop %v736
    %v739 = vmul.f32 %v738, %v736
    %v740 = vmul.f32 %v739, %v738
    %v741 = vmul.f32 0.5, %v740
    %v742 = vsub.f32 1.5, %v741
    %v743 = vmul.f32 %v738, %v742
    %vm744 = vweird.f32 %v736
    %vm745 = vweird.f32 %v738
    %vm746 = vmor %vm744, %vm745
    %v747 = vsel %vm746, %v738, %v743
    %v748 = vrsqrt.pop %v737
    %v749 = vmul.f32 %v748, %v737
    %v750 = vmul.f32 %v749, %v748
    %v751 = vmul.f32 0.5, %v750
    %v752 = vsub.f32 1.5, %v751
    %v753 = vmul.f32 %v748, %v752
    %vm754 = vweird.f32 %v737
    %vm755 = vweird.f32 %v748
    %vm756 = vmor %vm754, %vm755
    %v757 = vsel %vm756, %v748, %v753
    %v758 = vmul.f32 %v724, %v747
    %v759 = vmul.f32 %v725, %v757
    %s760 = scalar_lea.vmem %s5, 2
    %v761 = vld [vmem:[%s760] sm:$0x1]
    %v763 = vperm.slane %v761, 0
    %v765 = vmul.f32 %v758, %v763
    %v766 = vmul.f32 %v759, %v763
    %s767 = scalar_lea.vmem %s6, 2
    %v768 = vld [vmem:[%s767] sm:$0x1]
    %v770 = vperm.slane %v768, 0
    %v772 = vadd.f32 %v765, %v770
    %v773 = vadd.f32 %v766, %v770
    %v774 = vadd.f32 %v221, %v772
    %v775 = vadd.f32 %v222, %v773
    %v776 = vmax.f32 %v774, 0.0
    %v777 = vmax.f32 %v775, 0.0
    %778 = vst.msk [vmem:[#allocation3 + $0x1] sm:$0xff] %vm100, %v776
    %779 = vst.msk [vmem:[#allocation3 + $0x9] sm:$0xff] %vm100, %v777
    %s780 = scalar_lea.vmem %s4, 3
    %v781 = vld [vmem:[%s780] sm:$0x1]
    %v782 = vld [vmem:[#allocation3] sm:$0xff]
    %v783 = vld [vmem:[#allocation3 + $0x8] sm:$0xff]
    %v784 = vpack.c.bf16 %v783, %v782
    %s785 = scalar_lea.vmem [#allocation9], 144
    %v786 = vld [vmem:[%s785] sm:$0xf]
    %v787 = vld [vmem:[%s785 + $0x4] sm:$0xf]
    %v788 = vld [vmem:[%s785 + $0x8] sm:$0xf]
    %v789 = vld [vmem:[%s785 + $0xc] sm:$0xf]
    %v790 = vld [vmem:[#allocation3 + $0x1] sm:$0xff]
    %v791 = vld [vmem:[#allocation3 + $0x9] sm:$0xff]
    %v792 = vpack.c.bf16 %v791, %v790
    %s793 = scalar_lea.vmem [#allocation9], 160
    %v794 = vld [vmem:[%s793] sm:$0xf]
    %v795 = vld [vmem:[%s793 + $0x4] sm:$0xf]
    %v796 = vld [vmem:[%s793 + $0x8] sm:$0xf]
    %v797 = vld [vmem:[%s793 + $0xc] sm:$0xf]
    %v802 = vunpack.c.l.b16 %v794
    %v803 = vunpack.c.l.b16 %v795
    %v804 = vunpack.c.l.b16 %v796
    %v805 = vunpack.c.l.b16 %v797
    %v806 = vpack.c.b16 %v803, %v802
    %v807 = vpack.c.b16 %v805, %v804
    %v811 = vsel %vm100, %v792, 0
    %813 = vmatpush.bf16.msra.mxu0 0
    %814 = vmatpush.bf16.msra.mxu0 0
    %815 = vmatpush.bf16.msra.mxu0 0
    %816 = vmatpush.bf16.msra.mxu0 0
    %817 = vmatpush.bf16.msra.mxu0 0
    %818 = vmatpush.bf16.msra.mxu0 0
    %819 = vmatpush.bf16.msra.mxu0 %v807
    %820 = vmatpush.bf16.msra.mxu0 %v806
    %821 = vmatmul.bf16.gmra.mxu0 %v811
    %v822 = vpop.f32.mrf.mxu0
    %v823 = vadd.f32 0.0, %v822
    %v824 = vpop.f32.mrf.mxu0
    %v825 = vadd.f32 0.0, %v824
    %826 = vdwg.mxu0
    %v831 = vunpack.c.l.b16 %v786
    %v832 = vunpack.c.l.b16 %v787
    %v833 = vunpack.c.l.b16 %v788
    %v834 = vunpack.c.l.b16 %v789
    %v835 = vpack.c.b16 %v832, %v831
    %v836 = vpack.c.b16 %v834, %v833
    %v840 = vsel %vm100, %v784, 0
    %842 = vmatpush.bf16.msra.mxu0 0
    %843 = vmatpush.bf16.msra.mxu0 0
    %844 = vmatpush.bf16.msra.mxu0 0
    %845 = vmatpush.bf16.msra.mxu0 0
    %846 = vmatpush.bf16.msra.mxu0 0
    %847 = vmatpush.bf16.msra.mxu0 0
    %848 = vmatpush.bf16.msra.mxu0 %v836
    %849 = vmatpush.bf16.msra.mxu0 %v835
    %850 = vmatmul.bf16.gmra.mxu0 %v840
    %v851 = vpop.f32.mrf.mxu0
    %v852 = vadd.f32 %v823, %v851
    %v853 = vpop.f32.mrf.mxu0
    %v854 = vadd.f32 %v825, %v853
    %855 = vdwg.mxu0
    %v856 = vld [vmem:[#allocation3 + $0x2] sm:$0xff]
    %v857 = vld [vmem:[#allocation3 + $0xa] sm:$0xff]
    %v858 = vpack.c.bf16 %v857, %v856
    %s859 = scalar_lea.vmem [#allocation9], 176
    %v860 = vld [vmem:[%s859] sm:$0xf]
    %v861 = vld [vmem:[%s859 + $0x4] sm:$0xf]
    %v862 = vld [vmem:[%s859 + $0x8] sm:$0xf]
    %v863 = vld [vmem:[%s859 + $0xc] sm:$0xf]
    %v868 = vunpack.c.l.b16 %v860
    %v869 = vunpack.c.l.b16 %v861
    %v870 = vunpack.c.l.b16 %v862
    %v871 = vunpack.c.l.b16 %v863
    %v872 = vpack.c.b16 %v869, %v868
    %v873 = vpack.c.b16 %v871, %v870
    %v877 = vsel %vm100, %v858, 0
    %879 = vmatpush.bf16.msra.mxu0 0
    %880 = vmatpush.bf16.msra.mxu0 0
    %881 = vmatpush.bf16.msra.mxu0 0
    %882 = vmatpush.bf16.msra.mxu0 0
    %883 = vmatpush.bf16.msra.mxu0 0
    %884 = vmatpush.bf16.msra.mxu0 0
    %885 = vmatpush.bf16.msra.mxu0 %v873
    %886 = vmatpush.bf16.msra.mxu0 %v872
    %887 = vmatmul.bf16.gmra.mxu0 %v877
    %v888 = vpop.f32.mrf.mxu0
    %v889 = vadd.f32 0.0, %v888
    %v890 = vpop.f32.mrf.mxu0
    %v891 = vadd.f32 0.0, %v890
    %892 = vdwg.mxu0
    %v893 = vadd.f32 %v852, %v889
    %v894 = vadd.f32 %v854, %v891
    %v896 = vperm.slane %v781, 0
    %v898 = vadd.f32 %v893, %v896
    %v899 = vadd.f32 %v894, %v896
    %v900 = vsel %vm100, %v898, 0.0
    %901 = vadd.xlane.f32.xlu0 %v900
    %v902 = vpop.xlane.xlu0 %901
    %v903 = vsel %vm100, %v899, 0.0
    %904 = vadd.xlane.f32.xlu0 %v903
    %v905 = vpop.xlane.xlu0 %904
    %v906 = vmul.f32 %v902, %v357
    %v907 = vmul.f32 %v905, %v357
    %v908 = vsub.f32 %v898, %v906
    %v909 = vsub.f32 %v899, %v907
    %v910 = vmul.f32 %v908, %v908
    %v911 = vmul.f32 %v909, %v909
    %v912 = vsel %vm100, %v910, 0.0
    %913 = vadd.xlane.f32.xlu0 %v912
    %v914 = vpop.xlane.xlu0 %913
    %v915 = vsel %vm100, %v911, 0.0
    %916 = vadd.xlane.f32.xlu0 %v915
    %v917 = vpop.xlane.xlu0 %916
    %v918 = vmul.f32 %v914, %v357
    %v919 = vmul.f32 %v917, %v357
    %v920 = vadd.f32 %v918, 1e-05
    %v921 = vadd.f32 %v919, 1e-05
    %v922 = vrsqrt.pop %v920
    %v923 = vmul.f32 %v922, %v920
    %v924 = vmul.f32 %v923, %v922
    %v925 = vmul.f32 0.5, %v924
    %v926 = vsub.f32 1.5, %v925
    %v927 = vmul.f32 %v922, %v926
    %vm928 = vweird.f32 %v920
    %vm929 = vweird.f32 %v922
    %vm930 = vmor %vm928, %vm929
    %v931 = vsel %vm930, %v922, %v927
    %v932 = vrsqrt.pop %v921
    %v933 = vmul.f32 %v932, %v921
    %v934 = vmul.f32 %v933, %v932
    %v935 = vmul.f32 0.5, %v934
    %v936 = vsub.f32 1.5, %v935
    %v937 = vmul.f32 %v932, %v936
    %vm938 = vweird.f32 %v921
    %vm939 = vweird.f32 %v932
    %vm940 = vmor %vm938, %vm939
    %v941 = vsel %vm940, %v932, %v937
    %v942 = vmul.f32 %v908, %v931
    %v943 = vmul.f32 %v909, %v941
    %s944 = scalar_lea.vmem %s5, 3
    %v945 = vld [vmem:[%s944] sm:$0x1]
    %v947 = vperm.slane %v945, 0
    %v949 = vmul.f32 %v942, %v947
    %v950 = vmul.f32 %v943, %v947
    %s951 = scalar_lea.vmem %s6, 3
    %v952 = vld [vmem:[%s951] sm:$0x1]
    %v954 = vperm.slane %v952, 0
    %v956 = vadd.f32 %v949, %v954
    %v957 = vadd.f32 %v950, %v954
    %v958 = vadd.f32 %v774, %v956
    %v959 = vadd.f32 %v775, %v957
    %v960 = vadd.f32 %v592, %v958
    %v961 = vadd.f32 %v593, %v959
    %962 = vst.msk [vmem:[#allocation3 + $0x1] sm:$0xff] %vm100, %v960
    %963 = vst.msk [vmem:[#allocation3 + $0x9] sm:$0xff] %vm100, %v961
    %v964 = vld [vmem:[%s8] sm:$0x1]
    %v965 = vld [vmem:[#allocation3] sm:$0xff]
    %v966 = vld [vmem:[#allocation3 + $0x8] sm:$0xff]
    %v967 = vpack.c.bf16 %v966, %v965
    %v968 = vld [vmem:[#allocation10] sm:$0xf]
    %v969 = vld [vmem:[#allocation10 + $0x4] sm:$0xf]
    %v970 = vld [vmem:[#allocation10 + $0x8] sm:$0xf]
    %v971 = vld [vmem:[#allocation10 + $0xc] sm:$0xf]
    %v972 = vld [vmem:[#allocation3 + $0x1] sm:$0xff]
    %v973 = vld [vmem:[#allocation3 + $0x9] sm:$0xff]
    %v974 = vpack.c.bf16 %v973, %v972
    %s975 = scalar_lea.vmem [#allocation10], 16
    %v976 = vld [vmem:[%s975] sm:$0xf]
    %v977 = vld [vmem:[%s975 + $0x4] sm:$0xf]
    %v978 = vld [vmem:[%s975 + $0x8] sm:$0xf]
    %v979 = vld [vmem:[%s975 + $0xc] sm:$0xf]
    %v984 = vunpack.c.l.b16 %v976
    %v985 = vunpack.c.l.b16 %v977
    %v986 = vunpack.c.l.b16 %v978
    %v987 = vunpack.c.l.b16 %v979
    %v988 = vpack.c.b16 %v985, %v984
    %v989 = vpack.c.b16 %v987, %v986
    %v993 = vsel %vm100, %v974, 0
    %995 = vmatpush.bf16.msra.mxu0 0
    %996 = vmatpush.bf16.msra.mxu0 0
    %997 = vmatpush.bf16.msra.mxu0 0
    %998 = vmatpush.bf16.msra.mxu0 0
    %999 = vmatpush.bf16.msra.mxu0 0
    %1000 = vmatpush.bf16.msra.mxu0 0
    %1001 = vmatpush.bf16.msra.mxu0 %v989
    %1002 = vmatpush.bf16.msra.mxu0 %v988
    %1003 = vmatmul.bf16.gmra.mxu0 %v993
    %v1004 = vpop.f32.mrf.mxu0
    %v1005 = vadd.f32 0.0, %v1004
    %v1006 = vpop.f32.mrf.mxu0
    %v1007 = vadd.f32 0.0, %v1006
    %1008 = vdwg.mxu0
    %v1013 = vunpack.c.l.b16 %v968
    %v1014 = vunpack.c.l.b16 %v969
    %v1015 = vunpack.c.l.b16 %v970
    %v1016 = vunpack.c.l.b16 %v971
    %v1017 = vpack.c.b16 %v1014, %v1013
    %v1018 = vpack.c.b16 %v1016, %v1015
    %v1022 = vsel %vm100, %v967, 0
    %1024 = vmatpush.bf16.msra.mxu0 0
    %1025 = vmatpush.bf16.msra.mxu0 0
    %1026 = vmatpush.bf16.msra.mxu0 0
    %1027 = vmatpush.bf16.msra.mxu0 0
    %1028 = vmatpush.bf16.msra.mxu0 0
    %1029 = vmatpush.bf16.msra.mxu0 0
    %1030 = vmatpush.bf16.msra.mxu0 %v1018
    %1031 = vmatpush.bf16.msra.mxu0 %v1017
    %1032 = vmatmul.bf16.gmra.mxu0 %v1022
    %v1033 = vpop.f32.mrf.mxu0
    %v1034 = vadd.f32 %v1005, %v1033
    %v1035 = vpop.f32.mrf.mxu0
    %v1036 = vadd.f32 %v1007, %v1035
    %1037 = vdwg.mxu0
    %v1038 = vld [vmem:[#allocation3 + $0x2] sm:$0xff]
    %v1039 = vld [vmem:[#allocation3 + $0xa] sm:$0xff]
    %v1040 = vpack.c.bf16 %v1039, %v1038
    %s1041 = scalar_lea.vmem [#allocation10], 32
    %v1042 = vld [vmem:[%s1041] sm:$0xf]
    %v1043 = vld [vmem:[%s1041 + $0x4] sm:$0xf]
    %v1044 = vld [vmem:[%s1041 + $0x8] sm:$0xf]
    %v1045 = vld [vmem:[%s1041 + $0xc] sm:$0xf]
    %v1050 = vunpack.c.l.b16 %v1042
    %v1051 = vunpack.c.l.b16 %v1043
    %v1052 = vunpack.c.l.b16 %v1044
    %v1053 = vunpack.c.l.b16 %v1045
    %v1054 = vpack.c.b16 %v1051, %v1050
    %v1055 = vpack.c.b16 %v1053, %v1052
    %v1059 = vsel %vm100, %v1040, 0
    %1061 = vmatpush.bf16.msra.mxu0 0
    %1062 = vmatpush.bf16.msra.mxu0 0
    %1063 = vmatpush.bf16.msra.mxu0 0
    %1064 = vmatpush.bf16.msra.mxu0 0
    %1065 = vmatpush.bf16.msra.mxu0 0
    %1066 = vmatpush.bf16.msra.mxu0 0
    %1067 = vmatpush.bf16.msra.mxu0 %v1055
    %1068 = vmatpush.bf16.msra.mxu0 %v1054
    %1069 = vmatmul.bf16.gmra.mxu0 %v1059
    %v1070 = vpop.f32.mrf.mxu0
    %v1071 = vadd.f32 0.0, %v1070
    %v1072 = vpop.f32.mrf.mxu0
    %v1073 = vadd.f32 0.0, %v1072
    %1074 = vdwg.mxu0
    %v1075 = vadd.f32 %v1034, %v1071
    %v1076 = vadd.f32 %v1036, %v1073
    %v1078 = vperm.slane %v964, 0
    %v1080 = vadd.f32 %v1075, %v1078
    %v1081 = vadd.f32 %v1076, %v1078
    %1082 = vxpose.xlu0.b32.start [1/16] %v1080, 128
    %1083 = vxpose.xlu0.b32.cont [2/16] %v1081, 128
    %1084 = vxpose.xlu0.b32.cont [3/16] 0.0, 128
    %1085 = vxpose.xlu0.b32.cont [4/16] 0.0, 128
    %1086 = vxpose.xlu0.b32.cont [5/16] 0.0, 128
    %1087 = vxpose.xlu0.b32.cont [6/16] 0.0, 128
    %1088 = vxpose.xlu0.b32.cont [7/16] 0.0, 128
    %1089 = vxpose.xlu0.b32.cont [8/16] 0.0, 128
    %1090 = vxpose.xlu0.b32.cont [9/16] 0.0, 128
    %1091 = vxpose.xlu0.b32.cont [10/16] 0.0, 128
    %1092 = vxpose.xlu0.b32.cont [11/16] 0.0, 128
    %1093 = vxpose.xlu0.b32.cont [12/16] 0.0, 128
    %1094 = vxpose.xlu0.b32.cont [13/16] 0.0, 128
    %1095 = vxpose.xlu0.b32.cont [14/16] 0.0, 128
    %1096 = vxpose.xlu0.b32.cont [15/16] 0.0, 128
    %1097 = vxpose.xlu0.b32.end [16/16] 0.0, 128
    %v1098 = vpop.trf.xlu0
    %v1099 = vpop.trf.xlu0
    %v1100 = vpop.trf.xlu0
    %v1101 = vpop.trf.xlu0
    %v1102 = vpop.trf.xlu0
    %v1103 = vpop.trf.xlu0
    %v1104 = vpop.trf.xlu0
    %v1105 = vpop.trf.xlu0
    %v1106 = vpop.trf.xlu0
    %v1107 = vpop.trf.xlu0
    %v1108 = vpop.trf.xlu0
    %v1109 = vpop.trf.xlu0
    %v1110 = vpop.trf.xlu0
    %v1111 = vpop.trf.xlu0
    %v1112 = vpop.trf.xlu0
    %v1113 = vpop.trf.xlu0
    %vm1114 = vcmask 125952
    %1115 = vst.msk [vmem:[#allocation12] sm:$0xf] %vm1114, %v1098
    %s1116 = scalar_lea.vmem %s0, 4
    %v1117 = vld [vmem:[%s1116] sm:$0xf]
    %1118 = vxpose.xlu0.b32.start [1/16] %v1117, 128
    %1119 = vxpose.xlu0.b32.cont [2/16] 0.0, 128
    %1120 = vxpose.xlu0.b32.cont [3/16] 0.0, 128
    %1121 = vxpose.xlu0.b32.cont [4/16] 0.0, 128
    %1122 = vxpose.xlu0.b32.cont [5/16] 0.0, 128
    %1123 = vxpose.xlu0.b32.cont [6/16] 0.0, 128
    %1124 = vxpose.xlu0.b32.cont [7/16] 0.0, 128
    %1125 = vxpose.xlu0.b32.cont [8/16] 0.0, 128
    %1126 = vxpose.xlu0.b32.cont [9/16] 0.0, 128
    %1127 = vxpose.xlu0.b32.cont [10/16] 0.0, 128
    %1128 = vxpose.xlu0.b32.cont [11/16] 0.0, 128
    %1129 = vxpose.xlu0.b32.cont [12/16] 0.0, 128
    %1130 = vxpose.xlu0.b32.cont [13/16] 0.0, 128
    %1131 = vxpose.xlu0.b32.cont [14/16] 0.0, 128
    %1132 = vxpose.xlu0.b32.cont [15/16] 0.0, 128
    %1133 = vxpose.xlu0.b32.end [16/16] 0.0, 128
    %v1134 = vpop.trf.xlu0
    %v1135 = vpop.trf.xlu0
    %v1136 = vpop.trf.xlu0
    %v1137 = vpop.trf.xlu0
    %v1138 = vpop.trf.xlu0
    %v1139 = vpop.trf.xlu0
    %v1140 = vpop.trf.xlu0
    %v1141 = vpop.trf.xlu0
    %v1142 = vpop.trf.xlu0
    %v1143 = vpop.trf.xlu0
    %v1144 = vpop.trf.xlu0
    %v1145 = vpop.trf.xlu0
    %v1146 = vpop.trf.xlu0
    %v1147 = vpop.trf.xlu0
    %v1148 = vpop.trf.xlu0
    %v1149 = vpop.trf.xlu0
    %1150 = vst.msk [vmem:[#allocation2 + $0x1] sm:$0xff] %vm95, %v1134
    %1151 = vst.msk [vmem:[#allocation2 + $0x9] sm:$0xff] %vm95, %v1135
    %v1152 = vld [vmem:[#allocation7] sm:$0x1]
    %v1153 = vld [vmem:[#allocation2] sm:$0xff]
    %v1154 = vld [vmem:[#allocation2 + $0x8] sm:$0xff]
    %v1155 = vpack.c.bf16 %v1154, %v1153
    %v1156 = vld [vmem:[#allocation4] sm:$0x3]
    %v1157 = vld [vmem:[#allocation2 + $0x1] sm:$0xff]
    %v1158 = vld [vmem:[#allocation2 + $0x9] sm:$0xff]
    %v1159 = vpack.c.bf16 %v1158, %v1157
    %v1160 = vld [vmem:[%s148] sm:$0x3]
    %v1162 = vsel %vm95, %v1159, 0
    %v1165 = vsel %vm153, %v1160, 0
    %1167 = vmatpush.bf16.msra.mxu0 0
    %1168 = vmatpush.bf16.msra.mxu0 0
    %1169 = vmatpush.bf16.msra.mxu0 0
    %1170 = vmatpush.bf16.msra.mxu0 0
    %1171 = vmatpush.bf16.msra.mxu0 0
    %1172 = vmatpush.bf16.msra.mxu0 0
    %1173 = vmatpush.bf16.msra.mxu0 0
    %1174 = vmatpush.bf16.msra.mxu0 %v1165
    %1175 = vmatmul.bf16.gmra.mxu0 %v1162
    %v1176 = vpop.f32.mrf.mxu0
    %v1177 = vadd.f32 0.0, %v1176
    %v1178 = vpop.f32.mrf.mxu0
    %v1179 = vadd.f32 0.0, %v1178
    %1180 = vdwg.mxu0
    %v1182 = vsel %vm95, %v1155, 0
    %v1185 = vsel %vm153, %v1156, 0
    %1187 = vmatpush.bf16.msra.mxu0 0
    %1188 = vmatpush.bf16.msra.mxu0 0
    %1189 = vmatpush.bf16.msra.mxu0 0
    %1190 = vmatpush.bf16.msra.mxu0 0
    %1191 = vmatpush.bf16.msra.mxu0 0
    %1192 = vmatpush.bf16.msra.mxu0 0
    %1193 = vmatpush.bf16.msra.mxu0 0
    %1194 = vmatpush.bf16.msra.mxu0 %v1185
    %1195 = vmatmul.bf16.gmra.mxu0 %v1182
    %v1196 = vpop.f32.mrf.mxu0
    %v1197 = vadd.f32 %v1177, %v1196
    %v1198 = vpop.f32.mrf.mxu0
    %v1199 = vadd.f32 %v1179, %v1198
    %1200 = vdwg.mxu0
    %v1201 = vld [vmem:[#allocation2 + $0x2] sm:$0xff]
    %v1202 = vld [vmem:[#allocation2 + $0xa] sm:$0xff]
    %v1203 = vpack.c.bf16 %v1202, %v1201
    %v1204 = vld [vmem:[%s194] sm:$0x3]
    %v1206 = vsel %vm95, %v1203, 0
    %v1209 = vsel %vm153, %v1204, 0
    %1211 = vmatpush.bf16.msra.mxu0 0
    %1212 = vmatpush.bf16.msra.mxu0 0
    %1213 = vmatpush.bf16.msra.mxu0 0
    %1214 = vmatpush.bf16.msra.mxu0 0
    %1215 = vmatpush.bf16.msra.mxu0 0
    %1216 = vmatpush.bf16.msra.mxu0 0
    %1217 = vmatpush.bf16.msra.mxu0 0
    %1218 = vmatpush.bf16.msra.mxu0 %v1209
    %1219 = vmatmul.bf16.gmra.mxu0 %v1206
    %v1220 = vpop.f32.mrf.mxu0
    %v1221 = vadd.f32 0.0, %v1220
    %v1222 = vpop.f32.mrf.mxu0
    %v1223 = vadd.f32 0.0, %v1222
    %1224 = vdwg.mxu0
    %v1225 = vadd.f32 %v1197, %v1221
    %v1226 = vadd.f32 %v1199, %v1223
    %v1228 = vperm.slane %v1152, 0
    %v1230 = vadd.f32 %v1225, %v1228
    %v1231 = vadd.f32 %v1226, %v1228
    %v1232 = vmax.f32 %v1230, 0.0
    %v1233 = vmax.f32 %v1231, 0.0
    %1234 = vst.msk [vmem:[#allocation3 + $0x1] sm:$0xff] %vm100, %v1232
    %1235 = vst.msk [vmem:[#allocation3 + $0x9] sm:$0xff] %vm100, %v1233
    %v1236 = vld [vmem:[%s4] sm:$0x1]
    %v1237 = vld [vmem:[#allocation3] sm:$0xff]
    %v1238 = vld [vmem:[#allocation3 + $0x8] sm:$0xff]
    %v1239 = vpack.c.bf16 %v1238, %v1237
    %v1240 = vld [vmem:[#allocation9] sm:$0xf]
    %v1241 = vld [vmem:[#allocation9 + $0x4] sm:$0xf]
    %v1242 = vld [vmem:[#allocation9 + $0x8] sm:$0xf]
    %v1243 = vld [vmem:[#allocation9 + $0xc] sm:$0xf]
    %v1244 = vld [vmem:[#allocation3 + $0x1] sm:$0xff]
    %v1245 = vld [vmem:[#allocation3 + $0x9] sm:$0xff]
    %v1246 = vpack.c.bf16 %v1245, %v1244
    %v1247 = vld [vmem:[%s238] sm:$0xf]
    %v1248 = vld [vmem:[%s238 + $0x4] sm:$0xf]
    %v1249 = vld [vmem:[%s238 + $0x8] sm:$0xf]
    %v1250 = vld [vmem:[%s238 + $0xc] sm:$0xf]
    %v1255 = vunpack.c.l.b16 %v1247
    %v1256 = vunpack.c.l.b16 %v1248
    %v1257 = vunpack.c.l.b16 %v1249
    %v1258 = vunpack.c.l.b16 %v1250
    %v1259 = vpack.c.b16 %v1256, %v1255
    %v1260 = vpack.c.b16 %v1258, %v1257
    %v1264 = vsel %vm100, %v1246, 0
    %1266 = vmatpush.bf16.msra.mxu0 0
    %1267 = vmatpush.bf16.msra.mxu0 0
    %1268 = vmatpush.bf16.msra.mxu0 0
    %1269 = vmatpush.bf16.msra.mxu0 0
    %1270 = vmatpush.bf16.msra.mxu0 0
    %1271 = vmatpush.bf16.msra.mxu0 0
    %1272 = vmatpush.bf16.msra.mxu0 %v1260
    %1273 = vmatpush.bf16.msra.mxu0 %v1259
    %1274 = vmatmul.bf16.gmra.mxu0 %v1264
    %v1275 = vpop.f32.mrf.mxu0
    %v1276 = vadd.f32 0.0, %v1275
    %v1277 = vpop.f32.mrf.mxu0
    %v1278 = vadd.f32 0.0, %v1277
    %1279 = vdwg.mxu0
    %v1284 = vunpack.c.l.b16 %v1240
    %v1285 = vunpack.c.l.b16 %v1241
    %v1286 = vunpack.c.l.b16 %v1242
    %v1287 = vunpack.c.l.b16 %v1243
    %v1288 = vpack.c.b16 %v1285, %v1284
    %v1289 = vpack.c.b16 %v1287, %v1286
    %v1293 = vsel %vm100, %v1239, 0
    %1295 = vmatpush.bf16.msra.mxu0 0
    %1296 = vmatpush.bf16.msra.mxu0 0
    %1297 = vmatpush.bf16.msra.mxu0 0
    %1298 = vmatpush.bf16.msra.mxu0 0
    %1299 = vmatpush.bf16.msra.mxu0 0
    %1300 = vmatpush.bf16.msra.mxu0 0
    %1301 = vmatpush.bf16.msra.mxu0 %v1289
    %1302 = vmatpush.bf16.msra.mxu0 %v1288
    %1303 = vmatmul.bf16.gmra.mxu0 %v1293
    %v1304 = vpop.f32.mrf.mxu0
    %v1305 = vadd.f32 %v1276, %v1304
    %v1306 = vpop.f32.mrf.mxu0
    %v1307 = vadd.f32 %v1278, %v1306
    %1308 = vdwg.mxu0
    %v1309 = vld [vmem:[#allocation3 + $0x2] sm:$0xff]
    %v1310 = vld [vmem:[#allocation3 + $0xa] sm:$0xff]
    %v1311 = vpack.c.bf16 %v1310, %v1309
    %v1312 = vld [vmem:[%s304] sm:$0xf]
    %v1313 = vld [vmem:[%s304 + $0x4] sm:$0xf]
    %v1314 = vld [vmem:[%s304 + $0x8] sm:$0xf]
    %v1315 = vld [vmem:[%s304 + $0xc] sm:$0xf]
    %v1320 = vunpack.c.l.b16 %v1312
    %v1321 = vunpack.c.l.b16 %v1313
    %v1322 = vunpack.c.l.b16 %v1314
    %v1323 = vunpack.c.l.b16 %v1315
    %v1324 = vpack.c.b16 %v1321, %v1320
    %v1325 = vpack.c.b16 %v1323, %v1322
    %v1329 = vsel %vm100, %v1311, 0
    %1331 = vmatpush.bf16.msra.mxu0 0
    %1332 = vmatpush.bf16.msra.mxu0 0
    %1333 = vmatpush.bf16.msra.mxu0 0
    %1334 = vmatpush.bf16.msra.mxu0 0
    %1335 = vmatpush.bf16.msra.mxu0 0
    %1336 = vmatpush.bf16.msra.mxu0 0
    %1337 = vmatpush.bf16.msra.mxu0 %v1325
    %1338 = vmatpush.bf16.msra.mxu0 %v1324
    %1339 = vmatmul.bf16.gmra.mxu0 %v1329
    %v1340 = vpop.f32.mrf.mxu0
    %v1341 = vadd.f32 0.0, %v1340
    %v1342 = vpop.f32.mrf.mxu0
    %v1343 = vadd.f32 0.0, %v1342
    %1344 = vdwg.mxu0
    %v1345 = vadd.f32 %v1305, %v1341
    %v1346 = vadd.f32 %v1307, %v1343
    %v1348 = vperm.slane %v1236, 0
    %v1350 = vadd.f32 %v1345, %v1348
    %v1351 = vadd.f32 %v1346, %v1348
    %v1352 = vsel %vm100, %v1350, 0.0
    %1353 = vadd.xlane.f32.xlu0 %v1352
    %v1354 = vpop.xlane.xlu0 %1353
    %v1355 = vsel %vm100, %v1351, 0.0
    %1356 = vadd.xlane.f32.xlu0 %v1355
    %v1357 = vpop.xlane.xlu0 %1356
    %v1358 = vmul.f32 %v1354, %v357
    %v1359 = vmul.f32 %v1357, %v357
    %v1360 = vsub.f32 %v1350, %v1358
    %v1361 = vsub.f32 %v1351, %v1359
    %v1362 = vmul.f32 %v1360, %v1360
    %v1363 = vmul.f32 %v1361, %v1361
    %v1364 = vsel %vm100, %v1362, 0.0
    %1365 = vadd.xlane.f32.xlu0 %v1364
    %v1366 = vpop.xlane.xlu0 %1365
    %v1367 = vsel %vm100, %v1363, 0.0
    %1368 = vadd.xlane.f32.xlu0 %v1367
    %v1369 = vpop.xlane.xlu0 %1368
    %v1370 = vmul.f32 %v1366, %v357
    %v1371 = vmul.f32 %v1369, %v357
    %v1372 = vadd.f32 %v1370, 1e-05
    %v1373 = vadd.f32 %v1371, 1e-05
    %v1374 = vrsqrt.pop %v1372
    %v1375 = vmul.f32 %v1374, %v1372
    %v1376 = vmul.f32 %v1375, %v1374
    %v1377 = vmul.f32 0.5, %v1376
    %v1378 = vsub.f32 1.5, %v1377
    %v1379 = vmul.f32 %v1374, %v1378
    %vm1380 = vweird.f32 %v1372
    %vm1381 = vweird.f32 %v1374
    %vm1382 = vmor %vm1380, %vm1381
    %v1383 = vsel %vm1382, %v1374, %v1379
    %v1384 = vrsqrt.pop %v1373
    %v1385 = vmul.f32 %v1384, %v1373
    %v1386 = vmul.f32 %v1385, %v1384
    %v1387 = vmul.f32 0.5, %v1386
    %v1388 = vsub.f32 1.5, %v1387
    %v1389 = vmul.f32 %v1384, %v1388
    %vm1390 = vweird.f32 %v1373
    %vm1391 = vweird.f32 %v1384
    %vm1392 = vmor %vm1390, %vm1391
    %v1393 = vsel %vm1392, %v1384, %v1389
    %v1394 = vmul.f32 %v1360, %v1383
    %v1395 = vmul.f32 %v1361, %v1393
    %v1396 = vld [vmem:[%s5] sm:$0x1]
    %v1398 = vperm.slane %v1396, 0
    %v1400 = vmul.f32 %v1394, %v1398
    %v1401 = vmul.f32 %v1395, %v1398
    %v1402 = vld [vmem:[%s6] sm:$0x1]
    %v1404 = vperm.slane %v1402, 0
    %v1406 = vadd.f32 %v1400, %v1404
    %v1407 = vadd.f32 %v1401, %v1404
    %v1408 = vadd.f32 %v1230, %v1406
    %v1409 = vadd.f32 %v1231, %v1407
    %v1410 = vmax.f32 %v1408, 0.0
    %v1411 = vmax.f32 %v1409, 0.0
    %1412 = vst.msk [vmem:[#allocation3 + $0x1] sm:$0xff] %vm100, %v1410
    %1413 = vst.msk [vmem:[#allocation3 + $0x9] sm:$0xff] %vm100, %v1411
    %v1414 = vld [vmem:[%s414] sm:$0x1]
    %v1415 = vld [vmem:[#allocation3] sm:$0xff]
    %v1416 = vld [vmem:[#allocation3 + $0x8] sm:$0xff]
    %v1417 = vpack.c.bf16 %v1416, %v1415
    %v1418 = vld [vmem:[%s419] sm:$0xf]
    %v1419 = vld [vmem:[%s419 + $0x4] sm:$0xf]
    %v1420 = vld [vmem:[%s419 + $0x8] sm:$0xf]
    %v1421 = vld [vmem:[%s419 + $0xc] sm:$0xf]
    %v1422 = vld [vmem:[#allocation3 + $0x1] sm:$0xff]
    %v1423 = vld [vmem:[#allocation3 + $0x9] sm:$0xff]
    %v1424 = vpack.c.bf16 %v1423, %v1422
    %v1425 = vld [vmem:[%s427] sm:$0xf]
    %v1426 = vld [vmem:[%s427 + $0x4] sm:$0xf]
    %v1427 = vld [vmem:[%s427 + $0x8] sm:$0xf]
    %v1428 = vld [vmem:[%s427 + $0xc] sm:$0xf]
    %v1433 = vunpack.c.l.b16 %v1425
    %v1434 = vunpack.c.l.b16 %v1426
    %v1435 = vunpack.c.l.b16 %v1427
    %v1436 = vunpack.c.l.b16 %v1428
    %v1437 = vpack.c.b16 %v1434, %v1433
    %v1438 = vpack.c.b16 %v1436, %v1435
    %v1442 = vsel %vm100, %v1424, 0
    %1444 = vmatpush.bf16.msra.mxu0 0
    %1445 = vmatpush.bf16.msra.mxu0 0
    %1446 = vmatpush.bf16.msra.mxu0 0
    %1447 = vmatpush.bf16.msra.mxu0 0
    %1448 = vmatpush.bf16.msra.mxu0 0
    %1449 = vmatpush.bf16.msra.mxu0 0
    %1450 = vmatpush.bf16.msra.mxu0 %v1438
    %1451 = vmatpush.bf16.msra.mxu0 %v1437
    %1452 = vmatmul.bf16.gmra.mxu0 %v1442
    %v1453 = vpop.f32.mrf.mxu0
    %v1454 = vadd.f32 0.0, %v1453
    %v1455 = vpop.f32.mrf.mxu0
    %v1456 = vadd.f32 0.0, %v1455
    %1457 = vdwg.mxu0
    %v1462 = vunpack.c.l.b16 %v1418
    %v1463 = vunpack.c.l.b16 %v1419
    %v1464 = vunpack.c.l.b16 %v1420
    %v1465 = vunpack.c.l.b16 %v1421
    %v1466 = vpack.c.b16 %v1463, %v1462
    %v1467 = vpack.c.b16 %v1465, %v1464
    %v1471 = vsel %vm100, %v1417, 0
    %1473 = vmatpush.bf16.msra.mxu0 0
    %1474 = vmatpush.bf16.msra.mxu0 0
    %1475 = vmatpush.bf16.msra.mxu0 0
    %1476 = vmatpush.bf16.msra.mxu0 0
    %1477 = vmatpush.bf16.msra.mxu0 0
    %1478 = vmatpush.bf16.msra.mxu0 0
    %1479 = vmatpush.bf16.msra.mxu0 %v1467
    %1480 = vmatpush.bf16.msra.mxu0 %v1466
    %1481 = vmatmul.bf16.gmra.mxu0 %v1471
    %v1482 = vpop.f32.mrf.mxu0
    %v1483 = vadd.f32 %v1454, %v1482
    %v1484 = vpop.f32.mrf.mxu0
    %v1485 = vadd.f32 %v1456, %v1484
    %1486 = vdwg.mxu0
    %v1487 = vld [vmem:[#allocation3 + $0x2] sm:$0xff]
    %v1488 = vld [vmem:[#allocation3 + $0xa] sm:$0xff]
    %v1489 = vpack.c.bf16 %v1488, %v1487
    %v1490 = vld [vmem:[%s493] sm:$0xf]
    %v1491 = vld [vmem:[%s493 + $0x4] sm:$0xf]
    %v1492 = vld [vmem:[%s493 + $0x8] sm:$0xf]
    %v1493 = vld [vmem:[%s493 + $0xc] sm:$0xf]
    %v1498 = vunpack.c.l.b16 %v1490
    %v1499 = vunpack.c.l.b16 %v1491
    %v1500 = vunpack.c.l.b16 %v1492
    %v1501 = vunpack.c.l.b16 %v1493
    %v1502 = vpack.c.b16 %v1499, %v1498
    %v1503 = vpack.c.b16 %v1501, %v1500
    %v1507 = vsel %vm100, %v1489, 0
    %1509 = vmatpush.bf16.msra.mxu0 0
    %1510 = vmatpush.bf16.msra.mxu0 0
    %1511 = vmatpush.bf16.msra.mxu0 0
    %1512 = vmatpush.bf16.msra.mxu0 0
    %1513 = vmatpush.bf16.msra.mxu0 0
    %1514 = vmatpush.bf16.msra.mxu0 0
    %1515 = vmatpush.bf16.msra.mxu0 %v1503
    %1516 = vmatpush.bf16.msra.mxu0 %v1502
    %1517 = vmatmul.bf16.gmra.mxu0 %v1507
    %v1518 = vpop.f32.mrf.mxu0
    %v1519 = vadd.f32 0.0, %v1518
    %v1520 = vpop.f32.mrf.mxu0
    %v1521 = vadd.f32 0.0, %v1520
    %1522 = vdwg.mxu0
    %v1523 = vadd.f32 %v1483, %v1519
    %v1524 = vadd.f32 %v1485, %v1521
    %v1526 = vperm.slane %v1414, 0
    %v1528 = vadd.f32 %v1523, %v1526
    %v1529 = vadd.f32 %v1524, %v1526
    %v1530 = vsel %vm100, %v1528, 0.0
    %1531 = vadd.xlane.f32.xlu0 %v1530
    %v1532 = vpop.xlane.xlu0 %1531
    %v1533 = vsel %vm100, %v1529, 0.0
    %1534 = vadd.xlane.f32.xlu0 %v1533
    %v1535 = vpop.xlane.xlu0 %1534
    %v1536 = vmul.f32 %v1532, %v357
    %v1537 = vmul.f32 %v1535, %v357
    %v1538 = vsub.f32 %v1528, %v1536
    %v1539 = vsub.f32 %v1529, %v1537
    %v1540 = vmul.f32 %v1538, %v1538
    %v1541 = vmul.f32 %v1539, %v1539
    %v1542 = vsel %vm100, %v1540, 0.0
    %1543 = vadd.xlane.f32.xlu0 %v1542
    %v1544 = vpop.xlane.xlu0 %1543
    %v1545 = vsel %vm100, %v1541, 0.0
    %1546 = vadd.xlane.f32.xlu0 %v1545
    %v1547 = vpop.xlane.xlu0 %1546
    %v1548 = vmul.f32 %v1544, %v357
    %v1549 = vmul.f32 %v1547, %v357
    %v1550 = vadd.f32 %v1548, 1e-05
    %v1551 = vadd.f32 %v1549, 1e-05
    %v1552 = vrsqrt.pop %v1550
    %v1553 = vmul.f32 %v1552, %v1550
    %v1554 = vmul.f32 %v1553, %v1552
    %v1555 = vmul.f32 0.5, %v1554
    %v1556 = vsub.f32 1.5, %v1555
    %v1557 = vmul.f32 %v1552, %v1556
    %vm1558 = vweird.f32 %v1550
    %vm1559 = vweird.f32 %v1552
    %vm1560 = vmor %vm1558, %vm1559
    %v1561 = vsel %vm1560, %v1552, %v1557
    %v1562 = vrsqrt.pop %v1551
    %v1563 = vmul.f32 %v1562, %v1551
    %v1564 = vmul.f32 %v1563, %v1562
    %v1565 = vmul.f32 0.5, %v1564
    %v1566 = vsub.f32 1.5, %v1565
    %v1567 = vmul.f32 %v1562, %v1566
    %vm1568 = vweird.f32 %v1551
    %vm1569 = vweird.f32 %v1562
    %vm1570 = vmor %vm1568, %vm1569
    %v1571 = vsel %vm1570, %v1562, %v1567
    %v1572 = vmul.f32 %v1538, %v1561
    %v1573 = vmul.f32 %v1539, %v1571
    %v1574 = vld [vmem:[%s578] sm:$0x1]
    %v1576 = vperm.slane %v1574, 0
    %v1578 = vmul.f32 %v1572, %v1576
    %v1579 = vmul.f32 %v1573, %v1576
    %v1580 = vld [vmem:[%s585] sm:$0x1]
    %v1582 = vperm.slane %v1580, 0
    %v1584 = vadd.f32 %v1578, %v1582
    %v1585 = vadd.f32 %v1579, %v1582
    %v1586 = vadd.f32 %v1408, %v1584
    %v1587 = vadd.f32 %v1409, %v1585
    %1588 = vst.msk [vmem:[#allocation3 + $0x1] sm:$0xff] %vm100, %v1232
    %1589 = vst.msk [vmem:[#allocation3 + $0x9] sm:$0xff] %vm100, %v1233
    %v1590 = vld [vmem:[%s596] sm:$0x1]
    %v1591 = vld [vmem:[#allocation3] sm:$0xff]
    %v1592 = vld [vmem:[#allocation3 + $0x8] sm:$0xff]
    %v1593 = vpack.c.bf16 %v1592, %v1591
    %v1594 = vld [vmem:[%s601] sm:$0xf]
    %v1595 = vld [vmem:[%s601 + $0x4] sm:$0xf]
    %v1596 = vld [vmem:[%s601 + $0x8] sm:$0xf]
    %v1597 = vld [vmem:[%s601 + $0xc] sm:$0xf]
    %v1598 = vld [vmem:[#allocation3 + $0x1] sm:$0xff]
    %v1599 = vld [vmem:[#allocation3 + $0x9] sm:$0xff]
    %v1600 = vpack.c.bf16 %v1599, %v1598
    %v1601 = vld [vmem:[%s609] sm:$0xf]
    %v1602 = vld [vmem:[%s609 + $0x4] sm:$0xf]
    %v1603 = vld [vmem:[%s609 + $0x8] sm:$0xf]
    %v1604 = vld [vmem:[%s609 + $0xc] sm:$0xf]
    %v1609 = vunpack.c.l.b16 %v1601
    %v1610 = vunpack.c.l.b16 %v1602
    %v1611 = vunpack.c.l.b16 %v1603
    %v1612 = vunpack.c.l.b16 %v1604
    %v1613 = vpack.c.b16 %v1610, %v1609
    %v1614 = vpack.c.b16 %v1612, %v1611
    %v1618 = vsel %vm100, %v1600, 0
    %1620 = vmatpush.bf16.msra.mxu0 0
    %1621 = vmatpush.bf16.msra.mxu0 0
    %1622 = vmatpush.bf16.msra.mxu0 0
    %1623 = vmatpush.bf16.msra.mxu0 0
    %1624 = vmatpush.bf16.msra.mxu0 0
    %1625 = vmatpush.bf16.msra.mxu0 0
    %1626 = vmatpush.bf16.msra.mxu0 %v1614
    %1627 = vmatpush.bf16.msra.mxu0 %v1613
    %1628 = vmatmul.bf16.gmra.mxu0 %v1618
    %v1629 = vpop.f32.mrf.mxu0
    %v1630 = vadd.f32 0.0, %v1629
    %v1631 = vpop.f32.mrf.mxu0
    %v1632 = vadd.f32 0.0, %v1631
    %1633 = vdwg.mxu0
    %v1638 = vunpack.c.l.b16 %v1594
    %v1639 = vunpack.c.l.b16 %v1595
    %v1640 = vunpack.c.l.b16 %v1596
    %v1641 = vunpack.c.l.b16 %v1597
    %v1642 = vpack.c.b16 %v1639, %v1638
    %v1643 = vpack.c.b16 %v1641, %v1640
    %v1647 = vsel %vm100, %v1593, 0
    %1649 = vmatpush.bf16.msra.mxu0 0
    %1650 = vmatpush.bf16.msra.mxu0 0
    %1651 = vmatpush.bf16.msra.mxu0 0
    %1652 = vmatpush.bf16.msra.mxu0 0
    %1653 = vmatpush.bf16.msra.mxu0 0
    %1654 = vmatpush.bf16.msra.mxu0 0
    %1655 = vmatpush.bf16.msra.mxu0 %v1643
    %1656 = vmatpush.bf16.msra.mxu0 %v1642
    %1657 = vmatmul.bf16.gmra.mxu0 %v1647
    %v1658 = vpop.f32.mrf.mxu0
    %v1659 = vadd.f32 %v1630, %v1658
    %v1660 = vpop.f32.mrf.mxu0
    %v1661 = vadd.f32 %v1632, %v1660
    %1662 = vdwg.mxu0
    %v1663 = vld [vmem:[#allocation3 + $0x2] sm:$0xff]
    %v1664 = vld [vmem:[#allocation3 + $0xa] sm:$0xff]
    %v1665 = vpack.c.bf16 %v1664, %v1663
    %v1666 = vld [vmem:[%s675] sm:$0xf]
    %v1667 = vld [vmem:[%s675 + $0x4] sm:$0xf]
    %v1668 = vld [vmem:[%s675 + $0x8] sm:$0xf]
    %v1669 = vld [vmem:[%s675 + $0xc] sm:$0xf]
    %v1674 = vunpack.c.l.b16 %v1666
    %v1675 = vunpack.c.l.b16 %v1667
    %v1676 = vunpack.c.l.b16 %v1668
    %v1677 = vunpack.c.l.b16 %v1669
    %v1678 = vpack.c.b16 %v1675, %v1674
    %v1679 = vpack.c.b16 %v1677, %v1676
    %v1683 = vsel %vm100, %v1665, 0
    %1685 = vmatpush.bf16.msra.mxu0 0
    %1686 = vmatpush.bf16.msra.mxu0 0
    %1687 = vmatpush.bf16.msra.mxu0 0
    %1688 = vmatpush.bf16.msra.mxu0 0
    %1689 = vmatpush.bf16.msra.mxu0 0
    %1690 = vmatpush.bf16.msra.mxu0 0
    %1691 = vmatpush.bf16.msra.mxu0 %v1679
    %1692 = vmatpush.bf16.msra.mxu0 %v1678
    %1693 = vmatmul.bf16.gmra.mxu0 %v1683
    %v1694 = vpop.f32.mrf.mxu0
    %v1695 = vadd.f32 0.0, %v1694
    %v1696 = vpop.f32.mrf.mxu0
    %v1697 = vadd.f32 0.0, %v1696
    %1698 = vdwg.mxu0
    %v1699 = vadd.f32 %v1659, %v1695
    %v1700 = vadd.f32 %v1661, %v1697
    %v1702 = vperm.slane %v1590, 0
    %v1704 = vadd.f32 %v1699, %v1702
    %v1705 = vadd.f32 %v1700, %v1702
    %v1706 = vsel %vm100, %v1704, 0.0
    %1707 = vadd.xlane.f32.xlu0 %v1706
    %v1708 = vpop.xlane.xlu0 %1707
    %v1709 = vsel %vm100, %v1705, 0.0
    %1710 = vadd.xlane.f32.xlu0 %v1709
    %v1711 = vpop.xlane.xlu0 %1710
    %v1712 = vmul.f32 %v1708, %v357
    %v1713 = vmul.f32 %v1711, %v357
    %v1714 = vsub.f32 %v1704, %v1712
    %v1715 = vsub.f32 %v1705, %v1713
    %v1716 = vmul.f32 %v1714, %v1714
    %v1717 = vmul.f32 %v1715, %v1715
    %v1718 = vsel %vm100, %v1716, 0.0
    %1719 = vadd.xlane.f32.xlu0 %v1718
    %v1720 = vpop.xlane.xlu0 %1719
    %v1721 = vsel %vm100, %v1717, 0.0
    %1722 = vadd.xlane.f32.xlu0 %v1721
    %v1723 = vpop.xlane.xlu0 %1722
    %v1724 = vmul.f32 %v1720, %v357
    %v1725 = vmul.f32 %v1723, %v357
    %v1726 = vadd.f32 %v1724, 1e-05
    %v1727 = vadd.f32 %v1725, 1e-05
    %v1728 = vrsqrt.pop %v1726
    %v1729 = vmul.f32 %v1728, %v1726
    %v1730 = vmul.f32 %v1729, %v1728
    %v1731 = vmul.f32 0.5, %v1730
    %v1732 = vsub.f32 1.5, %v1731
    %v1733 = vmul.f32 %v1728, %v1732
    %vm1734 = vweird.f32 %v1726
    %vm1735 = vweird.f32 %v1728
    %vm1736 = vmor %vm1734, %vm1735
    %v1737 = vsel %vm1736, %v1728, %v1733
    %v1738 = vrsqrt.pop %v1727
    %v1739 = vmul.f32 %v1738, %v1727
    %v1740 = vmul.f32 %v1739, %v1738
    %v1741 = vmul.f32 0.5, %v1740
    %v1742 = vsub.f32 1.5, %v1741
    %v1743 = vmul.f32 %v1738, %v1742
    %vm1744 = vweird.f32 %v1727
    %vm1745 = vweird.f32 %v1738
    %vm1746 = vmor %vm1744, %vm1745
    %v1747 = vsel %vm1746, %v1738, %v1743
    %v1748 = vmul.f32 %v1714, %v1737
    %v1749 = vmul.f32 %v1715, %v1747
    %v1750 = vld [vmem:[%s760] sm:$0x1]
    %v1752 = vperm.slane %v1750, 0
    %v1754 = vmul.f32 %v1748, %v1752
    %v1755 = vmul.f32 %v1749, %v1752
    %v1756 = vld [vmem:[%s767] sm:$0x1]
    %v1758 = vperm.slane %v1756, 0
    %v1760 = vadd.f32 %v1754, %v1758
    %v1761 = vadd.f32 %v1755, %v1758
    %v1762 = vadd.f32 %v1230, %v1760
    %v1763 = vadd.f32 %v1231, %v1761
    %v1764 = vmax.f32 %v1762, 0.0
    %v1765 = vmax.f32 %v1763, 0.0
    %1766 = vst.msk [vmem:[#allocation3 + $0x1] sm:$0xff] %vm100, %v1764
    %1767 = vst.msk [vmem:[#allocation3 + $0x9] sm:$0xff] %vm100, %v1765
    %v1768 = vld [vmem:[%s780] sm:$0x1]
    %v1769 = vld [vmem:[#allocation3] sm:$0xff]
    %v1770 = vld [vmem:[#allocation3 + $0x8] sm:$0xff]
    %v1771 = vpack.c.bf16 %v1770, %v1769
    %v1772 = vld [vmem:[%s785] sm:$0xf]
    %v1773 = vld [vmem:[%s785 + $0x4] sm:$0xf]
    %v1774 = vld [vmem:[%s785 + $0x8] sm:$0xf]
    %v1775 = vld [vmem:[%s785 + $0xc] sm:$0xf]
    %v1776 = vld [vmem:[#allocation3 + $0x1] sm:$0xff]
    %v1777 = vld [vmem:[#allocation3 + $0x9] sm:$0xff]
    %v1778 = vpack.c.bf16 %v1777, %v1776
    %v1779 = vld [vmem:[%s793] sm:$0xf]
    %v1780 = vld [vmem:[%s793 + $0x4] sm:$0xf]
    %v1781 = vld [vmem:[%s793 + $0x8] sm:$0xf]
    %v1782 = vld [vmem:[%s793 + $0xc] sm:$0xf]
    %v1787 = vunpack.c.l.b16 %v1779
    %v1788 = vunpack.c.l.b16 %v1780
    %v1789 = vunpack.c.l.b16 %v1781
    %v1790 = vunpack.c.l.b16 %v1782
    %v1791 = vpack.c.b16 %v1788, %v1787
    %v1792 = vpack.c.b16 %v1790, %v1789
    %v1796 = vsel %vm100, %v1778, 0
    %1798 = vmatpush.bf16.msra.mxu0 0
    %1799 = vmatpush.bf16.msra.mxu0 0
    %1800 = vmatpush.bf16.msra.mxu0 0
    %1801 = vmatpush.bf16.msra.mxu0 0
    %1802 = vmatpush.bf16.msra.mxu0 0
    %1803 = vmatpush.bf16.msra.mxu0 0
    %1804 = vmatpush.bf16.msra.mxu0 %v1792
    %1805 = vmatpush.bf16.msra.mxu0 %v1791
    %1806 = vmatmul.bf16.gmra.mxu0 %v1796
    %v1807 = vpop.f32.mrf.mxu0
    %v1808 = vadd.f32 0.0, %v1807
    %v1809 = vpop.f32.mrf.mxu0
    %v1810 = vadd.f32 0.0, %v1809
    %1811 = vdwg.mxu0
    %v1816 = vunpack.c.l.b16 %v1772
    %v1817 = vunpack.c.l.b16 %v1773
    %v1818 = vunpack.c.l.b16 %v1774
    %v1819 = vunpack.c.l.b16 %v1775
    %v1820 = vpack.c.b16 %v1817, %v1816
    %v1821 = vpack.c.b16 %v1819, %v1818
    %v1825 = vsel %vm100, %v1771, 0
    %1827 = vmatpush.bf16.msra.mxu0 0
    %1828 = vmatpush.bf16.msra.mxu0 0
    %1829 = vmatpush.bf16.msra.mxu0 0
    %1830 = vmatpush.bf16.msra.mxu0 0
    %1831 = vmatpush.bf16.msra.mxu0 0
    %1832 = vmatpush.bf16.msra.mxu0 0
    %1833 = vmatpush.bf16.msra.mxu0 %v1821
    %1834 = vmatpush.bf16.msra.mxu0 %v1820
    %1835 = vmatmul.bf16.gmra.mxu0 %v1825
    %v1836 = vpop.f32.mrf.mxu0
    %v1837 = vadd.f32 %v1808, %v1836
    %v1838 = vpop.f32.mrf.mxu0
    %v1839 = vadd.f32 %v1810, %v1838
    %1840 = vdwg.mxu0
    %v1841 = vld [vmem:[#allocation3 + $0x2] sm:$0xff]
    %v1842 = vld [vmem:[#allocation3 + $0xa] sm:$0xff]
    %v1843 = vpack.c.bf16 %v1842, %v1841
    %v1844 = vld [vmem:[%s859] sm:$0xf]
    %v1845 = vld [vmem:[%s859 + $0x4] sm:$0xf]
    %v1846 = vld [vmem:[%s859 + $0x8] sm:$0xf]
    %v1847 = vld [vmem:[%s859 + $0xc] sm:$0xf]
    %v1852 = vunpack.c.l.b16 %v1844
    %v1853 = vunpack.c.l.b16 %v1845
    %v1854 = vunpack.c.l.b16 %v1846
    %v1855 = vunpack.c.l.b16 %v1847
    %v1856 = vpack.c.b16 %v1853, %v1852
    %v1857 = vpack.c.b16 %v1855, %v1854
    %v1861 = vsel %vm100, %v1843, 0
    %1863 = vmatpush.bf16.msra.mxu0 0
    %1864 = vmatpush.bf16.msra.mxu0 0
    %1865 = vmatpush.bf16.msra.mxu0 0
    %1866 = vmatpush.bf16.msra.mxu0 0
    %1867 = vmatpush.bf16.msra.mxu0 0
    %1868 = vmatpush.bf16.msra.mxu0 0
    %1869 = vmatpush.bf16.msra.mxu0 %v1857
    %1870 = vmatpush.bf16.msra.mxu0 %v1856
    %1871 = vmatmul.bf16.gmra.mxu0 %v1861
    %v1872 = vpop.f32.mrf.mxu0
    %v1873 = vadd.f32 0.0, %v1872
    %v1874 = vpop.f32.mrf.mxu0
    %v1875 = vadd.f32 0.0, %v1874
    %1876 = vdwg.mxu0
    %v1877 = vadd.f32 %v1837, %v1873
    %v1878 = vadd.f32 %v1839, %v1875
    %v1880 = vperm.slane %v1768, 0
    %v1882 = vadd.f32 %v1877, %v1880
    %v1883 = vadd.f32 %v1878, %v1880
    %v1884 = vsel %vm100, %v1882, 0.0
    %1885 = vadd.xlane.f32.xlu0 %v1884
    %v1886 = vpop.xlane.xlu0 %1885
    %v1887 = vsel %vm100, %v1883, 0.0
    %1888 = vadd.xlane.f32.xlu0 %v1887
    %v1889 = vpop.xlane.xlu0 %1888
    %v1890 = vmul.f32 %v1886, %v357
    %v1891 = vmul.f32 %v1889, %v357
    %v1892 = vsub.f32 %v1882, %v1890
    %v1893 = vsub.f32 %v1883, %v1891
    %v1894 = vmul.f32 %v1892, %v1892
    %v1895 = vmul.f32 %v1893, %v1893
    %v1896 = vsel %vm100, %v1894, 0.0
    %1897 = vadd.xlane.f32.xlu0 %v1896
    %v1898 = vpop.xlane.xlu0 %1897
    %v1899 = vsel %vm100, %v1895, 0.0
    %1900 = vadd.xlane.f32.xlu0 %v1899
    %v1901 = vpop.xlane.xlu0 %1900
    %v1902 = vmul.f32 %v1898, %v357
    %v1903 = vmul.f32 %v1901, %v357
    %v1904 = vadd.f32 %v1902, 1e-05
    %v1905 = vadd.f32 %v1903, 1e-05
    %v1906 = vrsqrt.pop %v1904
    %v1907 = vmul.f32 %v1906, %v1904
    %v1908 = vmul.f32 %v1907, %v1906
    %v1909 = vmul.f32 0.5, %v1908
    %v1910 = vsub.f32 1.5, %v1909
    %v1911 = vmul.f32 %v1906, %v1910
    %vm1912 = vweird.f32 %v1904
    %vm1913 = vweird.f32 %v1906
    %vm1914 = vmor %vm1912, %vm1913
    %v1915 = vsel %vm1914, %v1906, %v1911
    %v1916 = vrsqrt.pop %v1905
    %v1917 = vmul.f32 %v1916, %v1905
    %v1918 = vmul.f32 %v1917, %v1916
    %v1919 = vmul.f32 0.5, %v1918
    %v1920 = vsub.f32 1.5, %v1919
    %v1921 = vmul.f32 %v1916, %v1920
    %vm1922 = vweird.f32 %v1905
    %vm1923 = vweird.f32 %v1916
    %vm1924 = vmor %vm1922, %vm1923
    %v1925 = vsel %vm1924, %v1916, %v1921
    %v1926 = vmul.f32 %v1892, %v1915
    %v1927 = vmul.f32 %v1893, %v1925
    %v1928 = vld [vmem:[%s944] sm:$0x1]
    %v1930 = vperm.slane %v1928, 0
    %v1932 = vmul.f32 %v1926, %v1930
    %v1933 = vmul.f32 %v1927, %v1930
    %v1934 = vld [vmem:[%s951] sm:$0x1]
    %v1936 = vperm.slane %v1934, 0
    %v1938 = vadd.f32 %v1932, %v1936
    %v1939 = vadd.f32 %v1933, %v1936
    %v1940 = vadd.f32 %v1762, %v1938
    %v1941 = vadd.f32 %v1763, %v1939
    %v1942 = vadd.f32 %v1586, %v1940
    %v1943 = vadd.f32 %v1587, %v1941
    %1944 = vst.msk [vmem:[#allocation3 + $0x1] sm:$0xff] %vm100, %v1942
    %1945 = vst.msk [vmem:[#allocation3 + $0x9] sm:$0xff] %vm100, %v1943
    %v1946 = vld [vmem:[%s8] sm:$0x1]
    %v1947 = vld [vmem:[#allocation3] sm:$0xff]
    %v1948 = vld [vmem:[#allocation3 + $0x8] sm:$0xff]
    %v1949 = vpack.c.bf16 %v1948, %v1947
    %v1950 = vld [vmem:[#allocation10] sm:$0xf]
    %v1951 = vld [vmem:[#allocation10 + $0x4] sm:$0xf]
    %v1952 = vld [vmem:[#allocation10 + $0x8] sm:$0xf]
    %v1953 = vld [vmem:[#allocation10 + $0xc] sm:$0xf]
    %v1954 = vld [vmem:[#allocation3 + $0x1] sm:$0xff]
    %v1955 = vld [vmem:[#allocation3 + $0x9] sm:$0xff]
    %v1956 = vpack.c.bf16 %v1955, %v1954
    %v1957 = vld [vmem:[%s975] sm:$0xf]
    %v1958 = vld [vmem:[%s975 + $0x4] sm:$0xf]
    %v1959 = vld [vmem:[%s975 + $0x8] sm:$0xf]
    %v1960 = vld [vmem:[%s975 + $0xc] sm:$0xf]
    %v1965 = vunpack.c.l.b16 %v1957
    %v1966 = vunpack.c.l.b16 %v1958
    %v1967 = vunpack.c.l.b16 %v1959
    %v1968 = vunpack.c.l.b16 %v1960
    %v1969 = vpack.c.b16 %v1966, %v1965
    %v1970 = vpack.c.b16 %v1968, %v1967
    %v1974 = vsel %vm100, %v1956, 0
    %1976 = vmatpush.bf16.msra.mxu0 0
    %1977 = vmatpush.bf16.msra.mxu0 0
    %1978 = vmatpush.bf16.msra.mxu0 0
    %1979 = vmatpush.bf16.msra.mxu0 0
    %1980 = vmatpush.bf16.msra.mxu0 0
    %1981 = vmatpush.bf16.msra.mxu0 0
    %1982 = vmatpush.bf16.msra.mxu0 %v1970
    %1983 = vmatpush.bf16.msra.mxu0 %v1969
    %1984 = vmatmul.bf16.gmra.mxu0 %v1974
    %v1985 = vpop.f32.mrf.mxu0
    %v1986 = vadd.f32 0.0, %v1985
    %v1987 = vpop.f32.mrf.mxu0
    %v1988 = vadd.f32 0.0, %v1987
    %1989 = vdwg.mxu0
    %v1994 = vunpack.c.l.b16 %v1950
    %v1995 = vunpack.c.l.b16 %v1951
    %v1996 = vunpack.c.l.b16 %v1952
    %v1997 = vunpack.c.l.b16 %v1953
    %v1998 = vpack.c.b16 %v1995, %v1994
    %v1999 = vpack.c.b16 %v1997, %v1996
    %v2003 = vsel %vm100, %v1949, 0
    %2005 = vmatpush.bf16.msra.mxu0 0
    %2006 = vmatpush.bf16.msra.mxu0 0
    %2007 = vmatpush.bf16.msra.mxu0 0
    %2008 = vmatpush.bf16.msra.mxu0 0
    %2009 = vmatpush.bf16.msra.mxu0 0
    %2010 = vmatpush.bf16.msra.mxu0 0
    %2011 = vmatpush.bf16.msra.mxu0 %v1999
    %2012 = vmatpush.bf16.msra.mxu0 %v1998
    %2013 = vmatmul.bf16.gmra.mxu0 %v2003
    %v2014 = vpop.f32.mrf.mxu0
    %v2015 = vadd.f32 %v1986, %v2014
    %v2016 = vpop.f32.mrf.mxu0
    %v2017 = vadd.f32 %v1988, %v2016
    %2018 = vdwg.mxu0
    %v2019 = vld [vmem:[#allocation3 + $0x2] sm:$0xff]
    %v2020 = vld [vmem:[#allocation3 + $0xa] sm:$0xff]
    %v2021 = vpack.c.bf16 %v2020, %v2019
    %v2022 = vld [vmem:[%s1041] sm:$0xf]
    %v2023 = vld [vmem:[%s1041 + $0x4] sm:$0xf]
    %v2024 = vld [vmem:[%s1041 + $0x8] sm:$0xf]
    %v2025 = vld [vmem:[%s1041 + $0xc] sm:$0xf]
    %v2030 = vunpack.c.l.b16 %v2022
    %v2031 = vunpack.c.l.b16 %v2023
    %v2032 = vunpack.c.l.b16 %v2024
    %v2033 = vunpack.c.l.b16 %v2025
    %v2034 = vpack.c.b16 %v2031, %v2030
    %v2035 = vpack.c.b16 %v2033, %v2032
    %v2039 = vsel %vm100, %v2021, 0
    %2041 = vmatpush.bf16.msra.mxu0 0
    %2042 = vmatpush.bf16.msra.mxu0 0
    %2043 = vmatpush.bf16.msra.mxu0 0
    %2044 = vmatpush.bf16.msra.mxu0 0
    %2045 = vmatpush.bf16.msra.mxu0 0
    %2046 = vmatpush.bf16.msra.mxu0 0
    %2047 = vmatpush.bf16.msra.mxu0 %v2035
    %2048 = vmatpush.bf16.msra.mxu0 %v2034
    %2049 = vmatmul.bf16.gmra.mxu0 %v2039
    %v2050 = vpop.f32.mrf.mxu0
    %v2051 = vadd.f32 0.0, %v2050
    %v2052 = vpop.f32.mrf.mxu0
    %v2053 = vadd.f32 0.0, %v2052
    %2054 = vdwg.mxu0
    %v2055 = vadd.f32 %v2015, %v2051
    %v2056 = vadd.f32 %v2017, %v2053
    %v2058 = vperm.slane %v1946, 0
    %v2060 = vadd.f32 %v2055, %v2058
    %v2061 = vadd.f32 %v2056, %v2058
    %2062 = vxpose.xlu0.b32.start [1/16] %v2060, 128
    %2063 = vxpose.xlu0.b32.cont [2/16] %v2061, 128
    %2064 = vxpose.xlu0.b32.cont [3/16] 0.0, 128
    %2065 = vxpose.xlu0.b32.cont [4/16] 0.0, 128
    %2066 = vxpose.xlu0.b32.cont [5/16] 0.0, 128
    %2067 = vxpose.xlu0.b32.cont [6/16] 0.0, 128
    %2068 = vxpose.xlu0.b32.cont [7/16] 0.0, 128
    %2069 = vxpose.xlu0.b32.cont [8/16] 0.0, 128
    %2070 = vxpose.xlu0.b32.cont [9/16] 0.0, 128
    %2071 = vxpose.xlu0.b32.cont [10/16] 0.0, 128
    %2072 = vxpose.xlu0.b32.cont [11/16] 0.0, 128
    %2073 = vxpose.xlu0.b32.cont [12/16] 0.0, 128
    %2074 = vxpose.xlu0.b32.cont [13/16] 0.0, 128
    %2075 = vxpose.xlu0.b32.cont [14/16] 0.0, 128
    %2076 = vxpose.xlu0.b32.cont [15/16] 0.0, 128
    %2077 = vxpose.xlu0.b32.end [16/16] 0.0, 128
    %v2078 = vpop.trf.xlu0
    %v2079 = vpop.trf.xlu0
    %v2080 = vpop.trf.xlu0
    %v2081 = vpop.trf.xlu0
    %v2082 = vpop.trf.xlu0
    %v2083 = vpop.trf.xlu0
    %v2084 = vpop.trf.xlu0
    %v2085 = vpop.trf.xlu0
    %v2086 = vpop.trf.xlu0
    %v2087 = vpop.trf.xlu0
    %v2088 = vpop.trf.xlu0
    %v2089 = vpop.trf.xlu0
    %v2090 = vpop.trf.xlu0
    %v2091 = vpop.trf.xlu0
    %v2092 = vpop.trf.xlu0
    %v2093 = vpop.trf.xlu0
    %s2094 = scalar_lea.vmem [#allocation12], 4
    %2095 = vst.msk [vmem:[%s2094] sm:$0xf] %vm1114, %v2078
    // Predicated region
    $region54: #{conv_net_double.1} parent=1 // pred_check
      _
    $region55: #{conv_net_double.1} parent=1 // pred_check_branch
      %2097 = sbr.rel (0) target = $region57
    $region56: #{conv_net_double.1} parent=1 // pred_region
      %2099 = vsyncadd [#allocation6], 0
      %s2100 = sshll.u32 [#allocation12], 4
      %s2101 = int_to_ptr.vmem [resolvable:$true] %s2100
      %s2102 = sshll.u32 %s9, 4
      %s2103 = int_to_ptr.hbm [resolvable:$true] %s2102
      %2108 = dma.vmem_to_hbm [thread:$0]  %s2101, 128, %s2103, [#allocation6], 64, 64, 4
    $region57: #{conv_net_double.1} parent=1 // pred_fallthru
      _
    // Predicated region
    $region58: #{conv_net_double.1} parent=1 // pred_check
      _
    $region59: #{conv_net_double.1} parent=1 // pred_check_branch
      %2110 = sbr.rel (0) target = $region61
    $region60: #{conv_net_double.1} parent=1 // pred_region
      %2112 = dma.done [#allocation6], 128
    $region61: #{conv_net_double.1} parent=1 // pred_fallthru
      _
    %2113 = vsyncpa [#allocation5], 1
    %2114 = vsyncpa [#allocation8], 1
    %2115 = vsyncpa [#allocation11], 1
    %2116 = vsyncpa [#allocation6], 1

// kernel: conv_net_double.1
$region0: #{conv_net_double.1}
  #allocation0 [shape = 'u32[]', space=smem, size = 0x4, offset = 0x4, fixed_abs, tag = 'smem constant byte address 0x4 - core index']
  #allocation1 [shape = 'u32[72,128]{1,0:T(1,128)}', space=vmem, size = 0x9000, scoped, tag = 'internal scratch']
  #allocation2 [shape = 'f32[18,4]{1,0:T(8,128)}', space=vmem, size = 0x3000, scoped, tag = 'scratch operand']
  #allocation3 [shape = 'f32[18,32]{1,0:T(8,128)}', space=vmem, size = 0x3000, scoped, tag = 'scratch operand']
  %s0 = inlined_call_operand.vmem [shape: f32[2,4,16], index: 0, kind: input, shape index: {}]
  %s1 = inlined_call_operand.hbm [shape: bf16[3,4,32], index: 1, kind: input, shape index: {}]
  %s2 = inlined_call_operand.hbm [shape: f32[1,32], index: 2, kind: input, shape index: {}]
  %s3 = inlined_call_operand.hbm [shape: bf16[4,3,32,32], index: 3, kind: input, shape index: {}]
  %s4 = inlined_call_operand.vmem [shape: f32[4,1,32], index: 4, kind: input, shape index: {}]
  %s5 = inlined_call_operand.vmem [shape: f32[4,1,32], index: 5, kind: input, shape index: {}]
  %s6 = inlined_call_operand.vmem [shape: f32[4,1,32], index: 6, kind: input, shape index: {}]
  %s7 = inlined_call_operand.hbm [shape: bf16[3,32,4], index: 7, kind: input, shape index: {}]
  %s8 = inlined_call_operand.vmem [shape: f32[1,4], index: 8, kind: input, shape index: {}]
  %s9 = inlined_call_operand.hbm [shape: f32[2,4,16], index: 9, kind: output, shape index: {}]
  %s10 = sld [smem:[#allocation0]]
  $region62: #{conv_net_double.1} parent=0
    _
  %s12 = ssub.s32 1, %s10
  %s13 = scalar_select 0, %s12, %s10
  $region1: #{conv_net_double.1} parent=0
    #allocation4 [shape = 'u8[3072]{0}', space=vmem, size = 0xc00, scoped, tag = 'input window, operand 1, single buffered']
    #allocation5 [shape = 's32[1]{0}', space=sflag, size = 0x4, scoped, tag = 'scoped memory for conv_net_double.1']
    #allocation6 [shape = 's32[1]{0}', space=sflag, size = 0x4, scoped, tag = 'scoped memory for conv_net_double.1']
    #allocation7 [shape = 'u8[512]{0}', space=vmem, size = 0x400, scoped, tag = 'input window, operand 2, single buffered']
    #allocation8 [shape = 's32[1]{0}', space=sflag, size = 0x4, scoped, tag = 'scoped memory for conv_net_double.1']
    #allocation9 [shape = 'u8[98304]{0}', space=vmem, size = 0x18000, scoped, tag = 'input window, operand 3, single buffered']
    #allocation10 [shape = 'u8[24576]{0}', space=vmem, size = 0x6000, scoped, tag = 'input window, operand 7, single buffered']
    #allocation11 [shape = 's32[1]{0}', space=sflag, size = 0x4, scoped, tag = 'scoped memory for conv_net_double.1']
    #allocation12 [shape = 'u8[4096]{0}', space=vmem, size = 0x1000, scoped, tag = 'output window, operand 0, single buffered']
    %14 = vsyncpa [#allocation5], 0
    %15 = vsyncpa [#allocation8], 0
    %16 = vsyncpa [#allocation11], 0
    %17 = vsyncpa [#allocation6], 0
    // Predicated region
    $region2: #{conv_net_double.1} parent=1 // pred_check
      _
    $region3: #{conv_net_double.1} parent=1 // pred_check_branch
      %19 = sbr.rel (0) target = $region5
    $region4: #{conv_net_double.1} parent=1 // pred_region
      _
    $region5: #{conv_net_double.1} parent=1 // pred_fallthru
      _
    // Predicated region
    $region6: #{conv_net_double.1} parent=1 // pred_check
      _
    $region7: #{conv_net_double.1} parent=1 // pred_check_branch
      %21 = sbr.rel (0) target = $region9
    $region8: #{conv_net_double.1} parent=1 // pred_region
      %23 = vsyncadd [#allocation5], 0
      %s24 = sshll.u32 %s1, 4
      %s25 = int_to_ptr.hbm [resolvable:$true] %s24
      %s26 = sshll.u32 [#allocation4], 4
      %s27 = int_to_ptr.vmem [resolvable:$true] %s26
      %32 = dma.hbm_to_vmem [thread:$0]  %s25, 96, %s27, [#allocation5], 32, 32, 2
    $region9: #{conv_net_double.1} parent=1 // pred_fallthru
      _
    // Predicated region
    $region10: #{conv_net_double.1} parent=1 // pred_check
      _
    $region11: #{conv_net_double.1} parent=1 // pred_check_branch
      %34 = sbr.rel (0) target = $region13
    $region12: #{conv_net_double.1} parent=1 // pred_region
      %36 = vsyncadd [#allocation8], 0
      %s38 = sshll.u32 %s2, 4
      %s39 = int_to_ptr.hbm [resolvable:$true] %s38
      %s40 = sshll.u32 [#allocation7], 4
      %s41 = int_to_ptr.vmem [resolvable:$true] %s40
      %43 = dma.hbm_to_vmem [thread:$0]  %s39, 16, %s41, [#allocation8]
    $region13: #{conv_net_double.1} parent=1 // pred_fallthru
      _
    // Predicated region
    $region14: #{conv_net_double.1} parent=1 // pred_check
      _
    $region15: #{conv_net_double.1} parent=1 // pred_check_branch
      %45 = sbr.rel (0) target = $region17
    $region16: #{conv_net_double.1} parent=1 // pred_region
      %47 = vsyncadd [#allocation8], 0
      %s48 = sshll.u32 %s3, 4
      %s49 = int_to_ptr.hbm [resolvable:$true] %s48
      %s50 = sshll.u32 [#allocation9], 4
      %s51 = int_to_ptr.vmem [resolvable:$true] %s50
      %56 = dma.hbm_to_vmem [thread:$0]  %s49, 3072, %s51, [#allocation8], 64, 64, 4
    $region17: #{conv_net_double.1} parent=1 // pred_fallthru
      _
    // Predicated region
    $region18: #{conv_net_double.1} parent=1 // pred_check
      _
    $region19: #{conv_net_double.1} parent=1 // pred_check_branch
      %58 = sbr.rel (0) target = $region21
    $region20: #{conv_net_double.1} parent=1 // pred_region
      _
    $region21: #{conv_net_double.1} parent=1 // pred_fallthru
      _
    // Predicated region
    $region22: #{conv_net_double.1} parent=1 // pred_check
      _
    $region23: #{conv_net_double.1} parent=1 // pred_check_branch
      %60 = sbr.rel (0) target = $region25
    $region24: #{conv_net_double.1} parent=1 // pred_region
      _
    $region25: #{conv_net_double.1} parent=1 // pred_fallthru
      _
    // Predicated region
    $region26: #{conv_net_double.1} parent=1 // pred_check
      _
    $region27: #{conv_net_double.1} parent=1 // pred_check_branch
      %62 = sbr.rel (0) target = $region29
    $region28: #{conv_net_double.1} parent=1 // pred_region
      _
    $region29: #{conv_net_double.1} parent=1 // pred_fallthru
      _
    // Predicated region
    $region30: #{conv_net_double.1} parent=1 // pred_check
      _
    $region31: #{conv_net_double.1} parent=1 // pred_check_branch
      %64 = sbr.rel (0) target = $region33
    $region32: #{conv_net_double.1} parent=1 // pred_region
      %66 = vsyncadd [#allocation11], 0
      %s67 = sshll.u32 %s7, 4
      %s68 = int_to_ptr.hbm [resolvable:$true] %s67
      %s69 = sshll.u32 [#allocation10], 4
      %s70 = int_to_ptr.vmem [resolvable:$true] %s69
      %75 = dma.hbm_to_vmem [thread:$0]  %s68, 768, %s70, [#allocation11], 64, 64, 4
    $region33: #{conv_net_double.1} parent=1 // pred_fallthru
      _
    // Predicated region
    $region34: #{conv_net_double.1} parent=1 // pred_check
      _
    $region35: #{conv_net_double.1} parent=1 // pred_check_branch
      %77 = sbr.rel (0) target = $region37
    $region36: #{conv_net_double.1} parent=1 // pred_region
      _
    $region37: #{conv_net_double.1} parent=1 // pred_fallthru
      _
    // Predicated region
    $region38: #{conv_net_double.1} parent=1 // pred_check
      _
    $region39: #{conv_net_double.1} parent=1 // pred_check_branch
      %79 = sbr.rel (0) target = $region41
    $region40: #{conv_net_double.1} parent=1 // pred_region
      %81 = dma.done [#allocation5], 96
    $region41: #{conv_net_double.1} parent=1 // pred_fallthru
      _
    // Predicated region
    $region42: #{conv_net_double.1} parent=1 // pred_check
      _
    $region43: #{conv_net_double.1} parent=1 // pred_check_branch
      %83 = sbr.rel (0) target = $region45
    $region44: #{conv_net_double.1} parent=1 // pred_region
      %85 = dma.done [#allocation8], 16
    $region45: #{conv_net_double.1} parent=1 // pred_fallthru
      _
    // Predicated region
    $region46: #{conv_net_double.1} parent=1 // pred_check
      _
    $region47: #{conv_net_double.1} parent=1 // pred_check_branch
      %87 = sbr.rel (0) target = $region49
    $region48: #{conv_net_double.1} parent=1 // pred_region
      %89 = dma.done [#allocation8], 3072
    $region49: #{conv_net_double.1} parent=1 // pred_fallthru
      _
    // Predicated region
    $region50: #{conv_net_double.1} parent=1 // pred_check
      _
    $region51: #{conv_net_double.1} parent=1 // pred_check_branch
      %91 = sbr.rel (0) target = $region53
    $region52: #{conv_net_double.1} parent=1 // pred_region
      %93 = dma.done [#allocation11], 768
    $region53: #{conv_net_double.1} parent=1 // pred_fallthru
      _
    %vm95 = vcmask 31744
    %96 = vst.msk [vmem:[#allocation2] sm:$0xff] %vm95, 0.0
    %97 = vst.msk [vmem:[#allocation2 + $0x8] sm:$0xff] %vm95, 0.0
    %vm98 = vcmask 25600
    %99 = vst.msk [vmem:[#allocation2 + $0x10] sm:$0x3] %vm98, 0.0
    %vm100 = vcmask 261120
    %101 = vst.msk [vmem:[#allocation3] sm:$0xff] %vm100, 0.0
    %102 = vst.msk [vmem:[#allocation3 + $0x8] sm:$0xff] %vm100, 0.0
    %vm103 = vcmask 254976
    %104 = vst.msk [vmem:[#allocation3 + $0x10] sm:$0x3] %vm103, 0.0
    %v105 = vld [vmem:[%s0] sm:$0xf]
    %106 = vxpose.xlu0.b32.start [1/16] %v105, 128
    %107 = vxpose.xlu0.b32.cont [2/16] 0.0, 128
    %108 = vxpose.xlu0.b32.cont [3/16] 0.0, 128
    %109 = vxpose.xlu0.b32.cont [4/16] 0.0, 128
    %110 = vxpose.xlu0.b32.cont [5/16] 0.0, 128
    %111 = vxpose.xlu0.b32.cont [6/16] 0.0, 128
    %112 = vxpose.xlu0.b32.cont [7/16] 0.0, 128
    %113 = vxpose.xlu0.b32.cont [8/16] 0.0, 128
    %114 = vxpose.xlu0.b32.cont [9/16] 0.0, 128
    %115 = vxpose.xlu0.b32.cont [10/16] 0.0, 128
    %116 = vxpose.xlu0.b32.cont [11/16] 0.0, 128
    %117 = vxpose.xlu0.b32.cont [12/16] 0.0, 128
    %118 = vxpose.xlu0.b32.cont [13/16] 0.0, 128
    %119 = vxpose.xlu0.b32.cont [14/16] 0.0, 128
    %120 = vxpose.xlu0.b32.cont [15/16] 0.0, 128
    %121 = vxpose.xlu0.b32.end [16/16] 0.0, 128
    %v122 = vpop.trf.xlu0
    %v123 = vpop.trf.xlu0
    %v124 = vpop.trf.xlu0
    %v125 = vpop.trf.xlu0
    %v126 = vpop.trf.xlu0
    %v127 = vpop.trf.xlu0
    %v128 = vpop.trf.xlu0
    %v129 = vpop.trf.xlu0
    %v130 = vpop.trf.xlu0
    %v131 = vpop.trf.xlu0
    %v132 = vpop.trf.xlu0
    %v133 = vpop.trf.xlu0
    %v134 = vpop.trf.xlu0
    %v135 = vpop.trf.xlu0
    %v136 = vpop.trf.xlu0
    %v137 = vpop.trf.xlu0
    %138 = vst.msk [vmem:[#allocation2 + $0x1] sm:$0xff] %vm95, %v122
    %139 = vst.msk [vmem:[#allocation2 + $0x9] sm:$0xff] %vm95, %v123
    %v140 = vld [vmem:[#allocation7] sm:$0x1]
    %v141 = vld [vmem:[#allocation2] sm:$0xff]
    %v142 = vld [vmem:[#allocation2 + $0x8] sm:$0xff]
    %v143 = vpack.c.bf16 %v142, %v141
    %v144 = vld [vmem:[#allocation4] sm:$0x3]
    %v145 = vld [vmem:[#allocation2 + $0x1] sm:$0xff]
    %v146 = vld [vmem:[#allocation2 + $0x9] sm:$0xff]
    %v147 = vpack.c.bf16 %v146, %v145
    %s148 = scalar_lea.vmem [#allocation4], 2
    %v149 = vld [vmem:[%s148] sm:$0x3]
    %v151 = vsel %vm95, %v147, 0
    %vm153 = vcmask 1041408
    %v155 = vsel %vm153, %v149, 0
    %157 = vmatpush.bf16.msra.mxu0 0
    %158 = vmatpush.bf16.msra.mxu0 0
    %159 = vmatpush.bf16.msra.mxu0 0
    %160 = vmatpush.bf16.msra.mxu0 0
    %161 = vmatpush.bf16.msra.mxu0 0
    %162 = vmatpush.bf16.msra.mxu0 0
    %163 = vmatpush.bf16.msra.mxu0 0
    %164 = vmatpush.bf16.msra.mxu0 %v155
    %165 = vmatmul.bf16.gmra.mxu0 %v151
    %v166 = vpop.f32.mrf.mxu0
    %v167 = vadd.f32 0.0, %v166
    %v168 = vpop.f32.mrf.mxu0
    %v169 = vadd.f32 0.0, %v168
    %170 = vdwg.mxu0
    %v172 = vsel %vm95, %v143, 0
    %v175 = vsel %vm153, %v144, 0
    %177 = vmatpush.bf16.msra.mxu0 0
    %178 = vmatpush.bf16.msra.mxu0 0
    %179 = vmatpush.bf16.msra.mxu0 0
    %180 = vmatpush.bf16.msra.mxu0 0
    %181 = vmatpush.bf16.msra.mxu0 0
    %182 = vmatpush.bf16.msra.mxu0 0
    %183 = vmatpush.bf16.msra.mxu0 0
    %184 = vmatpush.bf16.msra.mxu0 %v175
    %185 = vmatmul.bf16.gmra.mxu0 %v172
    %v186 = vpop.f32.mrf.mxu0
    %v187 = vadd.f32 %v167, %v186
    %v188 = vpop.f32.mrf.mxu0
    %v189 = vadd.f32 %v169, %v188
    %190 = vdwg.mxu0
    %v191 = vld [vmem:[#allocation2 + $0x2] sm:$0xff]
    %v192 = vld [vmem:[#allocation2 + $0xa] sm:$0xff]
    %v193 = vpack.c.bf16 %v192, %v191
    %s194 = scalar_lea.vmem [#allocation4], 4
    %v195 = vld [vmem:[%s194] sm:$0x3]
    %v197 = vsel %vm95, %v193, 0
    %v200 = vsel %vm153, %v195, 0
    %202 = vmatpush.bf16.msra.mxu0 0
    %203 = vmatpush.bf16.msra.mxu0 0
    %204 = vmatpush.bf16.msra.mxu0 0
    %205 = vmatpush.bf16.msra.mxu0 0
    %206 = vmatpush.bf16.msra.mxu0 0
    %207 = vmatpush.bf16.msra.mxu0 0
    %208 = vmatpush.bf16.msra.mxu0 0
    %209 = vmatpush.bf16.msra.mxu0 %v200
    %210 = vmatmul.bf16.gmra.mxu0 %v197
    %v211 = vpop.f32.mrf.mxu0
    %v212 = vadd.f32 0.0, %v211
    %v213 = vpop.f32.mrf.mxu0
    %v214 = vadd.f32 0.0, %v213
    %215 = vdwg.mxu0
    %v216 = vadd.f32 %v187, %v212
    %v217 = vadd.f32 %v189, %v214
    %v219 = vperm.slane %v140, 0
    %v221 = vadd.f32 %v216, %v219
    %v222 = vadd.f32 %v217, %v219
    %v223 = vmax.f32 %v221, 0.0
    %v224 = vmax.f32 %v222, 0.0
    %225 = vst.msk [vmem:[#allocation3 + $0x1] sm:$0xff] %vm100, %v223
    %226 = vst.msk [vmem:[#allocation3 + $0x9] sm:$0xff] %vm100, %v224
    %v227 = vld [vmem:[%s4] sm:$0x1]
    %v228 = vld [vmem:[#allocation3] sm:$0xff]
    %v229 = vld [vmem:[#allocation3 + $0x8] sm:$0xff]
    %v230 = vpack.c.bf16 %v229, %v228
    %v231 = vld [vmem:[#allocation9] sm:$0xf]
    %v232 = vld [vmem:[#allocation9 + $0x4] sm:$0xf]
    %v233 = vld [vmem:[#allocation9 + $0x8] sm:$0xf]
    %v234 = vld [vmem:[#allocation9 + $0xc] sm:$0xf]
    %v235 = vld [vmem:[#allocation3 + $0x1] sm:$0xff]
    %v236 = vld [vmem:[#allocation3 + $0x9] sm:$0xff]
    %v237 = vpack.c.bf16 %v236, %v235
    %s238 = scalar_lea.vmem [#allocation9], 16
    %v239 = vld [vmem:[%s238] sm:$0xf]
    %v240 = vld [vmem:[%s238 + $0x4] sm:$0xf]
    %v241 = vld [vmem:[%s238 + $0x8] sm:$0xf]
    %v242 = vld [vmem:[%s238 + $0xc] sm:$0xf]
    %v247 = vunpack.c.l.b16 %v239
    %v248 = vunpack.c.l.b16 %v240
    %v249 = vunpack.c.l.b16 %v241
    %v250 = vunpack.c.l.b16 %v242
    %v251 = vpack.c.b16 %v248, %v247
    %v252 = vpack.c.b16 %v250, %v249
    %v256 = vsel %vm100, %v237, 0
    %258 = vmatpush.bf16.msra.mxu0 0
    %259 = vmatpush.bf16.msra.mxu0 0
    %260 = vmatpush.bf16.msra.mxu0 0
    %261 = vmatpush.bf16.msra.mxu0 0
    %262 = vmatpush.bf16.msra.mxu0 0
    %263 = vmatpush.bf16.msra.mxu0 0
    %264 = vmatpush.bf16.msra.mxu0 %v252
    %265 = vmatpush.bf16.msra.mxu0 %v251
    %266 = vmatmul.bf16.gmra.mxu0 %v256
    %v267 = vpop.f32.mrf.mxu0
    %v268 = vadd.f32 0.0, %v267
    %v269 = vpop.f32.mrf.mxu0
    %v270 = vadd.f32 0.0, %v269
    %271 = vdwg.mxu0
    %v276 = vunpack.c.l.b16 %v231
    %v277 = vunpack.c.l.b16 %v232
    %v278 = vunpack.c.l.b16 %v233
    %v279 = vunpack.c.l.b16 %v234
    %v280 = vpack.c.b16 %v277, %v276
    %v281 = vpack.c.b16 %v279, %v278
    %v285 = vsel %vm100, %v230, 0
    %287 = vmatpush.bf16.msra.mxu0 0
    %288 = vmatpush.bf16.msra.mxu0 0
    %289 = vmatpush.bf16.msra.mxu0 0
    %290 = vmatpush.bf16.msra.mxu0 0
    %291 = vmatpush.bf16.msra.mxu0 0
    %292 = vmatpush.bf16.msra.mxu0 0
    %293 = vmatpush.bf16.msra.mxu0 %v281
    %294 = vmatpush.bf16.msra.mxu0 %v280
    %295 = vmatmul.bf16.gmra.mxu0 %v285
    %v296 = vpop.f32.mrf.mxu0
    %v297 = vadd.f32 %v268, %v296
    %v298 = vpop.f32.mrf.mxu0
    %v299 = vadd.f32 %v270, %v298
    %300 = vdwg.mxu0
    %v301 = vld [vmem:[#allocation3 + $0x2] sm:$0xff]
    %v302 = vld [vmem:[#allocation3 + $0xa] sm:$0xff]
    %v303 = vpack.c.bf16 %v302, %v301
    %s304 = scalar_lea.vmem [#allocation9], 32
    %v305 = vld [vmem:[%s304] sm:$0xf]
    %v306 = vld [vmem:[%s304 + $0x4] sm:$0xf]
    %v307 = vld [vmem:[%s304 + $0x8] sm:$0xf]
    %v308 = vld [vmem:[%s304 + $0xc] sm:$0xf]
    %v313 = vunpack.c.l.b16 %v305
    %v314 = vunpack.c.l.b16 %v306
    %v315 = vunpack.c.l.b16 %v307
    %v316 = vunpack.c.l.b16 %v308
    %v317 = vpack.c.b16 %v314, %v313
    %v318 = vpack.c.b16 %v316, %v315
    %v322 = vsel %vm100, %v303, 0
    %324 = vmatpush.bf16.msra.mxu0 0
    %325 = vmatpush.bf16.msra.mxu0 0
    %326 = vmatpush.bf16.msra.mxu0 0
    %327 = vmatpush.bf16.msra.mxu0 0
    %328 = vmatpush.bf16.msra.mxu0 0
    %329 = vmatpush.bf16.msra.mxu0 0
    %330 = vmatpush.bf16.msra.mxu0 %v318
    %331 = vmatpush.bf16.msra.mxu0 %v317
    %332 = vmatmul.bf16.gmra.mxu0 %v322
    %v333 = vpop.f32.mrf.mxu0
    %v334 = vadd.f32 0.0, %v333
    %v335 = vpop.f32.mrf.mxu0
    %v336 = vadd.f32 0.0, %v335
    %337 = vdwg.mxu0
    %v338 = vadd.f32 %v297, %v334
    %v339 = vadd.f32 %v299, %v336
    %v341 = vperm.slane %v227, 0
    %v343 = vadd.f32 %v338, %v341
    %v344 = vadd.f32 %v339, %v341
    %v345 = vsel %vm100, %v343, 0.0
    %346 = vadd.xlane.f32.xlu0 %v345
    %v347 = vpop.xlane.xlu0 %346
    %v348 = vsel %vm100, %v344, 0.0
    %349 = vadd.xlane.f32.xlu0 %v348
    %v350 = vpop.xlane.xlu0 %349
    %v351 = vrcp.pop 32.0
    %v352 = vmul.f32 32.0, %v351
    %v353 = vsub.f32 1.0, %v352
    %v354 = vmul.f32 %v351, %v353
    %v355 = vadd.f32 %v351, %v354
    %vm356 = vweird.f32 %v351
    %v357 = vsel %vm356, %v351, %v355
    %v358 = vmul.f32 %v347, %v357
    %v359 = vmul.f32 %v350, %v357
    %v360 = vsub.f32 %v343, %v358
    %v361 = vsub.f32 %v344, %v359
    %v362 = vmul.f32 %v360, %v360
    %v363 = vmul.f32 %v361, %v361
    %v364 = vsel %vm100, %v362, 0.0
    %365 = vadd.xlane.f32.xlu0 %v364
    %v366 = vpop.xlane.xlu0 %365
    %v367 = vsel %vm100, %v363, 0.0
    %368 = vadd.xlane.f32.xlu0 %v367
    %v369 = vpop.xlane.xlu0 %368
    %v370 = vmul.f32 %v366, %v357
    %v371 = vmul.f32 %v369, %v357
    %v372 = vadd.f32 %v370, 1e-05
    %v373 = vadd.f32 %v371, 1e-05
    %v374 = vrsqrt.pop %v372
    %v375 = vmul.f32 %v374, %v372
    %v376 = vmul.f32 %v375, %v374
    %v377 = vmul.f32 0.5, %v376
    %v378 = vsub.f32 1.5, %v377
    %v379 = vmul.f32 %v374, %v378
    %vm380 = vweird.f32 %v372
    %vm381 = vweird.f32 %v374
    %vm382 = vmor %vm380, %vm381
    %v383 = vsel %vm382, %v374, %v379
    %v384 = vrsqrt.pop %v373
    %v385 = vmul.f32 %v384, %v373
    %v386 = vmul.f32 %v385, %v384
    %v387 = vmul.f32 0.5, %v386
    %v388 = vsub.f32 1.5, %v387
    %v389 = vmul.f32 %v384, %v388
    %vm390 = vweird.f32 %v373
    %vm391 = vweird.f32 %v384
    %vm392 = vmor %vm390, %vm391
    %v393 = vsel %vm392, %v384, %v389
    %v394 = vmul.f32 %v360, %v383
    %v395 = vmul.f32 %v361, %v393
    %v396 = vld [vmem:[%s5] sm:$0x1]
    %v398 = vperm.slane %v396, 0
    %v400 = vmul.f32 %v394, %v398
    %v401 = vmul.f32 %v395, %v398
    %v402 = vld [vmem:[%s6] sm:$0x1]
    %v404 = vperm.slane %v402, 0
    %v406 = vadd.f32 %v400, %v404
    %v407 = vadd.f32 %v401, %v404
    %v408 = vadd.f32 %v221, %v406
    %v409 = vadd.f32 %v222, %v407
    %v410 = vmax.f32 %v408, 0.0
    %v411 = vmax.f32 %v409, 0.0
    %412 = vst.msk [vmem:[#allocation3 + $0x1] sm:$0xff] %vm100, %v410
    %413 = vst.msk [vmem:[#allocation3 + $0x9] sm:$0xff] %vm100, %v411
    %s414 = scalar_lea.vmem %s4, 1
    %v415 = vld [vmem:[%s414] sm:$0x1]
    %v416 = vld [vmem:[#allocation3] sm:$0xff]
    %v417 = vld [vmem:[#allocation3 + $0x8] sm:$0xff]
    %v418 = vpack.c.bf16 %v417, %v416
    %s419 = scalar_lea.vmem [#allocation9], 48
    %v420 = vld [vmem:[%s419] sm:$0xf]
    %v421 = vld [vmem:[%s419 + $0x4] sm:$0xf]
    %v422 = vld [vmem:[%s419 + $0x8] sm:$0xf]
    %v423 = vld [vmem:[%s419 + $0xc] sm:$0xf]
    %v424 = vld [vmem:[#allocation3 + $0x1] sm:$0xff]
    %v425 = vld [vmem:[#allocation3 + $0x9] sm:$0xff]
    %v426 = vpack.c.bf16 %v425, %v424
    %s427 = scalar_lea.vmem [#allocation9], 64
    %v428 = vld [vmem:[%s427] sm:$0xf]
    %v429 = vld [vmem:[%s427 + $0x4] sm:$0xf]
    %v430 = vld [vmem:[%s427 + $0x8] sm:$0xf]
    %v431 = vld [vmem:[%s427 + $0xc] sm:$0xf]
    %v436 = vunpack.c.l.b16 %v428
    %v437 = vunpack.c.l.b16 %v429
    %v438 = vunpack.c.l.b16 %v430
    %v439 = vunpack.c.l.b16 %v431
    %v440 = vpack.c.b16 %v437, %v436
    %v441 = vpack.c.b16 %v439, %v438
    %v445 = vsel %vm100, %v426, 0
    %447 = vmatpush.bf16.msra.mxu0 0
    %448 = vmatpush.bf16.msra.mxu0 0
    %449 = vmatpush.bf16.msra.mxu0 0
    %450 = vmatpush.bf16.msra.mxu0 0
    %451 = vmatpush.bf16.msra.mxu0 0
    %452 = vmatpush.bf16.msra.mxu0 0
    %453 = vmatpush.bf16.msra.mxu0 %v441
    %454 = vmatpush.bf16.msra.mxu0 %v440
    %455 = vmatmul.bf16.gmra.mxu0 %v445
    %v456 = vpop.f32.mrf.mxu0
    %v457 = vadd.f32 0.0, %v456
    %v458 = vpop.f32.mrf.mxu0
    %v459 = vadd.f32 0.0, %v458
    %460 = vdwg.mxu0
    %v465 = vunpack.c.l.b16 %v420
    %v466 = vunpack.c.l.b16 %v421
    %v467 = vunpack.c.l.b16 %v422
    %v468 = vunpack.c.l.b16 %v423
    %v469 = vpack.c.b16 %v466, %v465
    %v470 = vpack.c.b16 %v468, %v467
    %v474 = vsel %vm100, %v418, 0
    %476 = vmatpush.bf16.msra.mxu0 0
    %477 = vmatpush.bf16.msra.mxu0 0
    %478 = vmatpush.bf16.msra.mxu0 0
    %479 = vmatpush.bf16.msra.mxu0 0
    %480 = vmatpush.bf16.msra.mxu0 0
    %481 = vmatpush.bf16.msra.mxu0 0
    %482 = vmatpush.bf16.msra.mxu0 %v470
    %483 = vmatpush.bf16.msra.mxu0 %v469
    %484 = vmatmul.bf16.gmra.mxu0 %v474
    %v485 = vpop.f32.mrf.mxu0
    %v486 = vadd.f32 %v457, %v485
    %v487 = vpop.f32.mrf.mxu0
    %v488 = vadd.f32 %v459, %v487
    %489 = vdwg.mxu0
    %v490 = vld [vmem:[#allocation3 + $0x2] sm:$0xff]
    %v491 = vld [vmem:[#allocation3 + $0xa] sm:$0xff]
    %v492 = vpack.c.bf16 %v491, %v490
    %s493 = scalar_lea.vmem [#allocation9], 80
    %v494 = vld [vmem:[%s493] sm:$0xf]
    %v495 = vld [vmem:[%s493 + $0x4] sm:$0xf]
    %v496 = vld [vmem:[%s493 + $0x8] sm:$0xf]
    %v497 = vld [vmem:[%s493 + $0xc] sm:$0xf]
    %v502 = vunpack.c.l.b16 %v494
    %v503 = vunpack.c.l.b16 %v495
    %v504 = vunpack.c.l.b16 %v496
    %v505 = vunpack.c.l.b16 %v497
    %v506 = vpack.c.b16 %v503, %v502
    %v507 = vpack.c.b16 %v505, %v504
    %v511 = vsel %vm100, %v492, 0
    %513 = vmatpush.bf16.msra.mxu0 0
    %514 = vmatpush.bf16.msra.mxu0 0
    %515 = vmatpush.bf16.msra.mxu0 0
    %516 = vmatpush.bf16.msra.mxu0 0
    %517 = vmatpush.bf16.msra.mxu0 0
    %518 = vmatpush.bf16.msra.mxu0 0
    %519 = vmatpush.bf16.msra.mxu0 %v507
    %520 = vmatpush.bf16.msra.mxu0 %v506
    %521 = vmatmul.bf16.gmra.mxu0 %v511
    %v522 = vpop.f32.mrf.mxu0
    %v523 = vadd.f32 0.0, %v522
    %v524 = vpop.f32.mrf.mxu0
    %v525 = vadd.f32 0.0, %v524
    %526 = vdwg.mxu0
    %v527 = vadd.f32 %v486, %v523
    %v528 = vadd.f32 %v488, %v525
    %v530 = vperm.slane %v415, 0
    %v532 = vadd.f32 %v527, %v530
    %v533 = vadd.f32 %v528, %v530
    %v534 = vsel %vm100, %v532, 0.0
    %535 = vadd.xlane.f32.xlu0 %v534
    %v536 = vpop.xlane.xlu0 %535
    %v537 = vsel %vm100, %v533, 0.0
    %538 = vadd.xlane.f32.xlu0 %v537
    %v539 = vpop.xlane.xlu0 %538
    %v540 = vmul.f32 %v536, %v357
    %v541 = vmul.f32 %v539, %v357
    %v542 = vsub.f32 %v532, %v540
    %v543 = vsub.f32 %v533, %v541
    %v544 = vmul.f32 %v542, %v542
    %v545 = vmul.f32 %v543, %v543
    %v546 = vsel %vm100, %v544, 0.0
    %547 = vadd.xlane.f32.xlu0 %v546
    %v548 = vpop.xlane.xlu0 %547
    %v549 = vsel %vm100, %v545, 0.0
    %550 = vadd.xlane.f32.xlu0 %v549
    %v551 = vpop.xlane.xlu0 %550
    %v552 = vmul.f32 %v548, %v357
    %v553 = vmul.f32 %v551, %v357
    %v554 = vadd.f32 %v552, 1e-05
    %v555 = vadd.f32 %v553, 1e-05
    %v556 = vrsqrt.pop %v554
    %v557 = vmul.f32 %v556, %v554
    %v558 = vmul.f32 %v557, %v556
    %v559 = vmul.f32 0.5, %v558
    %v560 = vsub.f32 1.5, %v559
    %v561 = vmul.f32 %v556, %v560
    %vm562 = vweird.f32 %v554
    %vm563 = vweird.f32 %v556
    %vm564 = vmor %vm562, %vm563
    %v565 = vsel %vm564, %v556, %v561
    %v566 = vrsqrt.pop %v555
    %v567 = vmul.f32 %v566, %v555
    %v568 = vmul.f32 %v567, %v566
    %v569 = vmul.f32 0.5, %v568
    %v570 = vsub.f32 1.5, %v569
    %v571 = vmul.f32 %v566, %v570
    %vm572 = vweird.f32 %v555
    %vm573 = vweird.f32 %v566
    %vm574 = vmor %vm572, %vm573
    %v575 = vsel %vm574, %v566, %v571
    %v576 = vmul.f32 %v542, %v565
    %v577 = vmul.f32 %v543, %v575
    %s578 = scalar_lea.vmem %s5, 1
    %v579 = vld [vmem:[%s578] sm:$0x1]
    %v581 = vperm.slane %v579, 0
    %v583 = vmul.f32 %v576, %v581
    %v584 = vmul.f32 %v577, %v581
    %s585 = scalar_lea.vmem %s6, 1
    %v586 = vld [vmem:[%s585] sm:$0x1]
    %v588 = vperm.slane %v586, 0
    %v590 = vadd.f32 %v583, %v588
    %v591 = vadd.f32 %v584, %v588
    %v592 = vadd.f32 %v408, %v590
    %v593 = vadd.f32 %v409, %v591
    %594 = vst.msk [vmem:[#allocation3 + $0x1] sm:$0xff] %vm100, %v223
    %595 = vst.msk [vmem:[#allocation3 + $0x9] sm:$0xff] %vm100, %v224
    %s596 = scalar_lea.vmem %s4, 2
    %v597 = vld [vmem:[%s596] sm:$0x1]
    %v598 = vld [vmem:[#allocation3] sm:$0xff]
    %v599 = vld [vmem:[#allocation3 + $0x8] sm:$0xff]
    %v600 = vpack.c.bf16 %v599, %v598
    %s601 = scalar_lea.vmem [#allocation9], 96
    %v602 = vld [vmem:[%s601] sm:$0xf]
    %v603 = vld [vmem:[%s601 + $0x4] sm:$0xf]
    %v604 = vld [vmem:[%s601 + $0x8] sm:$0xf]
    %v605 = vld [vmem:[%s601 + $0xc] sm:$0xf]
    %v606 = vld [vmem:[#allocation3 + $0x1] sm:$0xff]
    %v607 = vld [vmem:[#allocation3 + $0x9] sm:$0xff]
    %v608 = vpack.c.bf16 %v607, %v606
    %s609 = scalar_lea.vmem [#allocation9], 112
    %v610 = vld [vmem:[%s609] sm:$0xf]
    %v611 = vld [vmem:[%s609 + $0x4] sm:$0xf]
    %v612 = vld [vmem:[%s609 + $0x8] sm:$0xf]
    %v613 = vld [vmem:[%s609 + $0xc] sm:$0xf]
    %v618 = vunpack.c.l.b16 %v610
    %v619 = vunpack.c.l.b16 %v611
    %v620 = vunpack.c.l.b16 %v612
    %v621 = vunpack.c.l.b16 %v613
    %v622 = vpack.c.b16 %v619, %v618
    %v623 = vpack.c.b16 %v621, %v620
    %v627 = vsel %vm100, %v608, 0
    %629 = vmatpush.bf16.msra.mxu0 0
    %630 = vmatpush.bf16.msra.mxu0 0
    %631 = vmatpush.bf16.msra.mxu0 0
    %632 = vmatpush.bf16.msra.mxu0 0
    %633 = vmatpush.bf16.msra.mxu0 0
    %634 = vmatpush.bf16.msra.mxu0 0
    %635 = vmatpush.bf16.msra.mxu0 %v623
    %636 = vmatpush.bf16.msra.mxu0 %v622
    %637 = vmatmul.bf16.gmra.mxu0 %v627
    %v638 = vpop.f32.mrf.mxu0
    %v639 = vadd.f32 0.0, %v638
    %v640 = vpop.f32.mrf.mxu0
    %v641 = vadd.f32 0.0, %v640
    %642 = vdwg.mxu0
    %v647 = vunpack.c.l.b16 %v602
    %v648 = vunpack.c.l.b16 %v603
    %v649 = vunpack.c.l.b16 %v604
    %v650 = vunpack.c.l.b16 %v605
    %v651 = vpack.c.b16 %v648, %v647
    %v652 = vpack.c.b16 %v650, %v649
    %v656 = vsel %vm100, %v600, 0
    %658 = vmatpush.bf16.msra.mxu0 0
    %659 = vmatpush.bf16.msra.mxu0 0
    %660 = vmatpush.bf16.msra.mxu0 0
    %661 = vmatpush.bf16.msra.mxu0 0
    %662 = vmatpush.bf16.msra.mxu0 0
    %663 = vmatpush.bf16.msra.mxu0 0
    %664 = vmatpush.bf16.msra.mxu0 %v652
    %665 = vmatpush.bf16.msra.mxu0 %v651
    %666 = vmatmul.bf16.gmra.mxu0 %v656
    %v667 = vpop.f32.mrf.mxu0
    %v668 = vadd.f32 %v639, %v667
    %v669 = vpop.f32.mrf.mxu0
    %v670 = vadd.f32 %v641, %v669
    %671 = vdwg.mxu0
    %v672 = vld [vmem:[#allocation3 + $0x2] sm:$0xff]
    %v673 = vld [vmem:[#allocation3 + $0xa] sm:$0xff]
    %v674 = vpack.c.bf16 %v673, %v672
    %s675 = scalar_lea.vmem [#allocation9], 128
    %v676 = vld [vmem:[%s675] sm:$0xf]
    %v677 = vld [vmem:[%s675 + $0x4] sm:$0xf]
    %v678 = vld [vmem:[%s675 + $0x8] sm:$0xf]
    %v679 = vld [vmem:[%s675 + $0xc] sm:$0xf]
    %v684 = vunpack.c.l.b16 %v676
    %v685 = vunpack.c.l.b16 %v677
    %v686 = vunpack.c.l.b16 %v678
    %v687 = vunpack.c.l.b16 %v679
    %v688 = vpack.c.b16 %v685, %v684
    %v689 = vpack.c.b16 %v687, %v686
    %v693 = vsel %vm100, %v674, 0
    %695 = vmatpush.bf16.msra.mxu0 0
    %696 = vmatpush.bf16.msra.mxu0 0
    %697 = vmatpush.bf16.msra.mxu0 0
    %698 = vmatpush.bf16.msra.mxu0 0
    %699 = vmatpush.bf16.msra.mxu0 0
    %700 = vmatpush.bf16.msra.mxu0 0
    %701 = vmatpush.bf16.msra.mxu0 %v689
    %702 = vmatpush.bf16.msra.mxu0 %v688
    %703 = vmatmul.bf16.gmra.mxu0 %v693
    %v704 = vpop.f32.mrf.mxu0
    %v705 = vadd.f32 0.0, %v704
    %v706 = vpop.f32.mrf.mxu0
    %v707 = vadd.f32 0.0, %v706
    %708 = vdwg.mxu0
    %v709 = vadd.f32 %v668, %v705
    %v710 = vadd.f32 %v670, %v707
    %v712 = vperm.slane %v597, 0
    %v714 = vadd.f32 %v709, %v712
    %v715 = vadd.f32 %v710, %v712
    %v716 = vsel %vm100, %v714, 0.0
    %717 = vadd.xlane.f32.xlu0 %v716
    %v718 = vpop.xlane.xlu0 %717
    %v719 = vsel %vm100, %v715, 0.0
    %720 = vadd.xlane.f32.xlu0 %v719
    %v721 = vpop.xlane.xlu0 %720
    %v722 = vmul.f32 %v718, %v357
    %v723 = vmul.f32 %v721, %v357
    %v724 = vsub.f32 %v714, %v722
    %v725 = vsub.f32 %v715, %v723
    %v726 = vmul.f32 %v724, %v724
    %v727 = vmul.f32 %v725, %v725
    %v728 = vsel %vm100, %v726, 0.0
    %729 = vadd.xlane.f32.xlu0 %v728
    %v730 = vpop.xlane.xlu0 %729
    %v731 = vsel %vm100, %v727, 0.0
    %732 = vadd.xlane.f32.xlu0 %v731
    %v733 = vpop.xlane.xlu0 %732
    %v734 = vmul.f32 %v730, %v357
    %v735 = vmul.f32 %v733, %v357
    %v736 = vadd.f32 %v734, 1e-05
    %v737 = vadd.f32 %v735, 1e-05
    %v738 = vrsqrt.pop %v736
    %v739 = vmul.f32 %v738, %v736
    %v740 = vmul.f32 %v739, %v738
    %v741 = vmul.f32 0.5, %v740
    %v742 = vsub.f32 1.5, %v741
    %v743 = vmul.f32 %v738, %v742
    %vm744 = vweird.f32 %v736
    %vm745 = vweird.f32 %v738
    %vm746 = vmor %vm744, %vm745
    %v747 = vsel %vm746, %v738, %v743
    %v748 = vrsqrt.pop %v737
    %v749 = vmul.f32 %v748, %v737
    %v750 = vmul.f32 %v749, %v748
    %v751 = vmul.f32 0.5, %v750
    %v752 = vsub.f32 1.5, %v751
    %v753 = vmul.f32 %v748, %v752
    %vm754 = vweird.f32 %v737
    %vm755 = vweird.f32 %v748
    %vm756 = vmor %vm754, %vm755
    %v757 = vsel %vm756, %v748, %v753
    %v758 = vmul.f32 %v724, %v747
    %v759 = vmul.f32 %v725, %v757
    %s760 = scalar_lea.vmem %s5, 2
    %v761 = vld [vmem:[%s760] sm:$0x1]
    %v763 = vperm.slane %v761, 0
    %v765 = vmul.f32 %v758, %v763
    %v766 = vmul.f32 %v759, %v763
    %s767 = scalar_lea.vmem %s6, 2
    %v768 = vld [vmem:[%s767] sm:$0x1]
    %v770 = vperm.slane %v768, 0
    %v772 = vadd.f32 %v765, %v770
    %v773 = vadd.f32 %v766, %v770
    %v774 = vadd.f32 %v221, %v772
    %v775 = vadd.f32 %v222, %v773
    %v776 = vmax.f32 %v774, 0.0
    %v777 = vmax.f32 %v775, 0.0
    %778 = vst.msk [vmem:[#allocation3 + $0x1] sm:$0xff] %vm100, %v776
    %779 = vst.msk [vmem:[#allocation3 + $0x9] sm:$0xff] %vm100, %v777
    %s780 = scalar_lea.vmem %s4, 3
    %v781 = vld [vmem:[%s780] sm:$0x1]
    %v782 = vld [vmem:[#allocation3] sm:$0xff]
    %v783 = vld [vmem:[#allocation3 + $0x8] sm:$0xff]
    %v784 = vpack.c.bf16 %v783, %v782
    %s785 = scalar_lea.vmem [#allocation9], 144
    %v786 = vld [vmem:[%s785] sm:$0xf]
    %v787 = vld [vmem:[%s785 + $0x4] sm:$0xf]
    %v788 = vld [vmem:[%s785 + $0x8] sm:$0xf]
    %v789 = vld [vmem:[%s785 + $0xc] sm:$0xf]
    %v790 = vld [vmem:[#allocation3 + $0x1] sm:$0xff]
    %v791 = vld [vmem:[#allocation3 + $0x9] sm:$0xff]
    %v792 = vpack.c.bf16 %v791, %v790
    %s793 = scalar_lea.vmem [#allocation9], 160
    %v794 = vld [vmem:[%s793] sm:$0xf]
    %v795 = vld [vmem:[%s793 + $0x4] sm:$0xf]
    %v796 = vld [vmem:[%s793 + $0x8] sm:$0xf]
    %v797 = vld [vmem:[%s793 + $0xc] sm:$0xf]
    %v802 = vunpack.c.l.b16 %v794
    %v803 = vunpack.c.l.b16 %v795
    %v804 = vunpack.c.l.b16 %v796
    %v805 = vunpack.c.l.b16 %v797
    %v806 = vpack.c.b16 %v803, %v802
    %v807 = vpack.c.b16 %v805, %v804
    %v811 = vsel %vm100, %v792, 0
    %813 = vmatpush.bf16.msra.mxu0 0
    %814 = vmatpush.bf16.msra.mxu0 0
    %815 = vmatpush.bf16.msra.mxu0 0
    %816 = vmatpush.bf16.msra.mxu0 0
    %817 = vmatpush.bf16.msra.mxu0 0
    %818 = vmatpush.bf16.msra.mxu0 0
    %819 = vmatpush.bf16.msra.mxu0 %v807
    %820 = vmatpush.bf16.msra.mxu0 %v806
    %821 = vmatmul.bf16.gmra.mxu0 %v811
    %v822 = vpop.f32.mrf.mxu0
    %v823 = vadd.f32 0.0, %v822
    %v824 = vpop.f32.mrf.mxu0
    %v825 = vadd.f32 0.0, %v824
    %826 = vdwg.mxu0
    %v831 = vunpack.c.l.b16 %v786
    %v832 = vunpack.c.l.b16 %v787
    %v833 = vunpack.c.l.b16 %v788
    %v834 = vunpack.c.l.b16 %v789
    %v835 = vpack.c.b16 %v832, %v831
    %v836 = vpack.c.b16 %v834, %v833
    %v840 = vsel %vm100, %v784, 0
    %842 = vmatpush.bf16.msra.mxu0 0
    %843 = vmatpush.bf16.msra.mxu0 0
    %844 = vmatpush.bf16.msra.mxu0 0
    %845 = vmatpush.bf16.msra.mxu0 0
    %846 = vmatpush.bf16.msra.mxu0 0
    %847 = vmatpush.bf16.msra.mxu0 0
    %848 = vmatpush.bf16.msra.mxu0 %v836
    %849 = vmatpush.bf16.msra.mxu0 %v835
    %850 = vmatmul.bf16.gmra.mxu0 %v840
    %v851 = vpop.f32.mrf.mxu0
    %v852 = vadd.f32 %v823, %v851
    %v853 = vpop.f32.mrf.mxu0
    %v854 = vadd.f32 %v825, %v853
    %855 = vdwg.mxu0
    %v856 = vld [vmem:[#allocation3 + $0x2] sm:$0xff]
    %v857 = vld [vmem:[#allocation3 + $0xa] sm:$0xff]
    %v858 = vpack.c.bf16 %v857, %v856
    %s859 = scalar_lea.vmem [#allocation9], 176
    %v860 = vld [vmem:[%s859] sm:$0xf]
    %v861 = vld [vmem:[%s859 + $0x4] sm:$0xf]
    %v862 = vld [vmem:[%s859 + $0x8] sm:$0xf]
    %v863 = vld [vmem:[%s859 + $0xc] sm:$0xf]
    %v868 = vunpack.c.l.b16 %v860
    %v869 = vunpack.c.l.b16 %v861
    %v870 = vunpack.c.l.b16 %v862
    %v871 = vunpack.c.l.b16 %v863
    %v872 = vpack.c.b16 %v869, %v868
    %v873 = vpack.c.b16 %v871, %v870
    %v877 = vsel %vm100, %v858, 0
    %879 = vmatpush.bf16.msra.mxu0 0
    %880 = vmatpush.bf16.msra.mxu0 0
    %881 = vmatpush.bf16.msra.mxu0 0
    %882 = vmatpush.bf16.msra.mxu0 0
    %883 = vmatpush.bf16.msra.mxu0 0
    %884 = vmatpush.bf16.msra.mxu0 0
    %885 = vmatpush.bf16.msra.mxu0 %v873
    %886 = vmatpush.bf16.msra.mxu0 %v872
    %887 = vmatmul.bf16.gmra.mxu0 %v877
    %v888 = vpop.f32.mrf.mxu0
    %v889 = vadd.f32 0.0, %v888
    %v890 = vpop.f32.mrf.mxu0
    %v891 = vadd.f32 0.0, %v890
    %892 = vdwg.mxu0
    %v893 = vadd.f32 %v852, %v889
    %v894 = vadd.f32 %v854, %v891
    %v896 = vperm.slane %v781, 0
    %v898 = vadd.f32 %v893, %v896
    %v899 = vadd.f32 %v894, %v896
    %v900 = vsel %vm100, %v898, 0.0
    %901 = vadd.xlane.f32.xlu0 %v900
    %v902 = vpop.xlane.xlu0 %901
    %v903 = vsel %vm100, %v899, 0.0
    %904 = vadd.xlane.f32.xlu0 %v903
    %v905 = vpop.xlane.xlu0 %904
    %v906 = vmul.f32 %v902, %v357
    %v907 = vmul.f32 %v905, %v357
    %v908 = vsub.f32 %v898, %v906
    %v909 = vsub.f32 %v899, %v907
    %v910 = vmul.f32 %v908, %v908
    %v911 = vmul.f32 %v909, %v909
    %v912 = vsel %vm100, %v910, 0.0
    %913 = vadd.xlane.f32.xlu0 %v912
    %v914 = vpop.xlane.xlu0 %913
    %v915 = vsel %vm100, %v911, 0.0
    %916 = vadd.xlane.f32.xlu0 %v915
    %v917 = vpop.xlane.xlu0 %916
    %v918 = vmul.f32 %v914, %v357
    %v919 = vmul.f32 %v917, %v357
    %v920 = vadd.f32 %v918, 1e-05
    %v921 = vadd.f32 %v919, 1e-05
    %v922 = vrsqrt.pop %v920
    %v923 = vmul.f32 %v922, %v920
    %v924 = vmul.f32 %v923, %v922
    %v925 = vmul.f32 0.5, %v924
    %v926 = vsub.f32 1.5, %v925
    %v927 = vmul.f32 %v922, %v926
    %vm928 = vweird.f32 %v920
    %vm929 = vweird.f32 %v922
    %vm930 = vmor %vm928, %vm929
    %v931 = vsel %vm930, %v922, %v927
    %v932 = vrsqrt.pop %v921
    %v933 = vmul.f32 %v932, %v921
    %v934 = vmul.f32 %v933, %v932
    %v935 = vmul.f32 0.5, %v934
    %v936 = vsub.f32 1.5, %v935
    %v937 = vmul.f32 %v932, %v936
    %vm938 = vweird.f32 %v921
    %vm939 = vweird.f32 %v932
    %vm940 = vmor %vm938, %vm939
    %v941 = vsel %vm940, %v932, %v937
    %v942 = vmul.f32 %v908, %v931
    %v943 = vmul.f32 %v909, %v941
    %s944 = scalar_lea.vmem %s5, 3
    %v945 = vld [vmem:[%s944] sm:$0x1]
    %v947 = vperm.slane %v945, 0
    %v949 = vmul.f32 %v942, %v947
    %v950 = vmul.f32 %v943, %v947
    %s951 = scalar_lea.vmem %s6, 3
    %v952 = vld [vmem:[%s951] sm:$0x1]
    %v954 = vperm.slane %v952, 0
    %v956 = vadd.f32 %v949, %v954
    %v957 = vadd.f32 %v950, %v954
    %v958 = vadd.f32 %v774, %v956
    %v959 = vadd.f32 %v775, %v957
    %v960 = vadd.f32 %v592, %v958
    %v961 = vadd.f32 %v593, %v959
    %962 = vst.msk [vmem:[#allocation3 + $0x1] sm:$0xff] %vm100, %v960
    %963 = vst.msk [vmem:[#allocation3 + $0x9] sm:$0xff] %vm100, %v961
    %v964 = vld [vmem:[%s8] sm:$0x1]
    %v965 = vld [vmem:[#allocation3] sm:$0xff]
    %v966 = vld [vmem:[#allocation3 + $0x8] sm:$0xff]
    %v967 = vpack.c.bf16 %v966, %v965
    %v968 = vld [vmem:[#allocation10] sm:$0xf]
    %v969 = vld [vmem:[#allocation10 + $0x4] sm:$0xf]
    %v970 = vld [vmem:[#allocation10 + $0x8] sm:$0xf]
    %v971 = vld [vmem:[#allocation10 + $0xc] sm:$0xf]
    %v972 = vld [vmem:[#allocation3 + $0x1] sm:$0xff]
    %v973 = vld [vmem:[#allocation3 + $0x9] sm:$0xff]
    %v974 = vpack.c.bf16 %v973, %v972
    %s975 = scalar_lea.vmem [#allocation10], 16
    %v976 = vld [vmem:[%s975] sm:$0xf]
    %v977 = vld [vmem:[%s975 + $0x4] sm:$0xf]
    %v978 = vld [vmem:[%s975 + $0x8] sm:$0xf]
    %v979 = vld [vmem:[%s975 + $0xc] sm:$0xf]
    %v984 = vunpack.c.l.b16 %v976
    %v985 = vunpack.c.l.b16 %v977
    %v986 = vunpack.c.l.b16 %v978
    %v987 = vunpack.c.l.b16 %v979
    %v988 = vpack.c.b16 %v985, %v984
    %v989 = vpack.c.b16 %v987, %v986
    %v993 = vsel %vm100, %v974, 0
    %995 = vmatpush.bf16.msra.mxu0 0
    %996 = vmatpush.bf16.msra.mxu0 0
    %997 = vmatpush.bf16.msra.mxu0 0
    %998 = vmatpush.bf16.msra.mxu0 0
    %999 = vmatpush.bf16.msra.mxu0 0
    %1000 = vmatpush.bf16.msra.mxu0 0
    %1001 = vmatpush.bf16.msra.mxu0 %v989
    %1002 = vmatpush.bf16.msra.mxu0 %v988
    %1003 = vmatmul.bf16.gmra.mxu0 %v993
    %v1004 = vpop.f32.mrf.mxu0
    %v1005 = vadd.f32 0.0, %v1004
    %v1006 = vpop.f32.mrf.mxu0
    %v1007 = vadd.f32 0.0, %v1006
    %1008 = vdwg.mxu0
    %v1013 = vunpack.c.l.b16 %v968
    %v1014 = vunpack.c.l.b16 %v969
    %v1015 = vunpack.c.l.b16 %v970
    %v1016 = vunpack.c.l.b16 %v971
    %v1017 = vpack.c.b16 %v1014, %v1013
    %v1018 = vpack.c.b16 %v1016, %v1015
    %v1022 = vsel %vm100, %v967, 0
    %1024 = vmatpush.bf16.msra.mxu0 0
    %1025 = vmatpush.bf16.msra.mxu0 0
    %1026 = vmatpush.bf16.msra.mxu0 0
    %1027 = vmatpush.bf16.msra.mxu0 0
    %1028 = vmatpush.bf16.msra.mxu0 0
    %1029 = vmatpush.bf16.msra.mxu0 0
    %1030 = vmatpush.bf16.msra.mxu0 %v1018
    %1031 = vmatpush.bf16.msra.mxu0 %v1017
    %1032 = vmatmul.bf16.gmra.mxu0 %v1022
    %v1033 = vpop.f32.mrf.mxu0
    %v1034 = vadd.f32 %v1005, %v1033
    %v1035 = vpop.f32.mrf.mxu0
    %v1036 = vadd.f32 %v1007, %v1035
    %1037 = vdwg.mxu0
    %v1038 = vld [vmem:[#allocation3 + $0x2] sm:$0xff]
    %v1039 = vld [vmem:[#allocation3 + $0xa] sm:$0xff]
    %v1040 = vpack.c.bf16 %v1039, %v1038
    %s1041 = scalar_lea.vmem [#allocation10], 32
    %v1042 = vld [vmem:[%s1041] sm:$0xf]
    %v1043 = vld [vmem:[%s1041 + $0x4] sm:$0xf]
    %v1044 = vld [vmem:[%s1041 + $0x8] sm:$0xf]
    %v1045 = vld [vmem:[%s1041 + $0xc] sm:$0xf]
    %v1050 = vunpack.c.l.b16 %v1042
    %v1051 = vunpack.c.l.b16 %v1043
    %v1052 = vunpack.c.l.b16 %v1044
    %v1053 = vunpack.c.l.b16 %v1045
    %v1054 = vpack.c.b16 %v1051, %v1050
    %v1055 = vpack.c.b16 %v1053, %v1052
    %v1059 = vsel %vm100, %v1040, 0
    %1061 = vmatpush.bf16.msra.mxu0 0
    %1062 = vmatpush.bf16.msra.mxu0 0
    %1063 = vmatpush.bf16.msra.mxu0 0
    %1064 = vmatpush.bf16.msra.mxu0 0
    %1065 = vmatpush.bf16.msra.mxu0 0
    %1066 = vmatpush.bf16.msra.mxu0 0
    %1067 = vmatpush.bf16.msra.mxu0 %v1055
    %1068 = vmatpush.bf16.msra.mxu0 %v1054
    %1069 = vmatmul.bf16.gmra.mxu0 %v1059
    %v1070 = vpop.f32.mrf.mxu0
    %v1071 = vadd.f32 0.0, %v1070
    %v1072 = vpop.f32.mrf.mxu0
    %v1073 = vadd.f32 0.0, %v1072
    %1074 = vdwg.mxu0
    %v1075 = vadd.f32 %v1034, %v1071
    %v1076 = vadd.f32 %v1036, %v1073
    %v1078 = vperm.slane %v964, 0
    %v1080 = vadd.f32 %v1075, %v1078
    %v1081 = vadd.f32 %v1076, %v1078
    %1082 = vxpose.xlu0.b32.start [1/16] %v1080, 128
    %1083 = vxpose.xlu0.b32.cont [2/16] %v1081, 128
    %1084 = vxpose.xlu0.b32.cont [3/16] 0.0, 128
    %1085 = vxpose.xlu0.b32.cont [4/16] 0.0, 128
    %1086 = vxpose.xlu0.b32.cont [5/16] 0.0, 128
    %1087 = vxpose.xlu0.b32.cont [6/16] 0.0, 128
    %1088 = vxpose.xlu0.b32.cont [7/16] 0.0, 128
    %1089 = vxpose.xlu0.b32.cont [8/16] 0.0, 128
    %1090 = vxpose.xlu0.b32.cont [9/16] 0.0, 128
    %1091 = vxpose.xlu0.b32.cont [10/16] 0.0, 128
    %1092 = vxpose.xlu0.b32.cont [11/16] 0.0, 128
    %1093 = vxpose.xlu0.b32.cont [12/16] 0.0, 128
    %1094 = vxpose.xlu0.b32.cont [13/16] 0.0, 128
    %1095 = vxpose.xlu0.b32.cont [14/16] 0.0, 128
    %1096 = vxpose.xlu0.b32.cont [15/16] 0.0, 128
    %1097 = vxpose.xlu0.b32.end [16/16] 0.0, 128
    %v1098 = vpop.trf.xlu0
    %v1099 = vpop.trf.xlu0
    %v1100 = vpop.trf.xlu0
    %v1101 = vpop.trf.xlu0
    %v1102 = vpop.trf.xlu0
    %v1103 = vpop.trf.xlu0
    %v1104 = vpop.trf.xlu0
    %v1105 = vpop.trf.xlu0
    %v1106 = vpop.trf.xlu0
    %v1107 = vpop.trf.xlu0
    %v1108 = vpop.trf.xlu0
    %v1109 = vpop.trf.xlu0
    %v1110 = vpop.trf.xlu0
    %v1111 = vpop.trf.xlu0
    %v1112 = vpop.trf.xlu0
    %v1113 = vpop.trf.xlu0
    %vm1114 = vcmask 125952
    %1115 = vst.msk [vmem:[#allocation12] sm:$0xf] %vm1114, %v1098
    %s1116 = scalar_lea.vmem %s0, 4
    %v1117 = vld [vmem:[%s1116] sm:$0xf]
    %1118 = vxpose.xlu0.b32.start [1/16] %v1117, 128
    %1119 = vxpose.xlu0.b32.cont [2/16] 0.0, 128
    %1120 = vxpose.xlu0.b32.cont [3/16] 0.0, 128
    %1121 = vxpose.xlu0.b32.cont [4/16] 0.0, 128
    %1122 = vxpose.xlu0.b32.cont [5/16] 0.0, 128
    %1123 = vxpose.xlu0.b32.cont [6/16] 0.0, 128
    %1124 = vxpose.xlu0.b32.cont [7/16] 0.0, 128
    %1125 = vxpose.xlu0.b32.cont [8/16] 0.0, 128
    %1126 = vxpose.xlu0.b32.cont [9/16] 0.0, 128
    %1127 = vxpose.xlu0.b32.cont [10/16] 0.0, 128
    %1128 = vxpose.xlu0.b32.cont [11/16] 0.0, 128
    %1129 = vxpose.xlu0.b32.cont [12/16] 0.0, 128
    %1130 = vxpose.xlu0.b32.cont [13/16] 0.0, 128
    %1131 = vxpose.xlu0.b32.cont [14/16] 0.0, 128
    %1132 = vxpose.xlu0.b32.cont [15/16] 0.0, 128
    %1133 = vxpose.xlu0.b32.end [16/16] 0.0, 128
    %v1134 = vpop.trf.xlu0
    %v1135 = vpop.trf.xlu0
    %v1136 = vpop.trf.xlu0
    %v1137 = vpop.trf.xlu0
    %v1138 = vpop.trf.xlu0
    %v1139 = vpop.trf.xlu0
    %v1140 = vpop.trf.xlu0
    %v1141 = vpop.trf.xlu0
    %v1142 = vpop.trf.xlu0
    %v1143 = vpop.trf.xlu0
    %v1144 = vpop.trf.xlu0
    %v1145 = vpop.trf.xlu0
    %v1146 = vpop.trf.xlu0
    %v1147 = vpop.trf.xlu0
    %v1148 = vpop.trf.xlu0
    %v1149 = vpop.trf.xlu0
    %1150 = vst.msk [vmem:[#allocation2 + $0x1] sm:$0xff] %vm95, %v1134
    %1151 = vst.msk [vmem:[#allocation2 + $0x9] sm:$0xff] %vm95, %v1135
    %v1152 = vld [vmem:[#allocation7] sm:$0x1]
    %v1153 = vld [vmem:[#allocation2] sm:$0xff]
    %v1154 = vld [vmem:[#allocation2 + $0x8] sm:$0xff]
    %v1155 = vpack.c.bf16 %v1154, %v1153
    %v1156 = vld [vmem:[#allocation4] sm:$0x3]
    %v1157 = vld [vmem:[#allocation2 + $0x1] sm:$0xff]
    %v1158 = vld [vmem:[#allocation2 + $0x9] sm:$0xff]
    %v1159 = vpack.c.bf16 %v1158, %v1157
    %v1160 = vld [vmem:[%s148] sm:$0x3]
    %v1162 = vsel %vm95, %v1159, 0
    %v1165 = vsel %vm153, %v1160, 0
    %1167 = vmatpush.bf16.msra.mxu0 0
    %1168 = vmatpush.bf16.msra.mxu0 0
    %1169 = vmatpush.bf16.msra.mxu0 0
    %1170 = vmatpush.bf16.msra.mxu0 0
    %1171 = vmatpush.bf16.msra.mxu0 0
    %1172 = vmatpush.bf16.msra.mxu0 0
    %1173 = vmatpush.bf16.msra.mxu0 0
    %1174 = vmatpush.bf16.msra.mxu0 %v1165
    %1175 = vmatmul.bf16.gmra.mxu0 %v1162
    %v1176 = vpop.f32.mrf.mxu0
    %v1177 = vadd.f32 0.0, %v1176
    %v1178 = vpop.f32.mrf.mxu0
    %v1179 = vadd.f32 0.0, %v1178
    %1180 = vdwg.mxu0
    %v1182 = vsel %vm95, %v1155, 0
    %v1185 = vsel %vm153, %v1156, 0
    %1187 = vmatpush.bf16.msra.mxu0 0
    %1188 = vmatpush.bf16.msra.mxu0 0
    %1189 = vmatpush.bf16.msra.mxu0 0
    %1190 = vmatpush.bf16.msra.mxu0 0
    %1191 = vmatpush.bf16.msra.mxu0 0
    %1192 = vmatpush.bf16.msra.mxu0 0
    %1193 = vmatpush.bf16.msra.mxu0 0
    %1194 = vmatpush.bf16.msra.mxu0 %v1185
    %1195 = vmatmul.bf16.gmra.mxu0 %v1182
    %v1196 = vpop.f32.mrf.mxu0
    %v1197 = vadd.f32 %v1177, %v1196
    %v1198 = vpop.f32.mrf.mxu0
    %v1199 = vadd.f32 %v1179, %v1198
    %1200 = vdwg.mxu0
    %v1201 = vld [vmem:[#allocation2 + $0x2] sm:$0xff]
    %v1202 = vld [vmem:[#allocation2 + $0xa] sm:$0xff]
    %v1203 = vpack.c.bf16 %v1202, %v1201
    %v1204 = vld [vmem:[%s194] sm:$0x3]
    %v1206 = vsel %vm95, %v1203, 0
    %v1209 = vsel %vm153, %v1204, 0
    %1211 = vmatpush.bf16.msra.mxu0 0
    %1212 = vmatpush.bf16.msra.mxu0 0
    %1213 = vmatpush.bf16.msra.mxu0 0
    %1214 = vmatpush.bf16.msra.mxu0 0
    %1215 = vmatpush.bf16.msra.mxu0 0
    %1216 = vmatpush.bf16.msra.mxu0 0
    %1217 = vmatpush.bf16.msra.mxu0 0
    %1218 = vmatpush.bf16.msra.mxu0 %v1209
    %1219 = vmatmul.bf16.gmra.mxu0 %v1206
    %v1220 = vpop.f32.mrf.mxu0
    %v1221 = vadd.f32 0.0, %v1220
    %v1222 = vpop.f32.mrf.mxu0
    %v1223 = vadd.f32 0.0, %v1222
    %1224 = vdwg.mxu0
    %v1225 = vadd.f32 %v1197, %v1221
    %v1226 = vadd.f32 %v1199, %v1223
    %v1228 = vperm.slane %v1152, 0
    %v1230 = vadd.f32 %v1225, %v1228
    %v1231 = vadd.f32 %v1226, %v1228
    %v1232 = vmax.f32 %v1230, 0.0
    %v1233 = vmax.f32 %v1231, 0.0
    %1234 = vst.msk [vmem:[#allocation3 + $0x1] sm:$0xff] %vm100, %v1232
    %1235 = vst.msk [vmem:[#allocation3 + $0x9] sm:$0xff] %vm100, %v1233
    %v1236 = vld [vmem:[%s4] sm:$0x1]
    %v1237 = vld [vmem:[#allocation3] sm:$0xff]
    %v1238 = vld [vmem:[#allocation3 + $0x8] sm:$0xff]
    %v1239 = vpack.c.bf16 %v1238, %v1237
    %v1240 = vld [vmem:[#allocation9] sm:$0xf]
    %v1241 = vld [vmem:[#allocation9 + $0x4] sm:$0xf]
    %v1242 = vld [vmem:[#allocation9 + $0x8] sm:$0xf]
    %v1243 = vld [vmem:[#allocation9 + $0xc] sm:$0xf]
    %v1244 = vld [vmem:[#allocation3 + $0x1] sm:$0xff]
    %v1245 = vld [vmem:[#allocation3 + $0x9] sm:$0xff]
    %v1246 = vpack.c.bf16 %v1245, %v1244
    %v1247 = vld [vmem:[%s238] sm:$0xf]
    %v1248 = vld [vmem:[%s238 + $0x4] sm:$0xf]
    %v1249 = vld [vmem:[%s238 + $0x8] sm:$0xf]
    %v1250 = vld [vmem:[%s238 + $0xc] sm:$0xf]
    %v1255 = vunpack.c.l.b16 %v1247
    %v1256 = vunpack.c.l.b16 %v1248
    %v1257 = vunpack.c.l.b16 %v1249
    %v1258 = vunpack.c.l.b16 %v1250
    %v1259 = vpack.c.b16 %v1256, %v1255
    %v1260 = vpack.c.b16 %v1258, %v1257
    %v1264 = vsel %vm100, %v1246, 0
    %1266 = vmatpush.bf16.msra.mxu0 0
    %1267 = vmatpush.bf16.msra.mxu0 0
    %1268 = vmatpush.bf16.msra.mxu0 0
    %1269 = vmatpush.bf16.msra.mxu0 0
    %1270 = vmatpush.bf16.msra.mxu0 0
    %1271 = vmatpush.bf16.msra.mxu0 0
    %1272 = vmatpush.bf16.msra.mxu0 %v1260
    %1273 = vmatpush.bf16.msra.mxu0 %v1259
    %1274 = vmatmul.bf16.gmra.mxu0 %v1264
    %v1275 = vpop.f32.mrf.mxu0
    %v1276 = vadd.f32 0.0, %v1275
    %v1277 = vpop.f32.mrf.mxu0
    %v1278 = vadd.f32 0.0, %v1277
    %1279 = vdwg.mxu0
    %v1284 = vunpack.c.l.b16 %v1240
    %v1285 = vunpack.c.l.b16 %v1241
    %v1286 = vunpack.c.l.b16 %v1242
    %v1287 = vunpack.c.l.b16 %v1243
    %v1288 = vpack.c.b16 %v1285, %v1284
    %v1289 = vpack.c.b16 %v1287, %v1286
    %v1293 = vsel %vm100, %v1239, 0
    %1295 = vmatpush.bf16.msra.mxu0 0
    %1296 = vmatpush.bf16.msra.mxu0 0
    %1297 = vmatpush.bf16.msra.mxu0 0
    %1298 = vmatpush.bf16.msra.mxu0 0
    %1299 = vmatpush.bf16.msra.mxu0 0
    %1300 = vmatpush.bf16.msra.mxu0 0
    %1301 = vmatpush.bf16.msra.mxu0 %v1289
    %1302 = vmatpush.bf16.msra.mxu0 %v1288
    %1303 = vmatmul.bf16.gmra.mxu0 %v1293
    %v1304 = vpop.f32.mrf.mxu0
    %v1305 = vadd.f32 %v1276, %v1304
    %v1306 = vpop.f32.mrf.mxu0
    %v1307 = vadd.f32 %v1278, %v1306
    %1308 = vdwg.mxu0
    %v1309 = vld [vmem:[#allocation3 + $0x2] sm:$0xff]
    %v1310 = vld [vmem:[#allocation3 + $0xa] sm:$0xff]
    %v1311 = vpack.c.bf16 %v1310, %v1309
    %v1312 = vld [vmem:[%s304] sm:$0xf]
    %v1313 = vld [vmem:[%s304 + $0x4] sm:$0xf]
    %v1314 = vld [vmem:[%s304 + $0x8] sm:$0xf]
    %v1315 = vld [vmem:[%s304 + $0xc] sm:$0xf]
    %v1320 = vunpack.c.l.b16 %v1312
    %v1321 = vunpack.c.l.b16 %v1313
    %v1322 = vunpack.c.l.b16 %v1314
    %v1323 = vunpack.c.l.b16 %v1315
    %v1324 = vpack.c.b16 %v1321, %v1320
    %v1325 = vpack.c.b16 %v1323, %v1322
    %v1329 = vsel %vm100, %v1311, 0
    %1331 = vmatpush.bf16.msra.mxu0 0
    %1332 = vmatpush.bf16.msra.mxu0 0
    %1333 = vmatpush.bf16.msra.mxu0 0
    %1334 = vmatpush.bf16.msra.mxu0 0
    %1335 = vmatpush.bf16.msra.mxu0 0
    %1336 = vmatpush.bf16.msra.mxu0 0
    %1337 = vmatpush.bf16.msra.mxu0 %v1325
    %1338 = vmatpush.bf16.msra.mxu0 %v1324
    %1339 = vmatmul.bf16.gmra.mxu0 %v1329
    %v1340 = vpop.f32.mrf.mxu0
    %v1341 = vadd.f32 0.0, %v1340
    %v1342 = vpop.f32.mrf.mxu0
    %v1343 = vadd.f32 0.0, %v1342
    %1344 = vdwg.mxu0
    %v1345 = vadd.f32 %v1305, %v1341
    %v1346 = vadd.f32 %v1307, %v1343
    %v1348 = vperm.slane %v1236, 0
    %v1350 = vadd.f32 %v1345, %v1348
    %v1351 = vadd.f32 %v1346, %v1348
    %v1352 = vsel %vm100, %v1350, 0.0
    %1353 = vadd.xlane.f32.xlu0 %v1352
    %v1354 = vpop.xlane.xlu0 %1353
    %v1355 = vsel %vm100, %v1351, 0.0
    %1356 = vadd.xlane.f32.xlu0 %v1355
    %v1357 = vpop.xlane.xlu0 %1356
    %v1358 = vmul.f32 %v1354, %v357
    %v1359 = vmul.f32 %v1357, %v357
    %v1360 = vsub.f32 %v1350, %v1358
    %v1361 = vsub.f32 %v1351, %v1359
    %v1362 = vmul.f32 %v1360, %v1360
    %v1363 = vmul.f32 %v1361, %v1361
    %v1364 = vsel %vm100, %v1362, 0.0
    %1365 = vadd.xlane.f32.xlu0 %v1364
    %v1366 = vpop.xlane.xlu0 %1365
    %v1367 = vsel %vm100, %v1363, 0.0
    %1368 = vadd.xlane.f32.xlu0 %v1367
    %v1369 = vpop.xlane.xlu0 %1368
    %v1370 = vmul.f32 %v1366, %v357
    %v1371 = vmul.f32 %v1369, %v357
    %v1372 = vadd.f32 %v1370, 1e-05
    %v1373 = vadd.f32 %v1371, 1e-05
    %v1374 = vrsqrt.pop %v1372
    %v1375 = vmul.f32 %v1374, %v1372
    %v1376 = vmul.f32 %v1375, %v1374
    %v1377 = vmul.f32 0.5, %v1376
    %v1378 = vsub.f32 1.5, %v1377
    %v1379 = vmul.f32 %v1374, %v1378
    %vm1380 = vweird.f32 %v1372
    %vm1381 = vweird.f32 %v1374
    %vm1382 = vmor %vm1380, %vm1381
    %v1383 = vsel %vm1382, %v1374, %v1379
    %v1384 = vrsqrt.pop %v1373
    %v1385 = vmul.f32 %v1384, %v1373
    %v1386 = vmul.f32 %v1385, %v1384
    %v1387 = vmul.f32 0.5, %v1386
    %v1388 = vsub.f32 1.5, %v1387
    %v1389 = vmul.f32 %v1384, %v1388
    %vm1390 = vweird.f32 %v1373
    %vm1391 = vweird.f32 %v1384
    %vm1392 = vmor %vm1390, %vm1391
    %v1393 = vsel %vm1392, %v1384, %v1389
    %v1394 = vmul.f32 %v1360, %v1383
    %v1395 = vmul.f32 %v1361, %v1393
    %v1396 = vld [vmem:[%s5] sm:$0x1]
    %v1398 = vperm.slane %v1396, 0
    %v1400 = vmul.f32 %v1394, %v1398
    %v1401 = vmul.f32 %v1395, %v1398
    %v1402 = vld [vmem:[%s6] sm:$0x1]
    %v1404 = vperm.slane %v1402, 0
    %v1406 = vadd.f32 %v1400, %v1404
    %v1407 = vadd.f32 %v1401, %v1404
    %v1408 = vadd.f32 %v1230, %v1406
    %v1409 = vadd.f32 %v1231, %v1407
    %v1410 = vmax.f32 %v1408, 0.0
    %v1411 = vmax.f32 %v1409, 0.0
    %1412 = vst.msk [vmem:[#allocation3 + $0x1] sm:$0xff] %vm100, %v1410
    %1413 = vst.msk [vmem:[#allocation3 + $0x9] sm:$0xff] %vm100, %v1411
    %v1414 = vld [vmem:[%s414] sm:$0x1]
    %v1415 = vld [vmem:[#allocation3] sm:$0xff]
    %v1416 = vld [vmem:[#allocation3 + $0x8] sm:$0xff]
    %v1417 = vpack.c.bf16 %v1416, %v1415
    %v1418 = vld [vmem:[%s419] sm:$0xf]
    %v1419 = vld [vmem:[%s419 + $0x4] sm:$0xf]
    %v1420 = vld [vmem:[%s419 + $0x8] sm:$0xf]
    %v1421 = vld [vmem:[%s419 + $0xc] sm:$0xf]
    %v1422 = vld [vmem:[#allocation3 + $0x1] sm:$0xff]
    %v1423 = vld [vmem:[#allocation3 + $0x9] sm:$0xff]
    %v1424 = vpack.c.bf16 %v1423, %v1422
    %v1425 = vld [vmem:[%s427] sm:$0xf]
    %v1426 = vld [vmem:[%s427 + $0x4] sm:$0xf]
    %v1427 = vld [vmem:[%s427 + $0x8] sm:$0xf]
    %v1428 = vld [vmem:[%s427 + $0xc] sm:$0xf]
    %v1433 = vunpack.c.l.b16 %v1425
    %v1434 = vunpack.c.l.b16 %v1426
    %v1435 = vunpack.c.l.b16 %v1427
    %v1436 = vunpack.c.l.b16 %v1428
    %v1437 = vpack.c.b16 %v1434, %v1433
    %v1438 = vpack.c.b16 %v1436, %v1435
    %v1442 = vsel %vm100, %v1424, 0
    %1444 = vmatpush.bf16.msra.mxu0 0
    %1445 = vmatpush.bf16.msra.mxu0 0
    %1446 = vmatpush.bf16.msra.mxu0 0
    %1447 = vmatpush.bf16.msra.mxu0 0
    %1448 = vmatpush.bf16.msra.mxu0 0
    %1449 = vmatpush.bf16.msra.mxu0 0
    %1450 = vmatpush.bf16.msra.mxu0 %v1438
    %1451 = vmatpush.bf16.msra.mxu0 %v1437
    %1452 = vmatmul.bf16.gmra.mxu0 %v1442
    %v1453 = vpop.f32.mrf.mxu0
    %v1454 = vadd.f32 0.0, %v1453
    %v1455 = vpop.f32.mrf.mxu0
    %v1456 = vadd.f32 0.0, %v1455
    %1457 = vdwg.mxu0
    %v1462 = vunpack.c.l.b16 %v1418
    %v1463 = vunpack.c.l.b16 %v1419
    %v1464 = vunpack.c.l.b16 %v1420
    %v1465 = vunpack.c.l.b16 %v1421
    %v1466 = vpack.c.b16 %v1463, %v1462
    %v1467 = vpack.c.b16 %v1465, %v1464
    %v1471 = vsel %vm100, %v1417, 0
    %1473 = vmatpush.bf16.msra.mxu0 0
    %1474 = vmatpush.bf16.msra.mxu0 0
    %1475 = vmatpush.bf16.msra.mxu0 0
    %1476 = vmatpush.bf16.msra.mxu0 0
    %1477 = vmatpush.bf16.msra.mxu0 0
    %1478 = vmatpush.bf16.msra.mxu0 0
    %1479 = vmatpush.bf16.msra.mxu0 %v1467
    %1480 = vmatpush.bf16.msra.mxu0 %v1466
    %1481 = vmatmul.bf16.gmra.mxu0 %v1471
    %v1482 = vpop.f32.mrf.mxu0
    %v1483 = vadd.f32 %v1454, %v1482
    %v1484 = vpop.f32.mrf.mxu0
    %v1485 = vadd.f32 %v1456, %v1484
    %1486 = vdwg.mxu0
    %v1487 = vld [vmem:[#allocation3 + $0x2] sm:$0xff]
    %v1488 = vld [vmem:[#allocation3 + $0xa] sm:$0xff]
    %v1489 = vpack.c.bf16 %v1488, %v1487
    %v1490 = vld [vmem:[%s493] sm:$0xf]
    %v1491 = vld [vmem:[%s493 + $0x4] sm:$0xf]
    %v1492 = vld [vmem:[%s493 + $0x8] sm:$0xf]
    %v1493 = vld [vmem:[%s493 + $0xc] sm:$0xf]
    %v1498 = vunpack.c.l.b16 %v1490
    %v1499 = vunpack.c.l.b16 %v1491
    %v1500 = vunpack.c.l.b16 %v1492
    %v1501 = vunpack.c.l.b16 %v1493
    %v1502 = vpack.c.b16 %v1499, %v1498
    %v1503 = vpack.c.b16 %v1501, %v1500
    %v1507 = vsel %vm100, %v1489, 0
    %1509 = vmatpush.bf16.msra.mxu0 0
    %1510 = vmatpush.bf16.msra.mxu0 0
    %1511 = vmatpush.bf16.msra.mxu0 0
    %1512 = vmatpush.bf16.msra.mxu0 0
    %1513 = vmatpush.bf16.msra.mxu0 0
    %1514 = vmatpush.bf16.msra.mxu0 0
    %1515 = vmatpush.bf16.msra.mxu0 %v1503
    %1516 = vmatpush.bf16.msra.mxu0 %v1502
    %1517 = vmatmul.bf16.gmra.mxu0 %v1507
    %v1518 = vpop.f32.mrf.mxu0
    %v1519 = vadd.f32 0.0, %v1518
    %v1520 = vpop.f32.mrf.mxu0
    %v1521 = vadd.f32 0.0, %v1520
    %1522 = vdwg.mxu0
    %v1523 = vadd.f32 %v1483, %v1519
    %v1524 = vadd.f32 %v1485, %v1521
    %v1526 = vperm.slane %v1414, 0
    %v1528 = vadd.f32 %v1523, %v1526
    %v1529 = vadd.f32 %v1524, %v1526
    %v1530 = vsel %vm100, %v1528, 0.0
    %1531 = vadd.xlane.f32.xlu0 %v1530
    %v1532 = vpop.xlane.xlu0 %1531
    %v1533 = vsel %vm100, %v1529, 0.0
    %1534 = vadd.xlane.f32.xlu0 %v1533
    %v1535 = vpop.xlane.xlu0 %1534
    %v1536 = vmul.f32 %v1532, %v357
    %v1537 = vmul.f32 %v1535, %v357
    %v1538 = vsub.f32 %v1528, %v1536
    %v1539 = vsub.f32 %v1529, %v1537
    %v1540 = vmul.f32 %v1538, %v1538
    %v1541 = vmul.f32 %v1539, %v1539
    %v1542 = vsel %vm100, %v1540, 0.0
    %1543 = vadd.xlane.f32.xlu0 %v1542
    %v1544 = vpop.xlane.xlu0 %1543
    %v1545 = vsel %vm100, %v1541, 0.0
    %1546 = vadd.xlane.f32.xlu0 %v1545
    %v1547 = vpop.xlane.xlu0 %1546
    %v1548 = vmul.f32 %v1544, %v357
    %v1549 = vmul.f32 %v1547, %v357
    %v1550 = vadd.f32 %v1548, 1e-05
    %v1551 = vadd.f32 %v1549, 1e-05
    %v1552 = vrsqrt.pop %v1550
    %v1553 = vmul.f32 %v1552, %v1550
    %v1554 = vmul.f32 %v1553, %v1552
    %v1555 = vmul.f32 0.5, %v1554
    %v1556 = vsub.f32 1.5, %v1555
    %v1557 = vmul.f32 %v1552, %v1556
    %vm1558 = vweird.f32 %v1550
    %vm1559 = vweird.f32 %v1552
    %vm1560 = vmor %vm1558, %vm1559
    %v1561 = vsel %vm1560, %v1552, %v1557
    %v1562 = vrsqrt.pop %v1551
    %v1563 = vmul.f32 %v1562, %v1551
    %v1564 = vmul.f32 %v1563, %v1562
    %v1565 = vmul.f32 0.5, %v1564
    %v1566 = vsub.f32 1.5, %v1565
    %v1567 = vmul.f32 %v1562, %v1566
    %vm1568 = vweird.f32 %v1551
    %vm1569 = vweird.f32 %v1562
    %vm1570 = vmor %vm1568, %vm1569
    %v1571 = vsel %vm1570, %v1562, %v1567
    %v1572 = vmul.f32 %v1538, %v1561
    %v1573 = vmul.f32 %v1539, %v1571
    %v1574 = vld [vmem:[%s578] sm:$0x1]
    %v1576 = vperm.slane %v1574, 0
    %v1578 = vmul.f32 %v1572, %v1576
    %v1579 = vmul.f32 %v1573, %v1576
    %v1580 = vld [vmem:[%s585] sm:$0x1]
    %v1582 = vperm.slane %v1580, 0
    %v1584 = vadd.f32 %v1578, %v1582
    %v1585 = vadd.f32 %v1579, %v1582
    %v1586 = vadd.f32 %v1408, %v1584
    %v1587 = vadd.f32 %v1409, %v1585
    %1588 = vst.msk [vmem:[#allocation3 + $0x1] sm:$0xff] %vm100, %v1232
    %1589 = vst.msk [vmem:[#allocation3 + $0x9] sm:$0xff] %vm100, %v1233
    %v1590 = vld [vmem:[%s596] sm:$0x1]
    %v1591 = vld [vmem:[#allocation3] sm:$0xff]
    %v1592 = vld [vmem:[#allocation3 + $0x8] sm:$0xff]
    %v1593 = vpack.c.bf16 %v1592, %v1591
    %v1594 = vld [vmem:[%s601] sm:$0xf]
    %v1595 = vld [vmem:[%s601 + $0x4] sm:$0xf]
    %v1596 = vld [vmem:[%s601 + $0x8] sm:$0xf]
    %v1597 = vld [vmem:[%s601 + $0xc] sm:$0xf]
    %v1598 = vld [vmem:[#allocation3 + $0x1] sm:$0xff]
    %v1599 = vld [vmem:[#allocation3 + $0x9] sm:$0xff]
    %v1600 = vpack.c.bf16 %v1599, %v1598
    %v1601 = vld [vmem:[%s609] sm:$0xf]
    %v1602 = vld [vmem:[%s609 + $0x4] sm:$0xf]
    %v1603 = vld [vmem:[%s609 + $0x8] sm:$0xf]
    %v1604 = vld [vmem:[%s609 + $0xc] sm:$0xf]
    %v1609 = vunpack.c.l.b16 %v1601
    %v1610 = vunpack.c.l.b16 %v1602
    %v1611 = vunpack.c.l.b16 %v1603
    %v1612 = vunpack.c.l.b16 %v1604
    %v1613 = vpack.c.b16 %v1610, %v1609
    %v1614 = vpack.c.b16 %v1612, %v1611
    %v1618 = vsel %vm100, %v1600, 0
    %1620 = vmatpush.bf16.msra.mxu0 0
    %1621 = vmatpush.bf16.msra.mxu0 0
    %1622 = vmatpush.bf16.msra.mxu0 0
    %1623 = vmatpush.bf16.msra.mxu0 0
    %1624 = vmatpush.bf16.msra.mxu0 0
    %1625 = vmatpush.bf16.msra.mxu0 0
    %1626 = vmatpush.bf16.msra.mxu0 %v1614
    %1627 = vmatpush.bf16.msra.mxu0 %v1613
    %1628 = vmatmul.bf16.gmra.mxu0 %v1618
    %v1629 = vpop.f32.mrf.mxu0
    %v1630 = vadd.f32 0.0, %v1629
    %v1631 = vpop.f32.mrf.mxu0
    %v1632 = vadd.f32 0.0, %v1631
    %1633 = vdwg.mxu0
    %v1638 = vunpack.c.l.b16 %v1594
    %v1639 = vunpack.c.l.b16 %v1595
    %v1640 = vunpack.c.l.b16 %v1596
    %v1641 = vunpack.c.l.b16 %v1597
    %v1642 = vpack.c.b16 %v1639, %v1638
    %v1643 = vpack.c.b16 %v1641, %v1640
    %v1647 = vsel %vm100, %v1593, 0
    %1649 = vmatpush.bf16.msra.mxu0 0
    %1650 = vmatpush.bf16.msra.mxu0 0
    %1651 = vmatpush.bf16.msra.mxu0 0
    %1652 = vmatpush.bf16.msra.mxu0 0
    %1653 = vmatpush.bf16.msra.mxu0 0
    %1654 = vmatpush.bf16.msra.mxu0 0
    %1655 = vmatpush.bf16.msra.mxu0 %v1643
    %1656 = vmatpush.bf16.msra.mxu0 %v1642
    %1657 = vmatmul.bf16.gmra.mxu0 %v1647
    %v1658 = vpop.f32.mrf.mxu0
    %v1659 = vadd.f32 %v1630, %v1658
    %v1660 = vpop.f32.mrf.mxu0
    %v1661 = vadd.f32 %v1632, %v1660
    %1662 = vdwg.mxu0
    %v1663 = vld [vmem:[#allocation3 + $0x2] sm:$0xff]
    %v1664 = vld [vmem:[#allocation3 + $0xa] sm:$0xff]
    %v1665 = vpack.c.bf16 %v1664, %v1663
    %v1666 = vld [vmem:[%s675] sm:$0xf]
    %v1667 = vld [vmem:[%s675 + $0x4] sm:$0xf]
    %v1668 = vld [vmem:[%s675 + $0x8] sm:$0xf]
    %v1669 = vld [vmem:[%s675 + $0xc] sm:$0xf]
    %v1674 = vunpack.c.l.b16 %v1666
    %v1675 = vunpack.c.l.b16 %v1667
    %v1676 = vunpack.c.l.b16 %v1668
    %v1677 = vunpack.c.l.b16 %v1669
    %v1678 = vpack.c.b16 %v1675, %v1674
    %v1679 = vpack.c.b16 %v1677, %v1676
    %v1683 = vsel %vm100, %v1665, 0
    %1685 = vmatpush.bf16.msra.mxu0 0
    %1686 = vmatpush.bf16.msra.mxu0 0
    %1687 = vmatpush.bf16.msra.mxu0 0
    %1688 = vmatpush.bf16.msra.mxu0 0
    %1689 = vmatpush.bf16.msra.mxu0 0
    %1690 = vmatpush.bf16.msra.mxu0 0
    %1691 = vmatpush.bf16.msra.mxu0 %v1679
    %1692 = vmatpush.bf16.msra.mxu0 %v1678
    %1693 = vmatmul.bf16.gmra.mxu0 %v1683
    %v1694 = vpop.f32.mrf.mxu0
    %v1695 = vadd.f32 0.0, %v1694
    %v1696 = vpop.f32.mrf.mxu0
    %v1697 = vadd.f32 0.0, %v1696
    %1698 = vdwg.mxu0
    %v1699 = vadd.f32 %v1659, %v1695
    %v1700 = vadd.f32 %v1661, %v1697
    %v1702 = vperm.slane %v1590, 0
    %v1704 = vadd.f32 %v1699, %v1702
    %v1705 = vadd.f32 %v1700, %v1702
    %v1706 = vsel %vm100, %v1704, 0.0
    %1707 = vadd.xlane.f32.xlu0 %v1706
    %v1708 = vpop.xlane.xlu0 %1707
    %v1709 = vsel %vm100, %v1705, 0.0
    %1710 = vadd.xlane.f32.xlu0 %v1709
    %v1711 = vpop.xlane.xlu0 %1710
    %v1712 = vmul.f32 %v1708, %v357
    %v1713 = vmul.f32 %v1711, %v357
    %v1714 = vsub.f32 %v1704, %v1712
    %v1715 = vsub.f32 %v1705, %v1713
    %v1716 = vmul.f32 %v1714, %v1714
    %v1717 = vmul.f32 %v1715, %v1715
    %v1718 = vsel %vm100, %v1716, 0.0
    %1719 = vadd.xlane.f32.xlu0 %v1718
    %v1720 = vpop.xlane.xlu0 %1719
    %v1721 = vsel %vm100, %v1717, 0.0
    %1722 = vadd.xlane.f32.xlu0 %v1721
    %v1723 = vpop.xlane.xlu0 %1722
    %v1724 = vmul.f32 %v1720, %v357
    %v1725 = vmul.f32 %v1723, %v357
    %v1726 = vadd.f32 %v1724, 1e-05
    %v1727 = vadd.f32 %v1725, 1e-05
    %v1728 = vrsqrt.pop %v1726
    %v1729 = vmul.f32 %v1728, %v1726
    %v1730 = vmul.f32 %v1729, %v1728
    %v1731 = vmul.f32 0.5, %v1730
    %v1732 = vsub.f32 1.5, %v1731
    %v1733 = vmul.f32 %v1728, %v1732
    %vm1734 = vweird.f32 %v1726
    %vm1735 = vweird.f32 %v1728
    %vm1736 = vmor %vm1734, %vm1735
    %v1737 = vsel %vm1736, %v1728, %v1733
    %v1738 = vrsqrt.pop %v1727
    %v1739 = vmul.f32 %v1738, %v1727
    %v1740 = vmul.f32 %v1739, %v1738
    %v1741 = vmul.f32 0.5, %v1740
    %v1742 = vsub.f32 1.5, %v1741
    %v1743 = vmul.f32 %v1738, %v1742
    %vm1744 = vweird.f32 %v1727
    %vm1745 = vweird.f32 %v1738
    %vm1746 = vmor %vm1744, %vm1745
    %v1747 = vsel %vm1746, %v1738, %v1743
    %v1748 = vmul.f32 %v1714, %v1737
    %v1749 = vmul.f32 %v1715, %v1747
    %v1750 = vld [vmem:[%s760] sm:$0x1]
    %v1752 = vperm.slane %v1750, 0
    %v1754 = vmul.f32 %v1748, %v1752
    %v1755 = vmul.f32 %v1749, %v1752
    %v1756 = vld [vmem:[%s767] sm:$0x1]
    %v1758 = vperm.slane %v1756, 0
    %v1760 = vadd.f32 %v1754, %v1758
    %v1761 = vadd.f32 %v1755, %v1758
    %v1762 = vadd.f32 %v1230, %v1760
    %v1763 = vadd.f32 %v1231, %v1761
    %v1764 = vmax.f32 %v1762, 0.0
    %v1765 = vmax.f32 %v1763, 0.0
    %1766 = vst.msk [vmem:[#allocation3 + $0x1] sm:$0xff] %vm100, %v1764
    %1767 = vst.msk [vmem:[#allocation3 + $0x9] sm:$0xff] %vm100, %v1765
    %v1768 = vld [vmem:[%s780] sm:$0x1]
    %v1769 = vld [vmem:[#allocation3] sm:$0xff]
    %v1770 = vld [vmem:[#allocation3 + $0x8] sm:$0xff]
    %v1771 = vpack.c.bf16 %v1770, %v1769
    %v1772 = vld [vmem:[%s785] sm:$0xf]
    %v1773 = vld [vmem:[%s785 + $0x4] sm:$0xf]
    %v1774 = vld [vmem:[%s785 + $0x8] sm:$0xf]
    %v1775 = vld [vmem:[%s785 + $0xc] sm:$0xf]
    %v1776 = vld [vmem:[#allocation3 + $0x1] sm:$0xff]
    %v1777 = vld [vmem:[#allocation3 + $0x9] sm:$0xff]
    %v1778 = vpack.c.bf16 %v1777, %v1776
    %v1779 = vld [vmem:[%s793] sm:$0xf]
    %v1780 = vld [vmem:[%s793 + $0x4] sm:$0xf]
    %v1781 = vld [vmem:[%s793 + $0x8] sm:$0xf]
    %v1782 = vld [vmem:[%s793 + $0xc] sm:$0xf]
    %v1787 = vunpack.c.l.b16 %v1779
    %v1788 = vunpack.c.l.b16 %v1780
    %v1789 = vunpack.c.l.b16 %v1781
    %v1790 = vunpack.c.l.b16 %v1782
    %v1791 = vpack.c.b16 %v1788, %v1787
    %v1792 = vpack.c.b16 %v1790, %v1789
    %v1796 = vsel %vm100, %v1778, 0
    %1798 = vmatpush.bf16.msra.mxu0 0
    %1799 = vmatpush.bf16.msra.mxu0 0
    %1800 = vmatpush.bf16.msra.mxu0 0
    %1801 = vmatpush.bf16.msra.mxu0 0
    %1802 = vmatpush.bf16.msra.mxu0 0
    %1803 = vmatpush.bf16.msra.mxu0 0
    %1804 = vmatpush.bf16.msra.mxu0 %v1792
    %1805 = vmatpush.bf16.msra.mxu0 %v1791
    %1806 = vmatmul.bf16.gmra.mxu0 %v1796
    %v1807 = vpop.f32.mrf.mxu0
    %v1808 = vadd.f32 0.0, %v1807
    %v1809 = vpop.f32.mrf.mxu0
    %v1810 = vadd.f32 0.0, %v1809
    %1811 = vdwg.mxu0
    %v1816 = vunpack.c.l.b16 %v1772
    %v1817 = vunpack.c.l.b16 %v1773
    %v1818 = vunpack.c.l.b16 %v1774
    %v1819 = vunpack.c.l.b16 %v1775
    %v1820 = vpack.c.b16 %v1817, %v1816
    %v1821 = vpack.c.b16 %v1819, %v1818
    %v1825 = vsel %vm100, %v1771, 0
    %1827 = vmatpush.bf16.msra.mxu0 0
    %1828 = vmatpush.bf16.msra.mxu0 0
    %1829 = vmatpush.bf16.msra.mxu0 0
    %1830 = vmatpush.bf16.msra.mxu0 0
    %1831 = vmatpush.bf16.msra.mxu0 0
    %1832 = vmatpush.bf16.msra.mxu0 0
    %1833 = vmatpush.bf16.msra.mxu0 %v1821
    %1834 = vmatpush.bf16.msra.mxu0 %v1820
    %1835 = vmatmul.bf16.gmra.mxu0 %v1825
    %v1836 = vpop.f32.mrf.mxu0
    %v1837 = vadd.f32 %v1808, %v1836
    %v1838 = vpop.f32.mrf.mxu0
    %v1839 = vadd.f32 %v1810, %v1838
    %1840 = vdwg.mxu0
    %v1841 = vld [vmem:[#allocation3 + $0x2] sm:$0xff]
    %v1842 = vld [vmem:[#allocation3 + $0xa] sm:$0xff]
    %v1843 = vpack.c.bf16 %v1842, %v1841
    %v1844 = vld [vmem:[%s859] sm:$0xf]
    %v1845 = vld [vmem:[%s859 + $0x4] sm:$0xf]
    %v1846 = vld [vmem:[%s859 + $0x8] sm:$0xf]
    %v1847 = vld [vmem:[%s859 + $0xc] sm:$0xf]
    %v1852 = vunpack.c.l.b16 %v1844
    %v1853 = vunpack.c.l.b16 %v1845
    %v1854 = vunpack.c.l.b16 %v1846
    %v1855 = vunpack.c.l.b16 %v1847
    %v1856 = vpack.c.b16 %v1853, %v1852
    %v1857 = vpack.c.b16 %v1855, %v1854
    %v1861 = vsel %vm100, %v1843, 0
    %1863 = vmatpush.bf16.msra.mxu0 0
    %1864 = vmatpush.bf16.msra.mxu0 0
    %1865 = vmatpush.bf16.msra.mxu0 0
    %1866 = vmatpush.bf16.msra.mxu0 0
    %1867 = vmatpush.bf16.msra.mxu0 0
    %1868 = vmatpush.bf16.msra.mxu0 0
    %1869 = vmatpush.bf16.msra.mxu0 %v1857
    %1870 = vmatpush.bf16.msra.mxu0 %v1856
    %1871 = vmatmul.bf16.gmra.mxu0 %v1861
    %v1872 = vpop.f32.mrf.mxu0
    %v1873 = vadd.f32 0.0, %v1872
    %v1874 = vpop.f32.mrf.mxu0
    %v1875 = vadd.f32 0.0, %v1874
    %1876 = vdwg.mxu0
    %v1877 = vadd.f32 %v1837, %v1873
    %v1878 = vadd.f32 %v1839, %v1875
    %v1880 = vperm.slane %v1768, 0
    %v1882 = vadd.f32 %v1877, %v1880
    %v1883 = vadd.f32 %v1878, %v1880
    %v1884 = vsel %vm100, %v1882, 0.0
    %1885 = vadd.xlane.f32.xlu0 %v1884
    %v1886 = vpop.xlane.xlu0 %1885
    %v1887 = vsel %vm100, %v1883, 0.0
    %1888 = vadd.xlane.f32.xlu0 %v1887
    %v1889 = vpop.xlane.xlu0 %1888
    %v1890 = vmul.f32 %v1886, %v357
    %v1891 = vmul.f32 %v1889, %v357
    %v1892 = vsub.f32 %v1882, %v1890
    %v1893 = vsub.f32 %v1883, %v1891
    %v1894 = vmul.f32 %v1892, %v1892
    %v1895 = vmul.f32 %v1893, %v1893
    %v1896 = vsel %vm100, %v1894, 0.0
    %1897 = vadd.xlane.f32.xlu0 %v1896
    %v1898 = vpop.xlane.xlu0 %1897
    %v1899 = vsel %vm100, %v1895, 0.0
    %1900 = vadd.xlane.f32.xlu0 %v1899
    %v1901 = vpop.xlane.xlu0 %1900
    %v1902 = vmul.f32 %v1898, %v357
    %v1903 = vmul.f32 %v1901, %v357
    %v1904 = vadd.f32 %v1902, 1e-05
    %v1905 = vadd.f32 %v1903, 1e-05
    %v1906 = vrsqrt.pop %v1904
    %v1907 = vmul.f32 %v1906, %v1904
    %v1908 = vmul.f32 %v1907, %v1906
    %v1909 = vmul.f32 0.5, %v1908
    %v1910 = vsub.f32 1.5, %v1909
    %v1911 = vmul.f32 %v1906, %v1910
    %vm1912 = vweird.f32 %v1904
    %vm1913 = vweird.f32 %v1906
    %vm1914 = vmor %vm1912, %vm1913
    %v1915 = vsel %vm1914, %v1906, %v1911
    %v1916 = vrsqrt.pop %v1905
    %v1917 = vmul.f32 %v1916, %v1905
    %v1918 = vmul.f32 %v1917, %v1916
    %v1919 = vmul.f32 0.5, %v1918
    %v1920 = vsub.f32 1.5, %v1919
    %v1921 = vmul.f32 %v1916, %v1920
    %vm1922 = vweird.f32 %v1905
    %vm1923 = vweird.f32 %v1916
    %vm1924 = vmor %vm1922, %vm1923
    %v1925 = vsel %vm1924, %v1916, %v1921
    %v1926 = vmul.f32 %v1892, %v1915
    %v1927 = vmul.f32 %v1893, %v1925
    %v1928 = vld [vmem:[%s944] sm:$0x1]
    %v1930 = vperm.slane %v1928, 0
    %v1932 = vmul.f32 %v1926, %v1930
    %v1933 = vmul.f32 %v1927, %v1930
    %v1934 = vld [vmem:[%s951] sm:$0x1]
    %v1936 = vperm.slane %v1934, 0
    %v1938 = vadd.f32 %v1932, %v1936
    %v1939 = vadd.f32 %v1933, %v1936
    %v1940 = vadd.f32 %v1762, %v1938
    %v1941 = vadd.f32 %v1763, %v1939
    %v1942 = vadd.f32 %v1586, %v1940
    %v1943 = vadd.f32 %v1587, %v1941
    %1944 = vst.msk [vmem:[#allocation3 + $0x1] sm:$0xff] %vm100, %v1942
    %1945 = vst.msk [vmem:[#allocation3 + $0x9] sm:$0xff] %vm100, %v1943
    %v1946 = vld [vmem:[%s8] sm:$0x1]
    %v1947 = vld [vmem:[#allocation3] sm:$0xff]
    %v1948 = vld [vmem:[#allocation3 + $0x8] sm:$0xff]
    %v1949 = vpack.c.bf16 %v1948, %v1947
    %v1950 = vld [vmem:[#allocation10] sm:$0xf]
    %v1951 = vld [vmem:[#allocation10 + $0x4] sm:$0xf]
    %v1952 = vld [vmem:[#allocation10 + $0x8] sm:$0xf]
    %v1953 = vld [vmem:[#allocation10 + $0xc] sm:$0xf]
    %v1954 = vld [vmem:[#allocation3 + $0x1] sm:$0xff]
    %v1955 = vld [vmem:[#allocation3 + $0x9] sm:$0xff]
    %v1956 = vpack.c.bf16 %v1955, %v1954
    %v1957 = vld [vmem:[%s975] sm:$0xf]
    %v1958 = vld [vmem:[%s975 + $0x4] sm:$0xf]
    %v1959 = vld [vmem:[%s975 + $0x8] sm:$0xf]
    %v1960 = vld [vmem:[%s975 + $0xc] sm:$0xf]
    %v1965 = vunpack.c.l.b16 %v1957
    %v1966 = vunpack.c.l.b16 %v1958
    %v1967 = vunpack.c.l.b16 %v1959
    %v1968 = vunpack.c.l.b16 %v1960
    %v1969 = vpack.c.b16 %v1966, %v1965
    %v1970 = vpack.c.b16 %v1968, %v1967
    %v1974 = vsel %vm100, %v1956, 0
    %1976 = vmatpush.bf16.msra.mxu0 0
    %1977 = vmatpush.bf16.msra.mxu0 0
    %1978 = vmatpush.bf16.msra.mxu0 0
    %1979 = vmatpush.bf16.msra.mxu0 0
    %1980 = vmatpush.bf16.msra.mxu0 0
    %1981 = vmatpush.bf16.msra.mxu0 0
    %1982 = vmatpush.bf16.msra.mxu0 %v1970
    %1983 = vmatpush.bf16.msra.mxu0 %v1969
    %1984 = vmatmul.bf16.gmra.mxu0 %v1974
    %v1985 = vpop.f32.mrf.mxu0
    %v1986 = vadd.f32 0.0, %v1985
    %v1987 = vpop.f32.mrf.mxu0
    %v1988 = vadd.f32 0.0, %v1987
    %1989 = vdwg.mxu0
    %v1994 = vunpack.c.l.b16 %v1950
    %v1995 = vunpack.c.l.b16 %v1951
    %v1996 = vunpack.c.l.b16 %v1952
    %v1997 = vunpack.c.l.b16 %v1953
    %v1998 = vpack.c.b16 %v1995, %v1994
    %v1999 = vpack.c.b16 %v1997, %v1996
    %v2003 = vsel %vm100, %v1949, 0
    %2005 = vmatpush.bf16.msra.mxu0 0
    %2006 = vmatpush.bf16.msra.mxu0 0
    %2007 = vmatpush.bf16.msra.mxu0 0
    %2008 = vmatpush.bf16.msra.mxu0 0
    %2009 = vmatpush.bf16.msra.mxu0 0
    %2010 = vmatpush.bf16.msra.mxu0 0
    %2011 = vmatpush.bf16.msra.mxu0 %v1999
    %2012 = vmatpush.bf16.msra.mxu0 %v1998
    %2013 = vmatmul.bf16.gmra.mxu0 %v2003
    %v2014 = vpop.f32.mrf.mxu0
    %v2015 = vadd.f32 %v1986, %v2014
    %v2016 = vpop.f32.mrf.mxu0
    %v2017 = vadd.f32 %v1988, %v2016
    %2018 = vdwg.mxu0
    %v2019 = vld [vmem:[#allocation3 + $0x2] sm:$0xff]
    %v2020 = vld [vmem:[#allocation3 + $0xa] sm:$0xff]
    %v2021 = vpack.c.bf16 %v2020, %v2019
    %v2022 = vld [vmem:[%s1041] sm:$0xf]
    %v2023 = vld [vmem:[%s1041 + $0x4] sm:$0xf]
    %v2024 = vld [vmem:[%s1041 + $0x8] sm:$0xf]
    %v2025 = vld [vmem:[%s1041 + $0xc] sm:$0xf]
    %v2030 = vunpack.c.l.b16 %v2022
    %v2031 = vunpack.c.l.b16 %v2023
    %v2032 = vunpack.c.l.b16 %v2024
    %v2033 = vunpack.c.l.b16 %v2025
    %v2034 = vpack.c.b16 %v2031, %v2030
    %v2035 = vpack.c.b16 %v2033, %v2032
    %v2039 = vsel %vm100, %v2021, 0
    %2041 = vmatpush.bf16.msra.mxu0 0
    %2042 = vmatpush.bf16.msra.mxu0 0
    %2043 = vmatpush.bf16.msra.mxu0 0
    %2044 = vmatpush.bf16.msra.mxu0 0
    %2045 = vmatpush.bf16.msra.mxu0 0
    %2046 = vmatpush.bf16.msra.mxu0 0
    %2047 = vmatpush.bf16.msra.mxu0 %v2035
    %2048 = vmatpush.bf16.msra.mxu0 %v2034
    %2049 = vmatmul.bf16.gmra.mxu0 %v2039
    %v2050 = vpop.f32.mrf.mxu0
    %v2051 = vadd.f32 0.0, %v2050
    %v2052 = vpop.f32.mrf.mxu0
    %v2053 = vadd.f32 0.0, %v2052
    %2054 = vdwg.mxu0
    %v2055 = vadd.f32 %v2015, %v2051
    %v2056 = vadd.f32 %v2017, %v2053
    %v2058 = vperm.slane %v1946, 0
    %v2060 = vadd.f32 %v2055, %v2058
    %v2061 = vadd.f32 %v2056, %v2058
    %2062 = vxpose.xlu0.b32.start [1/16] %v2060, 128
    %2063 = vxpose.xlu0.b32.cont [2/16] %v2061, 128
    %2064 = vxpose.xlu0.b32.cont [3/16] 0.0, 128
    %2065 = vxpose.xlu0.b32.cont [4/16] 0.0, 128
    %2066 = vxpose.xlu0.b32.cont [5/16] 0.0, 128
    %2067 = vxpose.xlu0.b32.cont [6/16] 0.0, 128
    %2068 = vxpose.xlu0.b32.cont [7/16] 0.0, 128
    %2069 = vxpose.xlu0.b32.cont [8/16] 0.0, 128
    %2070 = vxpose.xlu0.b32.cont [9/16] 0.0, 128
    %2071 = vxpose.xlu0.b32.cont [10/16] 0.0, 128
    %2072 = vxpose.xlu0.b32.cont [11/16] 0.0, 128
    %2073 = vxpose.xlu0.b32.cont [12/16] 0.0, 128
    %2074 = vxpose.xlu0.b32.cont [13/16] 0.0, 128
    %2075 = vxpose.xlu0.b32.cont [14/16] 0.0, 128
    %2076 = vxpose.xlu0.b32.cont [15/16] 0.0, 128
    %2077 = vxpose.xlu0.b32.end [16/16] 0.0, 128
    %v2078 = vpop.trf.xlu0
    %v2079 = vpop.trf.xlu0
    %v2080 = vpop.trf.xlu0
    %v2081 = vpop.trf.xlu0
    %v2082 = vpop.trf.xlu0
    %v2083 = vpop.trf.xlu0
    %v2084 = vpop.trf.xlu0
    %v2085 = vpop.trf.xlu0
    %v2086 = vpop.trf.xlu0
    %v2087 = vpop.trf.xlu0
    %v2088 = vpop.trf.xlu0
    %v2089 = vpop.trf.xlu0
    %v2090 = vpop.trf.xlu0
    %v2091 = vpop.trf.xlu0
    %v2092 = vpop.trf.xlu0
    %v2093 = vpop.trf.xlu0
    %s2094 = scalar_lea.vmem [#allocation12], 4
    %2095 = vst.msk [vmem:[%s2094] sm:$0xf] %vm1114, %v2078
    // Predicated region
    $region54: #{conv_net_double.1} parent=1 // pred_check
      _
    $region55: #{conv_net_double.1} parent=1 // pred_check_branch
      %2097 = sbr.rel (0) target = $region57
    $region56: #{conv_net_double.1} parent=1 // pred_region
      %2099 = vsyncadd [#allocation6], 0
      %s2100 = sshll.u32 [#allocation12], 4
      %s2101 = int_to_ptr.vmem [resolvable:$true] %s2100
      %s2102 = sshll.u32 %s9, 4
      %s2103 = int_to_ptr.hbm [resolvable:$true] %s2102
      %2108 = dma.vmem_to_hbm [thread:$0]  %s2101, 128, %s2103, [#allocation6], 64, 64, 4
    $region57: #{conv_net_double.1} parent=1 // pred_fallthru
      _
    // Predicated region
    $region58: #{conv_net_double.1} parent=1 // pred_check
      _
    $region59: #{conv_net_double.1} parent=1 // pred_check_branch
      %2110 = sbr.rel (0) target = $region61
    $region60: #{conv_net_double.1} parent=1 // pred_region
      %2112 = dma.done [#allocation6], 128
    $region61: #{conv_net_double.1} parent=1 // pred_fallthru
      _
    %2113 = vsyncpa [#allocation5], 1
    %2114 = vsyncpa [#allocation8], 1
    %2115 = vsyncpa [#allocation11], 1
    %2116 = vsyncpa [#allocation6], 1

</llo_original>
